<compile_context>
chip_gen: v6e
topology: v6e:2x2x1
jax: 0.10.0
libtpu: 0.0.40
codegen_flags: <defaults>
</compile_context>

<pallas_src>
import jax
import jax.numpy as jnp
from jax.experimental import pallas as pl
from jax.experimental.pallas import tpu as pltpu


# ----------------------------------------------------------------------------
# Fused kernel.
#   x_ref   : (B, H, W, 1)    f32   NHWC input block
#   w1_ref  : (9, 32)         f32   conv1 taps, row k = dy*3 + dx
#   b1_ref  : (1, 32)         f32
#   w2_ref  : (288, 128)      bf16  conv2 im2col layout: row = (dy*3+dx)*32 + cin
#   b2_ref  : (1, 128)        f32
#   l1w_ref : (H*W*128, 128)  bf16  layer1 weight, rows in (H,W,C)-flatten order
#   l1b_ref : (1, 128)        f32
#   l4w_ref : (128, A)        f32
#   l4b_ref : (1, A)          f32
#   o_ref   : (B, A)          f32   Q-values
#   feat_ref: (B, H*W*128)    f32   VMEM scratch for the flattened features
# ----------------------------------------------------------------------------
def dqn_kernel(x_ref, w1_ref, b1_ref, w2_ref, b2_ref,
               l1w_ref, l1b_ref, l4w_ref, l4b_ref, o_ref, feat_ref):
    B, H, W, _ = x_ref.shape
    C1 = w1_ref.shape[1]
    C2 = w2_ref.shape[1]
    HW = H * W

    # ---- conv1: 3x3 "same", Cin=1, 9 shifted broadcast-MACs on the VPU ------
    x = x_ref[...]                                              # (B,H,W,1) f32
    zr = jnp.zeros((B, 1, W, 1), jnp.float32)
    xp = jnp.concatenate([zr, x, zr], axis=1)                   # (B,H+2,W,1)
    zc = jnp.zeros((B, H + 2, 1, 1), jnp.float32)
    xp = jnp.concatenate([zc, xp, zc], axis=2)                  # (B,H+2,W+2,1)

    w1 = w1_ref[...]                                            # (9,C1)
    acc1 = jnp.zeros((B, H, W, C1), jnp.float32)
    for k in range(9):
        dy, dx = divmod(k, 3)
        tap = xp[:, dy:dy + H, dx:dx + W, :]                    # (B,H,W,1)
        acc1 = acc1 + tap * w1[k:k + 1, :].reshape(1, 1, 1, C1)
    h1 = jnp.maximum(acc1 + b1_ref[...].reshape(1, 1, 1, C1), 0.0)

    # ---- conv2: 3x3 "same" via im2col -> one bf16 MXU matmul ----------------
    zr = jnp.zeros((B, 1, W, C1), jnp.float32)
    h1p = jnp.concatenate([zr, h1, zr], axis=1)                 # (B,H+2,W,C1)
    zc = jnp.zeros((B, H + 2, 1, C1), jnp.float32)
    h1p = jnp.concatenate([zc, h1p, zc], axis=2)                # (B,H+2,W+2,C1)

    cols = []
    for k in range(9):
        dy, dx = divmod(k, 3)
        cols.append(h1p[:, dy:dy + H, dx:dx + W, :].reshape(B * HW, C1))
    col = jnp.concatenate(cols, axis=1).astype(jnp.bfloat16)    # (B*HW, 9*C1)

    h2 = jnp.dot(col, w2_ref[...], preferred_element_type=jnp.float32)
    h2 = jnp.maximum(h2 + b2_ref[...], 0.0)                     # (B*HW, C2) f32

    # ---- flatten in (H,W,C) order into VMEM scratch -------------------------
    # Split-only reshape (lane dim unchanged), then HW lane-aligned 128-wide
    # stores; avoids an in-kernel lane-dim-changing reshape.
    h2_r = h2.reshape(B, HW, C2)                                # (B, HW, C2)
    for p in range(HW):
        feat_ref[:, p * C2:(p + 1) * C2] = h2_r[:, p, :]

    # ---- layer1 (+ReLU) and layer4 ------------------------------------------
    feat = feat_ref[...].astype(jnp.bfloat16)                   # (B, F) bf16
    h3 = jnp.dot(feat, l1w_ref[...], preferred_element_type=jnp.float32)
    h3 = jnp.maximum(h3 + l1b_ref[...], 0.0)                    # (B, 128) f32
    q = jnp.dot(h3, l4w_ref[...], preferred_element_type=jnp.float32)
    o_ref[...] = q + l4b_ref[...]


# ----------------------------------------------------------------------------
# Wrapper: optional 'parallel' grid over batch blocks (bb = B by default so at
# inference batch sizes the grid is (1,) and adds no per-step overhead; for
# training batches / v7x set batch_block to a multiple of 8 that divides B).
# ----------------------------------------------------------------------------
def dqn_forward(x, params, *, batch_block=None):
    B, H, W = x.shape
    x4 = x[..., None]                                  # torch.unsqueeze(x, 1), as NHWC
    C1 = params["conv1_w"].shape[1]
    C2 = params["conv2_w"].shape[1]
    F, N1 = params["l1_w"].shape
    A = params["l4_w"].shape[1]
    assert F == H * W * C2

    bb = B if batch_block is None else batch_block
    assert B % bb == 0
    grid = (B // bb,)

    flops = (2 * B * H * W * 9 * C1
             + 2 * B * H * W * (9 * C1) * C2
             + 2 * B * F * N1
             + 2 * B * N1 * A)
    bytes_accessed = (x4.size * 4
                      + params["conv1_w"].size * 4 + params["conv1_b"].size * 4
                      + params["conv2_w"].size * 2 + params["conv2_b"].size * 4
                      + params["l1_w"].size * 2 + params["l1_b"].size * 4
                      + params["l4_w"].size * 4 + params["l4_b"].size * 4
                      + B * A * 4)

    return pl.pallas_call(
        dqn_kernel,
        out_shape=jax.ShapeDtypeStruct((B, A), jnp.float32),
        grid=grid,
        in_specs=[
            pl.BlockSpec((bb, H, W, 1), lambda b: (b, 0, 0, 0)),
            pl.BlockSpec((9, C1), lambda b: (0, 0)),
            pl.BlockSpec((1, C1), lambda b: (0, 0)),
            pl.BlockSpec((9 * C1, C2), lambda b: (0, 0)),
            pl.BlockSpec((1, C2), lambda b: (0, 0)),
            pl.BlockSpec((F, N1), lambda b: (0, 0)),
            pl.BlockSpec((1, N1), lambda b: (0, 0)),
            pl.BlockSpec((N1, A), lambda b: (0, 0)),
            pl.BlockSpec((1, A), lambda b: (0, 0)),
        ],
        out_specs=pl.BlockSpec((bb, A), lambda b: (b, 0)),
        scratch_shapes=[pltpu.VMEM((bb, F), jnp.float32)],
        cost_estimate=pl.CostEstimate(flops=flops, transcendentals=0,
                                      bytes_accessed=bytes_accessed),
        compiler_params=pltpu.CompilerParams(
            dimension_semantics=("parallel",),
            vmem_limit_bytes=32 * 1024 * 1024),
    )(x4, params["conv1_w"], params["conv1_b"], params["conv2_w"],
      params["conv2_b"], params["l1_w"], params["l1_b"],
      params["l4_w"], params["l4_b"])


# ----------------------------------------------------------------------------
# Parameters in genuine PyTorch layouts + conversion to kernel layouts.
# ----------------------------------------------------------------------------
def init_torch_params(key, env_size, n_actions):
    H = W = env_size
    C1, C2, N1 = 32, 128, 128
    F = C2 * H * W                                      # PyTorch conv_output_size
    ks = jax.random.split(key, 8)
    s = 0.05
    return {
        "conv1_w": s * jax.random.normal(ks[0], (C1, 1, 3, 3), jnp.float32),
        "conv1_b": s * jax.random.normal(ks[1], (C1,), jnp.float32),
        "conv2_w": s * jax.random.normal(ks[2], (C2, C1, 3, 3), jnp.float32),
        "conv2_b": s * jax.random.normal(ks[3], (C2,), jnp.float32),
        "l1_w": s * jax.random.normal(ks[4], (N1, F), jnp.float32),
        "l1_b": s * jax.random.normal(ks[5], (N1,), jnp.float32),
        "l4_w": s * jax.random.normal(ks[6], (n_actions, N1), jnp.float32),
        "l4_b": s * jax.random.normal(ks[7], (n_actions,), jnp.float32),
    }


def to_kernel_params(tp, env_size):
    """PyTorch layouts -> kernel layouts (taps / im2col / (H,W,C)-flatten)."""
    H = W = env_size
    C1 = tp["conv1_w"].shape[0]
    C2 = tp["conv2_w"].shape[0]
    N1 = tp["l1_w"].shape[0]
    A = tp["l4_w"].shape[0]
    return {
        # (32,1,3,3) -> (9, 32), row k = dy*3 + dx
        "conv1_w": tp["conv1_w"].reshape(C1, 9).T,
        "conv1_b": tp["conv1_b"].reshape(1, C1),
        # (128,32,3,3) -> (288, 128), row = (dy*3+dx)*32 + cin
        "conv2_w": jnp.transpose(tp["conv2_w"], (2, 3, 1, 0)
                                 ).reshape(9 * C1, C2).astype(jnp.bfloat16),
        "conv2_b": tp["conv2_b"].reshape(1, C2),
        # PyTorch flattens (C,H,W); kernel flattens (H,W,C)
        "l1_w": jnp.transpose(tp["l1_w"].reshape(N1, C2, H, W), (2, 3, 1, 0)
                              ).reshape(H * W * C2, N1).astype(jnp.bfloat16),
        "l1_b": tp["l1_b"].reshape(1, N1),
        "l4_w": tp["l4_w"].T,
        "l4_b": tp["l4_b"].reshape(1, A),
    }


# Pure-JAX reference in PyTorch conventions (NCHW convs, (C,H,W) flatten).
def reference_forward(x, tp):
    dn = ("NCHW", "OIHW", "NCHW")
    xin = x[:, None, :, :]
    h1 = jax.lax.conv_general_dilated(xin, tp["conv1_w"], (1, 1), "SAME",
                                      dimension_numbers=dn)
    h1 = jax.nn.relu(h1 + tp["conv1_b"][None, :, None, None])
    h2 = jax.lax.conv_general_dilated(h1, tp["conv2_w"], (1, 1), "SAME",
                                      dimension_numbers=dn)
    h2 = jax.nn.relu(h2 + tp["conv2_b"][None, :, None, None])
    feat = h2.reshape(x.shape[0], -1)
    h3 = jax.nn.relu(feat @ tp["l1_w"].T + tp["l1_b"])
    return h3 @ tp["l4_w"].T + tp["l4_b"]


if __name__ == "__main__":
    env_size = 8
    batch = 2
    n_actions = 4

    key = jax.random.PRNGKey(0)
    k_param, k_x = jax.random.split(key)
    torch_params = init_torch_params(k_param, env_size, n_actions)
    params = to_kernel_params(torch_params, env_size)
    x = jax.random.normal(k_x, (batch, env_size, env_size), jnp.float32)

    out = jax.block_until_ready(jax.jit(dqn_forward)(x, params))
    assert out.shape == (batch, n_actions), out.shape
    assert bool(jnp.all(jnp.isfinite(out)))

    ref = reference_forward(x, torch_params)
    assert bool(jnp.allclose(out, ref, rtol=5e-2, atol=2e-2)), (out, ref)
    print("KERNEL_OK")
</pallas_src>

<mosaic_0001>
module attributes {stable_mosaic.version = 11 : i64} {
  func.func @dqn_kernel(%arg0: i32, %arg1: memref<2x8x8x1xf32, #tpu.memory_space<vmem>>, %arg2: memref<9x32xf32, #tpu.memory_space<vmem>>, %arg3: memref<1x32xf32, #tpu.memory_space<vmem>>, %arg4: memref<288x128xbf16, #tpu.memory_space<vmem>>, %arg5: memref<1x128xf32, #tpu.memory_space<vmem>>, %arg6: memref<8192x128xbf16, #tpu.memory_space<vmem>>, %arg7: memref<1x128xf32, #tpu.memory_space<vmem>>, %arg8: memref<128x4xf32, #tpu.memory_space<vmem>>, %arg9: memref<1x4xf32, #tpu.memory_space<vmem>>, %arg10: memref<2x4xf32, #tpu.memory_space<vmem>>, %arg11: memref<2x8192xf32, #tpu.memory_space<vmem>>) attributes {dimension_semantics = [#tpu.dimension_semantics<parallel>], iteration_bounds = array<i64: 1>, scalar_prefetch = 0 : i64, scratch_operands = 1 : i64, tpu.core_type = #tpu.core_type<tc>, window_params = [{transform_indices = @transform_0, window_bounds = array<i64: 2, 8, 8, 1>}, {pipeline_mode = #tpu.pipeline_mode<synchronous>, transform_indices = @transform_1, window_bounds = array<i64: 9, 32>}, {pipeline_mode = #tpu.pipeline_mode<synchronous>, transform_indices = @transform_2, window_bounds = array<i64: 1, 32>}, {pipeline_mode = #tpu.pipeline_mode<synchronous>, transform_indices = @transform_3, window_bounds = array<i64: 288, 128>}, {pipeline_mode = #tpu.pipeline_mode<synchronous>, transform_indices = @transform_4, window_bounds = array<i64: 1, 128>}, {pipeline_mode = #tpu.pipeline_mode<synchronous>, transform_indices = @transform_5, window_bounds = array<i64: 8192, 128>}, {pipeline_mode = #tpu.pipeline_mode<synchronous>, transform_indices = @transform_6, window_bounds = array<i64: 1, 128>}, {pipeline_mode = #tpu.pipeline_mode<synchronous>, transform_indices = @transform_7, window_bounds = array<i64: 128, 4>}, {pipeline_mode = #tpu.pipeline_mode<synchronous>, transform_indices = @transform_8, window_bounds = array<i64: 1, 4>}, {transform_indices = @transform_9, window_bounds = array<i64: 2, 4>}]} {
    %c0 = arith.constant 0 : index
    %c0_0 = arith.constant 0 : index
    %c0_1 = arith.constant 0 : index
    %c0_2 = arith.constant 0 : index
    %0 = vector.load %arg1[%c0, %c0_0, %c0_1, %c0_2] : memref<2x8x8x1xf32, #tpu.memory_space<vmem>>, vector<2x8x8x1xf32>
    %cst = arith.constant 0.000000e+00 : f32
    %1 = vector.broadcast %cst : f32 to vector<2x1x8x1xf32>
    %2 = tpu.concatenate %1, %0, %1 in 1 : vector<2x1x8x1xf32>, vector<2x8x8x1xf32>, vector<2x1x8x1xf32> -> vector<2x10x8x1xf32>
    %cst_3 = arith.constant 0.000000e+00 : f32
    %3 = vector.broadcast %cst_3 : f32 to vector<2x10x1x1xf32>
    %4 = tpu.concatenate %3, %2, %3 in 2 : vector<2x10x1x1xf32>, vector<2x10x8x1xf32>, vector<2x10x1x1xf32> -> vector<2x10x10x1xf32>
    %c0_4 = arith.constant 0 : index
    %c0_5 = arith.constant 0 : index
    %5 = vector.load %arg2[%c0_4, %c0_5] : memref<9x32xf32, #tpu.memory_space<vmem>>, vector<9x32xf32>
    %cst_6 = arith.constant 0.000000e+00 : f32
    %6 = vector.broadcast %cst_6 : f32 to vector<2x8x8x32xf32>
    %7 = vector.extract_strided_slice %4 {offsets = [0, 0, 0, 0], sizes = [2, 8, 8, 1], strides = [1, 1, 1, 1]} : vector<2x10x10x1xf32> to vector<2x8x8x1xf32>
    %8 = vector.extract_strided_slice %5 {offsets = [0, 0], sizes = [1, 32], strides = [1, 1]} : vector<9x32xf32> to vector<1x32xf32>
    %9 = vector.shape_cast %8 : vector<1x32xf32> to vector<1x1x1x32xf32>
    %10 = vector.broadcast %7 : vector<2x8x8x1xf32> to vector<2x8x8x32xf32>
    %11 = vector.broadcast %9 : vector<1x1x1x32xf32> to vector<2x8x8x32xf32>
    %12 = arith.mulf %10, %11 : vector<2x8x8x32xf32>
    %13 = arith.addf %6, %12 : vector<2x8x8x32xf32>
    %14 = vector.extract_strided_slice %4 {offsets = [0, 0, 1, 0], sizes = [2, 8, 8, 1], strides = [1, 1, 1, 1]} : vector<2x10x10x1xf32> to vector<2x8x8x1xf32>
    %15 = vector.extract_strided_slice %5 {offsets = [1, 0], sizes = [1, 32], strides = [1, 1]} : vector<9x32xf32> to vector<1x32xf32>
    %16 = vector.shape_cast %15 : vector<1x32xf32> to vector<1x1x1x32xf32>
    %17 = vector.broadcast %14 : vector<2x8x8x1xf32> to vector<2x8x8x32xf32>
    %18 = vector.broadcast %16 : vector<1x1x1x32xf32> to vector<2x8x8x32xf32>
    %19 = arith.mulf %17, %18 : vector<2x8x8x32xf32>
    %20 = arith.addf %13, %19 : vector<2x8x8x32xf32>
    %21 = vector.extract_strided_slice %4 {offsets = [0, 0, 2, 0], sizes = [2, 8, 8, 1], strides = [1, 1, 1, 1]} : vector<2x10x10x1xf32> to vector<2x8x8x1xf32>
    %22 = vector.extract_strided_slice %5 {offsets = [2, 0], sizes = [1, 32], strides = [1, 1]} : vector<9x32xf32> to vector<1x32xf32>
    %23 = vector.shape_cast %22 : vector<1x32xf32> to vector<1x1x1x32xf32>
    %24 = vector.broadcast %21 : vector<2x8x8x1xf32> to vector<2x8x8x32xf32>
    %25 = vector.broadcast %23 : vector<1x1x1x32xf32> to vector<2x8x8x32xf32>
    %26 = arith.mulf %24, %25 : vector<2x8x8x32xf32>
    %27 = arith.addf %20, %26 : vector<2x8x8x32xf32>
    %28 = vector.extract_strided_slice %4 {offsets = [0, 1, 0, 0], sizes = [2, 8, 8, 1], strides = [1, 1, 1, 1]} : vector<2x10x10x1xf32> to vector<2x8x8x1xf32>
    %29 = vector.extract_strided_slice %5 {offsets = [3, 0], sizes = [1, 32], strides = [1, 1]} : vector<9x32xf32> to vector<1x32xf32>
    %30 = vector.shape_cast %29 : vector<1x32xf32> to vector<1x1x1x32xf32>
    %31 = vector.broadcast %28 : vector<2x8x8x1xf32> to vector<2x8x8x32xf32>
    %32 = vector.broadcast %30 : vector<1x1x1x32xf32> to vector<2x8x8x32xf32>
    %33 = arith.mulf %31, %32 : vector<2x8x8x32xf32>
    %34 = arith.addf %27, %33 : vector<2x8x8x32xf32>
    %35 = vector.extract_strided_slice %4 {offsets = [0, 1, 1, 0], sizes = [2, 8, 8, 1], strides = [1, 1, 1, 1]} : vector<2x10x10x1xf32> to vector<2x8x8x1xf32>
    %36 = vector.extract_strided_slice %5 {offsets = [4, 0], sizes = [1, 32], strides = [1, 1]} : vector<9x32xf32> to vector<1x32xf32>
    %37 = vector.shape_cast %36 : vector<1x32xf32> to vector<1x1x1x32xf32>
    %38 = vector.broadcast %35 : vector<2x8x8x1xf32> to vector<2x8x8x32xf32>
    %39 = vector.broadcast %37 : vector<1x1x1x32xf32> to vector<2x8x8x32xf32>
    %40 = arith.mulf %38, %39 : vector<2x8x8x32xf32>
    %41 = arith.addf %34, %40 : vector<2x8x8x32xf32>
    %42 = vector.extract_strided_slice %4 {offsets = [0, 1, 2, 0], sizes = [2, 8, 8, 1], strides = [1, 1, 1, 1]} : vector<2x10x10x1xf32> to vector<2x8x8x1xf32>
    %43 = vector.extract_strided_slice %5 {offsets = [5, 0], sizes = [1, 32], strides = [1, 1]} : vector<9x32xf32> to vector<1x32xf32>
    %44 = vector.shape_cast %43 : vector<1x32xf32> to vector<1x1x1x32xf32>
    %45 = vector.broadcast %42 : vector<2x8x8x1xf32> to vector<2x8x8x32xf32>
    %46 = vector.broadcast %44 : vector<1x1x1x32xf32> to vector<2x8x8x32xf32>
    %47 = arith.mulf %45, %46 : vector<2x8x8x32xf32>
    %48 = arith.addf %41, %47 : vector<2x8x8x32xf32>
    %49 = vector.extract_strided_slice %4 {offsets = [0, 2, 0, 0], sizes = [2, 8, 8, 1], strides = [1, 1, 1, 1]} : vector<2x10x10x1xf32> to vector<2x8x8x1xf32>
    %50 = vector.extract_strided_slice %5 {offsets = [6, 0], sizes = [1, 32], strides = [1, 1]} : vector<9x32xf32> to vector<1x32xf32>
    %51 = vector.shape_cast %50 : vector<1x32xf32> to vector<1x1x1x32xf32>
    %52 = vector.broadcast %49 : vector<2x8x8x1xf32> to vector<2x8x8x32xf32>
    %53 = vector.broadcast %51 : vector<1x1x1x32xf32> to vector<2x8x8x32xf32>
    %54 = arith.mulf %52, %53 : vector<2x8x8x32xf32>
    %55 = arith.addf %48, %54 : vector<2x8x8x32xf32>
    %56 = vector.extract_strided_slice %4 {offsets = [0, 2, 1, 0], sizes = [2, 8, 8, 1], strides = [1, 1, 1, 1]} : vector<2x10x10x1xf32> to vector<2x8x8x1xf32>
    %57 = vector.extract_strided_slice %5 {offsets = [7, 0], sizes = [1, 32], strides = [1, 1]} : vector<9x32xf32> to vector<1x32xf32>
    %58 = vector.shape_cast %57 : vector<1x32xf32> to vector<1x1x1x32xf32>
    %59 = vector.broadcast %56 : vector<2x8x8x1xf32> to vector<2x8x8x32xf32>
    %60 = vector.broadcast %58 : vector<1x1x1x32xf32> to vector<2x8x8x32xf32>
    %61 = arith.mulf %59, %60 : vector<2x8x8x32xf32>
    %62 = arith.addf %55, %61 : vector<2x8x8x32xf32>
    %63 = vector.extract_strided_slice %4 {offsets = [0, 2, 2, 0], sizes = [2, 8, 8, 1], strides = [1, 1, 1, 1]} : vector<2x10x10x1xf32> to vector<2x8x8x1xf32>
    %64 = vector.extract_strided_slice %5 {offsets = [8, 0], sizes = [1, 32], strides = [1, 1]} : vector<9x32xf32> to vector<1x32xf32>
    %65 = vector.shape_cast %64 : vector<1x32xf32> to vector<1x1x1x32xf32>
    %66 = vector.broadcast %63 : vector<2x8x8x1xf32> to vector<2x8x8x32xf32>
    %67 = vector.broadcast %65 : vector<1x1x1x32xf32> to vector<2x8x8x32xf32>
    %68 = arith.mulf %66, %67 : vector<2x8x8x32xf32>
    %69 = arith.addf %62, %68 : vector<2x8x8x32xf32>
    %c0_7 = arith.constant 0 : index
    %c0_8 = arith.constant 0 : index
    %70 = vector.load %arg3[%c0_7, %c0_8] : memref<1x32xf32, #tpu.memory_space<vmem>>, vector<1x32xf32>
    %71 = vector.shape_cast %70 : vector<1x32xf32> to vector<1x1x1x32xf32>
    %72 = vector.broadcast %71 : vector<1x1x1x32xf32> to vector<2x8x8x32xf32>
    %73 = arith.addf %69, %72 : vector<2x8x8x32xf32>
    %cst_9 = arith.constant 0.000000e+00 : f32
    %74 = vector.broadcast %cst_9 : f32 to vector<2x8x8x32xf32>
    %75 = arith.maximumf %73, %74 : vector<2x8x8x32xf32>
    %cst_10 = arith.constant 0.000000e+00 : f32
    %76 = vector.broadcast %cst_10 : f32 to vector<2x1x8x32xf32>
    %77 = tpu.concatenate %76, %75, %76 in 1 : vector<2x1x8x32xf32>, vector<2x8x8x32xf32>, vector<2x1x8x32xf32> -> vector<2x10x8x32xf32>
    %cst_11 = arith.constant 0.000000e+00 : f32
    %78 = vector.broadcast %cst_11 : f32 to vector<2x10x1x32xf32>
    %79 = tpu.concatenate %78, %77, %78 in 2 : vector<2x10x1x32xf32>, vector<2x10x8x32xf32>, vector<2x10x1x32xf32> -> vector<2x10x10x32xf32>
    %80 = vector.extract_strided_slice %79 {offsets = [0, 0, 0, 0], sizes = [2, 8, 8, 32], strides = [1, 1, 1, 1]} : vector<2x10x10x32xf32> to vector<2x8x8x32xf32>
    %81 = vector.shape_cast %80 : vector<2x8x8x32xf32> to vector<128x32xf32>
    %82 = vector.extract_strided_slice %79 {offsets = [0, 0, 1, 0], sizes = [2, 8, 8, 32], strides = [1, 1, 1, 1]} : vector<2x10x10x32xf32> to vector<2x8x8x32xf32>
    %83 = vector.shape_cast %82 : vector<2x8x8x32xf32> to vector<128x32xf32>
    %84 = vector.extract_strided_slice %79 {offsets = [0, 0, 2, 0], sizes = [2, 8, 8, 32], strides = [1, 1, 1, 1]} : vector<2x10x10x32xf32> to vector<2x8x8x32xf32>
    %85 = vector.shape_cast %84 : vector<2x8x8x32xf32> to vector<128x32xf32>
    %86 = vector.extract_strided_slice %79 {offsets = [0, 1, 0, 0], sizes = [2, 8, 8, 32], strides = [1, 1, 1, 1]} : vector<2x10x10x32xf32> to vector<2x8x8x32xf32>
    %87 = vector.shape_cast %86 : vector<2x8x8x32xf32> to vector<128x32xf32>
    %88 = vector.extract_strided_slice %79 {offsets = [0, 1, 1, 0], sizes = [2, 8, 8, 32], strides = [1, 1, 1, 1]} : vector<2x10x10x32xf32> to vector<2x8x8x32xf32>
    %89 = vector.shape_cast %88 : vector<2x8x8x32xf32> to vector<128x32xf32>
    %90 = vector.extract_strided_slice %79 {offsets = [0, 1, 2, 0], sizes = [2, 8, 8, 32], strides = [1, 1, 1, 1]} : vector<2x10x10x32xf32> to vector<2x8x8x32xf32>
    %91 = vector.shape_cast %90 : vector<2x8x8x32xf32> to vector<128x32xf32>
    %92 = vector.extract_strided_slice %79 {offsets = [0, 2, 0, 0], sizes = [2, 8, 8, 32], strides = [1, 1, 1, 1]} : vector<2x10x10x32xf32> to vector<2x8x8x32xf32>
    %93 = vector.shape_cast %92 : vector<2x8x8x32xf32> to vector<128x32xf32>
    %94 = vector.extract_strided_slice %79 {offsets = [0, 2, 1, 0], sizes = [2, 8, 8, 32], strides = [1, 1, 1, 1]} : vector<2x10x10x32xf32> to vector<2x8x8x32xf32>
    %95 = vector.shape_cast %94 : vector<2x8x8x32xf32> to vector<128x32xf32>
    %96 = vector.extract_strided_slice %79 {offsets = [0, 2, 2, 0], sizes = [2, 8, 8, 32], strides = [1, 1, 1, 1]} : vector<2x10x10x32xf32> to vector<2x8x8x32xf32>
    %97 = vector.shape_cast %96 : vector<2x8x8x32xf32> to vector<128x32xf32>
    %98 = tpu.concatenate %81, %83, %85, %87, %89, %91, %93, %95, %97 in 1 : vector<128x32xf32>, vector<128x32xf32>, vector<128x32xf32>, vector<128x32xf32>, vector<128x32xf32>, vector<128x32xf32>, vector<128x32xf32>, vector<128x32xf32>, vector<128x32xf32> -> vector<128x288xf32>
    %99 = arith.truncf %98 : vector<128x288xf32> to vector<128x288xbf16>
    %c0_12 = arith.constant 0 : index
    %c0_13 = arith.constant 0 : index
    %100 = vector.load %arg4[%c0_12, %c0_13] : memref<288x128xbf16, #tpu.memory_space<vmem>>, vector<288x128xbf16>
    %cst_14 = arith.constant dense<0.000000e+00> : vector<128x128xf32>
    %101 = tpu.matmul %99, %100, %cst_14 {dimension_numbers = #tpu.dot_dimension_numbers<[1], [0], [0], [1], [0, 0, 1, 1], [], []>} : vector<128x288xbf16>, vector<288x128xbf16>, vector<128x128xf32> -> vector<128x128xf32>
    %c0_15 = arith.constant 0 : index
    %c0_16 = arith.constant 0 : index
    %102 = vector.load %arg5[%c0_15, %c0_16] : memref<1x128xf32, #tpu.memory_space<vmem>>, vector<1x128xf32>
    %103 = vector.broadcast %102 : vector<1x128xf32> to vector<128x128xf32>
    %104 = arith.addf %101, %103 : vector<128x128xf32>
    %cst_17 = arith.constant 0.000000e+00 : f32
    %105 = vector.broadcast %cst_17 : f32 to vector<128x128xf32>
    %106 = arith.maximumf %104, %105 : vector<128x128xf32>
    %107 = vector.shape_cast %106 : vector<128x128xf32> to vector<2x64x128xf32>
    %108 = vector.extract_strided_slice %107 {offsets = [0, 0, 0], sizes = [2, 1, 128], strides = [1, 1, 1]} : vector<2x64x128xf32> to vector<2x1x128xf32>
    %109 = vector.shape_cast %108 : vector<2x1x128xf32> to vector<2x128xf32>
    %c0_18 = arith.constant 0 : index
    %c0_19 = arith.constant 0 : index
    %110 = vector.load %arg11[%c0_18, %c0_19] : memref<2x8192xf32, #tpu.memory_space<vmem>>, vector<2x128xf32>
    tpu.vector_store %arg11[%c0_18, %c0_19], %109 {strides = array<i32>} : memref<2x8192xf32, #tpu.memory_space<vmem>>, vector<2x128xf32>,
    %111 = vector.extract_strided_slice %107 {offsets = [0, 1, 0], sizes = [2, 1, 128], strides = [1, 1, 1]} : vector<2x64x128xf32> to vector<2x1x128xf32>
    %112 = vector.shape_cast %111 : vector<2x1x128xf32> to vector<2x128xf32>
    %c0_20 = arith.constant 0 : index
    %c128 = arith.constant 128 : index
    %113 = vector.load %arg11[%c0_20, %c128] : memref<2x8192xf32, #tpu.memory_space<vmem>>, vector<2x128xf32>
    tpu.vector_store %arg11[%c0_20, %c128], %112 {strides = array<i32>} : memref<2x8192xf32, #tpu.memory_space<vmem>>, vector<2x128xf32>,
    %114 = vector.extract_strided_slice %107 {offsets = [0, 2, 0], sizes = [2, 1, 128], strides = [1, 1, 1]} : vector<2x64x128xf32> to vector<2x1x128xf32>
    %115 = vector.shape_cast %114 : vector<2x1x128xf32> to vector<2x128xf32>
    %c0_21 = arith.constant 0 : index
    %c256 = arith.constant 256 : index
    %116 = vector.load %arg11[%c0_21, %c256] : memref<2x8192xf32, #tpu.memory_space<vmem>>, vector<2x128xf32>
    tpu.vector_store %arg11[%c0_21, %c256], %115 {strides = array<i32>} : memref<2x8192xf32, #tpu.memory_space<vmem>>, vector<2x128xf32>,
    %117 = vector.extract_strided_slice %107 {offsets = [0, 3, 0], sizes = [2, 1, 128], strides = [1, 1, 1]} : vector<2x64x128xf32> to vector<2x1x128xf32>
    %118 = vector.shape_cast %117 : vector<2x1x128xf32> to vector<2x128xf32>
    %c0_22 = arith.constant 0 : index
    %c384 = arith.constant 384 : index
    %119 = vector.load %arg11[%c0_22, %c384] : memref<2x8192xf32, #tpu.memory_space<vmem>>, vector<2x128xf32>
    tpu.vector_store %arg11[%c0_22, %c384], %118 {strides = array<i32>} : memref<2x8192xf32, #tpu.memory_space<vmem>>, vector<2x128xf32>,
    %120 = vector.extract_strided_slice %107 {offsets = [0, 4, 0], sizes = [2, 1, 128], strides = [1, 1, 1]} : vector<2x64x128xf32> to vector<2x1x128xf32>
    %121 = vector.shape_cast %120 : vector<2x1x128xf32> to vector<2x128xf32>
    %c0_23 = arith.constant 0 : index
    %c512 = arith.constant 512 : index
    %122 = vector.load %arg11[%c0_23, %c512] : memref<2x8192xf32, #tpu.memory_space<vmem>>, vector<2x128xf32>
    tpu.vector_store %arg11[%c0_23, %c512], %121 {strides = array<i32>} : memref<2x8192xf32, #tpu.memory_space<vmem>>, vector<2x128xf32>,
    %123 = vector.extract_strided_slice %107 {offsets = [0, 5, 0], sizes = [2, 1, 128], strides = [1, 1, 1]} : vector<2x64x128xf32> to vector<2x1x128xf32>
    %124 = vector.shape_cast %123 : vector<2x1x128xf32> to vector<2x128xf32>
    %c0_24 = arith.constant 0 : index
    %c640 = arith.constant 640 : index
    %125 = vector.load %arg11[%c0_24, %c640] : memref<2x8192xf32, #tpu.memory_space<vmem>>, vector<2x128xf32>
    tpu.vector_store %arg11[%c0_24, %c640], %124 {strides = array<i32>} : memref<2x8192xf32, #tpu.memory_space<vmem>>, vector<2x128xf32>,
    %126 = vector.extract_strided_slice %107 {offsets = [0, 6, 0], sizes = [2, 1, 128], strides = [1, 1, 1]} : vector<2x64x128xf32> to vector<2x1x128xf32>
    %127 = vector.shape_cast %126 : vector<2x1x128xf32> to vector<2x128xf32>
    %c0_25 = arith.constant 0 : index
    %c768 = arith.constant 768 : index
    %128 = vector.load %arg11[%c0_25, %c768] : memref<2x8192xf32, #tpu.memory_space<vmem>>, vector<2x128xf32>
    tpu.vector_store %arg11[%c0_25, %c768], %127 {strides = array<i32>} : memref<2x8192xf32, #tpu.memory_space<vmem>>, vector<2x128xf32>,
    %129 = vector.extract_strided_slice %107 {offsets = [0, 7, 0], sizes = [2, 1, 128], strides = [1, 1, 1]} : vector<2x64x128xf32> to vector<2x1x128xf32>
    %130 = vector.shape_cast %129 : vector<2x1x128xf32> to vector<2x128xf32>
    %c0_26 = arith.constant 0 : index
    %c896 = arith.constant 896 : index
    %131 = vector.load %arg11[%c0_26, %c896] : memref<2x8192xf32, #tpu.memory_space<vmem>>, vector<2x128xf32>
    tpu.vector_store %arg11[%c0_26, %c896], %130 {strides = array<i32>} : memref<2x8192xf32, #tpu.memory_space<vmem>>, vector<2x128xf32>,
    %132 = vector.extract_strided_slice %107 {offsets = [0, 8, 0], sizes = [2, 1, 128], strides = [1, 1, 1]} : vector<2x64x128xf32> to vector<2x1x128xf32>
    %133 = vector.shape_cast %132 : vector<2x1x128xf32> to vector<2x128xf32>
    %c0_27 = arith.constant 0 : index
    %c1024 = arith.constant 1024 : index
    %134 = vector.load %arg11[%c0_27, %c1024] : memref<2x8192xf32, #tpu.memory_space<vmem>>, vector<2x128xf32>
    tpu.vector_store %arg11[%c0_27, %c1024], %133 {strides = array<i32>} : memref<2x8192xf32, #tpu.memory_space<vmem>>, vector<2x128xf32>,
    %135 = vector.extract_strided_slice %107 {offsets = [0, 9, 0], sizes = [2, 1, 128], strides = [1, 1, 1]} : vector<2x64x128xf32> to vector<2x1x128xf32>
    %136 = vector.shape_cast %135 : vector<2x1x128xf32> to vector<2x128xf32>
    %c0_28 = arith.constant 0 : index
    %c1152 = arith.constant 1152 : index
    %137 = vector.load %arg11[%c0_28, %c1152] : memref<2x8192xf32, #tpu.memory_space<vmem>>, vector<2x128xf32>
    tpu.vector_store %arg11[%c0_28, %c1152], %136 {strides = array<i32>} : memref<2x8192xf32, #tpu.memory_space<vmem>>, vector<2x128xf32>,
    %138 = vector.extract_strided_slice %107 {offsets = [0, 10, 0], sizes = [2, 1, 128], strides = [1, 1, 1]} : vector<2x64x128xf32> to vector<2x1x128xf32>
    %139 = vector.shape_cast %138 : vector<2x1x128xf32> to vector<2x128xf32>
    %c0_29 = arith.constant 0 : index
    %c1280 = arith.constant 1280 : index
    %140 = vector.load %arg11[%c0_29, %c1280] : memref<2x8192xf32, #tpu.memory_space<vmem>>, vector<2x128xf32>
    tpu.vector_store %arg11[%c0_29, %c1280], %139 {strides = array<i32>} : memref<2x8192xf32, #tpu.memory_space<vmem>>, vector<2x128xf32>,
    %141 = vector.extract_strided_slice %107 {offsets = [0, 11, 0], sizes = [2, 1, 128], strides = [1, 1, 1]} : vector<2x64x128xf32> to vector<2x1x128xf32>
    %142 = vector.shape_cast %141 : vector<2x1x128xf32> to vector<2x128xf32>
    %c0_30 = arith.constant 0 : index
    %c1408 = arith.constant 1408 : index
    %143 = vector.load %arg11[%c0_30, %c1408] : memref<2x8192xf32, #tpu.memory_space<vmem>>, vector<2x128xf32>
    tpu.vector_store %arg11[%c0_30, %c1408], %142 {strides = array<i32>} : memref<2x8192xf32, #tpu.memory_space<vmem>>, vector<2x128xf32>,
    %144 = vector.extract_strided_slice %107 {offsets = [0, 12, 0], sizes = [2, 1, 128], strides = [1, 1, 1]} : vector<2x64x128xf32> to vector<2x1x128xf32>
    %145 = vector.shape_cast %144 : vector<2x1x128xf32> to vector<2x128xf32>
    %c0_31 = arith.constant 0 : index
    %c1536 = arith.constant 1536 : index
    %146 = vector.load %arg11[%c0_31, %c1536] : memref<2x8192xf32, #tpu.memory_space<vmem>>, vector<2x128xf32>
    tpu.vector_store %arg11[%c0_31, %c1536], %145 {strides = array<i32>} : memref<2x8192xf32, #tpu.memory_space<vmem>>, vector<2x128xf32>,
    %147 = vector.extract_strided_slice %107 {offsets = [0, 13, 0], sizes = [2, 1, 128], strides = [1, 1, 1]} : vector<2x64x128xf32> to vector<2x1x128xf32>
    %148 = vector.shape_cast %147 : vector<2x1x128xf32> to vector<2x128xf32>
    %c0_32 = arith.constant 0 : index
    %c1664 = arith.constant 1664 : index
    %149 = vector.load %arg11[%c0_32, %c1664] : memref<2x8192xf32, #tpu.memory_space<vmem>>, vector<2x128xf32>
    tpu.vector_store %arg11[%c0_32, %c1664], %148 {strides = array<i32>} : memref<2x8192xf32, #tpu.memory_space<vmem>>, vector<2x128xf32>,
    %150 = vector.extract_strided_slice %107 {offsets = [0, 14, 0], sizes = [2, 1, 128], strides = [1, 1, 1]} : vector<2x64x128xf32> to vector<2x1x128xf32>
    %151 = vector.shape_cast %150 : vector<2x1x128xf32> to vector<2x128xf32>
    %c0_33 = arith.constant 0 : index
    %c1792 = arith.constant 1792 : index
    %152 = vector.load %arg11[%c0_33, %c1792] : memref<2x8192xf32, #tpu.memory_space<vmem>>, vector<2x128xf32>
    tpu.vector_store %arg11[%c0_33, %c1792], %151 {strides = array<i32>} : memref<2x8192xf32, #tpu.memory_space<vmem>>, vector<2x128xf32>,
    %153 = vector.extract_strided_slice %107 {offsets = [0, 15, 0], sizes = [2, 1, 128], strides = [1, 1, 1]} : vector<2x64x128xf32> to vector<2x1x128xf32>
    %154 = vector.shape_cast %153 : vector<2x1x128xf32> to vector<2x128xf32>
    %c0_34 = arith.constant 0 : index
    %c1920 = arith.constant 1920 : index
    %155 = vector.load %arg11[%c0_34, %c1920] : memref<2x8192xf32, #tpu.memory_space<vmem>>, vector<2x128xf32>
    tpu.vector_store %arg11[%c0_34, %c1920], %154 {strides = array<i32>} : memref<2x8192xf32, #tpu.memory_space<vmem>>, vector<2x128xf32>,
    %156 = vector.extract_strided_slice %107 {offsets = [0, 16, 0], sizes = [2, 1, 128], strides = [1, 1, 1]} : vector<2x64x128xf32> to vector<2x1x128xf32>
    %157 = vector.shape_cast %156 : vector<2x1x128xf32> to vector<2x128xf32>
    %c0_35 = arith.constant 0 : index
    %c2048 = arith.constant 2048 : index
    %158 = vector.load %arg11[%c0_35, %c2048] : memref<2x8192xf32, #tpu.memory_space<vmem>>, vector<2x128xf32>
    tpu.vector_store %arg11[%c0_35, %c2048], %157 {strides = array<i32>} : memref<2x8192xf32, #tpu.memory_space<vmem>>, vector<2x128xf32>,
    %159 = vector.extract_strided_slice %107 {offsets = [0, 17, 0], sizes = [2, 1, 128], strides = [1, 1, 1]} : vector<2x64x128xf32> to vector<2x1x128xf32>
    %160 = vector.shape_cast %159 : vector<2x1x128xf32> to vector<2x128xf32>
    %c0_36 = arith.constant 0 : index
    %c2176 = arith.constant 2176 : index
    %161 = vector.load %arg11[%c0_36, %c2176] : memref<2x8192xf32, #tpu.memory_space<vmem>>, vector<2x128xf32>
    tpu.vector_store %arg11[%c0_36, %c2176], %160 {strides = array<i32>} : memref<2x8192xf32, #tpu.memory_space<vmem>>, vector<2x128xf32>,
    %162 = vector.extract_strided_slice %107 {offsets = [0, 18, 0], sizes = [2, 1, 128], strides = [1, 1, 1]} : vector<2x64x128xf32> to vector<2x1x128xf32>
    %163 = vector.shape_cast %162 : vector<2x1x128xf32> to vector<2x128xf32>
    %c0_37 = arith.constant 0 : index
    %c2304 = arith.constant 2304 : index
    %164 = vector.load %arg11[%c0_37, %c2304] : memref<2x8192xf32, #tpu.memory_space<vmem>>, vector<2x128xf32>
    tpu.vector_store %arg11[%c0_37, %c2304], %163 {strides = array<i32>} : memref<2x8192xf32, #tpu.memory_space<vmem>>, vector<2x128xf32>,
    %165 = vector.extract_strided_slice %107 {offsets = [0, 19, 0], sizes = [2, 1, 128], strides = [1, 1, 1]} : vector<2x64x128xf32> to vector<2x1x128xf32>
    %166 = vector.shape_cast %165 : vector<2x1x128xf32> to vector<2x128xf32>
    %c0_38 = arith.constant 0 : index
    %c2432 = arith.constant 2432 : index
    %167 = vector.load %arg11[%c0_38, %c2432] : memref<2x8192xf32, #tpu.memory_space<vmem>>, vector<2x128xf32>
    tpu.vector_store %arg11[%c0_38, %c2432], %166 {strides = array<i32>} : memref<2x8192xf32, #tpu.memory_space<vmem>>, vector<2x128xf32>,
    %168 = vector.extract_strided_slice %107 {offsets = [0, 20, 0], sizes = [2, 1, 128], strides = [1, 1, 1]} : vector<2x64x128xf32> to vector<2x1x128xf32>
    %169 = vector.shape_cast %168 : vector<2x1x128xf32> to vector<2x128xf32>
    %c0_39 = arith.constant 0 : index
    %c2560 = arith.constant 2560 : index
    %170 = vector.load %arg11[%c0_39, %c2560] : memref<2x8192xf32, #tpu.memory_space<vmem>>, vector<2x128xf32>
    tpu.vector_store %arg11[%c0_39, %c2560], %169 {strides = array<i32>} : memref<2x8192xf32, #tpu.memory_space<vmem>>, vector<2x128xf32>,
    %171 = vector.extract_strided_slice %107 {offsets = [0, 21, 0], sizes = [2, 1, 128], strides = [1, 1, 1]} : vector<2x64x128xf32> to vector<2x1x128xf32>
    %172 = vector.shape_cast %171 : vector<2x1x128xf32> to vector<2x128xf32>
    %c0_40 = arith.constant 0 : index
    %c2688 = arith.constant 2688 : index
    %173 = vector.load %arg11[%c0_40, %c2688] : memref<2x8192xf32, #tpu.memory_space<vmem>>, vector<2x128xf32>
    tpu.vector_store %arg11[%c0_40, %c2688], %172 {strides = array<i32>} : memref<2x8192xf32, #tpu.memory_space<vmem>>, vector<2x128xf32>,
    %174 = vector.extract_strided_slice %107 {offsets = [0, 22, 0], sizes = [2, 1, 128], strides = [1, 1, 1]} : vector<2x64x128xf32> to vector<2x1x128xf32>
    %175 = vector.shape_cast %174 : vector<2x1x128xf32> to vector<2x128xf32>
    %c0_41 = arith.constant 0 : index
    %c2816 = arith.constant 2816 : index
    %176 = vector.load %arg11[%c0_41, %c2816] : memref<2x8192xf32, #tpu.memory_space<vmem>>, vector<2x128xf32>
    tpu.vector_store %arg11[%c0_41, %c2816], %175 {strides = array<i32>} : memref<2x8192xf32, #tpu.memory_space<vmem>>, vector<2x128xf32>,
    %177 = vector.extract_strided_slice %107 {offsets = [0, 23, 0], sizes = [2, 1, 128], strides = [1, 1, 1]} : vector<2x64x128xf32> to vector<2x1x128xf32>
    %178 = vector.shape_cast %177 : vector<2x1x128xf32> to vector<2x128xf32>
    %c0_42 = arith.constant 0 : index
    %c2944 = arith.constant 2944 : index
    %179 = vector.load %arg11[%c0_42, %c2944] : memref<2x8192xf32, #tpu.memory_space<vmem>>, vector<2x128xf32>
    tpu.vector_store %arg11[%c0_42, %c2944], %178 {strides = array<i32>} : memref<2x8192xf32, #tpu.memory_space<vmem>>, vector<2x128xf32>,
    %180 = vector.extract_strided_slice %107 {offsets = [0, 24, 0], sizes = [2, 1, 128], strides = [1, 1, 1]} : vector<2x64x128xf32> to vector<2x1x128xf32>
    %181 = vector.shape_cast %180 : vector<2x1x128xf32> to vector<2x128xf32>
    %c0_43 = arith.constant 0 : index
    %c3072 = arith.constant 3072 : index
    %182 = vector.load %arg11[%c0_43, %c3072] : memref<2x8192xf32, #tpu.memory_space<vmem>>, vector<2x128xf32>
    tpu.vector_store %arg11[%c0_43, %c3072], %181 {strides = array<i32>} : memref<2x8192xf32, #tpu.memory_space<vmem>>, vector<2x128xf32>,
    %183 = vector.extract_strided_slice %107 {offsets = [0, 25, 0], sizes = [2, 1, 128], strides = [1, 1, 1]} : vector<2x64x128xf32> to vector<2x1x128xf32>
    %184 = vector.shape_cast %183 : vector<2x1x128xf32> to vector<2x128xf32>
    %c0_44 = arith.constant 0 : index
    %c3200 = arith.constant 3200 : index
    %185 = vector.load %arg11[%c0_44, %c3200] : memref<2x8192xf32, #tpu.memory_space<vmem>>, vector<2x128xf32>
    tpu.vector_store %arg11[%c0_44, %c3200], %184 {strides = array<i32>} : memref<2x8192xf32, #tpu.memory_space<vmem>>, vector<2x128xf32>,
    %186 = vector.extract_strided_slice %107 {offsets = [0, 26, 0], sizes = [2, 1, 128], strides = [1, 1, 1]} : vector<2x64x128xf32> to vector<2x1x128xf32>
    %187 = vector.shape_cast %186 : vector<2x1x128xf32> to vector<2x128xf32>
    %c0_45 = arith.constant 0 : index
    %c3328 = arith.constant 3328 : index
    %188 = vector.load %arg11[%c0_45, %c3328] : memref<2x8192xf32, #tpu.memory_space<vmem>>, vector<2x128xf32>
    tpu.vector_store %arg11[%c0_45, %c3328], %187 {strides = array<i32>} : memref<2x8192xf32, #tpu.memory_space<vmem>>, vector<2x128xf32>,
    %189 = vector.extract_strided_slice %107 {offsets = [0, 27, 0], sizes = [2, 1, 128], strides = [1, 1, 1]} : vector<2x64x128xf32> to vector<2x1x128xf32>
    %190 = vector.shape_cast %189 : vector<2x1x128xf32> to vector<2x128xf32>
    %c0_46 = arith.constant 0 : index
    %c3456 = arith.constant 3456 : index
    %191 = vector.load %arg11[%c0_46, %c3456] : memref<2x8192xf32, #tpu.memory_space<vmem>>, vector<2x128xf32>
    tpu.vector_store %arg11[%c0_46, %c3456], %190 {strides = array<i32>} : memref<2x8192xf32, #tpu.memory_space<vmem>>, vector<2x128xf32>,
    %192 = vector.extract_strided_slice %107 {offsets = [0, 28, 0], sizes = [2, 1, 128], strides = [1, 1, 1]} : vector<2x64x128xf32> to vector<2x1x128xf32>
    %193 = vector.shape_cast %192 : vector<2x1x128xf32> to vector<2x128xf32>
    %c0_47 = arith.constant 0 : index
    %c3584 = arith.constant 3584 : index
    %194 = vector.load %arg11[%c0_47, %c3584] : memref<2x8192xf32, #tpu.memory_space<vmem>>, vector<2x128xf32>
    tpu.vector_store %arg11[%c0_47, %c3584], %193 {strides = array<i32>} : memref<2x8192xf32, #tpu.memory_space<vmem>>, vector<2x128xf32>,
    %195 = vector.extract_strided_slice %107 {offsets = [0, 29, 0], sizes = [2, 1, 128], strides = [1, 1, 1]} : vector<2x64x128xf32> to vector<2x1x128xf32>
    %196 = vector.shape_cast %195 : vector<2x1x128xf32> to vector<2x128xf32>
    %c0_48 = arith.constant 0 : index
    %c3712 = arith.constant 3712 : index
    %197 = vector.load %arg11[%c0_48, %c3712] : memref<2x8192xf32, #tpu.memory_space<vmem>>, vector<2x128xf32>
    tpu.vector_store %arg11[%c0_48, %c3712], %196 {strides = array<i32>} : memref<2x8192xf32, #tpu.memory_space<vmem>>, vector<2x128xf32>,
    %198 = vector.extract_strided_slice %107 {offsets = [0, 30, 0], sizes = [2, 1, 128], strides = [1, 1, 1]} : vector<2x64x128xf32> to vector<2x1x128xf32>
    %199 = vector.shape_cast %198 : vector<2x1x128xf32> to vector<2x128xf32>
    %c0_49 = arith.constant 0 : index
    %c3840 = arith.constant 3840 : index
    %200 = vector.load %arg11[%c0_49, %c3840] : memref<2x8192xf32, #tpu.memory_space<vmem>>, vector<2x128xf32>
    tpu.vector_store %arg11[%c0_49, %c3840], %199 {strides = array<i32>} : memref<2x8192xf32, #tpu.memory_space<vmem>>, vector<2x128xf32>,
    %201 = vector.extract_strided_slice %107 {offsets = [0, 31, 0], sizes = [2, 1, 128], strides = [1, 1, 1]} : vector<2x64x128xf32> to vector<2x1x128xf32>
    %202 = vector.shape_cast %201 : vector<2x1x128xf32> to vector<2x128xf32>
    %c0_50 = arith.constant 0 : index
    %c3968 = arith.constant 3968 : index
    %203 = vector.load %arg11[%c0_50, %c3968] : memref<2x8192xf32, #tpu.memory_space<vmem>>, vector<2x128xf32>
    tpu.vector_store %arg11[%c0_50, %c3968], %202 {strides = array<i32>} : memref<2x8192xf32, #tpu.memory_space<vmem>>, vector<2x128xf32>,
    %204 = vector.extract_strided_slice %107 {offsets = [0, 32, 0], sizes = [2, 1, 128], strides = [1, 1, 1]} : vector<2x64x128xf32> to vector<2x1x128xf32>
    %205 = vector.shape_cast %204 : vector<2x1x128xf32> to vector<2x128xf32>
    %c0_51 = arith.constant 0 : index
    %c4096 = arith.constant 4096 : index
    %206 = vector.load %arg11[%c0_51, %c4096] : memref<2x8192xf32, #tpu.memory_space<vmem>>, vector<2x128xf32>
    tpu.vector_store %arg11[%c0_51, %c4096], %205 {strides = array<i32>} : memref<2x8192xf32, #tpu.memory_space<vmem>>, vector<2x128xf32>,
    %207 = vector.extract_strided_slice %107 {offsets = [0, 33, 0], sizes = [2, 1, 128], strides = [1, 1, 1]} : vector<2x64x128xf32> to vector<2x1x128xf32>
    %208 = vector.shape_cast %207 : vector<2x1x128xf32> to vector<2x128xf32>
    %c0_52 = arith.constant 0 : index
    %c4224 = arith.constant 4224 : index
    %209 = vector.load %arg11[%c0_52, %c4224] : memref<2x8192xf32, #tpu.memory_space<vmem>>, vector<2x128xf32>
    tpu.vector_store %arg11[%c0_52, %c4224], %208 {strides = array<i32>} : memref<2x8192xf32, #tpu.memory_space<vmem>>, vector<2x128xf32>,
    %210 = vector.extract_strided_slice %107 {offsets = [0, 34, 0], sizes = [2, 1, 128], strides = [1, 1, 1]} : vector<2x64x128xf32> to vector<2x1x128xf32>
    %211 = vector.shape_cast %210 : vector<2x1x128xf32> to vector<2x128xf32>
    %c0_53 = arith.constant 0 : index
    %c4352 = arith.constant 4352 : index
    %212 = vector.load %arg11[%c0_53, %c4352] : memref<2x8192xf32, #tpu.memory_space<vmem>>, vector<2x128xf32>
    tpu.vector_store %arg11[%c0_53, %c4352], %211 {strides = array<i32>} : memref<2x8192xf32, #tpu.memory_space<vmem>>, vector<2x128xf32>,
    %213 = vector.extract_strided_slice %107 {offsets = [0, 35, 0], sizes = [2, 1, 128], strides = [1, 1, 1]} : vector<2x64x128xf32> to vector<2x1x128xf32>
    %214 = vector.shape_cast %213 : vector<2x1x128xf32> to vector<2x128xf32>
    %c0_54 = arith.constant 0 : index
    %c4480 = arith.constant 4480 : index
    %215 = vector.load %arg11[%c0_54, %c4480] : memref<2x8192xf32, #tpu.memory_space<vmem>>, vector<2x128xf32>
    tpu.vector_store %arg11[%c0_54, %c4480], %214 {strides = array<i32>} : memref<2x8192xf32, #tpu.memory_space<vmem>>, vector<2x128xf32>,
    %216 = vector.extract_strided_slice %107 {offsets = [0, 36, 0], sizes = [2, 1, 128], strides = [1, 1, 1]} : vector<2x64x128xf32> to vector<2x1x128xf32>
    %217 = vector.shape_cast %216 : vector<2x1x128xf32> to vector<2x128xf32>
    %c0_55 = arith.constant 0 : index
    %c4608 = arith.constant 4608 : index
    %218 = vector.load %arg11[%c0_55, %c4608] : memref<2x8192xf32, #tpu.memory_space<vmem>>, vector<2x128xf32>
    tpu.vector_store %arg11[%c0_55, %c4608], %217 {strides = array<i32>} : memref<2x8192xf32, #tpu.memory_space<vmem>>, vector<2x128xf32>,
    %219 = vector.extract_strided_slice %107 {offsets = [0, 37, 0], sizes = [2, 1, 128], strides = [1, 1, 1]} : vector<2x64x128xf32> to vector<2x1x128xf32>
    %220 = vector.shape_cast %219 : vector<2x1x128xf32> to vector<2x128xf32>
    %c0_56 = arith.constant 0 : index
    %c4736 = arith.constant 4736 : index
    %221 = vector.load %arg11[%c0_56, %c4736] : memref<2x8192xf32, #tpu.memory_space<vmem>>, vector<2x128xf32>
    tpu.vector_store %arg11[%c0_56, %c4736], %220 {strides = array<i32>} : memref<2x8192xf32, #tpu.memory_space<vmem>>, vector<2x128xf32>,
    %222 = vector.extract_strided_slice %107 {offsets = [0, 38, 0], sizes = [2, 1, 128], strides = [1, 1, 1]} : vector<2x64x128xf32> to vector<2x1x128xf32>
    %223 = vector.shape_cast %222 : vector<2x1x128xf32> to vector<2x128xf32>
    %c0_57 = arith.constant 0 : index
    %c4864 = arith.constant 4864 : index
    %224 = vector.load %arg11[%c0_57, %c4864] : memref<2x8192xf32, #tpu.memory_space<vmem>>, vector<2x128xf32>
    tpu.vector_store %arg11[%c0_57, %c4864], %223 {strides = array<i32>} : memref<2x8192xf32, #tpu.memory_space<vmem>>, vector<2x128xf32>,
    %225 = vector.extract_strided_slice %107 {offsets = [0, 39, 0], sizes = [2, 1, 128], strides = [1, 1, 1]} : vector<2x64x128xf32> to vector<2x1x128xf32>
    %226 = vector.shape_cast %225 : vector<2x1x128xf32> to vector<2x128xf32>
    %c0_58 = arith.constant 0 : index
    %c4992 = arith.constant 4992 : index
    %227 = vector.load %arg11[%c0_58, %c4992] : memref<2x8192xf32, #tpu.memory_space<vmem>>, vector<2x128xf32>
    tpu.vector_store %arg11[%c0_58, %c4992], %226 {strides = array<i32>} : memref<2x8192xf32, #tpu.memory_space<vmem>>, vector<2x128xf32>,
    %228 = vector.extract_strided_slice %107 {offsets = [0, 40, 0], sizes = [2, 1, 128], strides = [1, 1, 1]} : vector<2x64x128xf32> to vector<2x1x128xf32>
    %229 = vector.shape_cast %228 : vector<2x1x128xf32> to vector<2x128xf32>
    %c0_59 = arith.constant 0 : index
    %c5120 = arith.constant 5120 : index
    %230 = vector.load %arg11[%c0_59, %c5120] : memref<2x8192xf32, #tpu.memory_space<vmem>>, vector<2x128xf32>
    tpu.vector_store %arg11[%c0_59, %c5120], %229 {strides = array<i32>} : memref<2x8192xf32, #tpu.memory_space<vmem>>, vector<2x128xf32>,
    %231 = vector.extract_strided_slice %107 {offsets = [0, 41, 0], sizes = [2, 1, 128], strides = [1, 1, 1]} : vector<2x64x128xf32> to vector<2x1x128xf32>
    %232 = vector.shape_cast %231 : vector<2x1x128xf32> to vector<2x128xf32>
    %c0_60 = arith.constant 0 : index
    %c5248 = arith.constant 5248 : index
    %233 = vector.load %arg11[%c0_60, %c5248] : memref<2x8192xf32, #tpu.memory_space<vmem>>, vector<2x128xf32>
    tpu.vector_store %arg11[%c0_60, %c5248], %232 {strides = array<i32>} : memref<2x8192xf32, #tpu.memory_space<vmem>>, vector<2x128xf32>,
    %234 = vector.extract_strided_slice %107 {offsets = [0, 42, 0], sizes = [2, 1, 128], strides = [1, 1, 1]} : vector<2x64x128xf32> to vector<2x1x128xf32>
    %235 = vector.shape_cast %234 : vector<2x1x128xf32> to vector<2x128xf32>
    %c0_61 = arith.constant 0 : index
    %c5376 = arith.constant 5376 : index
    %236 = vector.load %arg11[%c0_61, %c5376] : memref<2x8192xf32, #tpu.memory_space<vmem>>, vector<2x128xf32>
    tpu.vector_store %arg11[%c0_61, %c5376], %235 {strides = array<i32>} : memref<2x8192xf32, #tpu.memory_space<vmem>>, vector<2x128xf32>,
    %237 = vector.extract_strided_slice %107 {offsets = [0, 43, 0], sizes = [2, 1, 128], strides = [1, 1, 1]} : vector<2x64x128xf32> to vector<2x1x128xf32>
    %238 = vector.shape_cast %237 : vector<2x1x128xf32> to vector<2x128xf32>
    %c0_62 = arith.constant 0 : index
    %c5504 = arith.constant 5504 : index
    %239 = vector.load %arg11[%c0_62, %c5504] : memref<2x8192xf32, #tpu.memory_space<vmem>>, vector<2x128xf32>
    tpu.vector_store %arg11[%c0_62, %c5504], %238 {strides = array<i32>} : memref<2x8192xf32, #tpu.memory_space<vmem>>, vector<2x128xf32>,
    %240 = vector.extract_strided_slice %107 {offsets = [0, 44, 0], sizes = [2, 1, 128], strides = [1, 1, 1]} : vector<2x64x128xf32> to vector<2x1x128xf32>
    %241 = vector.shape_cast %240 : vector<2x1x128xf32> to vector<2x128xf32>
    %c0_63 = arith.constant 0 : index
    %c5632 = arith.constant 5632 : index
    %242 = vector.load %arg11[%c0_63, %c5632] : memref<2x8192xf32, #tpu.memory_space<vmem>>, vector<2x128xf32>
    tpu.vector_store %arg11[%c0_63, %c5632], %241 {strides = array<i32>} : memref<2x8192xf32, #tpu.memory_space<vmem>>, vector<2x128xf32>,
    %243 = vector.extract_strided_slice %107 {offsets = [0, 45, 0], sizes = [2, 1, 128], strides = [1, 1, 1]} : vector<2x64x128xf32> to vector<2x1x128xf32>
    %244 = vector.shape_cast %243 : vector<2x1x128xf32> to vector<2x128xf32>
    %c0_64 = arith.constant 0 : index
    %c5760 = arith.constant 5760 : index
    %245 = vector.load %arg11[%c0_64, %c5760] : memref<2x8192xf32, #tpu.memory_space<vmem>>, vector<2x128xf32>
    tpu.vector_store %arg11[%c0_64, %c5760], %244 {strides = array<i32>} : memref<2x8192xf32, #tpu.memory_space<vmem>>, vector<2x128xf32>,
    %246 = vector.extract_strided_slice %107 {offsets = [0, 46, 0], sizes = [2, 1, 128], strides = [1, 1, 1]} : vector<2x64x128xf32> to vector<2x1x128xf32>
    %247 = vector.shape_cast %246 : vector<2x1x128xf32> to vector<2x128xf32>
    %c0_65 = arith.constant 0 : index
    %c5888 = arith.constant 5888 : index
    %248 = vector.load %arg11[%c0_65, %c5888] : memref<2x8192xf32, #tpu.memory_space<vmem>>, vector<2x128xf32>
    tpu.vector_store %arg11[%c0_65, %c5888], %247 {strides = array<i32>} : memref<2x8192xf32, #tpu.memory_space<vmem>>, vector<2x128xf32>,
    %249 = vector.extract_strided_slice %107 {offsets = [0, 47, 0], sizes = [2, 1, 128], strides = [1, 1, 1]} : vector<2x64x128xf32> to vector<2x1x128xf32>
    %250 = vector.shape_cast %249 : vector<2x1x128xf32> to vector<2x128xf32>
    %c0_66 = arith.constant 0 : index
    %c6016 = arith.constant 6016 : index
    %251 = vector.load %arg11[%c0_66, %c6016] : memref<2x8192xf32, #tpu.memory_space<vmem>>, vector<2x128xf32>
    tpu.vector_store %arg11[%c0_66, %c6016], %250 {strides = array<i32>} : memref<2x8192xf32, #tpu.memory_space<vmem>>, vector<2x128xf32>,
    %252 = vector.extract_strided_slice %107 {offsets = [0, 48, 0], sizes = [2, 1, 128], strides = [1, 1, 1]} : vector<2x64x128xf32> to vector<2x1x128xf32>
    %253 = vector.shape_cast %252 : vector<2x1x128xf32> to vector<2x128xf32>
    %c0_67 = arith.constant 0 : index
    %c6144 = arith.constant 6144 : index
    %254 = vector.load %arg11[%c0_67, %c6144] : memref<2x8192xf32, #tpu.memory_space<vmem>>, vector<2x128xf32>
    tpu.vector_store %arg11[%c0_67, %c6144], %253 {strides = array<i32>} : memref<2x8192xf32, #tpu.memory_space<vmem>>, vector<2x128xf32>,
    %255 = vector.extract_strided_slice %107 {offsets = [0, 49, 0], sizes = [2, 1, 128], strides = [1, 1, 1]} : vector<2x64x128xf32> to vector<2x1x128xf32>
    %256 = vector.shape_cast %255 : vector<2x1x128xf32> to vector<2x128xf32>
    %c0_68 = arith.constant 0 : index
    %c6272 = arith.constant 6272 : index
    %257 = vector.load %arg11[%c0_68, %c6272] : memref<2x8192xf32, #tpu.memory_space<vmem>>, vector<2x128xf32>
    tpu.vector_store %arg11[%c0_68, %c6272], %256 {strides = array<i32>} : memref<2x8192xf32, #tpu.memory_space<vmem>>, vector<2x128xf32>,
    %258 = vector.extract_strided_slice %107 {offsets = [0, 50, 0], sizes = [2, 1, 128], strides = [1, 1, 1]} : vector<2x64x128xf32> to vector<2x1x128xf32>
    %259 = vector.shape_cast %258 : vector<2x1x128xf32> to vector<2x128xf32>
    %c0_69 = arith.constant 0 : index
    %c6400 = arith.constant 6400 : index
    %260 = vector.load %arg11[%c0_69, %c6400] : memref<2x8192xf32, #tpu.memory_space<vmem>>, vector<2x128xf32>
    tpu.vector_store %arg11[%c0_69, %c6400], %259 {strides = array<i32>} : memref<2x8192xf32, #tpu.memory_space<vmem>>, vector<2x128xf32>,
    %261 = vector.extract_strided_slice %107 {offsets = [0, 51, 0], sizes = [2, 1, 128], strides = [1, 1, 1]} : vector<2x64x128xf32> to vector<2x1x128xf32>
    %262 = vector.shape_cast %261 : vector<2x1x128xf32> to vector<2x128xf32>
    %c0_70 = arith.constant 0 : index
    %c6528 = arith.constant 6528 : index
    %263 = vector.load %arg11[%c0_70, %c6528] : memref<2x8192xf32, #tpu.memory_space<vmem>>, vector<2x128xf32>
    tpu.vector_store %arg11[%c0_70, %c6528], %262 {strides = array<i32>} : memref<2x8192xf32, #tpu.memory_space<vmem>>, vector<2x128xf32>,
    %264 = vector.extract_strided_slice %107 {offsets = [0, 52, 0], sizes = [2, 1, 128], strides = [1, 1, 1]} : vector<2x64x128xf32> to vector<2x1x128xf32>
    %265 = vector.shape_cast %264 : vector<2x1x128xf32> to vector<2x128xf32>
    %c0_71 = arith.constant 0 : index
    %c6656 = arith.constant 6656 : index
    %266 = vector.load %arg11[%c0_71, %c6656] : memref<2x8192xf32, #tpu.memory_space<vmem>>, vector<2x128xf32>
    tpu.vector_store %arg11[%c0_71, %c6656], %265 {strides = array<i32>} : memref<2x8192xf32, #tpu.memory_space<vmem>>, vector<2x128xf32>,
    %267 = vector.extract_strided_slice %107 {offsets = [0, 53, 0], sizes = [2, 1, 128], strides = [1, 1, 1]} : vector<2x64x128xf32> to vector<2x1x128xf32>
    %268 = vector.shape_cast %267 : vector<2x1x128xf32> to vector<2x128xf32>
    %c0_72 = arith.constant 0 : index
    %c6784 = arith.constant 6784 : index
    %269 = vector.load %arg11[%c0_72, %c6784] : memref<2x8192xf32, #tpu.memory_space<vmem>>, vector<2x128xf32>
    tpu.vector_store %arg11[%c0_72, %c6784], %268 {strides = array<i32>} : memref<2x8192xf32, #tpu.memory_space<vmem>>, vector<2x128xf32>,
    %270 = vector.extract_strided_slice %107 {offsets = [0, 54, 0], sizes = [2, 1, 128], strides = [1, 1, 1]} : vector<2x64x128xf32> to vector<2x1x128xf32>
    %271 = vector.shape_cast %270 : vector<2x1x128xf32> to vector<2x128xf32>
    %c0_73 = arith.constant 0 : index
    %c6912 = arith.constant 6912 : index
    %272 = vector.load %arg11[%c0_73, %c6912] : memref<2x8192xf32, #tpu.memory_space<vmem>>, vector<2x128xf32>
    tpu.vector_store %arg11[%c0_73, %c6912], %271 {strides = array<i32>} : memref<2x8192xf32, #tpu.memory_space<vmem>>, vector<2x128xf32>,
    %273 = vector.extract_strided_slice %107 {offsets = [0, 55, 0], sizes = [2, 1, 128], strides = [1, 1, 1]} : vector<2x64x128xf32> to vector<2x1x128xf32>
    %274 = vector.shape_cast %273 : vector<2x1x128xf32> to vector<2x128xf32>
    %c0_74 = arith.constant 0 : index
    %c7040 = arith.constant 7040 : index
    %275 = vector.load %arg11[%c0_74, %c7040] : memref<2x8192xf32, #tpu.memory_space<vmem>>, vector<2x128xf32>
    tpu.vector_store %arg11[%c0_74, %c7040], %274 {strides = array<i32>} : memref<2x8192xf32, #tpu.memory_space<vmem>>, vector<2x128xf32>,
    %276 = vector.extract_strided_slice %107 {offsets = [0, 56, 0], sizes = [2, 1, 128], strides = [1, 1, 1]} : vector<2x64x128xf32> to vector<2x1x128xf32>
    %277 = vector.shape_cast %276 : vector<2x1x128xf32> to vector<2x128xf32>
    %c0_75 = arith.constant 0 : index
    %c7168 = arith.constant 7168 : index
    %278 = vector.load %arg11[%c0_75, %c7168] : memref<2x8192xf32, #tpu.memory_space<vmem>>, vector<2x128xf32>
    tpu.vector_store %arg11[%c0_75, %c7168], %277 {strides = array<i32>} : memref<2x8192xf32, #tpu.memory_space<vmem>>, vector<2x128xf32>,
    %279 = vector.extract_strided_slice %107 {offsets = [0, 57, 0], sizes = [2, 1, 128], strides = [1, 1, 1]} : vector<2x64x128xf32> to vector<2x1x128xf32>
    %280 = vector.shape_cast %279 : vector<2x1x128xf32> to vector<2x128xf32>
    %c0_76 = arith.constant 0 : index
    %c7296 = arith.constant 7296 : index
    %281 = vector.load %arg11[%c0_76, %c7296] : memref<2x8192xf32, #tpu.memory_space<vmem>>, vector<2x128xf32>
    tpu.vector_store %arg11[%c0_76, %c7296], %280 {strides = array<i32>} : memref<2x8192xf32, #tpu.memory_space<vmem>>, vector<2x128xf32>,
    %282 = vector.extract_strided_slice %107 {offsets = [0, 58, 0], sizes = [2, 1, 128], strides = [1, 1, 1]} : vector<2x64x128xf32> to vector<2x1x128xf32>
    %283 = vector.shape_cast %282 : vector<2x1x128xf32> to vector<2x128xf32>
    %c0_77 = arith.constant 0 : index
    %c7424 = arith.constant 7424 : index
    %284 = vector.load %arg11[%c0_77, %c7424] : memref<2x8192xf32, #tpu.memory_space<vmem>>, vector<2x128xf32>
    tpu.vector_store %arg11[%c0_77, %c7424], %283 {strides = array<i32>} : memref<2x8192xf32, #tpu.memory_space<vmem>>, vector<2x128xf32>,
    %285 = vector.extract_strided_slice %107 {offsets = [0, 59, 0], sizes = [2, 1, 128], strides = [1, 1, 1]} : vector<2x64x128xf32> to vector<2x1x128xf32>
    %286 = vector.shape_cast %285 : vector<2x1x128xf32> to vector<2x128xf32>
    %c0_78 = arith.constant 0 : index
    %c7552 = arith.constant 7552 : index
    %287 = vector.load %arg11[%c0_78, %c7552] : memref<2x8192xf32, #tpu.memory_space<vmem>>, vector<2x128xf32>
    tpu.vector_store %arg11[%c0_78, %c7552], %286 {strides = array<i32>} : memref<2x8192xf32, #tpu.memory_space<vmem>>, vector<2x128xf32>,
    %288 = vector.extract_strided_slice %107 {offsets = [0, 60, 0], sizes = [2, 1, 128], strides = [1, 1, 1]} : vector<2x64x128xf32> to vector<2x1x128xf32>
    %289 = vector.shape_cast %288 : vector<2x1x128xf32> to vector<2x128xf32>
    %c0_79 = arith.constant 0 : index
    %c7680 = arith.constant 7680 : index
    %290 = vector.load %arg11[%c0_79, %c7680] : memref<2x8192xf32, #tpu.memory_space<vmem>>, vector<2x128xf32>
    tpu.vector_store %arg11[%c0_79, %c7680], %289 {strides = array<i32>} : memref<2x8192xf32, #tpu.memory_space<vmem>>, vector<2x128xf32>,
    %291 = vector.extract_strided_slice %107 {offsets = [0, 61, 0], sizes = [2, 1, 128], strides = [1, 1, 1]} : vector<2x64x128xf32> to vector<2x1x128xf32>
    %292 = vector.shape_cast %291 : vector<2x1x128xf32> to vector<2x128xf32>
    %c0_80 = arith.constant 0 : index
    %c7808 = arith.constant 7808 : index
    %293 = vector.load %arg11[%c0_80, %c7808] : memref<2x8192xf32, #tpu.memory_space<vmem>>, vector<2x128xf32>
    tpu.vector_store %arg11[%c0_80, %c7808], %292 {strides = array<i32>} : memref<2x8192xf32, #tpu.memory_space<vmem>>, vector<2x128xf32>,
    %294 = vector.extract_strided_slice %107 {offsets = [0, 62, 0], sizes = [2, 1, 128], strides = [1, 1, 1]} : vector<2x64x128xf32> to vector<2x1x128xf32>
    %295 = vector.shape_cast %294 : vector<2x1x128xf32> to vector<2x128xf32>
    %c0_81 = arith.constant 0 : index
    %c7936 = arith.constant 7936 : index
    %296 = vector.load %arg11[%c0_81, %c7936] : memref<2x8192xf32, #tpu.memory_space<vmem>>, vector<2x128xf32>
    tpu.vector_store %arg11[%c0_81, %c7936], %295 {strides = array<i32>} : memref<2x8192xf32, #tpu.memory_space<vmem>>, vector<2x128xf32>,
    %297 = vector.extract_strided_slice %107 {offsets = [0, 63, 0], sizes = [2, 1, 128], strides = [1, 1, 1]} : vector<2x64x128xf32> to vector<2x1x128xf32>
    %298 = vector.shape_cast %297 : vector<2x1x128xf32> to vector<2x128xf32>
    %c0_82 = arith.constant 0 : index
    %c8064 = arith.constant 8064 : index
    %299 = vector.load %arg11[%c0_82, %c8064] : memref<2x8192xf32, #tpu.memory_space<vmem>>, vector<2x128xf32>
    tpu.vector_store %arg11[%c0_82, %c8064], %298 {strides = array<i32>} : memref<2x8192xf32, #tpu.memory_space<vmem>>, vector<2x128xf32>,
    %c0_83 = arith.constant 0 : index
    %c0_84 = arith.constant 0 : index
    %300 = vector.load %arg11[%c0_83, %c0_84] : memref<2x8192xf32, #tpu.memory_space<vmem>>, vector<2x8192xf32>
    %301 = arith.truncf %300 : vector<2x8192xf32> to vector<2x8192xbf16>
    %c0_85 = arith.constant 0 : index
    %c0_86 = arith.constant 0 : index
    %302 = vector.load %arg6[%c0_85, %c0_86] : memref<8192x128xbf16, #tpu.memory_space<vmem>>, vector<8192x128xbf16>
    %cst_87 = arith.constant dense<0.000000e+00> : vector<2x128xf32>
    %303 = tpu.matmul %301, %302, %cst_87 {dimension_numbers = #tpu.dot_dimension_numbers<[1], [0], [0], [1], [0, 0, 1, 1], [], []>} : vector<2x8192xbf16>, vector<8192x128xbf16>, vector<2x128xf32> -> vector<2x128xf32>
    %c0_88 = arith.constant 0 : index
    %c0_89 = arith.constant 0 : index
    %304 = vector.load %arg7[%c0_88, %c0_89] : memref<1x128xf32, #tpu.memory_space<vmem>>, vector<1x128xf32>
    %305 = vector.broadcast %304 : vector<1x128xf32> to vector<2x128xf32>
    %306 = arith.addf %303, %305 : vector<2x128xf32>
    %cst_90 = arith.constant 0.000000e+00 : f32
    %307 = vector.broadcast %cst_90 : f32 to vector<2x128xf32>
    %308 = arith.maximumf %306, %307 : vector<2x128xf32>
    %c0_91 = arith.constant 0 : index
    %c0_92 = arith.constant 0 : index
    %309 = vector.load %arg8[%c0_91, %c0_92] : memref<128x4xf32, #tpu.memory_space<vmem>>, vector<128x4xf32>
    %cst_93 = arith.constant dense<0.000000e+00> : vector<2x4xf32>
    %310 = tpu.matmul %308, %309, %cst_93 {dimension_numbers = #tpu.dot_dimension_numbers<[1], [0], [0], [1], [0, 0, 1, 1], [], []>} : vector<2x128xf32>, vector<128x4xf32>, vector<2x4xf32> -> vector<2x4xf32>
    %c0_94 = arith.constant 0 : index
    %c0_95 = arith.constant 0 : index
    %311 = vector.load %arg9[%c0_94, %c0_95] : memref<1x4xf32, #tpu.memory_space<vmem>>, vector<1x4xf32>
    %312 = vector.broadcast %311 : vector<1x4xf32> to vector<2x4xf32>
    %313 = arith.addf %310, %312 : vector<2x4xf32>
    %c0_96 = arith.constant 0 : index
    %c0_97 = arith.constant 0 : index
    %314 = vector.load %arg10[%c0_96, %c0_97] : memref<2x4xf32, #tpu.memory_space<vmem>>, vector<2x4xf32>
    tpu.vector_store %arg10[%c0_96, %c0_97], %313 {strides = array<i32>} : memref<2x4xf32, #tpu.memory_space<vmem>>, vector<2x4xf32>,
    return
  }
  func.func @transform_0(%arg0: i32) -> (i32, i32, i32, i32) {
    %c0_i32 = arith.constant 0 : i32
    %c0_i32_0 = arith.constant 0 : i32
    %c0_i32_1 = arith.constant 0 : i32
    %c0_i32_2 = arith.constant 0 : i32
    return %arg0, %c0_i32, %c0_i32_0, %c0_i32_1 : i32, i32, i32, i32
  }
  func.func @transform_1(%arg0: i32) -> (i32, i32) {
    %c0_i32 = arith.constant 0 : i32
    %c0_i32_0 = arith.constant 0 : i32
    %c0_i32_1 = arith.constant 0 : i32
    return %c0_i32, %c0_i32_0 : i32, i32
  }
  func.func @transform_2(%arg0: i32) -> (i32, i32) {
    %c0_i32 = arith.constant 0 : i32
    %c0_i32_0 = arith.constant 0 : i32
    %c0_i32_1 = arith.constant 0 : i32
    return %c0_i32, %c0_i32_0 : i32, i32
  }
  func.func @transform_3(%arg0: i32) -> (i32, i32) {
    %c0_i32 = arith.constant 0 : i32
    %c0_i32_0 = arith.constant 0 : i32
    %c0_i32_1 = arith.constant 0 : i32
    return %c0_i32, %c0_i32_0 : i32, i32
  }
  func.func @transform_4(%arg0: i32) -> (i32, i32) {
    %c0_i32 = arith.constant 0 : i32
    %c0_i32_0 = arith.constant 0 : i32
    %c0_i32_1 = arith.constant 0 : i32
    return %c0_i32, %c0_i32_0 : i32, i32
  }
  func.func @transform_5(%arg0: i32) -> (i32, i32) {
    %c0_i32 = arith.constant 0 : i32
    %c0_i32_0 = arith.constant 0 : i32
    %c0_i32_1 = arith.constant 0 : i32
    return %c0_i32, %c0_i32_0 : i32, i32
  }
  func.func @transform_6(%arg0: i32) -> (i32, i32) {
    %c0_i32 = arith.constant 0 : i32
    %c0_i32_0 = arith.constant 0 : i32
    %c0_i32_1 = arith.constant 0 : i32
    return %c0_i32, %c0_i32_0 : i32, i32
  }
  func.func @transform_7(%arg0: i32) -> (i32, i32) {
    %c0_i32 = arith.constant 0 : i32
    %c0_i32_0 = arith.constant 0 : i32
    %c0_i32_1 = arith.constant 0 : i32
    return %c0_i32, %c0_i32_0 : i32, i32
  }
  func.func @transform_8(%arg0: i32) -> (i32, i32) {
    %c0_i32 = arith.constant 0 : i32
    %c0_i32_0 = arith.constant 0 : i32
    %c0_i32_1 = arith.constant 0 : i32
    return %c0_i32, %c0_i32_0 : i32, i32
  }
  func.func @transform_9(%arg0: i32) -> (i32, i32) {
    %c0_i32 = arith.constant 0 : i32
    %c0_i32_0 = arith.constant 0 : i32
    return %arg0, %c0_i32 : i32, i32
  }
}

</mosaic_0001>

<llo_original>
// kernel: dqn_forward.1
$region0: #{dqn_forward.1}
  #allocation0 [shape = 'u32[]', space=smem, size = 0x4, offset = 0x4, fixed_abs, tag = 'smem constant byte address 0x4 - core index']
  #allocation1 [shape = 'u32[144,128]{1,0:T(1,128)}', space=vmem, size = 0x12000, scoped, tag = 'internal scratch']
  #allocation2 [shape = 'f32[2,8192]{1,0:T(2,128)}', space=vmem, size = 0x10000, scoped, tag = 'scratch operand']
  %s0 = inlined_call_operand.vmem [shape: f32[2,8,8,1], index: 0, kind: input, shape index: {}]
  %s1 = inlined_call_operand.hbm [shape: f32[9,32], index: 1, kind: input, shape index: {}]
  %s2 = inlined_call_operand.hbm [shape: f32[1,32], index: 2, kind: input, shape index: {}]
  %s3 = inlined_call_operand.hbm [shape: bf16[288,128], index: 3, kind: input, shape index: {}]
  %s4 = inlined_call_operand.hbm [shape: f32[1,128], index: 4, kind: input, shape index: {}]
  %s5 = inlined_call_operand.hbm [shape: bf16[8192,128], index: 5, kind: input, shape index: {}]
  %s6 = inlined_call_operand.hbm [shape: f32[1,128], index: 6, kind: input, shape index: {}]
  %s7 = inlined_call_operand.vmem [shape: f32[128,4], index: 7, kind: input, shape index: {}]
  %s8 = inlined_call_operand.hbm [shape: f32[1,4], index: 8, kind: input, shape index: {}]
  %s9 = inlined_call_operand.hbm [shape: f32[2,4], index: 9, kind: output, shape index: {}]
  %s10 = sld [smem:[#allocation0]]
  $region74: #{dqn_forward.1} parent=0
    _
  %s12 = ssub.s32 1, %s10
  %s13 = scalar_select 0, %s12, %s10
  $region1: #{dqn_forward.1} parent=0
    #allocation3 [shape = 'u8[8192]{0}', space=vmem, size = 0x2000, scoped, tag = 'input window, operand 1, single buffered']
    #allocation4 [shape = 's32[1]{0}', space=sflag, size = 0x4, scoped, tag = 'scoped memory for dqn_forward.1']
    #allocation5 [shape = 's32[1]{0}', space=sflag, size = 0x4, scoped, tag = 'scoped memory for dqn_forward.1']
    #allocation6 [shape = 'u8[512]{0}', space=vmem, size = 0x400, scoped, tag = 'input window, operand 2, single buffered']
    #allocation7 [shape = 's32[1]{0}', space=sflag, size = 0x4, scoped, tag = 'scoped memory for dqn_forward.1']
    #allocation8 [shape = 'u8[73728]{0}', space=vmem, size = 0x12000, scoped, tag = 'input window, operand 3, single buffered']
    #allocation9 [shape = 'u8[512]{0}', space=vmem, size = 0x400, scoped, tag = 'input window, operand 4, single buffered']
    #allocation10 [shape = 's32[1]{0}', space=sflag, size = 0x4, scoped, tag = 'scoped memory for dqn_forward.1']
    #allocation11 [shape = 'u8[2097152]{0}', space=vmem, size = 0x200000, scoped, tag = 'input window, operand 5, single buffered']
    #allocation12 [shape = 'u8[512]{0}', space=vmem, size = 0x400, scoped, tag = 'input window, operand 6, single buffered']
    #allocation13 [shape = 's32[1]{0}', space=sflag, size = 0x4, scoped, tag = 'scoped memory for dqn_forward.1']
    #allocation14 [shape = 'u8[512]{0}', space=vmem, size = 0x400, scoped, tag = 'input window, operand 8, single buffered']
    #allocation15 [shape = 'u8[1024]{0}', space=vmem, size = 0x400, scoped, tag = 'output window, operand 0, single buffered']
    %14 = vsyncpa [#allocation4], 0
    %15 = vsyncpa [#allocation7], 0
    %16 = vsyncpa [#allocation10], 0
    %17 = vsyncpa [#allocation13], 0
    %18 = vsyncpa [#allocation5], 0
    // Predicated region
    $region2: #{dqn_forward.1} parent=1 // pred_check
      _
    $region3: #{dqn_forward.1} parent=1 // pred_check_branch
      %20 = sbr.rel (0) target = $region5
    $region4: #{dqn_forward.1} parent=1 // pred_region
      _
    $region5: #{dqn_forward.1} parent=1 // pred_fallthru
      _
    // Predicated region
    $region6: #{dqn_forward.1} parent=1 // pred_check
      _
    $region7: #{dqn_forward.1} parent=1 // pred_check_branch
      %22 = sbr.rel (0) target = $region9
    $region8: #{dqn_forward.1} parent=1 // pred_region
      %s24 = ssub.s32 256, 256
      %25 = vsyncadd [#allocation4], %s24
      %s26 = sshll.u32 [#allocation3], 4
      %s27 = int_to_ptr.vmem [resolvable:$true] %s26
      %32 = dma.hbm_to_vmem [thread:$0]  %s1, 256, %s27, [#allocation4], 128, 128, 8
    $region9: #{dqn_forward.1} parent=1 // pred_fallthru
      _
    // Predicated region
    $region10: #{dqn_forward.1} parent=1 // pred_check
      _
    $region11: #{dqn_forward.1} parent=1 // pred_check_branch
      %34 = sbr.rel (0) target = $region13
    $region12: #{dqn_forward.1} parent=1 // pred_region
      %s36 = ssub.s32 16, 16
      %37 = vsyncadd [#allocation7], %s36
      %s39 = sshll.u32 [#allocation6], 4
      %s40 = int_to_ptr.vmem [resolvable:$true] %s39
      %42 = dma.hbm_to_vmem [thread:$0]  %s2, 16, %s40, [#allocation7]
    $region13: #{dqn_forward.1} parent=1 // pred_fallthru
      _
    // Predicated region
    $region14: #{dqn_forward.1} parent=1 // pred_check
      _
    $region15: #{dqn_forward.1} parent=1 // pred_check_branch
      %44 = sbr.rel (0) target = $region17
    $region16: #{dqn_forward.1} parent=1 // pred_region
      %s46 = ssub.s32 2304, 2304
      %47 = vsyncadd [#allocation7], %s46
      %s48 = sshll.u32 [#allocation8], 4
      %s49 = int_to_ptr.vmem [resolvable:$true] %s48
      %54 = dma.hbm_to_vmem [thread:$0]  %s3, 2304, %s49, [#allocation7], 64, 64, 4
    $region17: #{dqn_forward.1} parent=1 // pred_fallthru
      _
    // Predicated region
    $region18: #{dqn_forward.1} parent=1 // pred_check
      _
    $region19: #{dqn_forward.1} parent=1 // pred_check_branch
      %56 = sbr.rel (0) target = $region21
    $region20: #{dqn_forward.1} parent=1 // pred_region
      %s58 = ssub.s32 16, 16
      %59 = vsyncadd [#allocation10], %s58
      %s61 = sshll.u32 [#allocation9], 4
      %s62 = int_to_ptr.vmem [resolvable:$true] %s61
      %64 = dma.hbm_to_vmem [thread:$0]  %s4, 16, %s62, [#allocation10]
    $region21: #{dqn_forward.1} parent=1 // pred_fallthru
      _
    // Predicated region
    $region22: #{dqn_forward.1} parent=1 // pred_check
      _
    $region23: #{dqn_forward.1} parent=1 // pred_check_branch
      %66 = sbr.rel (0) target = $region25
    $region24: #{dqn_forward.1} parent=1 // pred_region
      %s68 = ssub.s32 65536, 65536
      %69 = vsyncadd [#allocation10], %s68
      %s70 = sshll.u32 [#allocation11], 4
      %s71 = int_to_ptr.vmem [resolvable:$true] %s70
      %76 = dma.hbm_to_vmem [thread:$0]  %s5, 65536, %s71, [#allocation10], 64, 64, 4
    $region25: #{dqn_forward.1} parent=1 // pred_fallthru
      _
    // Predicated region
    $region26: #{dqn_forward.1} parent=1 // pred_check
      _
    $region27: #{dqn_forward.1} parent=1 // pred_check_branch
      %78 = sbr.rel (0) target = $region29
    $region28: #{dqn_forward.1} parent=1 // pred_region
      %s80 = ssub.s32 16, 16
      %81 = vsyncadd [#allocation13], %s80
      %s83 = sshll.u32 [#allocation12], 4
      %s84 = int_to_ptr.vmem [resolvable:$true] %s83
      %86 = dma.hbm_to_vmem [thread:$0]  %s6, 16, %s84, [#allocation13]
    $region29: #{dqn_forward.1} parent=1 // pred_fallthru
      _
    // Predicated region
    $region30: #{dqn_forward.1} parent=1 // pred_check
      _
    $region31: #{dqn_forward.1} parent=1 // pred_check_branch
      %88 = sbr.rel (0) target = $region33
    $region32: #{dqn_forward.1} parent=1 // pred_region
      _
    $region33: #{dqn_forward.1} parent=1 // pred_fallthru
      _
    // Predicated region
    $region34: #{dqn_forward.1} parent=1 // pred_check
      _
    $region35: #{dqn_forward.1} parent=1 // pred_check_branch
      %90 = sbr.rel (0) target = $region37
    $region36: #{dqn_forward.1} parent=1 // pred_region
      %s92 = ssub.s32 16, 16
      %93 = vsyncadd [#allocation13], %s92
      %s95 = sshll.u32 [#allocation14], 4
      %s96 = int_to_ptr.vmem [resolvable:$true] %s95
      %98 = dma.hbm_to_vmem [thread:$0]  %s8, 16, %s96, [#allocation13]
    $region37: #{dqn_forward.1} parent=1 // pred_fallthru
      _
    // Predicated region
    $region38: #{dqn_forward.1} parent=1 // pred_check
      _
    $region39: #{dqn_forward.1} parent=1 // pred_check_branch
      %100 = sbr.rel (0) target = $region41
    $region40: #{dqn_forward.1} parent=1 // pred_region
      %101 = dma.done [#allocation4], 256
    $region41: #{dqn_forward.1} parent=1 // pred_fallthru
      _
    // Predicated region
    $region42: #{dqn_forward.1} parent=1 // pred_check
      _
    $region43: #{dqn_forward.1} parent=1 // pred_check_branch
      %103 = sbr.rel (0) target = $region45
    $region44: #{dqn_forward.1} parent=1 // pred_region
      %104 = dma.done [#allocation7], 16
    $region45: #{dqn_forward.1} parent=1 // pred_fallthru
      _
    // Predicated region
    $region46: #{dqn_forward.1} parent=1 // pred_check
      _
    $region47: #{dqn_forward.1} parent=1 // pred_check_branch
      %106 = sbr.rel (0) target = $region49
    $region48: #{dqn_forward.1} parent=1 // pred_region
      %107 = dma.done [#allocation7], 2304
    $region49: #{dqn_forward.1} parent=1 // pred_fallthru
      _
    // Predicated region
    $region50: #{dqn_forward.1} parent=1 // pred_check
      _
    $region51: #{dqn_forward.1} parent=1 // pred_check_branch
      %109 = sbr.rel (0) target = $region53
    $region52: #{dqn_forward.1} parent=1 // pred_region
      %110 = dma.done [#allocation10], 16
    $region53: #{dqn_forward.1} parent=1 // pred_fallthru
      _
    // Predicated region
    $region54: #{dqn_forward.1} parent=1 // pred_check
      _
    $region55: #{dqn_forward.1} parent=1 // pred_check_branch
      %112 = sbr.rel (0) target = $region57
    $region56: #{dqn_forward.1} parent=1 // pred_region
      %113 = dma.done [#allocation10], 65536
    $region57: #{dqn_forward.1} parent=1 // pred_fallthru
      _
    // Predicated region
    $region58: #{dqn_forward.1} parent=1 // pred_check
      _
    $region59: #{dqn_forward.1} parent=1 // pred_check_branch
      %115 = sbr.rel (0) target = $region61
    $region60: #{dqn_forward.1} parent=1 // pred_region
      %116 = dma.done [#allocation13], 16
    $region61: #{dqn_forward.1} parent=1 // pred_fallthru
      _
    // Predicated region
    $region62: #{dqn_forward.1} parent=1 // pred_check
      _
    $region63: #{dqn_forward.1} parent=1 // pred_check_branch
      %118 = sbr.rel (0) target = $region65
    $region64: #{dqn_forward.1} parent=1 // pred_region
      %119 = dma.done [#allocation13], 16
    $region65: #{dqn_forward.1} parent=1 // pred_fallthru
      _
    %v121 = vld [vmem:[%s0] sm:$0xff]
    %v122 = vld [vmem:[%s0 + $0x8] sm:$0xff]
    %v123 = vld [vmem:[%s0 + $0x10] sm:$0xff]
    %v124 = vld [vmem:[%s0 + $0x18] sm:$0xff]
    %v125 = vld [vmem:[%s0 + $0x20] sm:$0xff]
    %v126 = vld [vmem:[%s0 + $0x28] sm:$0xff]
    %v127 = vld [vmem:[%s0 + $0x30] sm:$0xff]
    %v128 = vld [vmem:[%s0 + $0x38] sm:$0xff]
    %v129 = vld [vmem:[%s0 + $0x40] sm:$0xff]
    %v130 = vld [vmem:[%s0 + $0x48] sm:$0xff]
    %v131 = vld [vmem:[%s0 + $0x50] sm:$0xff]
    %v132 = vld [vmem:[%s0 + $0x58] sm:$0xff]
    %v133 = vld [vmem:[%s0 + $0x60] sm:$0xff]
    %v134 = vld [vmem:[%s0 + $0x68] sm:$0xff]
    %v135 = vld [vmem:[%s0 + $0x70] sm:$0xff]
    %v136 = vld [vmem:[%s0 + $0x78] sm:$0xff]
    %v154 = vrot.slane 0.0, 7
    %v155 = vrot.slane %v121, 7
    %v156 = vrot.slane %v122, 7
    %v157 = vrot.slane %v123, 7
    %v158 = vrot.slane %v124, 7
    %v159 = vrot.slane %v125, 7
    %v160 = vrot.slane %v126, 7
    %v161 = vrot.slane %v127, 7
    %v162 = vrot.slane %v128, 7
    %v163 = vrot.slane %v129, 7
    %v164 = vrot.slane %v130, 7
    %v165 = vrot.slane %v131, 7
    %v166 = vrot.slane %v132, 7
    %v167 = vrot.slane %v133, 7
    %v168 = vrot.slane %v134, 7
    %v169 = vrot.slane %v135, 7
    %v170 = vrot.slane %v136, 7
    %vm188 = vcmask 1040384
    %v189 = vsel %vm188, 0.0, %v154
    %v190 = vsel %vm188, 0.0, %v155
    %v191 = vsel %vm188, 0.0, %v156
    %v192 = vsel %vm188, 0.0, %v157
    %v193 = vsel %vm188, 0.0, %v158
    %v194 = vsel %vm188, 0.0, %v159
    %v195 = vsel %vm188, 0.0, %v160
    %v196 = vsel %vm188, 0.0, %v161
    %v197 = vsel %vm188, 0.0, %v162
    %v198 = vsel %vm188, 0.0, %v163
    %v199 = vsel %vm188, 0.0, %v164
    %v200 = vsel %vm188, 0.0, %v165
    %v201 = vsel %vm188, 0.0, %v166
    %v202 = vsel %vm188, 0.0, %v167
    %v203 = vsel %vm188, 0.0, %v168
    %v204 = vsel %vm188, 0.0, %v169
    %v205 = vsel %vm188, 0.0, %v170
    %v206 = vsel %vm188, %v154, 0.0
    %v207 = vsel %vm188, %v155, 0.0
    %v208 = vsel %vm188, %v156, 0.0
    %v209 = vsel %vm188, %v157, 0.0
    %v210 = vsel %vm188, %v158, 0.0
    %v211 = vsel %vm188, %v159, 0.0
    %v212 = vsel %vm188, %v160, 0.0
    %v213 = vsel %vm188, %v161, 0.0
    %v214 = vsel %vm188, %v162, 0.0
    %v215 = vsel %vm188, %v163, 0.0
    %v216 = vsel %vm188, %v164, 0.0
    %v217 = vsel %vm188, %v165, 0.0
    %v218 = vsel %vm188, %v166, 0.0
    %v219 = vsel %vm188, %v167, 0.0
    %v220 = vsel %vm188, %v168, 0.0
    %v221 = vsel %vm188, %v169, 0.0
    %v222 = vsel %vm188, %v170, 0.0
    %v223 = vld [vmem:[#allocation3] sm:$0xff]
    %v224 = vld [vmem:[#allocation3 + $0x8] sm:$0x1]
    %226 = vset.pattern.permute.xlu0 0
    %227 = vperm.xlu0 %226, %v189
    %v228 = vpop.permute.xlu0 %227
    %231 = vset.pattern.permute.xlu0 0
    %232 = vperm.xlu0 %231, %v190
    %v233 = vpop.permute.xlu0 %232
    %236 = vset.pattern.permute.xlu0 0
    %237 = vperm.xlu0 %236, %v191
    %v238 = vpop.permute.xlu0 %237
    %241 = vset.pattern.permute.xlu0 0
    %242 = vperm.xlu0 %241, %v192
    %v243 = vpop.permute.xlu0 %242
    %246 = vset.pattern.permute.xlu0 0
    %247 = vperm.xlu0 %246, %v193
    %v248 = vpop.permute.xlu0 %247
    %251 = vset.pattern.permute.xlu0 0
    %252 = vperm.xlu0 %251, %v194
    %v253 = vpop.permute.xlu0 %252
    %256 = vset.pattern.permute.xlu0 0
    %257 = vperm.xlu0 %256, %v195
    %v258 = vpop.permute.xlu0 %257
    %261 = vset.pattern.permute.xlu0 0
    %262 = vperm.xlu0 %261, %v196
    %v263 = vpop.permute.xlu0 %262
    %266 = vset.pattern.permute.xlu0 0
    %267 = vperm.xlu0 %266, %v198
    %v268 = vpop.permute.xlu0 %267
    %271 = vset.pattern.permute.xlu0 0
    %272 = vperm.xlu0 %271, %v199
    %v273 = vpop.permute.xlu0 %272
    %276 = vset.pattern.permute.xlu0 0
    %277 = vperm.xlu0 %276, %v200
    %v278 = vpop.permute.xlu0 %277
    %281 = vset.pattern.permute.xlu0 0
    %282 = vperm.xlu0 %281, %v201
    %v283 = vpop.permute.xlu0 %282
    %286 = vset.pattern.permute.xlu0 0
    %287 = vperm.xlu0 %286, %v202
    %v288 = vpop.permute.xlu0 %287
    %291 = vset.pattern.permute.xlu0 0
    %292 = vperm.xlu0 %291, %v203
    %v293 = vpop.permute.xlu0 %292
    %296 = vset.pattern.permute.xlu0 0
    %297 = vperm.xlu0 %296, %v204
    %v298 = vpop.permute.xlu0 %297
    %v300 = vlaneseq
    %v301 = vshrl.u32 %v300, 7
    %v302 = vsub.s32 0, %v301
    %v303 = vrot.slane %v223, %v302
    %v304 = vmul.f32 %v228, %v303
    %v305 = vmul.f32 %v233, %v303
    %v306 = vmul.f32 %v238, %v303
    %v307 = vmul.f32 %v243, %v303
    %v308 = vmul.f32 %v248, %v303
    %v309 = vmul.f32 %v253, %v303
    %v310 = vmul.f32 %v258, %v303
    %v311 = vmul.f32 %v263, %v303
    %v312 = vmul.f32 %v268, %v303
    %v313 = vmul.f32 %v273, %v303
    %v314 = vmul.f32 %v278, %v303
    %v315 = vmul.f32 %v283, %v303
    %v316 = vmul.f32 %v288, %v303
    %v317 = vmul.f32 %v293, %v303
    %v318 = vmul.f32 %v298, %v303
    %v319 = vadd.f32 %v304, 0.0
    %v320 = vadd.f32 %v305, 0.0
    %v321 = vadd.f32 %v306, 0.0
    %v322 = vadd.f32 %v307, 0.0
    %v323 = vadd.f32 %v308, 0.0
    %v324 = vadd.f32 %v309, 0.0
    %v325 = vadd.f32 %v310, 0.0
    %v326 = vadd.f32 %v311, 0.0
    %v327 = vadd.f32 %v312, 0.0
    %v328 = vadd.f32 %v313, 0.0
    %v329 = vadd.f32 %v314, 0.0
    %v330 = vadd.f32 %v315, 0.0
    %v331 = vadd.f32 %v316, 0.0
    %v332 = vadd.f32 %v317, 0.0
    %v333 = vadd.f32 %v318, 0.0
    %335 = vset.pattern.permute.xlu0 0
    %336 = vperm.xlu0 %335, %v206
    %v337 = vpop.permute.xlu0 %336
    %340 = vset.pattern.permute.xlu0 0
    %341 = vperm.xlu0 %340, %v207
    %v342 = vpop.permute.xlu0 %341
    %345 = vset.pattern.permute.xlu0 0
    %346 = vperm.xlu0 %345, %v208
    %v347 = vpop.permute.xlu0 %346
    %350 = vset.pattern.permute.xlu0 0
    %351 = vperm.xlu0 %350, %v209
    %v352 = vpop.permute.xlu0 %351
    %355 = vset.pattern.permute.xlu0 0
    %356 = vperm.xlu0 %355, %v210
    %v357 = vpop.permute.xlu0 %356
    %360 = vset.pattern.permute.xlu0 0
    %361 = vperm.xlu0 %360, %v211
    %v362 = vpop.permute.xlu0 %361
    %365 = vset.pattern.permute.xlu0 0
    %366 = vperm.xlu0 %365, %v212
    %v367 = vpop.permute.xlu0 %366
    %370 = vset.pattern.permute.xlu0 0
    %371 = vperm.xlu0 %370, %v213
    %v372 = vpop.permute.xlu0 %371
    %375 = vset.pattern.permute.xlu0 0
    %376 = vperm.xlu0 %375, %v215
    %v377 = vpop.permute.xlu0 %376
    %380 = vset.pattern.permute.xlu0 0
    %381 = vperm.xlu0 %380, %v216
    %v382 = vpop.permute.xlu0 %381
    %385 = vset.pattern.permute.xlu0 0
    %386 = vperm.xlu0 %385, %v217
    %v387 = vpop.permute.xlu0 %386
    %390 = vset.pattern.permute.xlu0 0
    %391 = vperm.xlu0 %390, %v218
    %v392 = vpop.permute.xlu0 %391
    %395 = vset.pattern.permute.xlu0 0
    %396 = vperm.xlu0 %395, %v219
    %v397 = vpop.permute.xlu0 %396
    %400 = vset.pattern.permute.xlu0 0
    %401 = vperm.xlu0 %400, %v220
    %v402 = vpop.permute.xlu0 %401
    %405 = vset.pattern.permute.xlu0 0
    %406 = vperm.xlu0 %405, %v221
    %v407 = vpop.permute.xlu0 %406
    %v409 = vlaneseq
    %v410 = vshrl.u32 %v409, 7
    %v411 = vsub.s32 1, %v410
    %v412 = vrot.slane %v223, %v411
    %v413 = vmul.f32 %v228, %v412
    %v414 = vmul.f32 %v337, %v412
    %v415 = vmul.f32 %v233, %v412
    %v416 = vmul.f32 %v342, %v412
    %v417 = vmul.f32 %v238, %v412
    %v418 = vmul.f32 %v347, %v412
    %v419 = vmul.f32 %v243, %v412
    %v420 = vmul.f32 %v352, %v412
    %v421 = vmul.f32 %v248, %v412
    %v422 = vmul.f32 %v357, %v412
    %v423 = vmul.f32 %v253, %v412
    %v424 = vmul.f32 %v362, %v412
    %v425 = vmul.f32 %v258, %v412
    %v426 = vmul.f32 %v367, %v412
    %v427 = vmul.f32 %v263, %v412
    %v428 = vmul.f32 %v372, %v412
    %v429 = vmul.f32 %v268, %v412
    %v430 = vmul.f32 %v377, %v412
    %v431 = vmul.f32 %v273, %v412
    %v432 = vmul.f32 %v382, %v412
    %v433 = vmul.f32 %v278, %v412
    %v434 = vmul.f32 %v387, %v412
    %v435 = vmul.f32 %v283, %v412
    %v436 = vmul.f32 %v392, %v412
    %v437 = vmul.f32 %v288, %v412
    %v438 = vmul.f32 %v397, %v412
    %v439 = vmul.f32 %v293, %v412
    %v440 = vmul.f32 %v402, %v412
    %v441 = vmul.f32 %v298, %v412
    %v442 = vmul.f32 %v407, %v412
    %vm473 = vcmask 1046528
    %v474 = vrot.slane %v413, 1
    %v475 = vrot.slane %v414, 1
    %v476 = vsel %vm473, %v474, %v475
    %v477 = vrot.slane %v415, 1
    %v478 = vrot.slane %v416, 1
    %v479 = vsel %vm473, %v477, %v478
    %v480 = vrot.slane %v417, 1
    %v481 = vrot.slane %v418, 1
    %v482 = vsel %vm473, %v480, %v481
    %v483 = vrot.slane %v419, 1
    %v484 = vrot.slane %v420, 1
    %v485 = vsel %vm473, %v483, %v484
    %v486 = vrot.slane %v421, 1
    %v487 = vrot.slane %v422, 1
    %v488 = vsel %vm473, %v486, %v487
    %v489 = vrot.slane %v423, 1
    %v490 = vrot.slane %v424, 1
    %v491 = vsel %vm473, %v489, %v490
    %v492 = vrot.slane %v425, 1
    %v493 = vrot.slane %v426, 1
    %v494 = vsel %vm473, %v492, %v493
    %v495 = vrot.slane %v427, 1
    %v496 = vrot.slane %v428, 1
    %v497 = vsel %vm473, %v495, %v496
    %v498 = vrot.slane %v429, 1
    %v499 = vrot.slane %v430, 1
    %v500 = vsel %vm473, %v498, %v499
    %v501 = vrot.slane %v431, 1
    %v502 = vrot.slane %v432, 1
    %v503 = vsel %vm473, %v501, %v502
    %v504 = vrot.slane %v433, 1
    %v505 = vrot.slane %v434, 1
    %v506 = vsel %vm473, %v504, %v505
    %v507 = vrot.slane %v435, 1
    %v508 = vrot.slane %v436, 1
    %v509 = vsel %vm473, %v507, %v508
    %v510 = vrot.slane %v437, 1
    %v511 = vrot.slane %v438, 1
    %v512 = vsel %vm473, %v510, %v511
    %v513 = vrot.slane %v439, 1
    %v514 = vrot.slane %v440, 1
    %v515 = vsel %vm473, %v513, %v514
    %v516 = vrot.slane %v441, 1
    %v517 = vrot.slane %v442, 1
    %v518 = vsel %vm473, %v516, %v517
    %v534 = vadd.f32 %v319, %v476
    %v535 = vadd.f32 %v320, %v479
    %v536 = vadd.f32 %v321, %v482
    %v537 = vadd.f32 %v322, %v485
    %v538 = vadd.f32 %v323, %v488
    %v539 = vadd.f32 %v324, %v491
    %v540 = vadd.f32 %v325, %v494
    %v541 = vadd.f32 %v326, %v497
    %v542 = vadd.f32 %v327, %v500
    %v543 = vadd.f32 %v328, %v503
    %v544 = vadd.f32 %v329, %v506
    %v545 = vadd.f32 %v330, %v509
    %v546 = vadd.f32 %v331, %v512
    %v547 = vadd.f32 %v332, %v515
    %v548 = vadd.f32 %v333, %v518
    %v549 = vlaneseq
    %v550 = vshrl.u32 %v549, 7
    %v551 = vsub.s32 2, %v550
    %v552 = vrot.slane %v223, %v551
    %v553 = vmul.f32 %v228, %v552
    %v554 = vmul.f32 %v337, %v552
    %v555 = vmul.f32 %v233, %v552
    %v556 = vmul.f32 %v342, %v552
    %v557 = vmul.f32 %v238, %v552
    %v558 = vmul.f32 %v347, %v552
    %v559 = vmul.f32 %v243, %v552
    %v560 = vmul.f32 %v352, %v552
    %v561 = vmul.f32 %v248, %v552
    %v562 = vmul.f32 %v357, %v552
    %v563 = vmul.f32 %v253, %v552
    %v564 = vmul.f32 %v362, %v552
    %v565 = vmul.f32 %v258, %v552
    %v566 = vmul.f32 %v367, %v552
    %v567 = vmul.f32 %v263, %v552
    %v568 = vmul.f32 %v372, %v552
    %v569 = vmul.f32 %v268, %v552
    %v570 = vmul.f32 %v377, %v552
    %v571 = vmul.f32 %v273, %v552
    %v572 = vmul.f32 %v382, %v552
    %v573 = vmul.f32 %v278, %v552
    %v574 = vmul.f32 %v387, %v552
    %v575 = vmul.f32 %v283, %v552
    %v576 = vmul.f32 %v392, %v552
    %v577 = vmul.f32 %v288, %v552
    %v578 = vmul.f32 %v397, %v552
    %v579 = vmul.f32 %v293, %v552
    %v580 = vmul.f32 %v402, %v552
    %v581 = vmul.f32 %v298, %v552
    %v582 = vmul.f32 %v407, %v552
    %vm613 = vcmask 1045504
    %v614 = vrot.slane %v553, 2
    %v615 = vrot.slane %v554, 2
    %v616 = vsel %vm613, %v614, %v615
    %v617 = vrot.slane %v555, 2
    %v618 = vrot.slane %v556, 2
    %v619 = vsel %vm613, %v617, %v618
    %v620 = vrot.slane %v557, 2
    %v621 = vrot.slane %v558, 2
    %v622 = vsel %vm613, %v620, %v621
    %v623 = vrot.slane %v559, 2
    %v624 = vrot.slane %v560, 2
    %v625 = vsel %vm613, %v623, %v624
    %v626 = vrot.slane %v561, 2
    %v627 = vrot.slane %v562, 2
    %v628 = vsel %vm613, %v626, %v627
    %v629 = vrot.slane %v563, 2
    %v630 = vrot.slane %v564, 2
    %v631 = vsel %vm613, %v629, %v630
    %v632 = vrot.slane %v565, 2
    %v633 = vrot.slane %v566, 2
    %v634 = vsel %vm613, %v632, %v633
    %v635 = vrot.slane %v567, 2
    %v636 = vrot.slane %v568, 2
    %v637 = vsel %vm613, %v635, %v636
    %v638 = vrot.slane %v569, 2
    %v639 = vrot.slane %v570, 2
    %v640 = vsel %vm613, %v638, %v639
    %v641 = vrot.slane %v571, 2
    %v642 = vrot.slane %v572, 2
    %v643 = vsel %vm613, %v641, %v642
    %v644 = vrot.slane %v573, 2
    %v645 = vrot.slane %v574, 2
    %v646 = vsel %vm613, %v644, %v645
    %v647 = vrot.slane %v575, 2
    %v648 = vrot.slane %v576, 2
    %v649 = vsel %vm613, %v647, %v648
    %v650 = vrot.slane %v577, 2
    %v651 = vrot.slane %v578, 2
    %v652 = vsel %vm613, %v650, %v651
    %v653 = vrot.slane %v579, 2
    %v654 = vrot.slane %v580, 2
    %v655 = vsel %vm613, %v653, %v654
    %v656 = vrot.slane %v581, 2
    %v657 = vrot.slane %v582, 2
    %v658 = vsel %vm613, %v656, %v657
    %v674 = vadd.f32 %v534, %v616
    %v675 = vadd.f32 %v535, %v619
    %v676 = vadd.f32 %v536, %v622
    %v677 = vadd.f32 %v537, %v625
    %v678 = vadd.f32 %v538, %v628
    %v679 = vadd.f32 %v539, %v631
    %v680 = vadd.f32 %v540, %v634
    %v681 = vadd.f32 %v541, %v637
    %v682 = vadd.f32 %v542, %v640
    %v683 = vadd.f32 %v543, %v643
    %v684 = vadd.f32 %v544, %v646
    %v685 = vadd.f32 %v545, %v649
    %v686 = vadd.f32 %v546, %v652
    %v687 = vadd.f32 %v547, %v655
    %v688 = vadd.f32 %v548, %v658
    %690 = vset.pattern.permute.xlu0 0
    %691 = vperm.xlu0 %690, %v197
    %v692 = vpop.permute.xlu0 %691
    %695 = vset.pattern.permute.xlu0 0
    %696 = vperm.xlu0 %695, %v205
    %v697 = vpop.permute.xlu0 %696
    %v699 = vlaneseq
    %v700 = vshrl.u32 %v699, 7
    %v701 = vsub.s32 3, %v700
    %v702 = vrot.slane %v223, %v701
    %v703 = vmul.f32 %v233, %v702
    %v704 = vmul.f32 %v238, %v702
    %v705 = vmul.f32 %v243, %v702
    %v706 = vmul.f32 %v248, %v702
    %v707 = vmul.f32 %v253, %v702
    %v708 = vmul.f32 %v258, %v702
    %v709 = vmul.f32 %v263, %v702
    %v710 = vmul.f32 %v692, %v702
    %v711 = vmul.f32 %v268, %v702
    %v712 = vmul.f32 %v273, %v702
    %v713 = vmul.f32 %v278, %v702
    %v714 = vmul.f32 %v283, %v702
    %v715 = vmul.f32 %v288, %v702
    %v716 = vmul.f32 %v293, %v702
    %v717 = vmul.f32 %v298, %v702
    %v718 = vmul.f32 %v697, %v702
    %v719 = vadd.f32 %v674, %v703
    %v720 = vadd.f32 %v675, %v704
    %v721 = vadd.f32 %v676, %v705
    %v722 = vadd.f32 %v677, %v706
    %v723 = vadd.f32 %v678, %v707
    %v724 = vadd.f32 %v679, %v708
    %v725 = vadd.f32 %v680, %v709
    %v726 = vadd.f32 %v681, %v710
    %v727 = vadd.f32 %v674, %v711
    %v728 = vadd.f32 %v682, %v712
    %v729 = vadd.f32 %v683, %v713
    %v730 = vadd.f32 %v684, %v714
    %v731 = vadd.f32 %v685, %v715
    %v732 = vadd.f32 %v686, %v716
    %v733 = vadd.f32 %v687, %v717
    %v734 = vadd.f32 %v688, %v718
    %736 = vset.pattern.permute.xlu0 0
    %737 = vperm.xlu0 %736, %v214
    %v738 = vpop.permute.xlu0 %737
    %741 = vset.pattern.permute.xlu0 0
    %742 = vperm.xlu0 %741, %v222
    %v743 = vpop.permute.xlu0 %742
    %v745 = vlaneseq
    %v746 = vshrl.u32 %v745, 7
    %v747 = vsub.s32 4, %v746
    %v748 = vrot.slane %v223, %v747
    %v749 = vmul.f32 %v233, %v748
    %v750 = vmul.f32 %v342, %v748
    %v751 = vmul.f32 %v238, %v748
    %v752 = vmul.f32 %v347, %v748
    %v753 = vmul.f32 %v243, %v748
    %v754 = vmul.f32 %v352, %v748
    %v755 = vmul.f32 %v248, %v748
    %v756 = vmul.f32 %v357, %v748
    %v757 = vmul.f32 %v253, %v748
    %v758 = vmul.f32 %v362, %v748
    %v759 = vmul.f32 %v258, %v748
    %v760 = vmul.f32 %v367, %v748
    %v761 = vmul.f32 %v263, %v748
    %v762 = vmul.f32 %v372, %v748
    %v763 = vmul.f32 %v692, %v748
    %v764 = vmul.f32 %v738, %v748
    %v765 = vmul.f32 %v268, %v748
    %v766 = vmul.f32 %v377, %v748
    %v767 = vmul.f32 %v273, %v748
    %v768 = vmul.f32 %v382, %v748
    %v769 = vmul.f32 %v278, %v748
    %v770 = vmul.f32 %v387, %v748
    %v771 = vmul.f32 %v283, %v748
    %v772 = vmul.f32 %v392, %v748
    %v773 = vmul.f32 %v288, %v748
    %v774 = vmul.f32 %v397, %v748
    %v775 = vmul.f32 %v293, %v748
    %v776 = vmul.f32 %v402, %v748
    %v777 = vmul.f32 %v298, %v748
    %v778 = vmul.f32 %v407, %v748
    %v779 = vmul.f32 %v697, %v748
    %v780 = vmul.f32 %v743, %v748
    %v813 = vrot.slane %v749, 1
    %v814 = vrot.slane %v750, 1
    %v815 = vsel %vm473, %v813, %v814
    %v816 = vrot.slane %v751, 1
    %v817 = vrot.slane %v752, 1
    %v818 = vsel %vm473, %v816, %v817
    %v819 = vrot.slane %v753, 1
    %v820 = vrot.slane %v754, 1
    %v821 = vsel %vm473, %v819, %v820
    %v822 = vrot.slane %v755, 1
    %v823 = vrot.slane %v756, 1
    %v824 = vsel %vm473, %v822, %v823
    %v825 = vrot.slane %v757, 1
    %v826 = vrot.slane %v758, 1
    %v827 = vsel %vm473, %v825, %v826
    %v828 = vrot.slane %v759, 1
    %v829 = vrot.slane %v760, 1
    %v830 = vsel %vm473, %v828, %v829
    %v831 = vrot.slane %v761, 1
    %v832 = vrot.slane %v762, 1
    %v833 = vsel %vm473, %v831, %v832
    %v834 = vrot.slane %v763, 1
    %v835 = vrot.slane %v764, 1
    %v836 = vsel %vm473, %v834, %v835
    %v837 = vrot.slane %v765, 1
    %v838 = vrot.slane %v766, 1
    %v839 = vsel %vm473, %v837, %v838
    %v840 = vrot.slane %v767, 1
    %v841 = vrot.slane %v768, 1
    %v842 = vsel %vm473, %v840, %v841
    %v843 = vrot.slane %v769, 1
    %v844 = vrot.slane %v770, 1
    %v845 = vsel %vm473, %v843, %v844
    %v846 = vrot.slane %v771, 1
    %v847 = vrot.slane %v772, 1
    %v848 = vsel %vm473, %v846, %v847
    %v849 = vrot.slane %v773, 1
    %v850 = vrot.slane %v774, 1
    %v851 = vsel %vm473, %v849, %v850
    %v852 = vrot.slane %v775, 1
    %v853 = vrot.slane %v776, 1
    %v854 = vsel %vm473, %v852, %v853
    %v855 = vrot.slane %v777, 1
    %v856 = vrot.slane %v778, 1
    %v857 = vsel %vm473, %v855, %v856
    %v858 = vrot.slane %v779, 1
    %v859 = vrot.slane %v780, 1
    %v860 = vsel %vm473, %v858, %v859
    %v877 = vadd.f32 %v719, %v815
    %v878 = vadd.f32 %v720, %v818
    %v879 = vadd.f32 %v721, %v821
    %v880 = vadd.f32 %v722, %v824
    %v881 = vadd.f32 %v723, %v827
    %v882 = vadd.f32 %v724, %v830
    %v883 = vadd.f32 %v725, %v833
    %v884 = vadd.f32 %v726, %v836
    %v885 = vadd.f32 %v727, %v839
    %v886 = vadd.f32 %v728, %v842
    %v887 = vadd.f32 %v729, %v845
    %v888 = vadd.f32 %v730, %v848
    %v889 = vadd.f32 %v731, %v851
    %v890 = vadd.f32 %v732, %v854
    %v891 = vadd.f32 %v733, %v857
    %v892 = vadd.f32 %v734, %v860
    %v893 = vlaneseq
    %v894 = vshrl.u32 %v893, 7
    %v895 = vsub.s32 5, %v894
    %v896 = vrot.slane %v223, %v895
    %v897 = vmul.f32 %v233, %v896
    %v898 = vmul.f32 %v342, %v896
    %v899 = vmul.f32 %v238, %v896
    %v900 = vmul.f32 %v347, %v896
    %v901 = vmul.f32 %v243, %v896
    %v902 = vmul.f32 %v352, %v896
    %v903 = vmul.f32 %v248, %v896
    %v904 = vmul.f32 %v357, %v896
    %v905 = vmul.f32 %v253, %v896
    %v906 = vmul.f32 %v362, %v896
    %v907 = vmul.f32 %v258, %v896
    %v908 = vmul.f32 %v367, %v896
    %v909 = vmul.f32 %v263, %v896
    %v910 = vmul.f32 %v372, %v896
    %v911 = vmul.f32 %v692, %v896
    %v912 = vmul.f32 %v738, %v896
    %v913 = vmul.f32 %v268, %v896
    %v914 = vmul.f32 %v377, %v896
    %v915 = vmul.f32 %v273, %v896
    %v916 = vmul.f32 %v382, %v896
    %v917 = vmul.f32 %v278, %v896
    %v918 = vmul.f32 %v387, %v896
    %v919 = vmul.f32 %v283, %v896
    %v920 = vmul.f32 %v392, %v896
    %v921 = vmul.f32 %v288, %v896
    %v922 = vmul.f32 %v397, %v896
    %v923 = vmul.f32 %v293, %v896
    %v924 = vmul.f32 %v402, %v896
    %v925 = vmul.f32 %v298, %v896
    %v926 = vmul.f32 %v407, %v896
    %v927 = vmul.f32 %v697, %v896
    %v928 = vmul.f32 %v743, %v896
    %v961 = vrot.slane %v897, 2
    %v962 = vrot.slane %v898, 2
    %v963 = vsel %vm613, %v961, %v962
    %v964 = vrot.slane %v899, 2
    %v965 = vrot.slane %v900, 2
    %v966 = vsel %vm613, %v964, %v965
    %v967 = vrot.slane %v901, 2
    %v968 = vrot.slane %v902, 2
    %v969 = vsel %vm613, %v967, %v968
    %v970 = vrot.slane %v903, 2
    %v971 = vrot.slane %v904, 2
    %v972 = vsel %vm613, %v970, %v971
    %v973 = vrot.slane %v905, 2
    %v974 = vrot.slane %v906, 2
    %v975 = vsel %vm613, %v973, %v974
    %v976 = vrot.slane %v907, 2
    %v977 = vrot.slane %v908, 2
    %v978 = vsel %vm613, %v976, %v977
    %v979 = vrot.slane %v909, 2
    %v980 = vrot.slane %v910, 2
    %v981 = vsel %vm613, %v979, %v980
    %v982 = vrot.slane %v911, 2
    %v983 = vrot.slane %v912, 2
    %v984 = vsel %vm613, %v982, %v983
    %v985 = vrot.slane %v913, 2
    %v986 = vrot.slane %v914, 2
    %v987 = vsel %vm613, %v985, %v986
    %v988 = vrot.slane %v915, 2
    %v989 = vrot.slane %v916, 2
    %v990 = vsel %vm613, %v988, %v989
    %v991 = vrot.slane %v917, 2
    %v992 = vrot.slane %v918, 2
    %v993 = vsel %vm613, %v991, %v992
    %v994 = vrot.slane %v919, 2
    %v995 = vrot.slane %v920, 2
    %v996 = vsel %vm613, %v994, %v995
    %v997 = vrot.slane %v921, 2
    %v998 = vrot.slane %v922, 2
    %v999 = vsel %vm613, %v997, %v998
    %v1000 = vrot.slane %v923, 2
    %v1001 = vrot.slane %v924, 2
    %v1002 = vsel %vm613, %v1000, %v1001
    %v1003 = vrot.slane %v925, 2
    %v1004 = vrot.slane %v926, 2
    %v1005 = vsel %vm613, %v1003, %v1004
    %v1006 = vrot.slane %v927, 2
    %v1007 = vrot.slane %v928, 2
    %v1008 = vsel %vm613, %v1006, %v1007
    %v1025 = vadd.f32 %v877, %v963
    %v1026 = vadd.f32 %v878, %v966
    %v1027 = vadd.f32 %v879, %v969
    %v1028 = vadd.f32 %v880, %v972
    %v1029 = vadd.f32 %v881, %v975
    %v1030 = vadd.f32 %v882, %v978
    %v1031 = vadd.f32 %v883, %v981
    %v1032 = vadd.f32 %v884, %v984
    %v1033 = vadd.f32 %v885, %v987
    %v1034 = vadd.f32 %v886, %v990
    %v1035 = vadd.f32 %v887, %v993
    %v1036 = vadd.f32 %v888, %v996
    %v1037 = vadd.f32 %v889, %v999
    %v1038 = vadd.f32 %v890, %v1002
    %v1039 = vadd.f32 %v891, %v1005
    %v1040 = vadd.f32 %v892, %v1008
    %v1041 = vlaneseq
    %v1042 = vshrl.u32 %v1041, 7
    %v1043 = vsub.s32 6, %v1042
    %v1044 = vrot.slane %v223, %v1043
    %v1045 = vmul.f32 %v238, %v1044
    %v1046 = vmul.f32 %v243, %v1044
    %v1047 = vmul.f32 %v248, %v1044
    %v1048 = vmul.f32 %v253, %v1044
    %v1049 = vmul.f32 %v258, %v1044
    %v1050 = vmul.f32 %v263, %v1044
    %v1051 = vmul.f32 %v692, %v1044
    %v1052 = vmul.f32 %v228, %v1044
    %v1053 = vmul.f32 %v273, %v1044
    %v1054 = vmul.f32 %v278, %v1044
    %v1055 = vmul.f32 %v283, %v1044
    %v1056 = vmul.f32 %v288, %v1044
    %v1057 = vmul.f32 %v293, %v1044
    %v1058 = vmul.f32 %v298, %v1044
    %v1059 = vmul.f32 %v697, %v1044
    %v1060 = vadd.f32 %v1025, %v1045
    %v1061 = vadd.f32 %v1026, %v1046
    %v1062 = vadd.f32 %v1027, %v1047
    %v1063 = vadd.f32 %v1028, %v1048
    %v1064 = vadd.f32 %v1029, %v1049
    %v1065 = vadd.f32 %v1030, %v1050
    %v1066 = vadd.f32 %v1031, %v1051
    %v1067 = vadd.f32 %v1032, %v1052
    %v1068 = vadd.f32 %v1033, %v1053
    %v1069 = vadd.f32 %v1034, %v1054
    %v1070 = vadd.f32 %v1035, %v1055
    %v1071 = vadd.f32 %v1036, %v1056
    %v1072 = vadd.f32 %v1037, %v1057
    %v1073 = vadd.f32 %v1038, %v1058
    %v1074 = vadd.f32 %v1039, %v1059
    %v1075 = vadd.f32 %v1040, %v1052
    %v1076 = vlaneseq
    %v1077 = vshrl.u32 %v1076, 7
    %v1078 = vsub.s32 7, %v1077
    %v1079 = vrot.slane %v223, %v1078
    %v1080 = vmul.f32 %v238, %v1079
    %v1081 = vmul.f32 %v347, %v1079
    %v1082 = vmul.f32 %v243, %v1079
    %v1083 = vmul.f32 %v352, %v1079
    %v1084 = vmul.f32 %v248, %v1079
    %v1085 = vmul.f32 %v357, %v1079
    %v1086 = vmul.f32 %v253, %v1079
    %v1087 = vmul.f32 %v362, %v1079
    %v1088 = vmul.f32 %v258, %v1079
    %v1089 = vmul.f32 %v367, %v1079
    %v1090 = vmul.f32 %v263, %v1079
    %v1091 = vmul.f32 %v372, %v1079
    %v1092 = vmul.f32 %v692, %v1079
    %v1093 = vmul.f32 %v738, %v1079
    %v1094 = vmul.f32 %v228, %v1079
    %v1095 = vmul.f32 %v337, %v1079
    %v1096 = vmul.f32 %v273, %v1079
    %v1097 = vmul.f32 %v382, %v1079
    %v1098 = vmul.f32 %v278, %v1079
    %v1099 = vmul.f32 %v387, %v1079
    %v1100 = vmul.f32 %v283, %v1079
    %v1101 = vmul.f32 %v392, %v1079
    %v1102 = vmul.f32 %v288, %v1079
    %v1103 = vmul.f32 %v397, %v1079
    %v1104 = vmul.f32 %v293, %v1079
    %v1105 = vmul.f32 %v402, %v1079
    %v1106 = vmul.f32 %v298, %v1079
    %v1107 = vmul.f32 %v407, %v1079
    %v1108 = vmul.f32 %v697, %v1079
    %v1109 = vmul.f32 %v743, %v1079
    %v1140 = vrot.slane %v1080, 1
    %v1141 = vrot.slane %v1081, 1
    %v1142 = vsel %vm473, %v1140, %v1141
    %v1143 = vrot.slane %v1082, 1
    %v1144 = vrot.slane %v1083, 1
    %v1145 = vsel %vm473, %v1143, %v1144
    %v1146 = vrot.slane %v1084, 1
    %v1147 = vrot.slane %v1085, 1
    %v1148 = vsel %vm473, %v1146, %v1147
    %v1149 = vrot.slane %v1086, 1
    %v1150 = vrot.slane %v1087, 1
    %v1151 = vsel %vm473, %v1149, %v1150
    %v1152 = vrot.slane %v1088, 1
    %v1153 = vrot.slane %v1089, 1
    %v1154 = vsel %vm473, %v1152, %v1153
    %v1155 = vrot.slane %v1090, 1
    %v1156 = vrot.slane %v1091, 1
    %v1157 = vsel %vm473, %v1155, %v1156
    %v1158 = vrot.slane %v1092, 1
    %v1159 = vrot.slane %v1093, 1
    %v1160 = vsel %vm473, %v1158, %v1159
    %v1161 = vrot.slane %v1094, 1
    %v1162 = vrot.slane %v1095, 1
    %v1163 = vsel %vm473, %v1161, %v1162
    %v1164 = vrot.slane %v1096, 1
    %v1165 = vrot.slane %v1097, 1
    %v1166 = vsel %vm473, %v1164, %v1165
    %v1167 = vrot.slane %v1098, 1
    %v1168 = vrot.slane %v1099, 1
    %v1169 = vsel %vm473, %v1167, %v1168
    %v1170 = vrot.slane %v1100, 1
    %v1171 = vrot.slane %v1101, 1
    %v1172 = vsel %vm473, %v1170, %v1171
    %v1173 = vrot.slane %v1102, 1
    %v1174 = vrot.slane %v1103, 1
    %v1175 = vsel %vm473, %v1173, %v1174
    %v1176 = vrot.slane %v1104, 1
    %v1177 = vrot.slane %v1105, 1
    %v1178 = vsel %vm473, %v1176, %v1177
    %v1179 = vrot.slane %v1106, 1
    %v1180 = vrot.slane %v1107, 1
    %v1181 = vsel %vm473, %v1179, %v1180
    %v1182 = vrot.slane %v1108, 1
    %v1183 = vrot.slane %v1109, 1
    %v1184 = vsel %vm473, %v1182, %v1183
    %v1200 = vadd.f32 %v1060, %v1142
    %v1201 = vadd.f32 %v1061, %v1145
    %v1202 = vadd.f32 %v1062, %v1148
    %v1203 = vadd.f32 %v1063, %v1151
    %v1204 = vadd.f32 %v1064, %v1154
    %v1205 = vadd.f32 %v1065, %v1157
    %v1206 = vadd.f32 %v1066, %v1160
    %v1207 = vadd.f32 %v1067, %v1163
    %v1208 = vadd.f32 %v1068, %v1166
    %v1209 = vadd.f32 %v1069, %v1169
    %v1210 = vadd.f32 %v1070, %v1172
    %v1211 = vadd.f32 %v1071, %v1175
    %v1212 = vadd.f32 %v1072, %v1178
    %v1213 = vadd.f32 %v1073, %v1181
    %v1214 = vadd.f32 %v1074, %v1184
    %v1215 = vadd.f32 %v1075, %v1163
    %v1216 = vlaneseq
    %v1217 = vshrl.u32 %v1216, 7
    %v1218 = vsub.s32 0, %v1217
    %v1219 = vrot.slane %v224, %v1218
    %v1220 = vmul.f32 %v238, %v1219
    %v1221 = vmul.f32 %v347, %v1219
    %v1222 = vmul.f32 %v243, %v1219
    %v1223 = vmul.f32 %v352, %v1219
    %v1224 = vmul.f32 %v248, %v1219
    %v1225 = vmul.f32 %v357, %v1219
    %v1226 = vmul.f32 %v253, %v1219
    %v1227 = vmul.f32 %v362, %v1219
    %v1228 = vmul.f32 %v258, %v1219
    %v1229 = vmul.f32 %v367, %v1219
    %v1230 = vmul.f32 %v263, %v1219
    %v1231 = vmul.f32 %v372, %v1219
    %v1232 = vmul.f32 %v692, %v1219
    %v1233 = vmul.f32 %v738, %v1219
    %v1234 = vmul.f32 %v228, %v1219
    %v1235 = vmul.f32 %v337, %v1219
    %v1236 = vmul.f32 %v273, %v1219
    %v1237 = vmul.f32 %v382, %v1219
    %v1238 = vmul.f32 %v278, %v1219
    %v1239 = vmul.f32 %v387, %v1219
    %v1240 = vmul.f32 %v283, %v1219
    %v1241 = vmul.f32 %v392, %v1219
    %v1242 = vmul.f32 %v288, %v1219
    %v1243 = vmul.f32 %v397, %v1219
    %v1244 = vmul.f32 %v293, %v1219
    %v1245 = vmul.f32 %v402, %v1219
    %v1246 = vmul.f32 %v298, %v1219
    %v1247 = vmul.f32 %v407, %v1219
    %v1248 = vmul.f32 %v697, %v1219
    %v1249 = vmul.f32 %v743, %v1219
    %v1280 = vrot.slane %v1220, 2
    %v1281 = vrot.slane %v1221, 2
    %v1282 = vsel %vm613, %v1280, %v1281
    %v1283 = vrot.slane %v1222, 2
    %v1284 = vrot.slane %v1223, 2
    %v1285 = vsel %vm613, %v1283, %v1284
    %v1286 = vrot.slane %v1224, 2
    %v1287 = vrot.slane %v1225, 2
    %v1288 = vsel %vm613, %v1286, %v1287
    %v1289 = vrot.slane %v1226, 2
    %v1290 = vrot.slane %v1227, 2
    %v1291 = vsel %vm613, %v1289, %v1290
    %v1292 = vrot.slane %v1228, 2
    %v1293 = vrot.slane %v1229, 2
    %v1294 = vsel %vm613, %v1292, %v1293
    %v1295 = vrot.slane %v1230, 2
    %v1296 = vrot.slane %v1231, 2
    %v1297 = vsel %vm613, %v1295, %v1296
    %v1298 = vrot.slane %v1232, 2
    %v1299 = vrot.slane %v1233, 2
    %v1300 = vsel %vm613, %v1298, %v1299
    %v1301 = vrot.slane %v1234, 2
    %v1302 = vrot.slane %v1235, 2
    %v1303 = vsel %vm613, %v1301, %v1302
    %v1304 = vrot.slane %v1236, 2
    %v1305 = vrot.slane %v1237, 2
    %v1306 = vsel %vm613, %v1304, %v1305
    %v1307 = vrot.slane %v1238, 2
    %v1308 = vrot.slane %v1239, 2
    %v1309 = vsel %vm613, %v1307, %v1308
    %v1310 = vrot.slane %v1240, 2
    %v1311 = vrot.slane %v1241, 2
    %v1312 = vsel %vm613, %v1310, %v1311
    %v1313 = vrot.slane %v1242, 2
    %v1314 = vrot.slane %v1243, 2
    %v1315 = vsel %vm613, %v1313, %v1314
    %v1316 = vrot.slane %v1244, 2
    %v1317 = vrot.slane %v1245, 2
    %v1318 = vsel %vm613, %v1316, %v1317
    %v1319 = vrot.slane %v1246, 2
    %v1320 = vrot.slane %v1247, 2
    %v1321 = vsel %vm613, %v1319, %v1320
    %v1322 = vrot.slane %v1248, 2
    %v1323 = vrot.slane %v1249, 2
    %v1324 = vsel %vm613, %v1322, %v1323
    %v1340 = vadd.f32 %v1200, %v1282
    %v1341 = vadd.f32 %v1201, %v1285
    %v1342 = vadd.f32 %v1202, %v1288
    %v1343 = vadd.f32 %v1203, %v1291
    %v1344 = vadd.f32 %v1204, %v1294
    %v1345 = vadd.f32 %v1205, %v1297
    %v1346 = vadd.f32 %v1206, %v1300
    %v1347 = vadd.f32 %v1207, %v1303
    %v1348 = vadd.f32 %v1208, %v1306
    %v1349 = vadd.f32 %v1209, %v1309
    %v1350 = vadd.f32 %v1210, %v1312
    %v1351 = vadd.f32 %v1211, %v1315
    %v1352 = vadd.f32 %v1212, %v1318
    %v1353 = vadd.f32 %v1213, %v1321
    %v1354 = vadd.f32 %v1214, %v1324
    %v1355 = vadd.f32 %v1215, %v1303
    %v1356 = vld [vmem:[#allocation6] sm:$0x1]
    %v1358 = vlaneseq
    %v1359 = vshrl.u32 %v1358, 7
    %v1360 = vsub.s32 0, %v1359
    %v1361 = vrot.slane %v1356, %v1360
    %v1363 = vadd.f32 %v1340, %v1361
    %v1364 = vadd.f32 %v1341, %v1361
    %v1365 = vadd.f32 %v1342, %v1361
    %v1366 = vadd.f32 %v1343, %v1361
    %v1367 = vadd.f32 %v1344, %v1361
    %v1368 = vadd.f32 %v1345, %v1361
    %v1369 = vadd.f32 %v1346, %v1361
    %v1370 = vadd.f32 %v1347, %v1361
    %v1371 = vadd.f32 %v1348, %v1361
    %v1372 = vadd.f32 %v1349, %v1361
    %v1373 = vadd.f32 %v1350, %v1361
    %v1374 = vadd.f32 %v1351, %v1361
    %v1375 = vadd.f32 %v1352, %v1361
    %v1376 = vadd.f32 %v1353, %v1361
    %v1377 = vadd.f32 %v1354, %v1361
    %v1378 = vadd.f32 %v1355, %v1361
    %v1379 = vmax.f32 %v1363, 0.0
    %v1380 = vmax.f32 %v1364, 0.0
    %v1381 = vmax.f32 %v1365, 0.0
    %v1382 = vmax.f32 %v1366, 0.0
    %v1383 = vmax.f32 %v1367, 0.0
    %v1384 = vmax.f32 %v1368, 0.0
    %v1385 = vmax.f32 %v1369, 0.0
    %v1386 = vmax.f32 %v1370, 0.0
    %v1387 = vmax.f32 %v1371, 0.0
    %v1388 = vmax.f32 %v1372, 0.0
    %v1389 = vmax.f32 %v1373, 0.0
    %v1390 = vmax.f32 %v1374, 0.0
    %v1391 = vmax.f32 %v1375, 0.0
    %v1392 = vmax.f32 %v1376, 0.0
    %v1393 = vmax.f32 %v1377, 0.0
    %v1394 = vmax.f32 %v1378, 0.0
    %v1411 = vrot.slane %v1379, 7
    %v1412 = vrot.slane %v1380, 7
    %v1413 = vrot.slane %v1381, 7
    %v1414 = vrot.slane %v1382, 7
    %v1415 = vrot.slane %v1383, 7
    %v1416 = vrot.slane %v1384, 7
    %v1417 = vrot.slane %v1385, 7
    %v1418 = vrot.slane %v1386, 7
    %v1419 = vrot.slane %v1387, 7
    %v1420 = vrot.slane %v1388, 7
    %v1421 = vrot.slane %v1389, 7
    %v1422 = vrot.slane %v1390, 7
    %v1423 = vrot.slane %v1391, 7
    %v1424 = vrot.slane %v1392, 7
    %v1425 = vrot.slane %v1393, 7
    %v1426 = vrot.slane %v1394, 7
    %v1443 = vsel %vm188, 0.0, %v1411
    %v1444 = vsel %vm188, 0.0, %v1412
    %v1445 = vsel %vm188, 0.0, %v1413
    %v1446 = vsel %vm188, 0.0, %v1414
    %v1447 = vsel %vm188, 0.0, %v1415
    %v1448 = vsel %vm188, 0.0, %v1416
    %v1449 = vsel %vm188, 0.0, %v1417
    %v1450 = vsel %vm188, 0.0, %v1418
    %v1451 = vsel %vm188, 0.0, %v1419
    %v1452 = vsel %vm188, 0.0, %v1420
    %v1453 = vsel %vm188, 0.0, %v1421
    %v1454 = vsel %vm188, 0.0, %v1422
    %v1455 = vsel %vm188, 0.0, %v1423
    %v1456 = vsel %vm188, 0.0, %v1424
    %v1457 = vsel %vm188, 0.0, %v1425
    %v1458 = vsel %vm188, 0.0, %v1426
    %v1459 = vsel %vm188, %v1411, 0.0
    %v1460 = vsel %vm188, %v1412, 0.0
    %v1461 = vsel %vm188, %v1413, 0.0
    %v1462 = vsel %vm188, %v1414, 0.0
    %v1463 = vsel %vm188, %v1415, 0.0
    %v1464 = vsel %vm188, %v1416, 0.0
    %v1465 = vsel %vm188, %v1417, 0.0
    %v1466 = vsel %vm188, %v1418, 0.0
    %v1467 = vsel %vm188, %v1419, 0.0
    %v1468 = vsel %vm188, %v1420, 0.0
    %v1469 = vsel %vm188, %v1421, 0.0
    %v1470 = vsel %vm188, %v1422, 0.0
    %v1471 = vsel %vm188, %v1423, 0.0
    %v1472 = vsel %vm188, %v1424, 0.0
    %v1473 = vsel %vm188, %v1425, 0.0
    %v1474 = vsel %vm188, %v1426, 0.0
    %v1503 = vrot.slane %v189, 1
    %v1504 = vrot.slane %v206, 1
    %v1505 = vsel %vm473, %v1503, %v1504
    %v1506 = vrot.slane %v1443, 1
    %v1507 = vrot.slane %v1459, 1
    %v1508 = vsel %vm473, %v1506, %v1507
    %v1509 = vrot.slane %v1444, 1
    %v1510 = vrot.slane %v1460, 1
    %v1511 = vsel %vm473, %v1509, %v1510
    %v1512 = vrot.slane %v1445, 1
    %v1513 = vrot.slane %v1461, 1
    %v1514 = vsel %vm473, %v1512, %v1513
    %v1515 = vrot.slane %v1446, 1
    %v1516 = vrot.slane %v1462, 1
    %v1517 = vsel %vm473, %v1515, %v1516
    %v1518 = vrot.slane %v1447, 1
    %v1519 = vrot.slane %v1463, 1
    %v1520 = vsel %vm473, %v1518, %v1519
    %v1521 = vrot.slane %v1448, 1
    %v1522 = vrot.slane %v1464, 1
    %v1523 = vsel %vm473, %v1521, %v1522
    %v1524 = vrot.slane %v1449, 1
    %v1525 = vrot.slane %v1465, 1
    %v1526 = vsel %vm473, %v1524, %v1525
    %v1527 = vrot.slane %v1451, 1
    %v1528 = vrot.slane %v1467, 1
    %v1529 = vsel %vm473, %v1527, %v1528
    %v1530 = vrot.slane %v1452, 1
    %v1531 = vrot.slane %v1468, 1
    %v1532 = vsel %vm473, %v1530, %v1531
    %v1533 = vrot.slane %v1453, 1
    %v1534 = vrot.slane %v1469, 1
    %v1535 = vsel %vm473, %v1533, %v1534
    %v1536 = vrot.slane %v1454, 1
    %v1537 = vrot.slane %v1470, 1
    %v1538 = vsel %vm473, %v1536, %v1537
    %v1539 = vrot.slane %v1455, 1
    %v1540 = vrot.slane %v1471, 1
    %v1541 = vsel %vm473, %v1539, %v1540
    %v1542 = vrot.slane %v1456, 1
    %v1543 = vrot.slane %v1472, 1
    %v1544 = vsel %vm473, %v1542, %v1543
    %v1545 = vrot.slane %v1457, 1
    %v1546 = vrot.slane %v1473, 1
    %v1547 = vsel %vm473, %v1545, %v1546
    %v1548 = vrot.slane %v189, 2
    %v1549 = vrot.slane %v206, 2
    %v1550 = vsel %vm613, %v1548, %v1549
    %v1551 = vrot.slane %v1443, 2
    %v1552 = vrot.slane %v1459, 2
    %v1553 = vsel %vm613, %v1551, %v1552
    %v1554 = vrot.slane %v1444, 2
    %v1555 = vrot.slane %v1460, 2
    %v1556 = vsel %vm613, %v1554, %v1555
    %v1557 = vrot.slane %v1445, 2
    %v1558 = vrot.slane %v1461, 2
    %v1559 = vsel %vm613, %v1557, %v1558
    %v1560 = vrot.slane %v1446, 2
    %v1561 = vrot.slane %v1462, 2
    %v1562 = vsel %vm613, %v1560, %v1561
    %v1563 = vrot.slane %v1447, 2
    %v1564 = vrot.slane %v1463, 2
    %v1565 = vsel %vm613, %v1563, %v1564
    %v1566 = vrot.slane %v1448, 2
    %v1567 = vrot.slane %v1464, 2
    %v1568 = vsel %vm613, %v1566, %v1567
    %v1569 = vrot.slane %v1449, 2
    %v1570 = vrot.slane %v1465, 2
    %v1571 = vsel %vm613, %v1569, %v1570
    %v1572 = vrot.slane %v1451, 2
    %v1573 = vrot.slane %v1467, 2
    %v1574 = vsel %vm613, %v1572, %v1573
    %v1575 = vrot.slane %v1452, 2
    %v1576 = vrot.slane %v1468, 2
    %v1577 = vsel %vm613, %v1575, %v1576
    %v1578 = vrot.slane %v1453, 2
    %v1579 = vrot.slane %v1469, 2
    %v1580 = vsel %vm613, %v1578, %v1579
    %v1581 = vrot.slane %v1454, 2
    %v1582 = vrot.slane %v1470, 2
    %v1583 = vsel %vm613, %v1581, %v1582
    %v1584 = vrot.slane %v1455, 2
    %v1585 = vrot.slane %v1471, 2
    %v1586 = vsel %vm613, %v1584, %v1585
    %v1587 = vrot.slane %v1456, 2
    %v1588 = vrot.slane %v1472, 2
    %v1589 = vsel %vm613, %v1587, %v1588
    %v1590 = vrot.slane %v1457, 2
    %v1591 = vrot.slane %v1473, 2
    %v1592 = vsel %vm613, %v1590, %v1591
    %v1597 = vrot.slane %v1450, 1
    %v1598 = vrot.slane %v1466, 1
    %v1599 = vsel %vm473, %v1597, %v1598
    %v1600 = vrot.slane %v1458, 1
    %v1601 = vrot.slane %v1474, 1
    %v1602 = vsel %vm473, %v1600, %v1601
    %v1619 = vrot.slane %v1450, 2
    %v1620 = vrot.slane %v1466, 2
    %v1621 = vsel %vm613, %v1619, %v1620
    %v1622 = vrot.slane %v1458, 2
    %v1623 = vrot.slane %v1474, 2
    %v1624 = vsel %vm613, %v1622, %v1623
    %1640 = vrot.lane.b32.xlu0 %v1505, 32
    %v1641 = vpop.permute.xlu0 %1640
    %1642 = vrot.lane.b32.xlu0 %v1508, 32
    %v1643 = vpop.permute.xlu0 %1642
    %1644 = vrot.lane.b32.xlu0 %v1511, 32
    %v1645 = vpop.permute.xlu0 %1644
    %1646 = vrot.lane.b32.xlu0 %v1514, 32
    %v1647 = vpop.permute.xlu0 %1646
    %1648 = vrot.lane.b32.xlu0 %v1517, 32
    %v1649 = vpop.permute.xlu0 %1648
    %1650 = vrot.lane.b32.xlu0 %v1520, 32
    %v1651 = vpop.permute.xlu0 %1650
    %1652 = vrot.lane.b32.xlu0 %v1523, 32
    %v1653 = vpop.permute.xlu0 %1652
    %1654 = vrot.lane.b32.xlu0 %v1526, 32
    %v1655 = vpop.permute.xlu0 %1654
    %1656 = vrot.lane.b32.xlu0 %v1529, 32
    %v1657 = vpop.permute.xlu0 %1656
    %1658 = vrot.lane.b32.xlu0 %v1532, 32
    %v1659 = vpop.permute.xlu0 %1658
    %1660 = vrot.lane.b32.xlu0 %v1535, 32
    %v1661 = vpop.permute.xlu0 %1660
    %1662 = vrot.lane.b32.xlu0 %v1538, 32
    %v1663 = vpop.permute.xlu0 %1662
    %1664 = vrot.lane.b32.xlu0 %v1541, 32
    %v1665 = vpop.permute.xlu0 %1664
    %1666 = vrot.lane.b32.xlu0 %v1544, 32
    %v1667 = vpop.permute.xlu0 %1666
    %1668 = vrot.lane.b32.xlu0 %v1547, 32
    %v1669 = vpop.permute.xlu0 %1668
    %1685 = vrot.lane.b32.xlu0 %v1550, 64
    %v1686 = vpop.permute.xlu0 %1685
    %1687 = vrot.lane.b32.xlu0 %v1553, 64
    %v1688 = vpop.permute.xlu0 %1687
    %1689 = vrot.lane.b32.xlu0 %v1556, 64
    %v1690 = vpop.permute.xlu0 %1689
    %1691 = vrot.lane.b32.xlu0 %v1559, 64
    %v1692 = vpop.permute.xlu0 %1691
    %1693 = vrot.lane.b32.xlu0 %v1562, 64
    %v1694 = vpop.permute.xlu0 %1693
    %1695 = vrot.lane.b32.xlu0 %v1565, 64
    %v1696 = vpop.permute.xlu0 %1695
    %1697 = vrot.lane.b32.xlu0 %v1568, 64
    %v1698 = vpop.permute.xlu0 %1697
    %1699 = vrot.lane.b32.xlu0 %v1571, 64
    %v1700 = vpop.permute.xlu0 %1699
    %1701 = vrot.lane.b32.xlu0 %v1574, 64
    %v1702 = vpop.permute.xlu0 %1701
    %1703 = vrot.lane.b32.xlu0 %v1577, 64
    %v1704 = vpop.permute.xlu0 %1703
    %1705 = vrot.lane.b32.xlu0 %v1580, 64
    %v1706 = vpop.permute.xlu0 %1705
    %1707 = vrot.lane.b32.xlu0 %v1583, 64
    %v1708 = vpop.permute.xlu0 %1707
    %1709 = vrot.lane.b32.xlu0 %v1586, 64
    %v1710 = vpop.permute.xlu0 %1709
    %1711 = vrot.lane.b32.xlu0 %v1589, 64
    %v1712 = vpop.permute.xlu0 %1711
    %1713 = vrot.lane.b32.xlu0 %v1592, 64
    %v1714 = vpop.permute.xlu0 %1713
    %1730 = vrot.lane.b32.xlu0 %v1443, 96
    %v1731 = vpop.permute.xlu0 %1730
    %1732 = vrot.lane.b32.xlu0 %v1444, 96
    %v1733 = vpop.permute.xlu0 %1732
    %1734 = vrot.lane.b32.xlu0 %v1445, 96
    %v1735 = vpop.permute.xlu0 %1734
    %1736 = vrot.lane.b32.xlu0 %v1446, 96
    %v1737 = vpop.permute.xlu0 %1736
    %1738 = vrot.lane.b32.xlu0 %v1447, 96
    %v1739 = vpop.permute.xlu0 %1738
    %1740 = vrot.lane.b32.xlu0 %v1448, 96
    %v1741 = vpop.permute.xlu0 %1740
    %1742 = vrot.lane.b32.xlu0 %v1449, 96
    %v1743 = vpop.permute.xlu0 %1742
    %1744 = vrot.lane.b32.xlu0 %v1450, 96
    %v1745 = vpop.permute.xlu0 %1744
    %1746 = vrot.lane.b32.xlu0 %v1451, 96
    %v1747 = vpop.permute.xlu0 %1746
    %1748 = vrot.lane.b32.xlu0 %v1452, 96
    %v1749 = vpop.permute.xlu0 %1748
    %1750 = vrot.lane.b32.xlu0 %v1453, 96
    %v1751 = vpop.permute.xlu0 %1750
    %1752 = vrot.lane.b32.xlu0 %v1454, 96
    %v1753 = vpop.permute.xlu0 %1752
    %1754 = vrot.lane.b32.xlu0 %v1455, 96
    %v1755 = vpop.permute.xlu0 %1754
    %1756 = vrot.lane.b32.xlu0 %v1456, 96
    %v1757 = vpop.permute.xlu0 %1756
    %1758 = vrot.lane.b32.xlu0 %v1457, 96
    %v1759 = vpop.permute.xlu0 %1758
    %1760 = vrot.lane.b32.xlu0 %v1458, 96
    %v1761 = vpop.permute.xlu0 %1760
    %1778 = vrot.lane.b32.xlu0 %v1553, 32
    %v1779 = vpop.permute.xlu0 %1778
    %1780 = vrot.lane.b32.xlu0 %v1556, 32
    %v1781 = vpop.permute.xlu0 %1780
    %1782 = vrot.lane.b32.xlu0 %v1559, 32
    %v1783 = vpop.permute.xlu0 %1782
    %1784 = vrot.lane.b32.xlu0 %v1562, 32
    %v1785 = vpop.permute.xlu0 %1784
    %1786 = vrot.lane.b32.xlu0 %v1565, 32
    %v1787 = vpop.permute.xlu0 %1786
    %1788 = vrot.lane.b32.xlu0 %v1568, 32
    %v1789 = vpop.permute.xlu0 %1788
    %1790 = vrot.lane.b32.xlu0 %v1571, 32
    %v1791 = vpop.permute.xlu0 %1790
    %1792 = vrot.lane.b32.xlu0 %v1621, 32
    %v1793 = vpop.permute.xlu0 %1792
    %1794 = vrot.lane.b32.xlu0 %v1574, 32
    %v1795 = vpop.permute.xlu0 %1794
    %1796 = vrot.lane.b32.xlu0 %v1577, 32
    %v1797 = vpop.permute.xlu0 %1796
    %1798 = vrot.lane.b32.xlu0 %v1580, 32
    %v1799 = vpop.permute.xlu0 %1798
    %1800 = vrot.lane.b32.xlu0 %v1583, 32
    %v1801 = vpop.permute.xlu0 %1800
    %1802 = vrot.lane.b32.xlu0 %v1586, 32
    %v1803 = vpop.permute.xlu0 %1802
    %1804 = vrot.lane.b32.xlu0 %v1589, 32
    %v1805 = vpop.permute.xlu0 %1804
    %1806 = vrot.lane.b32.xlu0 %v1592, 32
    %v1807 = vpop.permute.xlu0 %1806
    %1808 = vrot.lane.b32.xlu0 %v1624, 32
    %v1809 = vpop.permute.xlu0 %1808
    %1826 = vrot.lane.b32.xlu0 %v1444, 64
    %v1827 = vpop.permute.xlu0 %1826
    %1828 = vrot.lane.b32.xlu0 %v1445, 64
    %v1829 = vpop.permute.xlu0 %1828
    %1830 = vrot.lane.b32.xlu0 %v1446, 64
    %v1831 = vpop.permute.xlu0 %1830
    %1832 = vrot.lane.b32.xlu0 %v1447, 64
    %v1833 = vpop.permute.xlu0 %1832
    %1834 = vrot.lane.b32.xlu0 %v1448, 64
    %v1835 = vpop.permute.xlu0 %1834
    %1836 = vrot.lane.b32.xlu0 %v1449, 64
    %v1837 = vpop.permute.xlu0 %1836
    %1838 = vrot.lane.b32.xlu0 %v1450, 64
    %v1839 = vpop.permute.xlu0 %1838
    %1840 = vrot.lane.b32.xlu0 %v189, 64
    %v1841 = vpop.permute.xlu0 %1840
    %1842 = vrot.lane.b32.xlu0 %v1452, 64
    %v1843 = vpop.permute.xlu0 %1842
    %1844 = vrot.lane.b32.xlu0 %v1453, 64
    %v1845 = vpop.permute.xlu0 %1844
    %1846 = vrot.lane.b32.xlu0 %v1454, 64
    %v1847 = vpop.permute.xlu0 %1846
    %1848 = vrot.lane.b32.xlu0 %v1455, 64
    %v1849 = vpop.permute.xlu0 %1848
    %1850 = vrot.lane.b32.xlu0 %v1456, 64
    %v1851 = vpop.permute.xlu0 %1850
    %1852 = vrot.lane.b32.xlu0 %v1457, 64
    %v1853 = vpop.permute.xlu0 %1852
    %1854 = vrot.lane.b32.xlu0 %v1458, 64
    %v1855 = vpop.permute.xlu0 %1854
    %1871 = vrot.lane.b32.xlu0 %v1511, 96
    %v1872 = vpop.permute.xlu0 %1871
    %1873 = vrot.lane.b32.xlu0 %v1514, 96
    %v1874 = vpop.permute.xlu0 %1873
    %1875 = vrot.lane.b32.xlu0 %v1517, 96
    %v1876 = vpop.permute.xlu0 %1875
    %1877 = vrot.lane.b32.xlu0 %v1520, 96
    %v1878 = vpop.permute.xlu0 %1877
    %1879 = vrot.lane.b32.xlu0 %v1523, 96
    %v1880 = vpop.permute.xlu0 %1879
    %1881 = vrot.lane.b32.xlu0 %v1526, 96
    %v1882 = vpop.permute.xlu0 %1881
    %1883 = vrot.lane.b32.xlu0 %v1599, 96
    %v1884 = vpop.permute.xlu0 %1883
    %1885 = vrot.lane.b32.xlu0 %v1505, 96
    %v1886 = vpop.permute.xlu0 %1885
    %1887 = vrot.lane.b32.xlu0 %v1532, 96
    %v1888 = vpop.permute.xlu0 %1887
    %1889 = vrot.lane.b32.xlu0 %v1535, 96
    %v1890 = vpop.permute.xlu0 %1889
    %1891 = vrot.lane.b32.xlu0 %v1538, 96
    %v1892 = vpop.permute.xlu0 %1891
    %1893 = vrot.lane.b32.xlu0 %v1541, 96
    %v1894 = vpop.permute.xlu0 %1893
    %1895 = vrot.lane.b32.xlu0 %v1544, 96
    %v1896 = vpop.permute.xlu0 %1895
    %1897 = vrot.lane.b32.xlu0 %v1547, 96
    %v1898 = vpop.permute.xlu0 %1897
    %1899 = vrot.lane.b32.xlu0 %v1602, 96
    %v1900 = vpop.permute.xlu0 %1899
    %vm1916 = vcmask 261120
    %v1917 = vsel %vm1916, %v189, %v1641
    %v1918 = vsel %vm1916, %v1443, %v1643
    %v1919 = vsel %vm1916, %v1444, %v1645
    %v1920 = vsel %vm1916, %v1445, %v1647
    %v1921 = vsel %vm1916, %v1446, %v1649
    %v1922 = vsel %vm1916, %v1447, %v1651
    %v1923 = vsel %vm1916, %v1448, %v1653
    %v1924 = vsel %vm1916, %v1449, %v1655
    %v1925 = vsel %vm1916, %v1451, %v1657
    %v1926 = vsel %vm1916, %v1452, %v1659
    %v1927 = vsel %vm1916, %v1453, %v1661
    %v1928 = vsel %vm1916, %v1454, %v1663
    %v1929 = vsel %vm1916, %v1455, %v1665
    %v1930 = vsel %vm1916, %v1456, %v1667
    %v1931 = vsel %vm1916, %v1457, %v1669
    %vm1932 = vcmask 523264
    %v1933 = vsel %vm1932, %v1917, %v1686
    %v1934 = vsel %vm1932, %v1918, %v1688
    %v1935 = vsel %vm1932, %v1919, %v1690
    %v1936 = vsel %vm1932, %v1920, %v1692
    %v1937 = vsel %vm1932, %v1921, %v1694
    %v1938 = vsel %vm1932, %v1922, %v1696
    %v1939 = vsel %vm1932, %v1923, %v1698
    %v1940 = vsel %vm1932, %v1924, %v1700
    %v1941 = vsel %vm1932, %v1925, %v1702
    %v1942 = vsel %vm1932, %v1926, %v1704
    %v1943 = vsel %vm1932, %v1927, %v1706
    %v1944 = vsel %vm1932, %v1928, %v1708
    %v1945 = vsel %vm1932, %v1929, %v1710
    %v1946 = vsel %vm1932, %v1930, %v1712
    %v1947 = vsel %vm1932, %v1931, %v1714
    %vm1948 = vcmask 785408
    %v1949 = vsel %vm1948, %v1933, %v1731
    %v1950 = vsel %vm1948, %v1934, %v1733
    %v1951 = vsel %vm1948, %v1935, %v1735
    %v1952 = vsel %vm1948, %v1936, %v1737
    %v1953 = vsel %vm1948, %v1937, %v1739
    %v1954 = vsel %vm1948, %v1938, %v1741
    %v1955 = vsel %vm1948, %v1939, %v1743
    %v1956 = vsel %vm1948, %v1940, %v1745
    %v1957 = vsel %vm1948, %v1933, %v1747
    %v1958 = vsel %vm1948, %v1941, %v1749
    %v1959 = vsel %vm1948, %v1942, %v1751
    %v1960 = vsel %vm1948, %v1943, %v1753
    %v1961 = vsel %vm1948, %v1944, %v1755
    %v1962 = vsel %vm1948, %v1945, %v1757
    %v1963 = vsel %vm1948, %v1946, %v1759
    %v1964 = vsel %vm1948, %v1947, %v1761
    %v1965 = vsel %vm1916, %v1508, %v1779
    %v1966 = vsel %vm1916, %v1511, %v1781
    %v1967 = vsel %vm1916, %v1514, %v1783
    %v1968 = vsel %vm1916, %v1517, %v1785
    %v1969 = vsel %vm1916, %v1520, %v1787
    %v1970 = vsel %vm1916, %v1523, %v1789
    %v1971 = vsel %vm1916, %v1526, %v1791
    %v1972 = vsel %vm1916, %v1599, %v1793
    %v1973 = vsel %vm1916, %v1529, %v1795
    %v1974 = vsel %vm1916, %v1532, %v1797
    %v1975 = vsel %vm1916, %v1535, %v1799
    %v1976 = vsel %vm1916, %v1538, %v1801
    %v1977 = vsel %vm1916, %v1541, %v1803
    %v1978 = vsel %vm1916, %v1544, %v1805
    %v1979 = vsel %vm1916, %v1547, %v1807
    %v1980 = vsel %vm1916, %v1602, %v1809
    %v1981 = vsel %vm1932, %v1965, %v1827
    %v1982 = vsel %vm1932, %v1966, %v1829
    %v1983 = vsel %vm1932, %v1967, %v1831
    %v1984 = vsel %vm1932, %v1968, %v1833
    %v1985 = vsel %vm1932, %v1969, %v1835
    %v1986 = vsel %vm1932, %v1970, %v1837
    %v1987 = vsel %vm1932, %v1971, %v1839
    %v1988 = vsel %vm1932, %v1972, %v1841
    %v1989 = vsel %vm1932, %v1973, %v1843
    %v1990 = vsel %vm1932, %v1974, %v1845
    %v1991 = vsel %vm1932, %v1975, %v1847
    %v1992 = vsel %vm1932, %v1976, %v1849
    %v1993 = vsel %vm1932, %v1977, %v1851
    %v1994 = vsel %vm1932, %v1978, %v1853
    %v1995 = vsel %vm1932, %v1979, %v1855
    %v1996 = vsel %vm1932, %v1980, %v1841
    %v1997 = vsel %vm1948, %v1981, %v1872
    %v1998 = vsel %vm1948, %v1982, %v1874
    %v1999 = vsel %vm1948, %v1983, %v1876
    %v2000 = vsel %vm1948, %v1984, %v1878
    %v2001 = vsel %vm1948, %v1985, %v1880
    %v2002 = vsel %vm1948, %v1986, %v1882
    %v2003 = vsel %vm1948, %v1987, %v1884
    %v2004 = vsel %vm1948, %v1988, %v1886
    %v2005 = vsel %vm1948, %v1989, %v1888
    %v2006 = vsel %vm1948, %v1990, %v1890
    %v2007 = vsel %vm1948, %v1991, %v1892
    %v2008 = vsel %vm1948, %v1992, %v1894
    %v2009 = vsel %vm1948, %v1993, %v1896
    %v2010 = vsel %vm1948, %v1994, %v1898
    %v2011 = vsel %vm1948, %v1995, %v1900
    %v2012 = vsel %vm1948, %v1996, %v1886
    %v2013 = vpack.c.bf16 %v1950, %v1949
    %v2014 = vpack.c.bf16 %v1998, %v1997
    %v2015 = vpack.c.bf16 %v1559, %v1556
    %v2016 = vpack.c.bf16 %v1952, %v1951
    %v2017 = vpack.c.bf16 %v2000, %v1999
    %v2018 = vpack.c.bf16 %v1565, %v1562
    %v2019 = vpack.c.bf16 %v1954, %v1953
    %v2020 = vpack.c.bf16 %v2002, %v2001
    %v2021 = vpack.c.bf16 %v1571, %v1568
    %v2022 = vpack.c.bf16 %v1956, %v1955
    %v2023 = vpack.c.bf16 %v2004, %v2003
    %v2024 = vpack.c.bf16 %v1550, %v1621
    %v2025 = vpack.c.bf16 %v1958, %v1957
    %v2026 = vpack.c.bf16 %v2006, %v2005
    %v2027 = vpack.c.bf16 %v1580, %v1577
    %v2028 = vpack.c.bf16 %v1960, %v1959
    %v2029 = vpack.c.bf16 %v2008, %v2007
    %v2030 = vpack.c.bf16 %v1586, %v1583
    %v2031 = vpack.c.bf16 %v1962, %v1961
    %v2032 = vpack.c.bf16 %v2010, %v2009
    %v2033 = vpack.c.bf16 %v1592, %v1589
    %v2034 = vpack.c.bf16 %v1964, %v1963
    %v2035 = vpack.c.bf16 %v2012, %v2011
    %v2036 = vpack.c.bf16 %v1550, %v1624
    %v2037 = vld [vmem:[#allocation8] sm:$0xf]
    %v2038 = vld [vmem:[#allocation8 + $0x4] sm:$0xf]
    %v2039 = vld [vmem:[#allocation8 + $0x8] sm:$0xf]
    %v2040 = vld [vmem:[#allocation8 + $0xc] sm:$0xf]
    %v2041 = vld [vmem:[#allocation8 + $0x10] sm:$0xf]
    %v2042 = vld [vmem:[#allocation8 + $0x14] sm:$0xf]
    %v2043 = vld [vmem:[#allocation8 + $0x18] sm:$0xf]
    %v2044 = vld [vmem:[#allocation8 + $0x1c] sm:$0xf]
    %v2045 = vld [vmem:[#allocation8 + $0x20] sm:$0xf]
    %v2046 = vld [vmem:[#allocation8 + $0x24] sm:$0xf]
    %v2047 = vld [vmem:[#allocation8 + $0x28] sm:$0xf]
    %v2048 = vld [vmem:[#allocation8 + $0x2c] sm:$0xf]
    %v2049 = vld [vmem:[#allocation8 + $0x30] sm:$0xf]
    %v2050 = vld [vmem:[#allocation8 + $0x34] sm:$0xf]
    %v2051 = vld [vmem:[#allocation8 + $0x38] sm:$0xf]
    %v2052 = vld [vmem:[#allocation8 + $0x3c] sm:$0xf]
    %v2053 = vld [vmem:[#allocation8 + $0x40] sm:$0xf]
    %v2054 = vld [vmem:[#allocation8 + $0x44] sm:$0xf]
    %v2055 = vld [vmem:[#allocation8 + $0x48] sm:$0xf]
    %v2056 = vld [vmem:[#allocation8 + $0x4c] sm:$0xf]
    %v2057 = vld [vmem:[#allocation8 + $0x50] sm:$0xf]
    %v2058 = vld [vmem:[#allocation8 + $0x54] sm:$0xf]
    %v2059 = vld [vmem:[#allocation8 + $0x58] sm:$0xf]
    %v2060 = vld [vmem:[#allocation8 + $0x5c] sm:$0xf]
    %v2061 = vld [vmem:[#allocation8 + $0x60] sm:$0xf]
    %v2062 = vld [vmem:[#allocation8 + $0x64] sm:$0xf]
    %v2063 = vld [vmem:[#allocation8 + $0x68] sm:$0xf]
    %v2064 = vld [vmem:[#allocation8 + $0x6c] sm:$0xf]
    %v2065 = vld [vmem:[#allocation8 + $0x70] sm:$0xf]
    %v2066 = vld [vmem:[#allocation8 + $0x74] sm:$0xf]
    %v2067 = vld [vmem:[#allocation8 + $0x78] sm:$0xf]
    %v2068 = vld [vmem:[#allocation8 + $0x7c] sm:$0xf]
    %v2069 = vld [vmem:[#allocation8 + $0x80] sm:$0xf]
    %v2070 = vld [vmem:[#allocation8 + $0x84] sm:$0xf]
    %v2071 = vld [vmem:[#allocation8 + $0x88] sm:$0xf]
    %v2072 = vld [vmem:[#allocation8 + $0x8c] sm:$0xf]
    %v2073 = vld [vmem:[#allocation9] sm:$0x1]
    %v2075 = vlaneseq
    %v2076 = vshrl.u32 %v2075, 7
    %v2077 = vsub.s32 0, %v2076
    %v2078 = vrot.slane %v2073, %v2077
    %v2116 = vunpack.c.l.b16 %v2037
    %v2117 = vunpack.c.l.b16 %v2038
    %v2118 = vunpack.c.l.b16 %v2039
    %v2119 = vunpack.c.l.b16 %v2040
    %v2120 = vunpack.c.l.b16 %v2041
    %v2121 = vunpack.c.l.b16 %v2042
    %v2122 = vunpack.c.l.b16 %v2043
    %v2123 = vunpack.c.l.b16 %v2044
    %v2124 = vunpack.c.l.b16 %v2045
    %v2125 = vunpack.c.l.b16 %v2046
    %v2126 = vunpack.c.l.b16 %v2047
    %v2127 = vunpack.c.l.b16 %v2048
    %v2128 = vunpack.c.l.b16 %v2049
    %v2129 = vunpack.c.l.b16 %v2050
    %v2130 = vunpack.c.l.b16 %v2051
    %v2131 = vunpack.c.l.b16 %v2052
    %v2132 = vunpack.c.l.b16 %v2053
    %v2133 = vunpack.c.l.b16 %v2054
    %v2134 = vunpack.c.l.b16 %v2055
    %v2135 = vunpack.c.l.b16 %v2056
    %v2136 = vunpack.c.l.b16 %v2057
    %v2137 = vunpack.c.l.b16 %v2058
    %v2138 = vunpack.c.l.b16 %v2059
    %v2139 = vunpack.c.l.b16 %v2060
    %v2140 = vunpack.c.l.b16 %v2061
    %v2141 = vunpack.c.l.b16 %v2062
    %v2142 = vunpack.c.l.b16 %v2063
    %v2143 = vunpack.c.l.b16 %v2064
    %v2144 = vunpack.c.l.b16 %v2065
    %v2145 = vunpack.c.l.b16 %v2066
    %v2146 = vunpack.c.l.b16 %v2067
    %v2147 = vunpack.c.l.b16 %v2068
    %v2148 = vunpack.c.l.b16 %v2069
    %v2149 = vunpack.c.l.b16 %v2070
    %v2150 = vunpack.c.l.b16 %v2071
    %v2151 = vunpack.c.l.b16 %v2072
    %v2152 = vpack.c.b16 %v2117, %v2116
    %v2153 = vpack.c.b16 %v2119, %v2118
    %v2154 = vpack.c.b16 %v2121, %v2120
    %v2155 = vpack.c.b16 %v2123, %v2122
    %v2156 = vpack.c.b16 %v2125, %v2124
    %v2157 = vpack.c.b16 %v2127, %v2126
    %v2158 = vpack.c.b16 %v2129, %v2128
    %v2159 = vpack.c.b16 %v2131, %v2130
    %v2160 = vpack.c.b16 %v2133, %v2132
    %v2161 = vpack.c.b16 %v2135, %v2134
    %v2162 = vpack.c.b16 %v2137, %v2136
    %v2163 = vpack.c.b16 %v2139, %v2138
    %v2164 = vpack.c.b16 %v2141, %v2140
    %v2165 = vpack.c.b16 %v2143, %v2142
    %v2166 = vpack.c.b16 %v2145, %v2144
    %v2167 = vpack.c.b16 %v2147, %v2146
    %v2168 = vpack.c.b16 %v2149, %v2148
    %v2169 = vpack.c.b16 %v2151, %v2150
    %v2189 = vsel %vm1916, %v2015, 0
    %v2192 = vsel %vm1916, %v2018, 0
    %v2195 = vsel %vm1916, %v2021, 0
    %v2198 = vsel %vm1916, %v2024, 0
    %v2201 = vsel %vm1916, %v2027, 0
    %v2204 = vsel %vm1916, %v2030, 0
    %v2207 = vsel %vm1916, %v2033, 0
    %v2210 = vsel %vm1916, %v2036, 0
    %2212 = vmatprep.subr.bf16.mxu0 0
    %2213 = vmatpush1.bf16.msra.mxu0 %v2159
    %2214 = vmatprep.subr.bf16.mxu0 0
    %2215 = vmatpush1.bf16.msra.mxu0 %v2158
    %2216 = vmatprep.subr.bf16.mxu0 0
    %2217 = vmatpush1.bf16.msra.mxu0 %v2157
    %2218 = vmatprep.subr.bf16.mxu0 0
    %2219 = vmatpush1.bf16.msra.mxu0 %v2156
    %2220 = vmatprep.subr.bf16.mxu0 0
    %2221 = vmatpush1.bf16.msra.mxu0 %v2155
    %2222 = vmatprep.subr.bf16.mxu0 0
    %2223 = vmatpush1.bf16.msra.mxu0 %v2154
    %2224 = vmatprep.subr.bf16.mxu0 0
    %2225 = vmatpush1.bf16.msra.mxu0 %v2153
    %2226 = vmatprep.subr.bf16.mxu0 0
    %2227 = vmatpush1.bf16.msra.mxu0 %v2152
    %2228 = vmatprep.subr.bf16.mxu0 0
    %2229 = vmatpush2.bf16.msra.mxu0 %v2167
    %2230 = vmatprep.subr.bf16.mxu0 0
    %2231 = vmatpush2.bf16.msra.mxu0 %v2166
    %2232 = vmatprep.subr.bf16.mxu0 0
    %2233 = vmatpush2.bf16.msra.mxu0 %v2165
    %2234 = vmatprep.subr.bf16.mxu0 0
    %2235 = vmatpush2.bf16.msra.mxu0 %v2164
    %2236 = vmatprep.subr.bf16.mxu0 0
    %2237 = vmatpush2.bf16.msra.mxu0 %v2163
    %2238 = vmatprep.subr.bf16.mxu0 0
    %2239 = vmatpush2.bf16.msra.mxu0 %v2162
    %2240 = vmatprep.subr.bf16.mxu0 0
    %2241 = vmatpush2.bf16.msra.mxu0 %v2161
    %2242 = vmatprep.subr.bf16.mxu0 0
    %2243 = vmatpush2.bf16.msra.mxu0 %v2160
    %2244 = vmatprep.mubr.bf16.mxu0 %v2014
    %2245 = vmatmul.mubr.bf16.gmra.mxu0 %v2013
    %v2246 = vpop.f32.mrf.mxu0
    %v2247 = vadd.f32 %v2078, %v2246
    %v2248 = vpop.f32.mrf.mxu0
    %v2249 = vpop.f32.mrf.mxu0
    %v2250 = vadd.f32 %v2078, %v2249
    %v2251 = vpop.f32.mrf.mxu0
    %2252 = vmatprep.mubr.bf16.mxu0 %v2017
    %2253 = vmatmul.mubr.bf16.gmra.mxu0 %v2016
    %v2254 = vpop.f32.mrf.mxu0
    %v2255 = vadd.f32 %v2078, %v2254
    %v2256 = vpop.f32.mrf.mxu0
    %v2257 = vpop.f32.mrf.mxu0
    %v2258 = vadd.f32 %v2078, %v2257
    %v2259 = vpop.f32.mrf.mxu0
    %2260 = vmatprep.mubr.bf16.mxu0 %v2020
    %2261 = vmatmul.mubr.bf16.gmra.mxu0 %v2019
    %v2262 = vpop.f32.mrf.mxu0
    %v2263 = vadd.f32 %v2078, %v2262
    %v2264 = vpop.f32.mrf.mxu0
    %v2265 = vpop.f32.mrf.mxu0
    %v2266 = vadd.f32 %v2078, %v2265
    %v2267 = vpop.f32.mrf.mxu0
    %2268 = vmatprep.mubr.bf16.mxu0 %v2023
    %2269 = vmatmul.mubr.bf16.gmra.mxu0 %v2022
    %v2270 = vpop.f32.mrf.mxu0
    %v2271 = vadd.f32 %v2078, %v2270
    %v2272 = vpop.f32.mrf.mxu0
    %v2273 = vpop.f32.mrf.mxu0
    %v2274 = vadd.f32 %v2078, %v2273
    %v2275 = vpop.f32.mrf.mxu0
    %2276 = vmatprep.mubr.bf16.mxu0 %v2026
    %2277 = vmatmul.mubr.bf16.gmra.mxu0 %v2025
    %v2278 = vpop.f32.mrf.mxu0
    %v2279 = vadd.f32 %v2078, %v2278
    %v2280 = vpop.f32.mrf.mxu0
    %v2281 = vpop.f32.mrf.mxu0
    %v2282 = vadd.f32 %v2078, %v2281
    %v2283 = vpop.f32.mrf.mxu0
    %2284 = vmatprep.mubr.bf16.mxu0 %v2029
    %2285 = vmatmul.mubr.bf16.gmra.mxu0 %v2028
    %v2286 = vpop.f32.mrf.mxu0
    %v2287 = vadd.f32 %v2078, %v2286
    %v2288 = vpop.f32.mrf.mxu0
    %v2289 = vpop.f32.mrf.mxu0
    %v2290 = vadd.f32 %v2078, %v2289
    %v2291 = vpop.f32.mrf.mxu0
    %2292 = vmatprep.mubr.bf16.mxu0 %v2032
    %2293 = vmatmul.mubr.bf16.gmra.mxu0 %v2031
    %v2294 = vpop.f32.mrf.mxu0
    %v2295 = vadd.f32 %v2078, %v2294
    %v2296 = vpop.f32.mrf.mxu0
    %v2297 = vpop.f32.mrf.mxu0
    %v2298 = vadd.f32 %v2078, %v2297
    %v2299 = vpop.f32.mrf.mxu0
    %2300 = vmatprep.mubr.bf16.mxu0 %v2035
    %2301 = vmatmul.mubr.bf16.gmra.mxu0 %v2034
    %v2302 = vpop.f32.mrf.mxu0
    %v2303 = vadd.f32 %v2078, %v2302
    %v2304 = vpop.f32.mrf.mxu0
    %v2305 = vpop.f32.mrf.mxu0
    %v2306 = vadd.f32 %v2078, %v2305
    %v2307 = vpop.f32.mrf.mxu0
    %2308 = vdwg.mxu0
    %2309 = vmatprep.subr.bf16.mxu0 0
    %2310 = vmatpush1.bf16.msra.mxu0 0
    %2311 = vmatprep.subr.bf16.mxu0 0
    %2312 = vmatpush1.bf16.msra.mxu0 0
    %2313 = vmatprep.subr.bf16.mxu0 0
    %2314 = vmatpush1.bf16.msra.mxu0 0
    %2315 = vmatprep.subr.bf16.mxu0 0
    %2316 = vmatpush1.bf16.msra.mxu0 0
    %2317 = vmatprep.subr.bf16.mxu0 0
    %2318 = vmatpush1.bf16.msra.mxu0 0
    %2319 = vmatprep.subr.bf16.mxu0 0
    %2320 = vmatpush1.bf16.msra.mxu0 0
    %2321 = vmatprep.subr.bf16.mxu0 0
    %2322 = vmatpush1.bf16.msra.mxu0 %v2169
    %2323 = vmatprep.subr.bf16.mxu0 0
    %2324 = vmatpush1.bf16.msra.mxu0 %v2168
    %2325 = vmatprep.subr.bf16.mxu0 0
    %2326 = vmatpush2.bf16.msra.mxu0 0
    %2327 = vmatprep.subr.bf16.mxu0 0
    %2328 = vmatpush2.bf16.msra.mxu0 0
    %2329 = vmatprep.subr.bf16.mxu0 0
    %2330 = vmatpush2.bf16.msra.mxu0 0
    %2331 = vmatprep.subr.bf16.mxu0 0
    %2332 = vmatpush2.bf16.msra.mxu0 0
    %2333 = vmatprep.subr.bf16.mxu0 0
    %2334 = vmatpush2.bf16.msra.mxu0 0
    %2335 = vmatprep.subr.bf16.mxu0 0
    %2336 = vmatpush2.bf16.msra.mxu0 0
    %2337 = vmatprep.subr.bf16.mxu0 0
    %2338 = vmatpush2.bf16.msra.mxu0 0
    %2339 = vmatprep.subr.bf16.mxu0 0
    %2340 = vmatpush2.bf16.msra.mxu0 0
    %2341 = vmatprep.mubr.bf16.mxu0 0
    %2342 = vmatmul.mubr.bf16.gmra.mxu0 %v2189
    %v2343 = vpop.f32.mrf.mxu0
    %v2344 = vadd.f32 %v2247, %v2343
    %v2345 = vpop.f32.mrf.mxu0
    %v2346 = vpop.f32.mrf.mxu0
    %v2347 = vadd.f32 %v2250, %v2346
    %v2348 = vpop.f32.mrf.mxu0
    %2349 = vmatprep.mubr.bf16.mxu0 0
    %2350 = vmatmul.mubr.bf16.gmra.mxu0 %v2192
    %v2351 = vpop.f32.mrf.mxu0
    %v2352 = vadd.f32 %v2255, %v2351
    %v2353 = vpop.f32.mrf.mxu0
    %v2354 = vpop.f32.mrf.mxu0
    %v2355 = vadd.f32 %v2258, %v2354
    %v2356 = vpop.f32.mrf.mxu0
    %2357 = vmatprep.mubr.bf16.mxu0 0
    %2358 = vmatmul.mubr.bf16.gmra.mxu0 %v2195
    %v2359 = vpop.f32.mrf.mxu0
    %v2360 = vadd.f32 %v2263, %v2359
    %v2361 = vpop.f32.mrf.mxu0
    %v2362 = vpop.f32.mrf.mxu0
    %v2363 = vadd.f32 %v2266, %v2362
    %v2364 = vpop.f32.mrf.mxu0
    %2365 = vmatprep.mubr.bf16.mxu0 0
    %2366 = vmatmul.mubr.bf16.gmra.mxu0 %v2198
    %v2367 = vpop.f32.mrf.mxu0
    %v2368 = vadd.f32 %v2271, %v2367
    %v2369 = vpop.f32.mrf.mxu0
    %v2370 = vpop.f32.mrf.mxu0
    %v2371 = vadd.f32 %v2274, %v2370
    %v2372 = vpop.f32.mrf.mxu0
    %2373 = vmatprep.mubr.bf16.mxu0 0
    %2374 = vmatmul.mubr.bf16.gmra.mxu0 %v2201
    %v2375 = vpop.f32.mrf.mxu0
    %v2376 = vadd.f32 %v2279, %v2375
    %v2377 = vpop.f32.mrf.mxu0
    %v2378 = vpop.f32.mrf.mxu0
    %v2379 = vadd.f32 %v2282, %v2378
    %v2380 = vpop.f32.mrf.mxu0
    %2381 = vmatprep.mubr.bf16.mxu0 0
    %2382 = vmatmul.mubr.bf16.gmra.mxu0 %v2204
    %v2383 = vpop.f32.mrf.mxu0
    %v2384 = vadd.f32 %v2287, %v2383
    %v2385 = vpop.f32.mrf.mxu0
    %v2386 = vpop.f32.mrf.mxu0
    %v2387 = vadd.f32 %v2290, %v2386
    %v2388 = vpop.f32.mrf.mxu0
    %2389 = vmatprep.mubr.bf16.mxu0 0
    %2390 = vmatmul.mubr.bf16.gmra.mxu0 %v2207
    %v2391 = vpop.f32.mrf.mxu0
    %v2392 = vadd.f32 %v2295, %v2391
    %v2393 = vpop.f32.mrf.mxu0
    %v2394 = vpop.f32.mrf.mxu0
    %v2395 = vadd.f32 %v2298, %v2394
    %v2396 = vpop.f32.mrf.mxu0
    %2397 = vmatprep.mubr.bf16.mxu0 0
    %2398 = vmatmul.mubr.bf16.gmra.mxu0 %v2210
    %v2399 = vpop.f32.mrf.mxu0
    %v2400 = vadd.f32 %v2303, %v2399
    %v2401 = vpop.f32.mrf.mxu0
    %v2402 = vpop.f32.mrf.mxu0
    %v2403 = vadd.f32 %v2306, %v2402
    %v2404 = vpop.f32.mrf.mxu0
    %2405 = vdwg.mxu0
    %v2406 = vmax.f32 %v2344, 0.0
    %v2407 = vmax.f32 %v2347, 0.0
    %v2408 = vmax.f32 %v2352, 0.0
    %v2409 = vmax.f32 %v2355, 0.0
    %v2410 = vmax.f32 %v2360, 0.0
    %v2411 = vmax.f32 %v2363, 0.0
    %v2412 = vmax.f32 %v2368, 0.0
    %v2413 = vmax.f32 %v2371, 0.0
    %v2414 = vmax.f32 %v2376, 0.0
    %v2415 = vmax.f32 %v2379, 0.0
    %v2416 = vmax.f32 %v2384, 0.0
    %v2417 = vmax.f32 %v2387, 0.0
    %v2418 = vmax.f32 %v2392, 0.0
    %v2419 = vmax.f32 %v2395, 0.0
    %v2420 = vmax.f32 %v2400, 0.0
    %v2421 = vmax.f32 %v2403, 0.0
    %v2425 = vunpack.c.l.s4 1983009808
    %v2426 = vunpack.c.0.s8 %v2425
    %v2427 = vlaneseq
    %v2428 = vshrl.u32 %v2427, 7
    %v2429 = vsub.s32 %v2426, %v2428
    %v2430 = vrot.slane %v2406, %v2429
    %v2432 = vunpack.c.l.s4 1983009808
    %v2433 = vunpack.c.0.s8 %v2432
    %v2434 = vlaneseq
    %v2435 = vshrl.u32 %v2434, 7
    %v2436 = vsub.s32 %v2433, %v2435
    %v2437 = vrot.slane %v2414, %v2436
    %vm2438 = vcmask 1044484
    %v2439 = vsel %vm2438, %v2430, %v2430
    %vm2440 = vcmask 1046534
    %v2441 = vsel %vm2440, %v2430, %v2439
    %v2442 = vrot.slane %v2437, 7
    %vm2443 = vcmask 1041409
    %v2444 = vsel %vm2443, %v2442, %v2441
    %vm2445 = vcmask 1043459
    %v2446 = vsel %vm2445, %v2442, %v2444
    %vm2447 = vcmask 1045509
    %v2448 = vsel %vm2447, %v2442, %v2446
    %vm2449 = vcmask 1047559
    %v2450 = vsel %vm2449, %v2442, %v2448
    %2452 = vst [vmem:[#allocation2] sm:$0x3] %v2450
    %v2453 = vrot.slane %v2430, 1
    %v2454 = vsel %vm2438, %v2453, %v2453
    %v2455 = vsel %vm2440, %v2453, %v2454
    %v2456 = vsel %vm2443, %v2437, %v2455
    %v2457 = vsel %vm2445, %v2437, %v2456
    %v2458 = vsel %vm2447, %v2437, %v2457
    %v2459 = vsel %vm2449, %v2437, %v2458
    %2461 = vst [vmem:[#allocation2 + $0x2] sm:$0x3] %v2459
    %v2462 = vcombine.high %v2430, %v2430
    %v2463 = vcombine.high %v2437, %v2437
    %v2464 = vsel %vm2438, %v2462, %v2462
    %v2465 = vsel %vm2440, %v2462, %v2464
    %v2466 = vrot.slane %v2463, 7
    %v2467 = vsel %vm2443, %v2466, %v2465
    %v2468 = vsel %vm2445, %v2466, %v2467
    %v2469 = vsel %vm2447, %v2466, %v2468
    %v2470 = vsel %vm2449, %v2466, %v2469
    %2472 = vst [vmem:[#allocation2 + $0x4] sm:$0x3] %v2470
    %v2473 = vrot.slane %v2462, 1
    %v2474 = vsel %vm2438, %v2473, %v2473
    %v2475 = vsel %vm2440, %v2473, %v2474
    %v2476 = vsel %vm2443, %v2463, %v2475
    %v2477 = vsel %vm2445, %v2463, %v2476
    %v2478 = vsel %vm2447, %v2463, %v2477
    %v2479 = vsel %vm2449, %v2463, %v2478
    %2481 = vst [vmem:[#allocation2 + $0x6] sm:$0x3] %v2479
    %v2482 = vcombine.high %v2406, %v2406
    %v2484 = vunpack.c.l.s4 1983009808
    %v2485 = vunpack.c.0.s8 %v2484
    %v2486 = vlaneseq
    %v2487 = vshrl.u32 %v2486, 7
    %v2488 = vsub.s32 %v2485, %v2487
    %v2489 = vrot.slane %v2482, %v2488
    %v2490 = vcombine.high %v2414, %v2414
    %v2492 = vunpack.c.l.s4 1983009808
    %v2493 = vunpack.c.0.s8 %v2492
    %v2494 = vlaneseq
    %v2495 = vshrl.u32 %v2494, 7
    %v2496 = vsub.s32 %v2493, %v2495
    %v2497 = vrot.slane %v2490, %v2496
    %v2498 = vsel %vm2438, %v2489, %v2489
    %v2499 = vsel %vm2440, %v2489, %v2498
    %v2500 = vrot.slane %v2497, 7
    %v2501 = vsel %vm2443, %v2500, %v2499
    %v2502 = vsel %vm2445, %v2500, %v2501
    %v2503 = vsel %vm2447, %v2500, %v2502
    %v2504 = vsel %vm2449, %v2500, %v2503
    %2506 = vst [vmem:[#allocation2 + $0x8] sm:$0x3] %v2504
    %v2507 = vrot.slane %v2489, 1
    %v2508 = vsel %vm2438, %v2507, %v2507
    %v2509 = vsel %vm2440, %v2507, %v2508
    %v2510 = vsel %vm2443, %v2497, %v2509
    %v2511 = vsel %vm2445, %v2497, %v2510
    %v2512 = vsel %vm2447, %v2497, %v2511
    %v2513 = vsel %vm2449, %v2497, %v2512
    %2515 = vst [vmem:[#allocation2 + $0xa] sm:$0x3] %v2513
    %v2516 = vcombine.high %v2489, %v2489
    %v2517 = vcombine.high %v2497, %v2497
    %v2518 = vsel %vm2438, %v2516, %v2516
    %v2519 = vsel %vm2440, %v2516, %v2518
    %v2520 = vrot.slane %v2517, 7
    %v2521 = vsel %vm2443, %v2520, %v2519
    %v2522 = vsel %vm2445, %v2520, %v2521
    %v2523 = vsel %vm2447, %v2520, %v2522
    %v2524 = vsel %vm2449, %v2520, %v2523
    %2526 = vst [vmem:[#allocation2 + $0xc] sm:$0x3] %v2524
    %v2527 = vrot.slane %v2516, 1
    %v2528 = vsel %vm2438, %v2527, %v2527
    %v2529 = vsel %vm2440, %v2527, %v2528
    %v2530 = vsel %vm2443, %v2517, %v2529
    %v2531 = vsel %vm2445, %v2517, %v2530
    %v2532 = vsel %vm2447, %v2517, %v2531
    %v2533 = vsel %vm2449, %v2517, %v2532
    %2535 = vst [vmem:[#allocation2 + $0xe] sm:$0x3] %v2533
    %v2539 = vunpack.c.l.s4 1983009808
    %v2540 = vunpack.c.0.s8 %v2539
    %v2541 = vlaneseq
    %v2542 = vshrl.u32 %v2541, 7
    %v2543 = vsub.s32 %v2540, %v2542
    %v2544 = vrot.slane %v2407, %v2543
    %v2546 = vunpack.c.l.s4 1983009808
    %v2547 = vunpack.c.0.s8 %v2546
    %v2548 = vlaneseq
    %v2549 = vshrl.u32 %v2548, 7
    %v2550 = vsub.s32 %v2547, %v2549
    %v2551 = vrot.slane %v2415, %v2550
    %v2552 = vsel %vm2438, %v2544, %v2544
    %v2553 = vsel %vm2440, %v2544, %v2552
    %v2554 = vrot.slane %v2551, 7
    %v2555 = vsel %vm2443, %v2554, %v2553
    %v2556 = vsel %vm2445, %v2554, %v2555
    %v2557 = vsel %vm2447, %v2554, %v2556
    %v2558 = vsel %vm2449, %v2554, %v2557
    %2560 = vst [vmem:[#allocation2 + $0x10] sm:$0x3] %v2558
    %v2561 = vrot.slane %v2544, 1
    %v2562 = vsel %vm2438, %v2561, %v2561
    %v2563 = vsel %vm2440, %v2561, %v2562
    %v2564 = vsel %vm2443, %v2551, %v2563
    %v2565 = vsel %vm2445, %v2551, %v2564
    %v2566 = vsel %vm2447, %v2551, %v2565
    %v2567 = vsel %vm2449, %v2551, %v2566
    %2569 = vst [vmem:[#allocation2 + $0x12] sm:$0x3] %v2567
    %v2570 = vcombine.high %v2544, %v2544
    %v2571 = vcombine.high %v2551, %v2551
    %v2572 = vsel %vm2438, %v2570, %v2570
    %v2573 = vsel %vm2440, %v2570, %v2572
    %v2574 = vrot.slane %v2571, 7
    %v2575 = vsel %vm2443, %v2574, %v2573
    %v2576 = vsel %vm2445, %v2574, %v2575
    %v2577 = vsel %vm2447, %v2574, %v2576
    %v2578 = vsel %vm2449, %v2574, %v2577
    %2580 = vst [vmem:[#allocation2 + $0x14] sm:$0x3] %v2578
    %v2581 = vrot.slane %v2570, 1
    %v2582 = vsel %vm2438, %v2581, %v2581
    %v2583 = vsel %vm2440, %v2581, %v2582
    %v2584 = vsel %vm2443, %v2571, %v2583
    %v2585 = vsel %vm2445, %v2571, %v2584
    %v2586 = vsel %vm2447, %v2571, %v2585
    %v2587 = vsel %vm2449, %v2571, %v2586
    %2589 = vst [vmem:[#allocation2 + $0x16] sm:$0x3] %v2587
    %v2590 = vcombine.high %v2407, %v2407
    %v2592 = vunpack.c.l.s4 1983009808
    %v2593 = vunpack.c.0.s8 %v2592
    %v2594 = vlaneseq
    %v2595 = vshrl.u32 %v2594, 7
    %v2596 = vsub.s32 %v2593, %v2595
    %v2597 = vrot.slane %v2590, %v2596
    %v2598 = vcombine.high %v2415, %v2415
    %v2600 = vunpack.c.l.s4 1983009808
    %v2601 = vunpack.c.0.s8 %v2600
    %v2602 = vlaneseq
    %v2603 = vshrl.u32 %v2602, 7
    %v2604 = vsub.s32 %v2601, %v2603
    %v2605 = vrot.slane %v2598, %v2604
    %v2606 = vsel %vm2438, %v2597, %v2597
    %v2607 = vsel %vm2440, %v2597, %v2606
    %v2608 = vrot.slane %v2605, 7
    %v2609 = vsel %vm2443, %v2608, %v2607
    %v2610 = vsel %vm2445, %v2608, %v2609
    %v2611 = vsel %vm2447, %v2608, %v2610
    %v2612 = vsel %vm2449, %v2608, %v2611
    %2614 = vst [vmem:[#allocation2 + $0x18] sm:$0x3] %v2612
    %v2615 = vrot.slane %v2597, 1
    %v2616 = vsel %vm2438, %v2615, %v2615
    %v2617 = vsel %vm2440, %v2615, %v2616
    %v2618 = vsel %vm2443, %v2605, %v2617
    %v2619 = vsel %vm2445, %v2605, %v2618
    %v2620 = vsel %vm2447, %v2605, %v2619
    %v2621 = vsel %vm2449, %v2605, %v2620
    %2623 = vst [vmem:[#allocation2 + $0x1a] sm:$0x3] %v2621
    %v2624 = vcombine.high %v2597, %v2597
    %v2625 = vcombine.high %v2605, %v2605
    %v2626 = vsel %vm2438, %v2624, %v2624
    %v2627 = vsel %vm2440, %v2624, %v2626
    %v2628 = vrot.slane %v2625, 7
    %v2629 = vsel %vm2443, %v2628, %v2627
    %v2630 = vsel %vm2445, %v2628, %v2629
    %v2631 = vsel %vm2447, %v2628, %v2630
    %v2632 = vsel %vm2449, %v2628, %v2631
    %2634 = vst [vmem:[#allocation2 + $0x1c] sm:$0x3] %v2632
    %v2635 = vrot.slane %v2624, 1
    %v2636 = vsel %vm2438, %v2635, %v2635
    %v2637 = vsel %vm2440, %v2635, %v2636
    %v2638 = vsel %vm2443, %v2625, %v2637
    %v2639 = vsel %vm2445, %v2625, %v2638
    %v2640 = vsel %vm2447, %v2625, %v2639
    %v2641 = vsel %vm2449, %v2625, %v2640
    %2643 = vst [vmem:[#allocation2 + $0x1e] sm:$0x3] %v2641
    %v2647 = vunpack.c.l.s4 1983009808
    %v2648 = vunpack.c.0.s8 %v2647
    %v2649 = vlaneseq
    %v2650 = vshrl.u32 %v2649, 7
    %v2651 = vsub.s32 %v2648, %v2650
    %v2652 = vrot.slane %v2408, %v2651
    %v2654 = vunpack.c.l.s4 1983009808
    %v2655 = vunpack.c.0.s8 %v2654
    %v2656 = vlaneseq
    %v2657 = vshrl.u32 %v2656, 7
    %v2658 = vsub.s32 %v2655, %v2657
    %v2659 = vrot.slane %v2416, %v2658
    %v2660 = vsel %vm2438, %v2652, %v2652
    %v2661 = vsel %vm2440, %v2652, %v2660
    %v2662 = vrot.slane %v2659, 7
    %v2663 = vsel %vm2443, %v2662, %v2661
    %v2664 = vsel %vm2445, %v2662, %v2663
    %v2665 = vsel %vm2447, %v2662, %v2664
    %v2666 = vsel %vm2449, %v2662, %v2665
    %2668 = vst [vmem:[#allocation2 + $0x20] sm:$0x3] %v2666
    %v2669 = vrot.slane %v2652, 1
    %v2670 = vsel %vm2438, %v2669, %v2669
    %v2671 = vsel %vm2440, %v2669, %v2670
    %v2672 = vsel %vm2443, %v2659, %v2671
    %v2673 = vsel %vm2445, %v2659, %v2672
    %v2674 = vsel %vm2447, %v2659, %v2673
    %v2675 = vsel %vm2449, %v2659, %v2674
    %2677 = vst [vmem:[#allocation2 + $0x22] sm:$0x3] %v2675
    %v2678 = vcombine.high %v2652, %v2652
    %v2679 = vcombine.high %v2659, %v2659
    %v2680 = vsel %vm2438, %v2678, %v2678
    %v2681 = vsel %vm2440, %v2678, %v2680
    %v2682 = vrot.slane %v2679, 7
    %v2683 = vsel %vm2443, %v2682, %v2681
    %v2684 = vsel %vm2445, %v2682, %v2683
    %v2685 = vsel %vm2447, %v2682, %v2684
    %v2686 = vsel %vm2449, %v2682, %v2685
    %2688 = vst [vmem:[#allocation2 + $0x24] sm:$0x3] %v2686
    %v2689 = vrot.slane %v2678, 1
    %v2690 = vsel %vm2438, %v2689, %v2689
    %v2691 = vsel %vm2440, %v2689, %v2690
    %v2692 = vsel %vm2443, %v2679, %v2691
    %v2693 = vsel %vm2445, %v2679, %v2692
    %v2694 = vsel %vm2447, %v2679, %v2693
    %v2695 = vsel %vm2449, %v2679, %v2694
    %2697 = vst [vmem:[#allocation2 + $0x26] sm:$0x3] %v2695
    %v2698 = vcombine.high %v2408, %v2408
    %v2700 = vunpack.c.l.s4 1983009808
    %v2701 = vunpack.c.0.s8 %v2700
    %v2702 = vlaneseq
    %v2703 = vshrl.u32 %v2702, 7
    %v2704 = vsub.s32 %v2701, %v2703
    %v2705 = vrot.slane %v2698, %v2704
    %v2706 = vcombine.high %v2416, %v2416
    %v2708 = vunpack.c.l.s4 1983009808
    %v2709 = vunpack.c.0.s8 %v2708
    %v2710 = vlaneseq
    %v2711 = vshrl.u32 %v2710, 7
    %v2712 = vsub.s32 %v2709, %v2711
    %v2713 = vrot.slane %v2706, %v2712
    %v2714 = vsel %vm2438, %v2705, %v2705
    %v2715 = vsel %vm2440, %v2705, %v2714
    %v2716 = vrot.slane %v2713, 7
    %v2717 = vsel %vm2443, %v2716, %v2715
    %v2718 = vsel %vm2445, %v2716, %v2717
    %v2719 = vsel %vm2447, %v2716, %v2718
    %v2720 = vsel %vm2449, %v2716, %v2719
    %2722 = vst [vmem:[#allocation2 + $0x28] sm:$0x3] %v2720
    %v2723 = vrot.slane %v2705, 1
    %v2724 = vsel %vm2438, %v2723, %v2723
    %v2725 = vsel %vm2440, %v2723, %v2724
    %v2726 = vsel %vm2443, %v2713, %v2725
    %v2727 = vsel %vm2445, %v2713, %v2726
    %v2728 = vsel %vm2447, %v2713, %v2727
    %v2729 = vsel %vm2449, %v2713, %v2728
    %2731 = vst [vmem:[#allocation2 + $0x2a] sm:$0x3] %v2729
    %v2732 = vcombine.high %v2705, %v2705
    %v2733 = vcombine.high %v2713, %v2713
    %v2734 = vsel %vm2438, %v2732, %v2732
    %v2735 = vsel %vm2440, %v2732, %v2734
    %v2736 = vrot.slane %v2733, 7
    %v2737 = vsel %vm2443, %v2736, %v2735
    %v2738 = vsel %vm2445, %v2736, %v2737
    %v2739 = vsel %vm2447, %v2736, %v2738
    %v2740 = vsel %vm2449, %v2736, %v2739
    %2742 = vst [vmem:[#allocation2 + $0x2c] sm:$0x3] %v2740
    %v2743 = vrot.slane %v2732, 1
    %v2744 = vsel %vm2438, %v2743, %v2743
    %v2745 = vsel %vm2440, %v2743, %v2744
    %v2746 = vsel %vm2443, %v2733, %v2745
    %v2747 = vsel %vm2445, %v2733, %v2746
    %v2748 = vsel %vm2447, %v2733, %v2747
    %v2749 = vsel %vm2449, %v2733, %v2748
    %2751 = vst [vmem:[#allocation2 + $0x2e] sm:$0x3] %v2749
    %v2755 = vunpack.c.l.s4 1983009808
    %v2756 = vunpack.c.0.s8 %v2755
    %v2757 = vlaneseq
    %v2758 = vshrl.u32 %v2757, 7
    %v2759 = vsub.s32 %v2756, %v2758
    %v2760 = vrot.slane %v2409, %v2759
    %v2762 = vunpack.c.l.s4 1983009808
    %v2763 = vunpack.c.0.s8 %v2762
    %v2764 = vlaneseq
    %v2765 = vshrl.u32 %v2764, 7
    %v2766 = vsub.s32 %v2763, %v2765
    %v2767 = vrot.slane %v2417, %v2766
    %v2768 = vsel %vm2438, %v2760, %v2760
    %v2769 = vsel %vm2440, %v2760, %v2768
    %v2770 = vrot.slane %v2767, 7
    %v2771 = vsel %vm2443, %v2770, %v2769
    %v2772 = vsel %vm2445, %v2770, %v2771
    %v2773 = vsel %vm2447, %v2770, %v2772
    %v2774 = vsel %vm2449, %v2770, %v2773
    %2776 = vst [vmem:[#allocation2 + $0x30] sm:$0x3] %v2774
    %v2777 = vrot.slane %v2760, 1
    %v2778 = vsel %vm2438, %v2777, %v2777
    %v2779 = vsel %vm2440, %v2777, %v2778
    %v2780 = vsel %vm2443, %v2767, %v2779
    %v2781 = vsel %vm2445, %v2767, %v2780
    %v2782 = vsel %vm2447, %v2767, %v2781
    %v2783 = vsel %vm2449, %v2767, %v2782
    %2785 = vst [vmem:[#allocation2 + $0x32] sm:$0x3] %v2783
    %v2786 = vcombine.high %v2760, %v2760
    %v2787 = vcombine.high %v2767, %v2767
    %v2788 = vsel %vm2438, %v2786, %v2786
    %v2789 = vsel %vm2440, %v2786, %v2788
    %v2790 = vrot.slane %v2787, 7
    %v2791 = vsel %vm2443, %v2790, %v2789
    %v2792 = vsel %vm2445, %v2790, %v2791
    %v2793 = vsel %vm2447, %v2790, %v2792
    %v2794 = vsel %vm2449, %v2790, %v2793
    %2796 = vst [vmem:[#allocation2 + $0x34] sm:$0x3] %v2794
    %v2797 = vrot.slane %v2786, 1
    %v2798 = vsel %vm2438, %v2797, %v2797
    %v2799 = vsel %vm2440, %v2797, %v2798
    %v2800 = vsel %vm2443, %v2787, %v2799
    %v2801 = vsel %vm2445, %v2787, %v2800
    %v2802 = vsel %vm2447, %v2787, %v2801
    %v2803 = vsel %vm2449, %v2787, %v2802
    %2805 = vst [vmem:[#allocation2 + $0x36] sm:$0x3] %v2803
    %v2806 = vcombine.high %v2409, %v2409
    %v2808 = vunpack.c.l.s4 1983009808
    %v2809 = vunpack.c.0.s8 %v2808
    %v2810 = vlaneseq
    %v2811 = vshrl.u32 %v2810, 7
    %v2812 = vsub.s32 %v2809, %v2811
    %v2813 = vrot.slane %v2806, %v2812
    %v2814 = vcombine.high %v2417, %v2417
    %v2816 = vunpack.c.l.s4 1983009808
    %v2817 = vunpack.c.0.s8 %v2816
    %v2818 = vlaneseq
    %v2819 = vshrl.u32 %v2818, 7
    %v2820 = vsub.s32 %v2817, %v2819
    %v2821 = vrot.slane %v2814, %v2820
    %v2822 = vsel %vm2438, %v2813, %v2813
    %v2823 = vsel %vm2440, %v2813, %v2822
    %v2824 = vrot.slane %v2821, 7
    %v2825 = vsel %vm2443, %v2824, %v2823
    %v2826 = vsel %vm2445, %v2824, %v2825
    %v2827 = vsel %vm2447, %v2824, %v2826
    %v2828 = vsel %vm2449, %v2824, %v2827
    %2830 = vst [vmem:[#allocation2 + $0x38] sm:$0x3] %v2828
    %v2831 = vrot.slane %v2813, 1
    %v2832 = vsel %vm2438, %v2831, %v2831
    %v2833 = vsel %vm2440, %v2831, %v2832
    %v2834 = vsel %vm2443, %v2821, %v2833
    %v2835 = vsel %vm2445, %v2821, %v2834
    %v2836 = vsel %vm2447, %v2821, %v2835
    %v2837 = vsel %vm2449, %v2821, %v2836
    %2839 = vst [vmem:[#allocation2 + $0x3a] sm:$0x3] %v2837
    %v2840 = vcombine.high %v2813, %v2813
    %v2841 = vcombine.high %v2821, %v2821
    %v2842 = vsel %vm2438, %v2840, %v2840
    %v2843 = vsel %vm2440, %v2840, %v2842
    %v2844 = vrot.slane %v2841, 7
    %v2845 = vsel %vm2443, %v2844, %v2843
    %v2846 = vsel %vm2445, %v2844, %v2845
    %v2847 = vsel %vm2447, %v2844, %v2846
    %v2848 = vsel %vm2449, %v2844, %v2847
    %2850 = vst [vmem:[#allocation2 + $0x3c] sm:$0x3] %v2848
    %v2851 = vrot.slane %v2840, 1
    %v2852 = vsel %vm2438, %v2851, %v2851
    %v2853 = vsel %vm2440, %v2851, %v2852
    %v2854 = vsel %vm2443, %v2841, %v2853
    %v2855 = vsel %vm2445, %v2841, %v2854
    %v2856 = vsel %vm2447, %v2841, %v2855
    %v2857 = vsel %vm2449, %v2841, %v2856
    %2859 = vst [vmem:[#allocation2 + $0x3e] sm:$0x3] %v2857
    %v2863 = vunpack.c.l.s4 1983009808
    %v2864 = vunpack.c.0.s8 %v2863
    %v2865 = vlaneseq
    %v2866 = vshrl.u32 %v2865, 7
    %v2867 = vsub.s32 %v2864, %v2866
    %v2868 = vrot.slane %v2410, %v2867
    %v2870 = vunpack.c.l.s4 1983009808
    %v2871 = vunpack.c.0.s8 %v2870
    %v2872 = vlaneseq
    %v2873 = vshrl.u32 %v2872, 7
    %v2874 = vsub.s32 %v2871, %v2873
    %v2875 = vrot.slane %v2418, %v2874
    %v2876 = vsel %vm2438, %v2868, %v2868
    %v2877 = vsel %vm2440, %v2868, %v2876
    %v2878 = vrot.slane %v2875, 7
    %v2879 = vsel %vm2443, %v2878, %v2877
    %v2880 = vsel %vm2445, %v2878, %v2879
    %v2881 = vsel %vm2447, %v2878, %v2880
    %v2882 = vsel %vm2449, %v2878, %v2881
    %2884 = vst [vmem:[#allocation2 + $0x40] sm:$0x3] %v2882
    %v2885 = vrot.slane %v2868, 1
    %v2886 = vsel %vm2438, %v2885, %v2885
    %v2887 = vsel %vm2440, %v2885, %v2886
    %v2888 = vsel %vm2443, %v2875, %v2887
    %v2889 = vsel %vm2445, %v2875, %v2888
    %v2890 = vsel %vm2447, %v2875, %v2889
    %v2891 = vsel %vm2449, %v2875, %v2890
    %2893 = vst [vmem:[#allocation2 + $0x42] sm:$0x3] %v2891
    %v2894 = vcombine.high %v2868, %v2868
    %v2895 = vcombine.high %v2875, %v2875
    %v2896 = vsel %vm2438, %v2894, %v2894
    %v2897 = vsel %vm2440, %v2894, %v2896
    %v2898 = vrot.slane %v2895, 7
    %v2899 = vsel %vm2443, %v2898, %v2897
    %v2900 = vsel %vm2445, %v2898, %v2899
    %v2901 = vsel %vm2447, %v2898, %v2900
    %v2902 = vsel %vm2449, %v2898, %v2901
    %2904 = vst [vmem:[#allocation2 + $0x44] sm:$0x3] %v2902
    %v2905 = vrot.slane %v2894, 1
    %v2906 = vsel %vm2438, %v2905, %v2905
    %v2907 = vsel %vm2440, %v2905, %v2906
    %v2908 = vsel %vm2443, %v2895, %v2907
    %v2909 = vsel %vm2445, %v2895, %v2908
    %v2910 = vsel %vm2447, %v2895, %v2909
    %v2911 = vsel %vm2449, %v2895, %v2910
    %2913 = vst [vmem:[#allocation2 + $0x46] sm:$0x3] %v2911
    %v2914 = vcombine.high %v2410, %v2410
    %v2916 = vunpack.c.l.s4 1983009808
    %v2917 = vunpack.c.0.s8 %v2916
    %v2918 = vlaneseq
    %v2919 = vshrl.u32 %v2918, 7
    %v2920 = vsub.s32 %v2917, %v2919
    %v2921 = vrot.slane %v2914, %v2920
    %v2922 = vcombine.high %v2418, %v2418
    %v2924 = vunpack.c.l.s4 1983009808
    %v2925 = vunpack.c.0.s8 %v2924
    %v2926 = vlaneseq
    %v2927 = vshrl.u32 %v2926, 7
    %v2928 = vsub.s32 %v2925, %v2927
    %v2929 = vrot.slane %v2922, %v2928
    %v2930 = vsel %vm2438, %v2921, %v2921
    %v2931 = vsel %vm2440, %v2921, %v2930
    %v2932 = vrot.slane %v2929, 7
    %v2933 = vsel %vm2443, %v2932, %v2931
    %v2934 = vsel %vm2445, %v2932, %v2933
    %v2935 = vsel %vm2447, %v2932, %v2934
    %v2936 = vsel %vm2449, %v2932, %v2935
    %2938 = vst [vmem:[#allocation2 + $0x48] sm:$0x3] %v2936
    %v2939 = vrot.slane %v2921, 1
    %v2940 = vsel %vm2438, %v2939, %v2939
    %v2941 = vsel %vm2440, %v2939, %v2940
    %v2942 = vsel %vm2443, %v2929, %v2941
    %v2943 = vsel %vm2445, %v2929, %v2942
    %v2944 = vsel %vm2447, %v2929, %v2943
    %v2945 = vsel %vm2449, %v2929, %v2944
    %2947 = vst [vmem:[#allocation2 + $0x4a] sm:$0x3] %v2945
    %v2948 = vcombine.high %v2921, %v2921
    %v2949 = vcombine.high %v2929, %v2929
    %v2950 = vsel %vm2438, %v2948, %v2948
    %v2951 = vsel %vm2440, %v2948, %v2950
    %v2952 = vrot.slane %v2949, 7
    %v2953 = vsel %vm2443, %v2952, %v2951
    %v2954 = vsel %vm2445, %v2952, %v2953
    %v2955 = vsel %vm2447, %v2952, %v2954
    %v2956 = vsel %vm2449, %v2952, %v2955
    %2958 = vst [vmem:[#allocation2 + $0x4c] sm:$0x3] %v2956
    %v2959 = vrot.slane %v2948, 1
    %v2960 = vsel %vm2438, %v2959, %v2959
    %v2961 = vsel %vm2440, %v2959, %v2960
    %v2962 = vsel %vm2443, %v2949, %v2961
    %v2963 = vsel %vm2445, %v2949, %v2962
    %v2964 = vsel %vm2447, %v2949, %v2963
    %v2965 = vsel %vm2449, %v2949, %v2964
    %2967 = vst [vmem:[#allocation2 + $0x4e] sm:$0x3] %v2965
    %v2971 = vunpack.c.l.s4 1983009808
    %v2972 = vunpack.c.0.s8 %v2971
    %v2973 = vlaneseq
    %v2974 = vshrl.u32 %v2973, 7
    %v2975 = vsub.s32 %v2972, %v2974
    %v2976 = vrot.slane %v2411, %v2975
    %v2978 = vunpack.c.l.s4 1983009808
    %v2979 = vunpack.c.0.s8 %v2978
    %v2980 = vlaneseq
    %v2981 = vshrl.u32 %v2980, 7
    %v2982 = vsub.s32 %v2979, %v2981
    %v2983 = vrot.slane %v2419, %v2982
    %v2984 = vsel %vm2438, %v2976, %v2976
    %v2985 = vsel %vm2440, %v2976, %v2984
    %v2986 = vrot.slane %v2983, 7
    %v2987 = vsel %vm2443, %v2986, %v2985
    %v2988 = vsel %vm2445, %v2986, %v2987
    %v2989 = vsel %vm2447, %v2986, %v2988
    %v2990 = vsel %vm2449, %v2986, %v2989
    %2992 = vst [vmem:[#allocation2 + $0x50] sm:$0x3] %v2990
    %v2993 = vrot.slane %v2976, 1
    %v2994 = vsel %vm2438, %v2993, %v2993
    %v2995 = vsel %vm2440, %v2993, %v2994
    %v2996 = vsel %vm2443, %v2983, %v2995
    %v2997 = vsel %vm2445, %v2983, %v2996
    %v2998 = vsel %vm2447, %v2983, %v2997
    %v2999 = vsel %vm2449, %v2983, %v2998
    %3001 = vst [vmem:[#allocation2 + $0x52] sm:$0x3] %v2999
    %v3002 = vcombine.high %v2976, %v2976
    %v3003 = vcombine.high %v2983, %v2983
    %v3004 = vsel %vm2438, %v3002, %v3002
    %v3005 = vsel %vm2440, %v3002, %v3004
    %v3006 = vrot.slane %v3003, 7
    %v3007 = vsel %vm2443, %v3006, %v3005
    %v3008 = vsel %vm2445, %v3006, %v3007
    %v3009 = vsel %vm2447, %v3006, %v3008
    %v3010 = vsel %vm2449, %v3006, %v3009
    %3012 = vst [vmem:[#allocation2 + $0x54] sm:$0x3] %v3010
    %v3013 = vrot.slane %v3002, 1
    %v3014 = vsel %vm2438, %v3013, %v3013
    %v3015 = vsel %vm2440, %v3013, %v3014
    %v3016 = vsel %vm2443, %v3003, %v3015
    %v3017 = vsel %vm2445, %v3003, %v3016
    %v3018 = vsel %vm2447, %v3003, %v3017
    %v3019 = vsel %vm2449, %v3003, %v3018
    %3021 = vst [vmem:[#allocation2 + $0x56] sm:$0x3] %v3019
    %v3022 = vcombine.high %v2411, %v2411
    %v3024 = vunpack.c.l.s4 1983009808
    %v3025 = vunpack.c.0.s8 %v3024
    %v3026 = vlaneseq
    %v3027 = vshrl.u32 %v3026, 7
    %v3028 = vsub.s32 %v3025, %v3027
    %v3029 = vrot.slane %v3022, %v3028
    %v3030 = vcombine.high %v2419, %v2419
    %v3032 = vunpack.c.l.s4 1983009808
    %v3033 = vunpack.c.0.s8 %v3032
    %v3034 = vlaneseq
    %v3035 = vshrl.u32 %v3034, 7
    %v3036 = vsub.s32 %v3033, %v3035
    %v3037 = vrot.slane %v3030, %v3036
    %v3038 = vsel %vm2438, %v3029, %v3029
    %v3039 = vsel %vm2440, %v3029, %v3038
    %v3040 = vrot.slane %v3037, 7
    %v3041 = vsel %vm2443, %v3040, %v3039
    %v3042 = vsel %vm2445, %v3040, %v3041
    %v3043 = vsel %vm2447, %v3040, %v3042
    %v3044 = vsel %vm2449, %v3040, %v3043
    %3046 = vst [vmem:[#allocation2 + $0x58] sm:$0x3] %v3044
    %v3047 = vrot.slane %v3029, 1
    %v3048 = vsel %vm2438, %v3047, %v3047
    %v3049 = vsel %vm2440, %v3047, %v3048
    %v3050 = vsel %vm2443, %v3037, %v3049
    %v3051 = vsel %vm2445, %v3037, %v3050
    %v3052 = vsel %vm2447, %v3037, %v3051
    %v3053 = vsel %vm2449, %v3037, %v3052
    %3055 = vst [vmem:[#allocation2 + $0x5a] sm:$0x3] %v3053
    %v3056 = vcombine.high %v3029, %v3029
    %v3057 = vcombine.high %v3037, %v3037
    %v3058 = vsel %vm2438, %v3056, %v3056
    %v3059 = vsel %vm2440, %v3056, %v3058
    %v3060 = vrot.slane %v3057, 7
    %v3061 = vsel %vm2443, %v3060, %v3059
    %v3062 = vsel %vm2445, %v3060, %v3061
    %v3063 = vsel %vm2447, %v3060, %v3062
    %v3064 = vsel %vm2449, %v3060, %v3063
    %3066 = vst [vmem:[#allocation2 + $0x5c] sm:$0x3] %v3064
    %v3067 = vrot.slane %v3056, 1
    %v3068 = vsel %vm2438, %v3067, %v3067
    %v3069 = vsel %vm2440, %v3067, %v3068
    %v3070 = vsel %vm2443, %v3057, %v3069
    %v3071 = vsel %vm2445, %v3057, %v3070
    %v3072 = vsel %vm2447, %v3057, %v3071
    %v3073 = vsel %vm2449, %v3057, %v3072
    %3075 = vst [vmem:[#allocation2 + $0x5e] sm:$0x3] %v3073
    %v3079 = vunpack.c.l.s4 1983009808
    %v3080 = vunpack.c.0.s8 %v3079
    %v3081 = vlaneseq
    %v3082 = vshrl.u32 %v3081, 7
    %v3083 = vsub.s32 %v3080, %v3082
    %v3084 = vrot.slane %v2412, %v3083
    %v3086 = vunpack.c.l.s4 1983009808
    %v3087 = vunpack.c.0.s8 %v3086
    %v3088 = vlaneseq
    %v3089 = vshrl.u32 %v3088, 7
    %v3090 = vsub.s32 %v3087, %v3089
    %v3091 = vrot.slane %v2420, %v3090
    %v3092 = vsel %vm2438, %v3084, %v3084
    %v3093 = vsel %vm2440, %v3084, %v3092
    %v3094 = vrot.slane %v3091, 7
    %v3095 = vsel %vm2443, %v3094, %v3093
    %v3096 = vsel %vm2445, %v3094, %v3095
    %v3097 = vsel %vm2447, %v3094, %v3096
    %v3098 = vsel %vm2449, %v3094, %v3097
    %3100 = vst [vmem:[#allocation2 + $0x60] sm:$0x3] %v3098
    %v3101 = vrot.slane %v3084, 1
    %v3102 = vsel %vm2438, %v3101, %v3101
    %v3103 = vsel %vm2440, %v3101, %v3102
    %v3104 = vsel %vm2443, %v3091, %v3103
    %v3105 = vsel %vm2445, %v3091, %v3104
    %v3106 = vsel %vm2447, %v3091, %v3105
    %v3107 = vsel %vm2449, %v3091, %v3106
    %3109 = vst [vmem:[#allocation2 + $0x62] sm:$0x3] %v3107
    %v3110 = vcombine.high %v3084, %v3084
    %v3111 = vcombine.high %v3091, %v3091
    %v3112 = vsel %vm2438, %v3110, %v3110
    %v3113 = vsel %vm2440, %v3110, %v3112
    %v3114 = vrot.slane %v3111, 7
    %v3115 = vsel %vm2443, %v3114, %v3113
    %v3116 = vsel %vm2445, %v3114, %v3115
    %v3117 = vsel %vm2447, %v3114, %v3116
    %v3118 = vsel %vm2449, %v3114, %v3117
    %3120 = vst [vmem:[#allocation2 + $0x64] sm:$0x3] %v3118
    %v3121 = vrot.slane %v3110, 1
    %v3122 = vsel %vm2438, %v3121, %v3121
    %v3123 = vsel %vm2440, %v3121, %v3122
    %v3124 = vsel %vm2443, %v3111, %v3123
    %v3125 = vsel %vm2445, %v3111, %v3124
    %v3126 = vsel %vm2447, %v3111, %v3125
    %v3127 = vsel %vm2449, %v3111, %v3126
    %3129 = vst [vmem:[#allocation2 + $0x66] sm:$0x3] %v3127
    %v3130 = vcombine.high %v2412, %v2412
    %v3132 = vunpack.c.l.s4 1983009808
    %v3133 = vunpack.c.0.s8 %v3132
    %v3134 = vlaneseq
    %v3135 = vshrl.u32 %v3134, 7
    %v3136 = vsub.s32 %v3133, %v3135
    %v3137 = vrot.slane %v3130, %v3136
    %v3138 = vcombine.high %v2420, %v2420
    %v3140 = vunpack.c.l.s4 1983009808
    %v3141 = vunpack.c.0.s8 %v3140
    %v3142 = vlaneseq
    %v3143 = vshrl.u32 %v3142, 7
    %v3144 = vsub.s32 %v3141, %v3143
    %v3145 = vrot.slane %v3138, %v3144
    %v3146 = vsel %vm2438, %v3137, %v3137
    %v3147 = vsel %vm2440, %v3137, %v3146
    %v3148 = vrot.slane %v3145, 7
    %v3149 = vsel %vm2443, %v3148, %v3147
    %v3150 = vsel %vm2445, %v3148, %v3149
    %v3151 = vsel %vm2447, %v3148, %v3150
    %v3152 = vsel %vm2449, %v3148, %v3151
    %3154 = vst [vmem:[#allocation2 + $0x68] sm:$0x3] %v3152
    %v3155 = vrot.slane %v3137, 1
    %v3156 = vsel %vm2438, %v3155, %v3155
    %v3157 = vsel %vm2440, %v3155, %v3156
    %v3158 = vsel %vm2443, %v3145, %v3157
    %v3159 = vsel %vm2445, %v3145, %v3158
    %v3160 = vsel %vm2447, %v3145, %v3159
    %v3161 = vsel %vm2449, %v3145, %v3160
    %3163 = vst [vmem:[#allocation2 + $0x6a] sm:$0x3] %v3161
    %v3164 = vcombine.high %v3137, %v3137
    %v3165 = vcombine.high %v3145, %v3145
    %v3166 = vsel %vm2438, %v3164, %v3164
    %v3167 = vsel %vm2440, %v3164, %v3166
    %v3168 = vrot.slane %v3165, 7
    %v3169 = vsel %vm2443, %v3168, %v3167
    %v3170 = vsel %vm2445, %v3168, %v3169
    %v3171 = vsel %vm2447, %v3168, %v3170
    %v3172 = vsel %vm2449, %v3168, %v3171
    %3174 = vst [vmem:[#allocation2 + $0x6c] sm:$0x3] %v3172
    %v3175 = vrot.slane %v3164, 1
    %v3176 = vsel %vm2438, %v3175, %v3175
    %v3177 = vsel %vm2440, %v3175, %v3176
    %v3178 = vsel %vm2443, %v3165, %v3177
    %v3179 = vsel %vm2445, %v3165, %v3178
    %v3180 = vsel %vm2447, %v3165, %v3179
    %v3181 = vsel %vm2449, %v3165, %v3180
    %3183 = vst [vmem:[#allocation2 + $0x6e] sm:$0x3] %v3181
    %v3187 = vunpack.c.l.s4 1983009808
    %v3188 = vunpack.c.0.s8 %v3187
    %v3189 = vlaneseq
    %v3190 = vshrl.u32 %v3189, 7
    %v3191 = vsub.s32 %v3188, %v3190
    %v3192 = vrot.slane %v2413, %v3191
    %v3194 = vunpack.c.l.s4 1983009808
    %v3195 = vunpack.c.0.s8 %v3194
    %v3196 = vlaneseq
    %v3197 = vshrl.u32 %v3196, 7
    %v3198 = vsub.s32 %v3195, %v3197
    %v3199 = vrot.slane %v2421, %v3198
    %v3200 = vsel %vm2438, %v3192, %v3192
    %v3201 = vsel %vm2440, %v3192, %v3200
    %v3202 = vrot.slane %v3199, 7
    %v3203 = vsel %vm2443, %v3202, %v3201
    %v3204 = vsel %vm2445, %v3202, %v3203
    %v3205 = vsel %vm2447, %v3202, %v3204
    %v3206 = vsel %vm2449, %v3202, %v3205
    %3208 = vst [vmem:[#allocation2 + $0x70] sm:$0x3] %v3206
    %v3209 = vrot.slane %v3192, 1
    %v3210 = vsel %vm2438, %v3209, %v3209
    %v3211 = vsel %vm2440, %v3209, %v3210
    %v3212 = vsel %vm2443, %v3199, %v3211
    %v3213 = vsel %vm2445, %v3199, %v3212
    %v3214 = vsel %vm2447, %v3199, %v3213
    %v3215 = vsel %vm2449, %v3199, %v3214
    %3217 = vst [vmem:[#allocation2 + $0x72] sm:$0x3] %v3215
    %v3218 = vcombine.high %v3192, %v3192
    %v3219 = vcombine.high %v3199, %v3199
    %v3220 = vsel %vm2438, %v3218, %v3218
    %v3221 = vsel %vm2440, %v3218, %v3220
    %v3222 = vrot.slane %v3219, 7
    %v3223 = vsel %vm2443, %v3222, %v3221
    %v3224 = vsel %vm2445, %v3222, %v3223
    %v3225 = vsel %vm2447, %v3222, %v3224
    %v3226 = vsel %vm2449, %v3222, %v3225
    %3228 = vst [vmem:[#allocation2 + $0x74] sm:$0x3] %v3226
    %v3229 = vrot.slane %v3218, 1
    %v3230 = vsel %vm2438, %v3229, %v3229
    %v3231 = vsel %vm2440, %v3229, %v3230
    %v3232 = vsel %vm2443, %v3219, %v3231
    %v3233 = vsel %vm2445, %v3219, %v3232
    %v3234 = vsel %vm2447, %v3219, %v3233
    %v3235 = vsel %vm2449, %v3219, %v3234
    %3237 = vst [vmem:[#allocation2 + $0x76] sm:$0x3] %v3235
    %v3238 = vcombine.high %v2413, %v2413
    %v3240 = vunpack.c.l.s4 1983009808
    %v3241 = vunpack.c.0.s8 %v3240
    %v3242 = vlaneseq
    %v3243 = vshrl.u32 %v3242, 7
    %v3244 = vsub.s32 %v3241, %v3243
    %v3245 = vrot.slane %v3238, %v3244
    %v3246 = vcombine.high %v2421, %v2421
    %v3248 = vunpack.c.l.s4 1983009808
    %v3249 = vunpack.c.0.s8 %v3248
    %v3250 = vlaneseq
    %v3251 = vshrl.u32 %v3250, 7
    %v3252 = vsub.s32 %v3249, %v3251
    %v3253 = vrot.slane %v3246, %v3252
    %v3254 = vsel %vm2438, %v3245, %v3245
    %v3255 = vsel %vm2440, %v3245, %v3254
    %v3256 = vrot.slane %v3253, 7
    %v3257 = vsel %vm2443, %v3256, %v3255
    %v3258 = vsel %vm2445, %v3256, %v3257
    %v3259 = vsel %vm2447, %v3256, %v3258
    %v3260 = vsel %vm2449, %v3256, %v3259
    %3262 = vst [vmem:[#allocation2 + $0x78] sm:$0x3] %v3260
    %v3263 = vrot.slane %v3245, 1
    %v3264 = vsel %vm2438, %v3263, %v3263
    %v3265 = vsel %vm2440, %v3263, %v3264
    %v3266 = vsel %vm2443, %v3253, %v3265
    %v3267 = vsel %vm2445, %v3253, %v3266
    %v3268 = vsel %vm2447, %v3253, %v3267
    %v3269 = vsel %vm2449, %v3253, %v3268
    %3271 = vst [vmem:[#allocation2 + $0x7a] sm:$0x3] %v3269
    %v3272 = vcombine.high %v3245, %v3245
    %v3273 = vcombine.high %v3253, %v3253
    %v3274 = vsel %vm2438, %v3272, %v3272
    %v3275 = vsel %vm2440, %v3272, %v3274
    %v3276 = vrot.slane %v3273, 7
    %v3277 = vsel %vm2443, %v3276, %v3275
    %v3278 = vsel %vm2445, %v3276, %v3277
    %v3279 = vsel %vm2447, %v3276, %v3278
    %v3280 = vsel %vm2449, %v3276, %v3279
    %3282 = vst [vmem:[#allocation2 + $0x7c] sm:$0x3] %v3280
    %v3283 = vrot.slane %v3272, 1
    %v3284 = vsel %vm2438, %v3283, %v3283
    %v3285 = vsel %vm2440, %v3283, %v3284
    %v3286 = vsel %vm2443, %v3273, %v3285
    %v3287 = vsel %vm2445, %v3273, %v3286
    %v3288 = vsel %vm2447, %v3273, %v3287
    %v3289 = vsel %vm2449, %v3273, %v3288
    %3291 = vst [vmem:[#allocation2 + $0x7e] sm:$0x3] %v3289
    %v3292 = vld [vmem:[#allocation2] sm:$0xff]
    %v3293 = vld [vmem:[#allocation2 + $0x8] sm:$0xff]
    %v3294 = vld [vmem:[#allocation2 + $0x10] sm:$0xff]
    %v3295 = vld [vmem:[#allocation2 + $0x18] sm:$0xff]
    %v3296 = vld [vmem:[#allocation2 + $0x20] sm:$0xff]
    %v3297 = vld [vmem:[#allocation2 + $0x28] sm:$0xff]
    %v3298 = vld [vmem:[#allocation2 + $0x30] sm:$0xff]
    %v3299 = vld [vmem:[#allocation2 + $0x38] sm:$0xff]
    %v3300 = vld [vmem:[#allocation2 + $0x40] sm:$0xff]
    %v3301 = vld [vmem:[#allocation2 + $0x48] sm:$0xff]
    %v3302 = vld [vmem:[#allocation2 + $0x50] sm:$0xff]
    %v3303 = vld [vmem:[#allocation2 + $0x58] sm:$0xff]
    %v3304 = vld [vmem:[#allocation2 + $0x60] sm:$0xff]
    %v3305 = vld [vmem:[#allocation2 + $0x68] sm:$0xff]
    %v3306 = vld [vmem:[#allocation2 + $0x70] sm:$0xff]
    %v3307 = vld [vmem:[#allocation2 + $0x78] sm:$0xff]
    %v3324 = vcombine.high %v3292, %v3292
    %v3326 = vunpack.c.l.s4 1983009808
    %v3327 = vunpack.c.0.s8 %v3326
    %v3328 = vlaneseq
    %v3329 = vshrl.u32 %v3328, 7
    %v3330 = vsub.s32 %v3327, %v3329
    %v3331 = vrot.slane %v3292, %v3330
    %v3333 = vunpack.c.l.s4 1983009808
    %v3334 = vunpack.c.0.s8 %v3333
    %v3335 = vlaneseq
    %v3336 = vshrl.u32 %v3335, 7
    %v3337 = vsub.s32 %v3334, %v3336
    %v3338 = vrot.slane %v3324, %v3337
    %v3339 = vcombine.high %v3331, %v3331
    %v3340 = vcombine.high %v3338, %v3338
    %v3341 = vcombine.high %v3293, %v3293
    %v3343 = vunpack.c.l.s4 1983009808
    %v3344 = vunpack.c.0.s8 %v3343
    %v3345 = vlaneseq
    %v3346 = vshrl.u32 %v3345, 7
    %v3347 = vsub.s32 %v3344, %v3346
    %v3348 = vrot.slane %v3293, %v3347
    %v3350 = vunpack.c.l.s4 1983009808
    %v3351 = vunpack.c.0.s8 %v3350
    %v3352 = vlaneseq
    %v3353 = vshrl.u32 %v3352, 7
    %v3354 = vsub.s32 %v3351, %v3353
    %v3355 = vrot.slane %v3341, %v3354
    %v3356 = vcombine.high %v3348, %v3348
    %v3357 = vcombine.high %v3355, %v3355
    %v3358 = vcombine.high %v3294, %v3294
    %v3360 = vunpack.c.l.s4 1983009808
    %v3361 = vunpack.c.0.s8 %v3360
    %v3362 = vlaneseq
    %v3363 = vshrl.u32 %v3362, 7
    %v3364 = vsub.s32 %v3361, %v3363
    %v3365 = vrot.slane %v3294, %v3364
    %v3367 = vunpack.c.l.s4 1983009808
    %v3368 = vunpack.c.0.s8 %v3367
    %v3369 = vlaneseq
    %v3370 = vshrl.u32 %v3369, 7
    %v3371 = vsub.s32 %v3368, %v3370
    %v3372 = vrot.slane %v3358, %v3371
    %v3373 = vcombine.high %v3365, %v3365
    %v3374 = vcombine.high %v3372, %v3372
    %v3375 = vcombine.high %v3295, %v3295
    %v3377 = vunpack.c.l.s4 1983009808
    %v3378 = vunpack.c.0.s8 %v3377
    %v3379 = vlaneseq
    %v3380 = vshrl.u32 %v3379, 7
    %v3381 = vsub.s32 %v3378, %v3380
    %v3382 = vrot.slane %v3295, %v3381
    %v3384 = vunpack.c.l.s4 1983009808
    %v3385 = vunpack.c.0.s8 %v3384
    %v3386 = vlaneseq
    %v3387 = vshrl.u32 %v3386, 7
    %v3388 = vsub.s32 %v3385, %v3387
    %v3389 = vrot.slane %v3375, %v3388
    %v3390 = vcombine.high %v3382, %v3382
    %v3391 = vcombine.high %v3389, %v3389
    %v3392 = vcombine.high %v3296, %v3296
    %v3394 = vunpack.c.l.s4 1983009808
    %v3395 = vunpack.c.0.s8 %v3394
    %v3396 = vlaneseq
    %v3397 = vshrl.u32 %v3396, 7
    %v3398 = vsub.s32 %v3395, %v3397
    %v3399 = vrot.slane %v3296, %v3398
    %v3401 = vunpack.c.l.s4 1983009808
    %v3402 = vunpack.c.0.s8 %v3401
    %v3403 = vlaneseq
    %v3404 = vshrl.u32 %v3403, 7
    %v3405 = vsub.s32 %v3402, %v3404
    %v3406 = vrot.slane %v3392, %v3405
    %v3407 = vcombine.high %v3399, %v3399
    %v3408 = vcombine.high %v3406, %v3406
    %v3409 = vcombine.high %v3297, %v3297
    %v3411 = vunpack.c.l.s4 1983009808
    %v3412 = vunpack.c.0.s8 %v3411
    %v3413 = vlaneseq
    %v3414 = vshrl.u32 %v3413, 7
    %v3415 = vsub.s32 %v3412, %v3414
    %v3416 = vrot.slane %v3297, %v3415
    %v3418 = vunpack.c.l.s4 1983009808
    %v3419 = vunpack.c.0.s8 %v3418
    %v3420 = vlaneseq
    %v3421 = vshrl.u32 %v3420, 7
    %v3422 = vsub.s32 %v3419, %v3421
    %v3423 = vrot.slane %v3409, %v3422
    %v3424 = vcombine.high %v3416, %v3416
    %v3425 = vcombine.high %v3423, %v3423
    %v3426 = vcombine.high %v3298, %v3298
    %v3428 = vunpack.c.l.s4 1983009808
    %v3429 = vunpack.c.0.s8 %v3428
    %v3430 = vlaneseq
    %v3431 = vshrl.u32 %v3430, 7
    %v3432 = vsub.s32 %v3429, %v3431
    %v3433 = vrot.slane %v3298, %v3432
    %v3435 = vunpack.c.l.s4 1983009808
    %v3436 = vunpack.c.0.s8 %v3435
    %v3437 = vlaneseq
    %v3438 = vshrl.u32 %v3437, 7
    %v3439 = vsub.s32 %v3436, %v3438
    %v3440 = vrot.slane %v3426, %v3439
    %v3441 = vcombine.high %v3433, %v3433
    %v3442 = vcombine.high %v3440, %v3440
    %v3443 = vcombine.high %v3299, %v3299
    %v3445 = vunpack.c.l.s4 1983009808
    %v3446 = vunpack.c.0.s8 %v3445
    %v3447 = vlaneseq
    %v3448 = vshrl.u32 %v3447, 7
    %v3449 = vsub.s32 %v3446, %v3448
    %v3450 = vrot.slane %v3299, %v3449
    %v3452 = vunpack.c.l.s4 1983009808
    %v3453 = vunpack.c.0.s8 %v3452
    %v3454 = vlaneseq
    %v3455 = vshrl.u32 %v3454, 7
    %v3456 = vsub.s32 %v3453, %v3455
    %v3457 = vrot.slane %v3443, %v3456
    %v3458 = vcombine.high %v3450, %v3450
    %v3459 = vcombine.high %v3457, %v3457
    %v3460 = vcombine.high %v3300, %v3300
    %v3462 = vunpack.c.l.s4 1983009808
    %v3463 = vunpack.c.0.s8 %v3462
    %v3464 = vlaneseq
    %v3465 = vshrl.u32 %v3464, 7
    %v3466 = vsub.s32 %v3463, %v3465
    %v3467 = vrot.slane %v3300, %v3466
    %v3469 = vunpack.c.l.s4 1983009808
    %v3470 = vunpack.c.0.s8 %v3469
    %v3471 = vlaneseq
    %v3472 = vshrl.u32 %v3471, 7
    %v3473 = vsub.s32 %v3470, %v3472
    %v3474 = vrot.slane %v3460, %v3473
    %v3475 = vcombine.high %v3467, %v3467
    %v3476 = vcombine.high %v3474, %v3474
    %v3477 = vcombine.high %v3301, %v3301
    %v3479 = vunpack.c.l.s4 1983009808
    %v3480 = vunpack.c.0.s8 %v3479
    %v3481 = vlaneseq
    %v3482 = vshrl.u32 %v3481, 7
    %v3483 = vsub.s32 %v3480, %v3482
    %v3484 = vrot.slane %v3301, %v3483
    %v3486 = vunpack.c.l.s4 1983009808
    %v3487 = vunpack.c.0.s8 %v3486
    %v3488 = vlaneseq
    %v3489 = vshrl.u32 %v3488, 7
    %v3490 = vsub.s32 %v3487, %v3489
    %v3491 = vrot.slane %v3477, %v3490
    %v3492 = vcombine.high %v3484, %v3484
    %v3493 = vcombine.high %v3491, %v3491
    %v3494 = vcombine.high %v3302, %v3302
    %v3496 = vunpack.c.l.s4 1983009808
    %v3497 = vunpack.c.0.s8 %v3496
    %v3498 = vlaneseq
    %v3499 = vshrl.u32 %v3498, 7
    %v3500 = vsub.s32 %v3497, %v3499
    %v3501 = vrot.slane %v3302, %v3500
    %v3503 = vunpack.c.l.s4 1983009808
    %v3504 = vunpack.c.0.s8 %v3503
    %v3505 = vlaneseq
    %v3506 = vshrl.u32 %v3505, 7
    %v3507 = vsub.s32 %v3504, %v3506
    %v3508 = vrot.slane %v3494, %v3507
    %v3509 = vcombine.high %v3501, %v3501
    %v3510 = vcombine.high %v3508, %v3508
    %v3511 = vcombine.high %v3303, %v3303
    %v3513 = vunpack.c.l.s4 1983009808
    %v3514 = vunpack.c.0.s8 %v3513
    %v3515 = vlaneseq
    %v3516 = vshrl.u32 %v3515, 7
    %v3517 = vsub.s32 %v3514, %v3516
    %v3518 = vrot.slane %v3303, %v3517
    %v3520 = vunpack.c.l.s4 1983009808
    %v3521 = vunpack.c.0.s8 %v3520
    %v3522 = vlaneseq
    %v3523 = vshrl.u32 %v3522, 7
    %v3524 = vsub.s32 %v3521, %v3523
    %v3525 = vrot.slane %v3511, %v3524
    %v3526 = vcombine.high %v3518, %v3518
    %v3527 = vcombine.high %v3525, %v3525
    %v3528 = vcombine.high %v3304, %v3304
    %v3530 = vunpack.c.l.s4 1983009808
    %v3531 = vunpack.c.0.s8 %v3530
    %v3532 = vlaneseq
    %v3533 = vshrl.u32 %v3532, 7
    %v3534 = vsub.s32 %v3531, %v3533
    %v3535 = vrot.slane %v3304, %v3534
    %v3537 = vunpack.c.l.s4 1983009808
    %v3538 = vunpack.c.0.s8 %v3537
    %v3539 = vlaneseq
    %v3540 = vshrl.u32 %v3539, 7
    %v3541 = vsub.s32 %v3538, %v3540
    %v3542 = vrot.slane %v3528, %v3541
    %v3543 = vcombine.high %v3535, %v3535
    %v3544 = vcombine.high %v3542, %v3542
    %v3545 = vcombine.high %v3305, %v3305
    %v3547 = vunpack.c.l.s4 1983009808
    %v3548 = vunpack.c.0.s8 %v3547
    %v3549 = vlaneseq
    %v3550 = vshrl.u32 %v3549, 7
    %v3551 = vsub.s32 %v3548, %v3550
    %v3552 = vrot.slane %v3305, %v3551
    %v3554 = vunpack.c.l.s4 1983009808
    %v3555 = vunpack.c.0.s8 %v3554
    %v3556 = vlaneseq
    %v3557 = vshrl.u32 %v3556, 7
    %v3558 = vsub.s32 %v3555, %v3557
    %v3559 = vrot.slane %v3545, %v3558
    %v3560 = vcombine.high %v3552, %v3552
    %v3561 = vcombine.high %v3559, %v3559
    %v3562 = vcombine.high %v3306, %v3306
    %v3564 = vunpack.c.l.s4 1983009808
    %v3565 = vunpack.c.0.s8 %v3564
    %v3566 = vlaneseq
    %v3567 = vshrl.u32 %v3566, 7
    %v3568 = vsub.s32 %v3565, %v3567
    %v3569 = vrot.slane %v3306, %v3568
    %v3571 = vunpack.c.l.s4 1983009808
    %v3572 = vunpack.c.0.s8 %v3571
    %v3573 = vlaneseq
    %v3574 = vshrl.u32 %v3573, 7
    %v3575 = vsub.s32 %v3572, %v3574
    %v3576 = vrot.slane %v3562, %v3575
    %v3577 = vcombine.high %v3569, %v3569
    %v3578 = vcombine.high %v3576, %v3576
    %v3579 = vcombine.high %v3307, %v3307
    %v3581 = vunpack.c.l.s4 1983009808
    %v3582 = vunpack.c.0.s8 %v3581
    %v3583 = vlaneseq
    %v3584 = vshrl.u32 %v3583, 7
    %v3585 = vsub.s32 %v3582, %v3584
    %v3586 = vrot.slane %v3307, %v3585
    %v3588 = vunpack.c.l.s4 1983009808
    %v3589 = vunpack.c.0.s8 %v3588
    %v3590 = vlaneseq
    %v3591 = vshrl.u32 %v3590, 7
    %v3592 = vsub.s32 %v3589, %v3591
    %v3593 = vrot.slane %v3579, %v3592
    %v3594 = vcombine.high %v3586, %v3586
    %v3595 = vcombine.high %v3593, %v3593
    %v3660 = vpack.c.bf16 %v3331, %v3331
    %v3661 = vpack.c.bf16 %v3339, %v3339
    %v3662 = vpack.c.bf16 %v3338, %v3338
    %v3663 = vpack.c.bf16 %v3340, %v3340
    %v3664 = vpack.c.bf16 %v3348, %v3348
    %v3665 = vpack.c.bf16 %v3356, %v3356
    %v3666 = vpack.c.bf16 %v3355, %v3355
    %v3667 = vpack.c.bf16 %v3357, %v3357
    %v3668 = vpack.c.bf16 %v3365, %v3365
    %v3669 = vpack.c.bf16 %v3373, %v3373
    %v3670 = vpack.c.bf16 %v3372, %v3372
    %v3671 = vpack.c.bf16 %v3374, %v3374
    %v3672 = vpack.c.bf16 %v3382, %v3382
    %v3673 = vpack.c.bf16 %v3390, %v3390
    %v3674 = vpack.c.bf16 %v3389, %v3389
    %v3675 = vpack.c.bf16 %v3391, %v3391
    %v3676 = vpack.c.bf16 %v3399, %v3399
    %v3677 = vpack.c.bf16 %v3407, %v3407
    %v3678 = vpack.c.bf16 %v3406, %v3406
    %v3679 = vpack.c.bf16 %v3408, %v3408
    %v3680 = vpack.c.bf16 %v3416, %v3416
    %v3681 = vpack.c.bf16 %v3424, %v3424
    %v3682 = vpack.c.bf16 %v3423, %v3423
    %v3683 = vpack.c.bf16 %v3425, %v3425
    %v3684 = vpack.c.bf16 %v3433, %v3433
    %v3685 = vpack.c.bf16 %v3441, %v3441
    %v3686 = vpack.c.bf16 %v3440, %v3440
    %v3687 = vpack.c.bf16 %v3442, %v3442
    %v3688 = vpack.c.bf16 %v3450, %v3450
    %v3689 = vpack.c.bf16 %v3458, %v3458
    %v3690 = vpack.c.bf16 %v3457, %v3457
    %v3691 = vpack.c.bf16 %v3459, %v3459
    %v3692 = vpack.c.bf16 %v3467, %v3467
    %v3693 = vpack.c.bf16 %v3475, %v3475
    %v3694 = vpack.c.bf16 %v3474, %v3474
    %v3695 = vpack.c.bf16 %v3476, %v3476
    %v3696 = vpack.c.bf16 %v3484, %v3484
    %v3697 = vpack.c.bf16 %v3492, %v3492
    %v3698 = vpack.c.bf16 %v3491, %v3491
    %v3699 = vpack.c.bf16 %v3493, %v3493
    %v3700 = vpack.c.bf16 %v3501, %v3501
    %v3701 = vpack.c.bf16 %v3509, %v3509
    %v3702 = vpack.c.bf16 %v3508, %v3508
    %v3703 = vpack.c.bf16 %v3510, %v3510
    %v3704 = vpack.c.bf16 %v3518, %v3518
    %v3705 = vpack.c.bf16 %v3526, %v3526
    %v3706 = vpack.c.bf16 %v3525, %v3525
    %v3707 = vpack.c.bf16 %v3527, %v3527
    %v3708 = vpack.c.bf16 %v3535, %v3535
    %v3709 = vpack.c.bf16 %v3543, %v3543
    %v3710 = vpack.c.bf16 %v3542, %v3542
    %v3711 = vpack.c.bf16 %v3544, %v3544
    %v3712 = vpack.c.bf16 %v3552, %v3552
    %v3713 = vpack.c.bf16 %v3560, %v3560
    %v3714 = vpack.c.bf16 %v3559, %v3559
    %v3715 = vpack.c.bf16 %v3561, %v3561
    %v3716 = vpack.c.bf16 %v3569, %v3569
    %v3717 = vpack.c.bf16 %v3577, %v3577
    %v3718 = vpack.c.bf16 %v3576, %v3576
    %v3719 = vpack.c.bf16 %v3578, %v3578
    %v3720 = vpack.c.bf16 %v3586, %v3586
    %v3721 = vpack.c.bf16 %v3594, %v3594
    %v3722 = vpack.c.bf16 %v3593, %v3593
    %v3723 = vpack.c.bf16 %v3595, %v3595
    %v3724 = vld [vmem:[#allocation11] sm:$0xf]
    %v3725 = vld [vmem:[#allocation11 + $0x4] sm:$0xf]
    %v3726 = vld [vmem:[#allocation11 + $0x8] sm:$0xf]
    %v3727 = vld [vmem:[#allocation11 + $0xc] sm:$0xf]
    %v3728 = vld [vmem:[#allocation11 + $0x10] sm:$0xf]
    %v3729 = vld [vmem:[#allocation11 + $0x14] sm:$0xf]
    %v3730 = vld [vmem:[#allocation11 + $0x18] sm:$0xf]
    %v3731 = vld [vmem:[#allocation11 + $0x1c] sm:$0xf]
    %v3732 = vld [vmem:[#allocation11 + $0x20] sm:$0xf]
    %v3733 = vld [vmem:[#allocation11 + $0x24] sm:$0xf]
    %v3734 = vld [vmem:[#allocation11 + $0x28] sm:$0xf]
    %v3735 = vld [vmem:[#allocation11 + $0x2c] sm:$0xf]
    %v3736 = vld [vmem:[#allocation11 + $0x30] sm:$0xf]
    %v3737 = vld [vmem:[#allocation11 + $0x34] sm:$0xf]
    %v3738 = vld [vmem:[#allocation11 + $0x38] sm:$0xf]
    %v3739 = vld [vmem:[#allocation11 + $0x3c] sm:$0xf]
    %v3740 = vld [vmem:[#allocation11 + $0x40] sm:$0xf]
    %v3741 = vld [vmem:[#allocation11 + $0x44] sm:$0xf]
    %v3742 = vld [vmem:[#allocation11 + $0x48] sm:$0xf]
    %v3743 = vld [vmem:[#allocation11 + $0x4c] sm:$0xf]
    %v3744 = vld [vmem:[#allocation11 + $0x50] sm:$0xf]
    %v3745 = vld [vmem:[#allocation11 + $0x54] sm:$0xf]
    %v3746 = vld [vmem:[#allocation11 + $0x58] sm:$0xf]
    %v3747 = vld [vmem:[#allocation11 + $0x5c] sm:$0xf]
    %v3748 = vld [vmem:[#allocation11 + $0x60] sm:$0xf]
    %v3749 = vld [vmem:[#allocation11 + $0x64] sm:$0xf]
    %v3750 = vld [vmem:[#allocation11 + $0x68] sm:$0xf]
    %v3751 = vld [vmem:[#allocation11 + $0x6c] sm:$0xf]
    %v3752 = vld [vmem:[#allocation11 + $0x70] sm:$0xf]
    %v3753 = vld [vmem:[#allocation11 + $0x74] sm:$0xf]
    %v3754 = vld [vmem:[#allocation11 + $0x78] sm:$0xf]
    %v3755 = vld [vmem:[#allocation11 + $0x7c] sm:$0xf]
    %v3756 = vld [vmem:[#allocation11 + $0x80] sm:$0xf]
    %v3757 = vld [vmem:[#allocation11 + $0x84] sm:$0xf]
    %v3758 = vld [vmem:[#allocation11 + $0x88] sm:$0xf]
    %v3759 = vld [vmem:[#allocation11 + $0x8c] sm:$0xf]
    %v3760 = vld [vmem:[#allocation11 + $0x90] sm:$0xf]
    %v3761 = vld [vmem:[#allocation11 + $0x94] sm:$0xf]
    %v3762 = vld [vmem:[#allocation11 + $0x98] sm:$0xf]
    %v3763 = vld [vmem:[#allocation11 + $0x9c] sm:$0xf]
    %v3764 = vld [vmem:[#allocation11 + $0xa0] sm:$0xf]
    %v3765 = vld [vmem:[#allocation11 + $0xa4] sm:$0xf]
    %v3766 = vld [vmem:[#allocation11 + $0xa8] sm:$0xf]
    %v3767 = vld [vmem:[#allocation11 + $0xac] sm:$0xf]
    %v3768 = vld [vmem:[#allocation11 + $0xb0] sm:$0xf]
    %v3769 = vld [vmem:[#allocation11 + $0xb4] sm:$0xf]
    %v3770 = vld [vmem:[#allocation11 + $0xb8] sm:$0xf]
    %v3771 = vld [vmem:[#allocation11 + $0xbc] sm:$0xf]
    %v3772 = vld [vmem:[#allocation11 + $0xc0] sm:$0xf]
    %v3773 = vld [vmem:[#allocation11 + $0xc4] sm:$0xf]
    %v3774 = vld [vmem:[#allocation11 + $0xc8] sm:$0xf]
    %v3775 = vld [vmem:[#allocation11 + $0xcc] sm:$0xf]
    %v3776 = vld [vmem:[#allocation11 + $0xd0] sm:$0xf]
    %v3777 = vld [vmem:[#allocation11 + $0xd4] sm:$0xf]
    %v3778 = vld [vmem:[#allocation11 + $0xd8] sm:$0xf]
    %v3779 = vld [vmem:[#allocation11 + $0xdc] sm:$0xf]
    %v3780 = vld [vmem:[#allocation11 + $0xe0] sm:$0xf]
    %v3781 = vld [vmem:[#allocation11 + $0xe4] sm:$0xf]
    %v3782 = vld [vmem:[#allocation11 + $0xe8] sm:$0xf]
    %v3783 = vld [vmem:[#allocation11 + $0xec] sm:$0xf]
    %v3784 = vld [vmem:[#allocation11 + $0xf0] sm:$0xf]
    %v3785 = vld [vmem:[#allocation11 + $0xf4] sm:$0xf]
    %v3786 = vld [vmem:[#allocation11 + $0xf8] sm:$0xf]
    %v3787 = vld [vmem:[#allocation11 + $0xfc] sm:$0xf]
    %v3788 = vld [vmem:[#allocation11 + $0x100] sm:$0xf]
    %v3789 = vld [vmem:[#allocation11 + $0x104] sm:$0xf]
    %v3790 = vld [vmem:[#allocation11 + $0x108] sm:$0xf]
    %v3791 = vld [vmem:[#allocation11 + $0x10c] sm:$0xf]
    %v3792 = vld [vmem:[#allocation11 + $0x110] sm:$0xf]
    %v3793 = vld [vmem:[#allocation11 + $0x114] sm:$0xf]
    %v3794 = vld [vmem:[#allocation11 + $0x118] sm:$0xf]
    %v3795 = vld [vmem:[#allocation11 + $0x11c] sm:$0xf]
    %v3796 = vld [vmem:[#allocation11 + $0x120] sm:$0xf]
    %v3797 = vld [vmem:[#allocation11 + $0x124] sm:$0xf]
    %v3798 = vld [vmem:[#allocation11 + $0x128] sm:$0xf]
    %v3799 = vld [vmem:[#allocation11 + $0x12c] sm:$0xf]
    %v3800 = vld [vmem:[#allocation11 + $0x130] sm:$0xf]
    %v3801 = vld [vmem:[#allocation11 + $0x134] sm:$0xf]
    %v3802 = vld [vmem:[#allocation11 + $0x138] sm:$0xf]
    %v3803 = vld [vmem:[#allocation11 + $0x13c] sm:$0xf]
    %v3804 = vld [vmem:[#allocation11 + $0x140] sm:$0xf]
    %v3805 = vld [vmem:[#allocation11 + $0x144] sm:$0xf]
    %v3806 = vld [vmem:[#allocation11 + $0x148] sm:$0xf]
    %v3807 = vld [vmem:[#allocation11 + $0x14c] sm:$0xf]
    %v3808 = vld [vmem:[#allocation11 + $0x150] sm:$0xf]
    %v3809 = vld [vmem:[#allocation11 + $0x154] sm:$0xf]
    %v3810 = vld [vmem:[#allocation11 + $0x158] sm:$0xf]
    %v3811 = vld [vmem:[#allocation11 + $0x15c] sm:$0xf]
    %v3812 = vld [vmem:[#allocation11 + $0x160] sm:$0xf]
    %v3813 = vld [vmem:[#allocation11 + $0x164] sm:$0xf]
    %v3814 = vld [vmem:[#allocation11 + $0x168] sm:$0xf]
    %v3815 = vld [vmem:[#allocation11 + $0x16c] sm:$0xf]
    %v3816 = vld [vmem:[#allocation11 + $0x170] sm:$0xf]
    %v3817 = vld [vmem:[#allocation11 + $0x174] sm:$0xf]
    %v3818 = vld [vmem:[#allocation11 + $0x178] sm:$0xf]
    %v3819 = vld [vmem:[#allocation11 + $0x17c] sm:$0xf]
    %v3820 = vld [vmem:[#allocation11 + $0x180] sm:$0xf]
    %v3821 = vld [vmem:[#allocation11 + $0x184] sm:$0xf]
    %v3822 = vld [vmem:[#allocation11 + $0x188] sm:$0xf]
    %v3823 = vld [vmem:[#allocation11 + $0x18c] sm:$0xf]
    %v3824 = vld [vmem:[#allocation11 + $0x190] sm:$0xf]
    %v3825 = vld [vmem:[#allocation11 + $0x194] sm:$0xf]
    %v3826 = vld [vmem:[#allocation11 + $0x198] sm:$0xf]
    %v3827 = vld [vmem:[#allocation11 + $0x19c] sm:$0xf]
    %v3828 = vld [vmem:[#allocation11 + $0x1a0] sm:$0xf]
    %v3829 = vld [vmem:[#allocation11 + $0x1a4] sm:$0xf]
    %v3830 = vld [vmem:[#allocation11 + $0x1a8] sm:$0xf]
    %v3831 = vld [vmem:[#allocation11 + $0x1ac] sm:$0xf]
    %v3832 = vld [vmem:[#allocation11 + $0x1b0] sm:$0xf]
    %v3833 = vld [vmem:[#allocation11 + $0x1b4] sm:$0xf]
    %v3834 = vld [vmem:[#allocation11 + $0x1b8] sm:$0xf]
    %v3835 = vld [vmem:[#allocation11 + $0x1bc] sm:$0xf]
    %v3836 = vld [vmem:[#allocation11 + $0x1c0] sm:$0xf]
    %v3837 = vld [vmem:[#allocation11 + $0x1c4] sm:$0xf]
    %v3838 = vld [vmem:[#allocation11 + $0x1c8] sm:$0xf]
    %v3839 = vld [vmem:[#allocation11 + $0x1cc] sm:$0xf]
    %v3840 = vld [vmem:[#allocation11 + $0x1d0] sm:$0xf]
    %v3841 = vld [vmem:[#allocation11 + $0x1d4] sm:$0xf]
    %v3842 = vld [vmem:[#allocation11 + $0x1d8] sm:$0xf]
    %v3843 = vld [vmem:[#allocation11 + $0x1dc] sm:$0xf]
    %v3844 = vld [vmem:[#allocation11 + $0x1e0] sm:$0xf]
    %v3845 = vld [vmem:[#allocation11 + $0x1e4] sm:$0xf]
    %v3846 = vld [vmem:[#allocation11 + $0x1e8] sm:$0xf]
    %v3847 = vld [vmem:[#allocation11 + $0x1ec] sm:$0xf]
    %v3848 = vld [vmem:[#allocation11 + $0x1f0] sm:$0xf]
    %v3849 = vld [vmem:[#allocation11 + $0x1f4] sm:$0xf]
    %v3850 = vld [vmem:[#allocation11 + $0x1f8] sm:$0xf]
    %v3851 = vld [vmem:[#allocation11 + $0x1fc] sm:$0xf]
    %v3852 = vld [vmem:[#allocation11 + $0x200] sm:$0xf]
    %v3853 = vld [vmem:[#allocation11 + $0x204] sm:$0xf]
    %v3854 = vld [vmem:[#allocation11 + $0x208] sm:$0xf]
    %v3855 = vld [vmem:[#allocation11 + $0x20c] sm:$0xf]
    %v3856 = vld [vmem:[#allocation11 + $0x210] sm:$0xf]
    %v3857 = vld [vmem:[#allocation11 + $0x214] sm:$0xf]
    %v3858 = vld [vmem:[#allocation11 + $0x218] sm:$0xf]
    %v3859 = vld [vmem:[#allocation11 + $0x21c] sm:$0xf]
    %v3860 = vld [vmem:[#allocation11 + $0x220] sm:$0xf]
    %v3861 = vld [vmem:[#allocation11 + $0x224] sm:$0xf]
    %v3862 = vld [vmem:[#allocation11 + $0x228] sm:$0xf]
    %v3863 = vld [vmem:[#allocation11 + $0x22c] sm:$0xf]
    %v3864 = vld [vmem:[#allocation11 + $0x230] sm:$0xf]
    %v3865 = vld [vmem:[#allocation11 + $0x234] sm:$0xf]
    %v3866 = vld [vmem:[#allocation11 + $0x238] sm:$0xf]
    %v3867 = vld [vmem:[#allocation11 + $0x23c] sm:$0xf]
    %v3868 = vld [vmem:[#allocation11 + $0x240] sm:$0xf]
    %v3869 = vld [vmem:[#allocation11 + $0x244] sm:$0xf]
    %v3870 = vld [vmem:[#allocation11 + $0x248] sm:$0xf]
    %v3871 = vld [vmem:[#allocation11 + $0x24c] sm:$0xf]
    %v3872 = vld [vmem:[#allocation11 + $0x250] sm:$0xf]
    %v3873 = vld [vmem:[#allocation11 + $0x254] sm:$0xf]
    %v3874 = vld [vmem:[#allocation11 + $0x258] sm:$0xf]
    %v3875 = vld [vmem:[#allocation11 + $0x25c] sm:$0xf]
    %v3876 = vld [vmem:[#allocation11 + $0x260] sm:$0xf]
    %v3877 = vld [vmem:[#allocation11 + $0x264] sm:$0xf]
    %v3878 = vld [vmem:[#allocation11 + $0x268] sm:$0xf]
    %v3879 = vld [vmem:[#allocation11 + $0x26c] sm:$0xf]
    %v3880 = vld [vmem:[#allocation11 + $0x270] sm:$0xf]
    %v3881 = vld [vmem:[#allocation11 + $0x274] sm:$0xf]
    %v3882 = vld [vmem:[#allocation11 + $0x278] sm:$0xf]
    %v3883 = vld [vmem:[#allocation11 + $0x27c] sm:$0xf]
    %v3884 = vld [vmem:[#allocation11 + $0x280] sm:$0xf]
    %v3885 = vld [vmem:[#allocation11 + $0x284] sm:$0xf]
    %v3886 = vld [vmem:[#allocation11 + $0x288] sm:$0xf]
    %v3887 = vld [vmem:[#allocation11 + $0x28c] sm:$0xf]
    %v3888 = vld [vmem:[#allocation11 + $0x290] sm:$0xf]
    %v3889 = vld [vmem:[#allocation11 + $0x294] sm:$0xf]
    %v3890 = vld [vmem:[#allocation11 + $0x298] sm:$0xf]
    %v3891 = vld [vmem:[#allocation11 + $0x29c] sm:$0xf]
    %v3892 = vld [vmem:[#allocation11 + $0x2a0] sm:$0xf]
    %v3893 = vld [vmem:[#allocation11 + $0x2a4] sm:$0xf]
    %v3894 = vld [vmem:[#allocation11 + $0x2a8] sm:$0xf]
    %v3895 = vld [vmem:[#allocation11 + $0x2ac] sm:$0xf]
    %v3896 = vld [vmem:[#allocation11 + $0x2b0] sm:$0xf]
    %v3897 = vld [vmem:[#allocation11 + $0x2b4] sm:$0xf]
    %v3898 = vld [vmem:[#allocation11 + $0x2b8] sm:$0xf]
    %v3899 = vld [vmem:[#allocation11 + $0x2bc] sm:$0xf]
    %v3900 = vld [vmem:[#allocation11 + $0x2c0] sm:$0xf]
    %v3901 = vld [vmem:[#allocation11 + $0x2c4] sm:$0xf]
    %v3902 = vld [vmem:[#allocation11 + $0x2c8] sm:$0xf]
    %v3903 = vld [vmem:[#allocation11 + $0x2cc] sm:$0xf]
    %v3904 = vld [vmem:[#allocation11 + $0x2d0] sm:$0xf]
    %v3905 = vld [vmem:[#allocation11 + $0x2d4] sm:$0xf]
    %v3906 = vld [vmem:[#allocation11 + $0x2d8] sm:$0xf]
    %v3907 = vld [vmem:[#allocation11 + $0x2dc] sm:$0xf]
    %v3908 = vld [vmem:[#allocation11 + $0x2e0] sm:$0xf]
    %v3909 = vld [vmem:[#allocation11 + $0x2e4] sm:$0xf]
    %v3910 = vld [vmem:[#allocation11 + $0x2e8] sm:$0xf]
    %v3911 = vld [vmem:[#allocation11 + $0x2ec] sm:$0xf]
    %v3912 = vld [vmem:[#allocation11 + $0x2f0] sm:$0xf]
    %v3913 = vld [vmem:[#allocation11 + $0x2f4] sm:$0xf]
    %v3914 = vld [vmem:[#allocation11 + $0x2f8] sm:$0xf]
    %v3915 = vld [vmem:[#allocation11 + $0x2fc] sm:$0xf]
    %v3916 = vld [vmem:[#allocation11 + $0x300] sm:$0xf]
    %v3917 = vld [vmem:[#allocation11 + $0x304] sm:$0xf]
    %v3918 = vld [vmem:[#allocation11 + $0x308] sm:$0xf]
    %v3919 = vld [vmem:[#allocation11 + $0x30c] sm:$0xf]
    %v3920 = vld [vmem:[#allocation11 + $0x310] sm:$0xf]
    %v3921 = vld [vmem:[#allocation11 + $0x314] sm:$0xf]
    %v3922 = vld [vmem:[#allocation11 + $0x318] sm:$0xf]
    %v3923 = vld [vmem:[#allocation11 + $0x31c] sm:$0xf]
    %v3924 = vld [vmem:[#allocation11 + $0x320] sm:$0xf]
    %v3925 = vld [vmem:[#allocation11 + $0x324] sm:$0xf]
    %v3926 = vld [vmem:[#allocation11 + $0x328] sm:$0xf]
    %v3927 = vld [vmem:[#allocation11 + $0x32c] sm:$0xf]
    %v3928 = vld [vmem:[#allocation11 + $0x330] sm:$0xf]
    %v3929 = vld [vmem:[#allocation11 + $0x334] sm:$0xf]
    %v3930 = vld [vmem:[#allocation11 + $0x338] sm:$0xf]
    %v3931 = vld [vmem:[#allocation11 + $0x33c] sm:$0xf]
    %v3932 = vld [vmem:[#allocation11 + $0x340] sm:$0xf]
    %v3933 = vld [vmem:[#allocation11 + $0x344] sm:$0xf]
    %v3934 = vld [vmem:[#allocation11 + $0x348] sm:$0xf]
    %v3935 = vld [vmem:[#allocation11 + $0x34c] sm:$0xf]
    %v3936 = vld [vmem:[#allocation11 + $0x350] sm:$0xf]
    %v3937 = vld [vmem:[#allocation11 + $0x354] sm:$0xf]
    %v3938 = vld [vmem:[#allocation11 + $0x358] sm:$0xf]
    %v3939 = vld [vmem:[#allocation11 + $0x35c] sm:$0xf]
    %v3940 = vld [vmem:[#allocation11 + $0x360] sm:$0xf]
    %v3941 = vld [vmem:[#allocation11 + $0x364] sm:$0xf]
    %v3942 = vld [vmem:[#allocation11 + $0x368] sm:$0xf]
    %v3943 = vld [vmem:[#allocation11 + $0x36c] sm:$0xf]
    %v3944 = vld [vmem:[#allocation11 + $0x370] sm:$0xf]
    %v3945 = vld [vmem:[#allocation11 + $0x374] sm:$0xf]
    %v3946 = vld [vmem:[#allocation11 + $0x378] sm:$0xf]
    %v3947 = vld [vmem:[#allocation11 + $0x37c] sm:$0xf]
    %v3948 = vld [vmem:[#allocation11 + $0x380] sm:$0xf]
    %v3949 = vld [vmem:[#allocation11 + $0x384] sm:$0xf]
    %v3950 = vld [vmem:[#allocation11 + $0x388] sm:$0xf]
    %v3951 = vld [vmem:[#allocation11 + $0x38c] sm:$0xf]
    %v3952 = vld [vmem:[#allocation11 + $0x390] sm:$0xf]
    %v3953 = vld [vmem:[#allocation11 + $0x394] sm:$0xf]
    %v3954 = vld [vmem:[#allocation11 + $0x398] sm:$0xf]
    %v3955 = vld [vmem:[#allocation11 + $0x39c] sm:$0xf]
    %v3956 = vld [vmem:[#allocation11 + $0x3a0] sm:$0xf]
    %v3957 = vld [vmem:[#allocation11 + $0x3a4] sm:$0xf]
    %v3958 = vld [vmem:[#allocation11 + $0x3a8] sm:$0xf]
    %v3959 = vld [vmem:[#allocation11 + $0x3ac] sm:$0xf]
    %v3960 = vld [vmem:[#allocation11 + $0x3b0] sm:$0xf]
    %v3961 = vld [vmem:[#allocation11 + $0x3b4] sm:$0xf]
    %v3962 = vld [vmem:[#allocation11 + $0x3b8] sm:$0xf]
    %v3963 = vld [vmem:[#allocation11 + $0x3bc] sm:$0xf]
    %v3964 = vld [vmem:[#allocation11 + $0x3c0] sm:$0xf]
    %v3965 = vld [vmem:[#allocation11 + $0x3c4] sm:$0xf]
    %v3966 = vld [vmem:[#allocation11 + $0x3c8] sm:$0xf]
    %v3967 = vld [vmem:[#allocation11 + $0x3cc] sm:$0xf]
    %v3968 = vld [vmem:[#allocation11 + $0x3d0] sm:$0xf]
    %v3969 = vld [vmem:[#allocation11 + $0x3d4] sm:$0xf]
    %v3970 = vld [vmem:[#allocation11 + $0x3d8] sm:$0xf]
    %v3971 = vld [vmem:[#allocation11 + $0x3dc] sm:$0xf]
    %v3972 = vld [vmem:[#allocation11 + $0x3e0] sm:$0xf]
    %v3973 = vld [vmem:[#allocation11 + $0x3e4] sm:$0xf]
    %v3974 = vld [vmem:[#allocation11 + $0x3e8] sm:$0xf]
    %v3975 = vld [vmem:[#allocation11 + $0x3ec] sm:$0xf]
    %v3976 = vld [vmem:[#allocation11 + $0x3f0] sm:$0xf]
    %v3977 = vld [vmem:[#allocation11 + $0x3f4] sm:$0xf]
    %v3978 = vld [vmem:[#allocation11 + $0x3f8] sm:$0xf]
    %v3979 = vld [vmem:[#allocation11 + $0x3fc] sm:$0xf]
    %v3980 = vld [vmem:[#allocation11 + $0x400] sm:$0xf]
    %v3981 = vld [vmem:[#allocation11 + $0x404] sm:$0xf]
    %v3982 = vld [vmem:[#allocation11 + $0x408] sm:$0xf]
    %v3983 = vld [vmem:[#allocation11 + $0x40c] sm:$0xf]
    %v3984 = vld [vmem:[#allocation11 + $0x410] sm:$0xf]
    %v3985 = vld [vmem:[#allocation11 + $0x414] sm:$0xf]
    %v3986 = vld [vmem:[#allocation11 + $0x418] sm:$0xf]
    %v3987 = vld [vmem:[#allocation11 + $0x41c] sm:$0xf]
    %v3988 = vld [vmem:[#allocation11 + $0x420] sm:$0xf]
    %v3989 = vld [vmem:[#allocation11 + $0x424] sm:$0xf]
    %v3990 = vld [vmem:[#allocation11 + $0x428] sm:$0xf]
    %v3991 = vld [vmem:[#allocation11 + $0x42c] sm:$0xf]
    %v3992 = vld [vmem:[#allocation11 + $0x430] sm:$0xf]
    %v3993 = vld [vmem:[#allocation11 + $0x434] sm:$0xf]
    %v3994 = vld [vmem:[#allocation11 + $0x438] sm:$0xf]
    %v3995 = vld [vmem:[#allocation11 + $0x43c] sm:$0xf]
    %v3996 = vld [vmem:[#allocation11 + $0x440] sm:$0xf]
    %v3997 = vld [vmem:[#allocation11 + $0x444] sm:$0xf]
    %v3998 = vld [vmem:[#allocation11 + $0x448] sm:$0xf]
    %v3999 = vld [vmem:[#allocation11 + $0x44c] sm:$0xf]
    %v4000 = vld [vmem:[#allocation11 + $0x450] sm:$0xf]
    %v4001 = vld [vmem:[#allocation11 + $0x454] sm:$0xf]
    %v4002 = vld [vmem:[#allocation11 + $0x458] sm:$0xf]
    %v4003 = vld [vmem:[#allocation11 + $0x45c] sm:$0xf]
    %v4004 = vld [vmem:[#allocation11 + $0x460] sm:$0xf]
    %v4005 = vld [vmem:[#allocation11 + $0x464] sm:$0xf]
    %v4006 = vld [vmem:[#allocation11 + $0x468] sm:$0xf]
    %v4007 = vld [vmem:[#allocation11 + $0x46c] sm:$0xf]
    %v4008 = vld [vmem:[#allocation11 + $0x470] sm:$0xf]
    %v4009 = vld [vmem:[#allocation11 + $0x474] sm:$0xf]
    %v4010 = vld [vmem:[#allocation11 + $0x478] sm:$0xf]
    %v4011 = vld [vmem:[#allocation11 + $0x47c] sm:$0xf]
    %v4012 = vld [vmem:[#allocation11 + $0x480] sm:$0xf]
    %v4013 = vld [vmem:[#allocation11 + $0x484] sm:$0xf]
    %v4014 = vld [vmem:[#allocation11 + $0x488] sm:$0xf]
    %v4015 = vld [vmem:[#allocation11 + $0x48c] sm:$0xf]
    %v4016 = vld [vmem:[#allocation11 + $0x490] sm:$0xf]
    %v4017 = vld [vmem:[#allocation11 + $0x494] sm:$0xf]
    %v4018 = vld [vmem:[#allocation11 + $0x498] sm:$0xf]
    %v4019 = vld [vmem:[#allocation11 + $0x49c] sm:$0xf]
    %v4020 = vld [vmem:[#allocation11 + $0x4a0] sm:$0xf]
    %v4021 = vld [vmem:[#allocation11 + $0x4a4] sm:$0xf]
    %v4022 = vld [vmem:[#allocation11 + $0x4a8] sm:$0xf]
    %v4023 = vld [vmem:[#allocation11 + $0x4ac] sm:$0xf]
    %v4024 = vld [vmem:[#allocation11 + $0x4b0] sm:$0xf]
    %v4025 = vld [vmem:[#allocation11 + $0x4b4] sm:$0xf]
    %v4026 = vld [vmem:[#allocation11 + $0x4b8] sm:$0xf]
    %v4027 = vld [vmem:[#allocation11 + $0x4bc] sm:$0xf]
    %v4028 = vld [vmem:[#allocation11 + $0x4c0] sm:$0xf]
    %v4029 = vld [vmem:[#allocation11 + $0x4c4] sm:$0xf]
    %v4030 = vld [vmem:[#allocation11 + $0x4c8] sm:$0xf]
    %v4031 = vld [vmem:[#allocation11 + $0x4cc] sm:$0xf]
    %v4032 = vld [vmem:[#allocation11 + $0x4d0] sm:$0xf]
    %v4033 = vld [vmem:[#allocation11 + $0x4d4] sm:$0xf]
    %v4034 = vld [vmem:[#allocation11 + $0x4d8] sm:$0xf]
    %v4035 = vld [vmem:[#allocation11 + $0x4dc] sm:$0xf]
    %v4036 = vld [vmem:[#allocation11 + $0x4e0] sm:$0xf]
    %v4037 = vld [vmem:[#allocation11 + $0x4e4] sm:$0xf]
    %v4038 = vld [vmem:[#allocation11 + $0x4e8] sm:$0xf]
    %v4039 = vld [vmem:[#allocation11 + $0x4ec] sm:$0xf]
    %v4040 = vld [vmem:[#allocation11 + $0x4f0] sm:$0xf]
    %v4041 = vld [vmem:[#allocation11 + $0x4f4] sm:$0xf]
    %v4042 = vld [vmem:[#allocation11 + $0x4f8] sm:$0xf]
    %v4043 = vld [vmem:[#allocation11 + $0x4fc] sm:$0xf]
    %v4044 = vld [vmem:[#allocation11 + $0x500] sm:$0xf]
    %v4045 = vld [vmem:[#allocation11 + $0x504] sm:$0xf]
    %v4046 = vld [vmem:[#allocation11 + $0x508] sm:$0xf]
    %v4047 = vld [vmem:[#allocation11 + $0x50c] sm:$0xf]
    %v4048 = vld [vmem:[#allocation11 + $0x510] sm:$0xf]
    %v4049 = vld [vmem:[#allocation11 + $0x514] sm:$0xf]
    %v4050 = vld [vmem:[#allocation11 + $0x518] sm:$0xf]
    %v4051 = vld [vmem:[#allocation11 + $0x51c] sm:$0xf]
    %v4052 = vld [vmem:[#allocation11 + $0x520] sm:$0xf]
    %v4053 = vld [vmem:[#allocation11 + $0x524] sm:$0xf]
    %v4054 = vld [vmem:[#allocation11 + $0x528] sm:$0xf]
    %v4055 = vld [vmem:[#allocation11 + $0x52c] sm:$0xf]
    %v4056 = vld [vmem:[#allocation11 + $0x530] sm:$0xf]
    %v4057 = vld [vmem:[#allocation11 + $0x534] sm:$0xf]
    %v4058 = vld [vmem:[#allocation11 + $0x538] sm:$0xf]
    %v4059 = vld [vmem:[#allocation11 + $0x53c] sm:$0xf]
    %v4060 = vld [vmem:[#allocation11 + $0x540] sm:$0xf]
    %v4061 = vld [vmem:[#allocation11 + $0x544] sm:$0xf]
    %v4062 = vld [vmem:[#allocation11 + $0x548] sm:$0xf]
    %v4063 = vld [vmem:[#allocation11 + $0x54c] sm:$0xf]
    %v4064 = vld [vmem:[#allocation11 + $0x550] sm:$0xf]
    %v4065 = vld [vmem:[#allocation11 + $0x554] sm:$0xf]
    %v4066 = vld [vmem:[#allocation11 + $0x558] sm:$0xf]
    %v4067 = vld [vmem:[#allocation11 + $0x55c] sm:$0xf]
    %v4068 = vld [vmem:[#allocation11 + $0x560] sm:$0xf]
    %v4069 = vld [vmem:[#allocation11 + $0x564] sm:$0xf]
    %v4070 = vld [vmem:[#allocation11 + $0x568] sm:$0xf]
    %v4071 = vld [vmem:[#allocation11 + $0x56c] sm:$0xf]
    %v4072 = vld [vmem:[#allocation11 + $0x570] sm:$0xf]
    %v4073 = vld [vmem:[#allocation11 + $0x574] sm:$0xf]
    %v4074 = vld [vmem:[#allocation11 + $0x578] sm:$0xf]
    %v4075 = vld [vmem:[#allocation11 + $0x57c] sm:$0xf]
    %v4076 = vld [vmem:[#allocation11 + $0x580] sm:$0xf]
    %v4077 = vld [vmem:[#allocation11 + $0x584] sm:$0xf]
    %v4078 = vld [vmem:[#allocation11 + $0x588] sm:$0xf]
    %v4079 = vld [vmem:[#allocation11 + $0x58c] sm:$0xf]
    %v4080 = vld [vmem:[#allocation11 + $0x590] sm:$0xf]
    %v4081 = vld [vmem:[#allocation11 + $0x594] sm:$0xf]
    %v4082 = vld [vmem:[#allocation11 + $0x598] sm:$0xf]
    %v4083 = vld [vmem:[#allocation11 + $0x59c] sm:$0xf]
    %v4084 = vld [vmem:[#allocation11 + $0x5a0] sm:$0xf]
    %v4085 = vld [vmem:[#allocation11 + $0x5a4] sm:$0xf]
    %v4086 = vld [vmem:[#allocation11 + $0x5a8] sm:$0xf]
    %v4087 = vld [vmem:[#allocation11 + $0x5ac] sm:$0xf]
    %v4088 = vld [vmem:[#allocation11 + $0x5b0] sm:$0xf]
    %v4089 = vld [vmem:[#allocation11 + $0x5b4] sm:$0xf]
    %v4090 = vld [vmem:[#allocation11 + $0x5b8] sm:$0xf]
    %v4091 = vld [vmem:[#allocation11 + $0x5bc] sm:$0xf]
    %v4092 = vld [vmem:[#allocation11 + $0x5c0] sm:$0xf]
    %v4093 = vld [vmem:[#allocation11 + $0x5c4] sm:$0xf]
    %v4094 = vld [vmem:[#allocation11 + $0x5c8] sm:$0xf]
    %v4095 = vld [vmem:[#allocation11 + $0x5cc] sm:$0xf]
    %v4096 = vld [vmem:[#allocation11 + $0x5d0] sm:$0xf]
    %v4097 = vld [vmem:[#allocation11 + $0x5d4] sm:$0xf]
    %v4098 = vld [vmem:[#allocation11 + $0x5d8] sm:$0xf]
    %v4099 = vld [vmem:[#allocation11 + $0x5dc] sm:$0xf]
    %v4100 = vld [vmem:[#allocation11 + $0x5e0] sm:$0xf]
    %v4101 = vld [vmem:[#allocation11 + $0x5e4] sm:$0xf]
    %v4102 = vld [vmem:[#allocation11 + $0x5e8] sm:$0xf]
    %v4103 = vld [vmem:[#allocation11 + $0x5ec] sm:$0xf]
    %v4104 = vld [vmem:[#allocation11 + $0x5f0] sm:$0xf]
    %v4105 = vld [vmem:[#allocation11 + $0x5f4] sm:$0xf]
    %v4106 = vld [vmem:[#allocation11 + $0x5f8] sm:$0xf]
    %v4107 = vld [vmem:[#allocation11 + $0x5fc] sm:$0xf]
    %v4108 = vld [vmem:[#allocation11 + $0x600] sm:$0xf]
    %v4109 = vld [vmem:[#allocation11 + $0x604] sm:$0xf]
    %v4110 = vld [vmem:[#allocation11 + $0x608] sm:$0xf]
    %v4111 = vld [vmem:[#allocation11 + $0x60c] sm:$0xf]
    %v4112 = vld [vmem:[#allocation11 + $0x610] sm:$0xf]
    %v4113 = vld [vmem:[#allocation11 + $0x614] sm:$0xf]
    %v4114 = vld [vmem:[#allocation11 + $0x618] sm:$0xf]
    %v4115 = vld [vmem:[#allocation11 + $0x61c] sm:$0xf]
    %v4116 = vld [vmem:[#allocation11 + $0x620] sm:$0xf]
    %v4117 = vld [vmem:[#allocation11 + $0x624] sm:$0xf]
    %v4118 = vld [vmem:[#allocation11 + $0x628] sm:$0xf]
    %v4119 = vld [vmem:[#allocation11 + $0x62c] sm:$0xf]
    %v4120 = vld [vmem:[#allocation11 + $0x630] sm:$0xf]
    %v4121 = vld [vmem:[#allocation11 + $0x634] sm:$0xf]
    %v4122 = vld [vmem:[#allocation11 + $0x638] sm:$0xf]
    %v4123 = vld [vmem:[#allocation11 + $0x63c] sm:$0xf]
    %v4124 = vld [vmem:[#allocation11 + $0x640] sm:$0xf]
    %v4125 = vld [vmem:[#allocation11 + $0x644] sm:$0xf]
    %v4126 = vld [vmem:[#allocation11 + $0x648] sm:$0xf]
    %v4127 = vld [vmem:[#allocation11 + $0x64c] sm:$0xf]
    %v4128 = vld [vmem:[#allocation11 + $0x650] sm:$0xf]
    %v4129 = vld [vmem:[#allocation11 + $0x654] sm:$0xf]
    %v4130 = vld [vmem:[#allocation11 + $0x658] sm:$0xf]
    %v4131 = vld [vmem:[#allocation11 + $0x65c] sm:$0xf]
    %v4132 = vld [vmem:[#allocation11 + $0x660] sm:$0xf]
    %v4133 = vld [vmem:[#allocation11 + $0x664] sm:$0xf]
    %v4134 = vld [vmem:[#allocation11 + $0x668] sm:$0xf]
    %v4135 = vld [vmem:[#allocation11 + $0x66c] sm:$0xf]
    %v4136 = vld [vmem:[#allocation11 + $0x670] sm:$0xf]
    %v4137 = vld [vmem:[#allocation11 + $0x674] sm:$0xf]
    %v4138 = vld [vmem:[#allocation11 + $0x678] sm:$0xf]
    %v4139 = vld [vmem:[#allocation11 + $0x67c] sm:$0xf]
    %v4140 = vld [vmem:[#allocation11 + $0x680] sm:$0xf]
    %v4141 = vld [vmem:[#allocation11 + $0x684] sm:$0xf]
    %v4142 = vld [vmem:[#allocation11 + $0x688] sm:$0xf]
    %v4143 = vld [vmem:[#allocation11 + $0x68c] sm:$0xf]
    %v4144 = vld [vmem:[#allocation11 + $0x690] sm:$0xf]
    %v4145 = vld [vmem:[#allocation11 + $0x694] sm:$0xf]
    %v4146 = vld [vmem:[#allocation11 + $0x698] sm:$0xf]
    %v4147 = vld [vmem:[#allocation11 + $0x69c] sm:$0xf]
    %v4148 = vld [vmem:[#allocation11 + $0x6a0] sm:$0xf]
    %v4149 = vld [vmem:[#allocation11 + $0x6a4] sm:$0xf]
    %v4150 = vld [vmem:[#allocation11 + $0x6a8] sm:$0xf]
    %v4151 = vld [vmem:[#allocation11 + $0x6ac] sm:$0xf]
    %v4152 = vld [vmem:[#allocation11 + $0x6b0] sm:$0xf]
    %v4153 = vld [vmem:[#allocation11 + $0x6b4] sm:$0xf]
    %v4154 = vld [vmem:[#allocation11 + $0x6b8] sm:$0xf]
    %v4155 = vld [vmem:[#allocation11 + $0x6bc] sm:$0xf]
    %v4156 = vld [vmem:[#allocation11 + $0x6c0] sm:$0xf]
    %v4157 = vld [vmem:[#allocation11 + $0x6c4] sm:$0xf]
    %v4158 = vld [vmem:[#allocation11 + $0x6c8] sm:$0xf]
    %v4159 = vld [vmem:[#allocation11 + $0x6cc] sm:$0xf]
    %v4160 = vld [vmem:[#allocation11 + $0x6d0] sm:$0xf]
    %v4161 = vld [vmem:[#allocation11 + $0x6d4] sm:$0xf]
    %v4162 = vld [vmem:[#allocation11 + $0x6d8] sm:$0xf]
    %v4163 = vld [vmem:[#allocation11 + $0x6dc] sm:$0xf]
    %v4164 = vld [vmem:[#allocation11 + $0x6e0] sm:$0xf]
    %v4165 = vld [vmem:[#allocation11 + $0x6e4] sm:$0xf]
    %v4166 = vld [vmem:[#allocation11 + $0x6e8] sm:$0xf]
    %v4167 = vld [vmem:[#allocation11 + $0x6ec] sm:$0xf]
    %v4168 = vld [vmem:[#allocation11 + $0x6f0] sm:$0xf]
    %v4169 = vld [vmem:[#allocation11 + $0x6f4] sm:$0xf]
    %v4170 = vld [vmem:[#allocation11 + $0x6f8] sm:$0xf]
    %v4171 = vld [vmem:[#allocation11 + $0x6fc] sm:$0xf]
    %v4172 = vld [vmem:[#allocation11 + $0x700] sm:$0xf]
    %v4173 = vld [vmem:[#allocation11 + $0x704] sm:$0xf]
    %v4174 = vld [vmem:[#allocation11 + $0x708] sm:$0xf]
    %v4175 = vld [vmem:[#allocation11 + $0x70c] sm:$0xf]
    %v4176 = vld [vmem:[#allocation11 + $0x710] sm:$0xf]
    %v4177 = vld [vmem:[#allocation11 + $0x714] sm:$0xf]
    %v4178 = vld [vmem:[#allocation11 + $0x718] sm:$0xf]
    %v4179 = vld [vmem:[#allocation11 + $0x71c] sm:$0xf]
    %v4180 = vld [vmem:[#allocation11 + $0x720] sm:$0xf]
    %v4181 = vld [vmem:[#allocation11 + $0x724] sm:$0xf]
    %v4182 = vld [vmem:[#allocation11 + $0x728] sm:$0xf]
    %v4183 = vld [vmem:[#allocation11 + $0x72c] sm:$0xf]
    %v4184 = vld [vmem:[#allocation11 + $0x730] sm:$0xf]
    %v4185 = vld [vmem:[#allocation11 + $0x734] sm:$0xf]
    %v4186 = vld [vmem:[#allocation11 + $0x738] sm:$0xf]
    %v4187 = vld [vmem:[#allocation11 + $0x73c] sm:$0xf]
    %v4188 = vld [vmem:[#allocation11 + $0x740] sm:$0xf]
    %v4189 = vld [vmem:[#allocation11 + $0x744] sm:$0xf]
    %v4190 = vld [vmem:[#allocation11 + $0x748] sm:$0xf]
    %v4191 = vld [vmem:[#allocation11 + $0x74c] sm:$0xf]
    %v4192 = vld [vmem:[#allocation11 + $0x750] sm:$0xf]
    %v4193 = vld [vmem:[#allocation11 + $0x754] sm:$0xf]
    %v4194 = vld [vmem:[#allocation11 + $0x758] sm:$0xf]
    %v4195 = vld [vmem:[#allocation11 + $0x75c] sm:$0xf]
    %v4196 = vld [vmem:[#allocation11 + $0x760] sm:$0xf]
    %v4197 = vld [vmem:[#allocation11 + $0x764] sm:$0xf]
    %v4198 = vld [vmem:[#allocation11 + $0x768] sm:$0xf]
    %v4199 = vld [vmem:[#allocation11 + $0x76c] sm:$0xf]
    %v4200 = vld [vmem:[#allocation11 + $0x770] sm:$0xf]
    %v4201 = vld [vmem:[#allocation11 + $0x774] sm:$0xf]
    %v4202 = vld [vmem:[#allocation11 + $0x778] sm:$0xf]
    %v4203 = vld [vmem:[#allocation11 + $0x77c] sm:$0xf]
    %v4204 = vld [vmem:[#allocation11 + $0x780] sm:$0xf]
    %v4205 = vld [vmem:[#allocation11 + $0x784] sm:$0xf]
    %v4206 = vld [vmem:[#allocation11 + $0x788] sm:$0xf]
    %v4207 = vld [vmem:[#allocation11 + $0x78c] sm:$0xf]
    %v4208 = vld [vmem:[#allocation11 + $0x790] sm:$0xf]
    %v4209 = vld [vmem:[#allocation11 + $0x794] sm:$0xf]
    %v4210 = vld [vmem:[#allocation11 + $0x798] sm:$0xf]
    %v4211 = vld [vmem:[#allocation11 + $0x79c] sm:$0xf]
    %v4212 = vld [vmem:[#allocation11 + $0x7a0] sm:$0xf]
    %v4213 = vld [vmem:[#allocation11 + $0x7a4] sm:$0xf]
    %v4214 = vld [vmem:[#allocation11 + $0x7a8] sm:$0xf]
    %v4215 = vld [vmem:[#allocation11 + $0x7ac] sm:$0xf]
    %v4216 = vld [vmem:[#allocation11 + $0x7b0] sm:$0xf]
    %v4217 = vld [vmem:[#allocation11 + $0x7b4] sm:$0xf]
    %v4218 = vld [vmem:[#allocation11 + $0x7b8] sm:$0xf]
    %v4219 = vld [vmem:[#allocation11 + $0x7bc] sm:$0xf]
    %v4220 = vld [vmem:[#allocation11 + $0x7c0] sm:$0xf]
    %v4221 = vld [vmem:[#allocation11 + $0x7c4] sm:$0xf]
    %v4222 = vld [vmem:[#allocation11 + $0x7c8] sm:$0xf]
    %v4223 = vld [vmem:[#allocation11 + $0x7cc] sm:$0xf]
    %v4224 = vld [vmem:[#allocation11 + $0x7d0] sm:$0xf]
    %v4225 = vld [vmem:[#allocation11 + $0x7d4] sm:$0xf]
    %v4226 = vld [vmem:[#allocation11 + $0x7d8] sm:$0xf]
    %v4227 = vld [vmem:[#allocation11 + $0x7dc] sm:$0xf]
    %v4228 = vld [vmem:[#allocation11 + $0x7e0] sm:$0xf]
    %v4229 = vld [vmem:[#allocation11 + $0x7e4] sm:$0xf]
    %v4230 = vld [vmem:[#allocation11 + $0x7e8] sm:$0xf]
    %v4231 = vld [vmem:[#allocation11 + $0x7ec] sm:$0xf]
    %v4232 = vld [vmem:[#allocation11 + $0x7f0] sm:$0xf]
    %v4233 = vld [vmem:[#allocation11 + $0x7f4] sm:$0xf]
    %v4234 = vld [vmem:[#allocation11 + $0x7f8] sm:$0xf]
    %v4235 = vld [vmem:[#allocation11 + $0x7fc] sm:$0xf]
    %v4236 = vld [vmem:[#allocation11 + $0x800] sm:$0xf]
    %v4237 = vld [vmem:[#allocation11 + $0x804] sm:$0xf]
    %v4238 = vld [vmem:[#allocation11 + $0x808] sm:$0xf]
    %v4239 = vld [vmem:[#allocation11 + $0x80c] sm:$0xf]
    %v4240 = vld [vmem:[#allocation11 + $0x810] sm:$0xf]
    %v4241 = vld [vmem:[#allocation11 + $0x814] sm:$0xf]
    %v4242 = vld [vmem:[#allocation11 + $0x818] sm:$0xf]
    %v4243 = vld [vmem:[#allocation11 + $0x81c] sm:$0xf]
    %v4244 = vld [vmem:[#allocation11 + $0x820] sm:$0xf]
    %v4245 = vld [vmem:[#allocation11 + $0x824] sm:$0xf]
    %v4246 = vld [vmem:[#allocation11 + $0x828] sm:$0xf]
    %v4247 = vld [vmem:[#allocation11 + $0x82c] sm:$0xf]
    %v4248 = vld [vmem:[#allocation11 + $0x830] sm:$0xf]
    %v4249 = vld [vmem:[#allocation11 + $0x834] sm:$0xf]
    %v4250 = vld [vmem:[#allocation11 + $0x838] sm:$0xf]
    %v4251 = vld [vmem:[#allocation11 + $0x83c] sm:$0xf]
    %v4252 = vld [vmem:[#allocation11 + $0x840] sm:$0xf]
    %v4253 = vld [vmem:[#allocation11 + $0x844] sm:$0xf]
    %v4254 = vld [vmem:[#allocation11 + $0x848] sm:$0xf]
    %v4255 = vld [vmem:[#allocation11 + $0x84c] sm:$0xf]
    %v4256 = vld [vmem:[#allocation11 + $0x850] sm:$0xf]
    %v4257 = vld [vmem:[#allocation11 + $0x854] sm:$0xf]
    %v4258 = vld [vmem:[#allocation11 + $0x858] sm:$0xf]
    %v4259 = vld [vmem:[#allocation11 + $0x85c] sm:$0xf]
    %v4260 = vld [vmem:[#allocation11 + $0x860] sm:$0xf]
    %v4261 = vld [vmem:[#allocation11 + $0x864] sm:$0xf]
    %v4262 = vld [vmem:[#allocation11 + $0x868] sm:$0xf]
    %v4263 = vld [vmem:[#allocation11 + $0x86c] sm:$0xf]
    %v4264 = vld [vmem:[#allocation11 + $0x870] sm:$0xf]
    %v4265 = vld [vmem:[#allocation11 + $0x874] sm:$0xf]
    %v4266 = vld [vmem:[#allocation11 + $0x878] sm:$0xf]
    %v4267 = vld [vmem:[#allocation11 + $0x87c] sm:$0xf]
    %v4268 = vld [vmem:[#allocation11 + $0x880] sm:$0xf]
    %v4269 = vld [vmem:[#allocation11 + $0x884] sm:$0xf]
    %v4270 = vld [vmem:[#allocation11 + $0x888] sm:$0xf]
    %v4271 = vld [vmem:[#allocation11 + $0x88c] sm:$0xf]
    %v4272 = vld [vmem:[#allocation11 + $0x890] sm:$0xf]
    %v4273 = vld [vmem:[#allocation11 + $0x894] sm:$0xf]
    %v4274 = vld [vmem:[#allocation11 + $0x898] sm:$0xf]
    %v4275 = vld [vmem:[#allocation11 + $0x89c] sm:$0xf]
    %v4276 = vld [vmem:[#allocation11 + $0x8a0] sm:$0xf]
    %v4277 = vld [vmem:[#allocation11 + $0x8a4] sm:$0xf]
    %v4278 = vld [vmem:[#allocation11 + $0x8a8] sm:$0xf]
    %v4279 = vld [vmem:[#allocation11 + $0x8ac] sm:$0xf]
    %v4280 = vld [vmem:[#allocation11 + $0x8b0] sm:$0xf]
    %v4281 = vld [vmem:[#allocation11 + $0x8b4] sm:$0xf]
    %v4282 = vld [vmem:[#allocation11 + $0x8b8] sm:$0xf]
    %v4283 = vld [vmem:[#allocation11 + $0x8bc] sm:$0xf]
    %v4284 = vld [vmem:[#allocation11 + $0x8c0] sm:$0xf]
    %v4285 = vld [vmem:[#allocation11 + $0x8c4] sm:$0xf]
    %v4286 = vld [vmem:[#allocation11 + $0x8c8] sm:$0xf]
    %v4287 = vld [vmem:[#allocation11 + $0x8cc] sm:$0xf]
    %v4288 = vld [vmem:[#allocation11 + $0x8d0] sm:$0xf]
    %v4289 = vld [vmem:[#allocation11 + $0x8d4] sm:$0xf]
    %v4290 = vld [vmem:[#allocation11 + $0x8d8] sm:$0xf]
    %v4291 = vld [vmem:[#allocation11 + $0x8dc] sm:$0xf]
    %v4292 = vld [vmem:[#allocation11 + $0x8e0] sm:$0xf]
    %v4293 = vld [vmem:[#allocation11 + $0x8e4] sm:$0xf]
    %v4294 = vld [vmem:[#allocation11 + $0x8e8] sm:$0xf]
    %v4295 = vld [vmem:[#allocation11 + $0x8ec] sm:$0xf]
    %v4296 = vld [vmem:[#allocation11 + $0x8f0] sm:$0xf]
    %v4297 = vld [vmem:[#allocation11 + $0x8f4] sm:$0xf]
    %v4298 = vld [vmem:[#allocation11 + $0x8f8] sm:$0xf]
    %v4299 = vld [vmem:[#allocation11 + $0x8fc] sm:$0xf]
    %v4300 = vld [vmem:[#allocation11 + $0x900] sm:$0xf]
    %v4301 = vld [vmem:[#allocation11 + $0x904] sm:$0xf]
    %v4302 = vld [vmem:[#allocation11 + $0x908] sm:$0xf]
    %v4303 = vld [vmem:[#allocation11 + $0x90c] sm:$0xf]
    %v4304 = vld [vmem:[#allocation11 + $0x910] sm:$0xf]
    %v4305 = vld [vmem:[#allocation11 + $0x914] sm:$0xf]
    %v4306 = vld [vmem:[#allocation11 + $0x918] sm:$0xf]
    %v4307 = vld [vmem:[#allocation11 + $0x91c] sm:$0xf]
    %v4308 = vld [vmem:[#allocation11 + $0x920] sm:$0xf]
    %v4309 = vld [vmem:[#allocation11 + $0x924] sm:$0xf]
    %v4310 = vld [vmem:[#allocation11 + $0x928] sm:$0xf]
    %v4311 = vld [vmem:[#allocation11 + $0x92c] sm:$0xf]
    %v4312 = vld [vmem:[#allocation11 + $0x930] sm:$0xf]
    %v4313 = vld [vmem:[#allocation11 + $0x934] sm:$0xf]
    %v4314 = vld [vmem:[#allocation11 + $0x938] sm:$0xf]
    %v4315 = vld [vmem:[#allocation11 + $0x93c] sm:$0xf]
    %v4316 = vld [vmem:[#allocation11 + $0x940] sm:$0xf]
    %v4317 = vld [vmem:[#allocation11 + $0x944] sm:$0xf]
    %v4318 = vld [vmem:[#allocation11 + $0x948] sm:$0xf]
    %v4319 = vld [vmem:[#allocation11 + $0x94c] sm:$0xf]
    %v4320 = vld [vmem:[#allocation11 + $0x950] sm:$0xf]
    %v4321 = vld [vmem:[#allocation11 + $0x954] sm:$0xf]
    %v4322 = vld [vmem:[#allocation11 + $0x958] sm:$0xf]
    %v4323 = vld [vmem:[#allocation11 + $0x95c] sm:$0xf]
    %v4324 = vld [vmem:[#allocation11 + $0x960] sm:$0xf]
    %v4325 = vld [vmem:[#allocation11 + $0x964] sm:$0xf]
    %v4326 = vld [vmem:[#allocation11 + $0x968] sm:$0xf]
    %v4327 = vld [vmem:[#allocation11 + $0x96c] sm:$0xf]
    %v4328 = vld [vmem:[#allocation11 + $0x970] sm:$0xf]
    %v4329 = vld [vmem:[#allocation11 + $0x974] sm:$0xf]
    %v4330 = vld [vmem:[#allocation11 + $0x978] sm:$0xf]
    %v4331 = vld [vmem:[#allocation11 + $0x97c] sm:$0xf]
    %v4332 = vld [vmem:[#allocation11 + $0x980] sm:$0xf]
    %v4333 = vld [vmem:[#allocation11 + $0x984] sm:$0xf]
    %v4334 = vld [vmem:[#allocation11 + $0x988] sm:$0xf]
    %v4335 = vld [vmem:[#allocation11 + $0x98c] sm:$0xf]
    %v4336 = vld [vmem:[#allocation11 + $0x990] sm:$0xf]
    %v4337 = vld [vmem:[#allocation11 + $0x994] sm:$0xf]
    %v4338 = vld [vmem:[#allocation11 + $0x998] sm:$0xf]
    %v4339 = vld [vmem:[#allocation11 + $0x99c] sm:$0xf]
    %v4340 = vld [vmem:[#allocation11 + $0x9a0] sm:$0xf]
    %v4341 = vld [vmem:[#allocation11 + $0x9a4] sm:$0xf]
    %v4342 = vld [vmem:[#allocation11 + $0x9a8] sm:$0xf]
    %v4343 = vld [vmem:[#allocation11 + $0x9ac] sm:$0xf]
    %v4344 = vld [vmem:[#allocation11 + $0x9b0] sm:$0xf]
    %v4345 = vld [vmem:[#allocation11 + $0x9b4] sm:$0xf]
    %v4346 = vld [vmem:[#allocation11 + $0x9b8] sm:$0xf]
    %v4347 = vld [vmem:[#allocation11 + $0x9bc] sm:$0xf]
    %v4348 = vld [vmem:[#allocation11 + $0x9c0] sm:$0xf]
    %v4349 = vld [vmem:[#allocation11 + $0x9c4] sm:$0xf]
    %v4350 = vld [vmem:[#allocation11 + $0x9c8] sm:$0xf]
    %v4351 = vld [vmem:[#allocation11 + $0x9cc] sm:$0xf]
    %v4352 = vld [vmem:[#allocation11 + $0x9d0] sm:$0xf]
    %v4353 = vld [vmem:[#allocation11 + $0x9d4] sm:$0xf]
    %v4354 = vld [vmem:[#allocation11 + $0x9d8] sm:$0xf]
    %v4355 = vld [vmem:[#allocation11 + $0x9dc] sm:$0xf]
    %v4356 = vld [vmem:[#allocation11 + $0x9e0] sm:$0xf]
    %v4357 = vld [vmem:[#allocation11 + $0x9e4] sm:$0xf]
    %v4358 = vld [vmem:[#allocation11 + $0x9e8] sm:$0xf]
    %v4359 = vld [vmem:[#allocation11 + $0x9ec] sm:$0xf]
    %v4360 = vld [vmem:[#allocation11 + $0x9f0] sm:$0xf]
    %v4361 = vld [vmem:[#allocation11 + $0x9f4] sm:$0xf]
    %v4362 = vld [vmem:[#allocation11 + $0x9f8] sm:$0xf]
    %v4363 = vld [vmem:[#allocation11 + $0x9fc] sm:$0xf]
    %v4364 = vld [vmem:[#allocation11 + $0xa00] sm:$0xf]
    %v4365 = vld [vmem:[#allocation11 + $0xa04] sm:$0xf]
    %v4366 = vld [vmem:[#allocation11 + $0xa08] sm:$0xf]
    %v4367 = vld [vmem:[#allocation11 + $0xa0c] sm:$0xf]
    %v4368 = vld [vmem:[#allocation11 + $0xa10] sm:$0xf]
    %v4369 = vld [vmem:[#allocation11 + $0xa14] sm:$0xf]
    %v4370 = vld [vmem:[#allocation11 + $0xa18] sm:$0xf]
    %v4371 = vld [vmem:[#allocation11 + $0xa1c] sm:$0xf]
    %v4372 = vld [vmem:[#allocation11 + $0xa20] sm:$0xf]
    %v4373 = vld [vmem:[#allocation11 + $0xa24] sm:$0xf]
    %v4374 = vld [vmem:[#allocation11 + $0xa28] sm:$0xf]
    %v4375 = vld [vmem:[#allocation11 + $0xa2c] sm:$0xf]
    %v4376 = vld [vmem:[#allocation11 + $0xa30] sm:$0xf]
    %v4377 = vld [vmem:[#allocation11 + $0xa34] sm:$0xf]
    %v4378 = vld [vmem:[#allocation11 + $0xa38] sm:$0xf]
    %v4379 = vld [vmem:[#allocation11 + $0xa3c] sm:$0xf]
    %v4380 = vld [vmem:[#allocation11 + $0xa40] sm:$0xf]
    %v4381 = vld [vmem:[#allocation11 + $0xa44] sm:$0xf]
    %v4382 = vld [vmem:[#allocation11 + $0xa48] sm:$0xf]
    %v4383 = vld [vmem:[#allocation11 + $0xa4c] sm:$0xf]
    %v4384 = vld [vmem:[#allocation11 + $0xa50] sm:$0xf]
    %v4385 = vld [vmem:[#allocation11 + $0xa54] sm:$0xf]
    %v4386 = vld [vmem:[#allocation11 + $0xa58] sm:$0xf]
    %v4387 = vld [vmem:[#allocation11 + $0xa5c] sm:$0xf]
    %v4388 = vld [vmem:[#allocation11 + $0xa60] sm:$0xf]
    %v4389 = vld [vmem:[#allocation11 + $0xa64] sm:$0xf]
    %v4390 = vld [vmem:[#allocation11 + $0xa68] sm:$0xf]
    %v4391 = vld [vmem:[#allocation11 + $0xa6c] sm:$0xf]
    %v4392 = vld [vmem:[#allocation11 + $0xa70] sm:$0xf]
    %v4393 = vld [vmem:[#allocation11 + $0xa74] sm:$0xf]
    %v4394 = vld [vmem:[#allocation11 + $0xa78] sm:$0xf]
    %v4395 = vld [vmem:[#allocation11 + $0xa7c] sm:$0xf]
    %v4396 = vld [vmem:[#allocation11 + $0xa80] sm:$0xf]
    %v4397 = vld [vmem:[#allocation11 + $0xa84] sm:$0xf]
    %v4398 = vld [vmem:[#allocation11 + $0xa88] sm:$0xf]
    %v4399 = vld [vmem:[#allocation11 + $0xa8c] sm:$0xf]
    %v4400 = vld [vmem:[#allocation11 + $0xa90] sm:$0xf]
    %v4401 = vld [vmem:[#allocation11 + $0xa94] sm:$0xf]
    %v4402 = vld [vmem:[#allocation11 + $0xa98] sm:$0xf]
    %v4403 = vld [vmem:[#allocation11 + $0xa9c] sm:$0xf]
    %v4404 = vld [vmem:[#allocation11 + $0xaa0] sm:$0xf]
    %v4405 = vld [vmem:[#allocation11 + $0xaa4] sm:$0xf]
    %v4406 = vld [vmem:[#allocation11 + $0xaa8] sm:$0xf]
    %v4407 = vld [vmem:[#allocation11 + $0xaac] sm:$0xf]
    %v4408 = vld [vmem:[#allocation11 + $0xab0] sm:$0xf]
    %v4409 = vld [vmem:[#allocation11 + $0xab4] sm:$0xf]
    %v4410 = vld [vmem:[#allocation11 + $0xab8] sm:$0xf]
    %v4411 = vld [vmem:[#allocation11 + $0xabc] sm:$0xf]
    %v4412 = vld [vmem:[#allocation11 + $0xac0] sm:$0xf]
    %v4413 = vld [vmem:[#allocation11 + $0xac4] sm:$0xf]
    %v4414 = vld [vmem:[#allocation11 + $0xac8] sm:$0xf]
    %v4415 = vld [vmem:[#allocation11 + $0xacc] sm:$0xf]
    %v4416 = vld [vmem:[#allocation11 + $0xad0] sm:$0xf]
    %v4417 = vld [vmem:[#allocation11 + $0xad4] sm:$0xf]
    %v4418 = vld [vmem:[#allocation11 + $0xad8] sm:$0xf]
    %v4419 = vld [vmem:[#allocation11 + $0xadc] sm:$0xf]
    %v4420 = vld [vmem:[#allocation11 + $0xae0] sm:$0xf]
    %v4421 = vld [vmem:[#allocation11 + $0xae4] sm:$0xf]
    %v4422 = vld [vmem:[#allocation11 + $0xae8] sm:$0xf]
    %v4423 = vld [vmem:[#allocation11 + $0xaec] sm:$0xf]
    %v4424 = vld [vmem:[#allocation11 + $0xaf0] sm:$0xf]
    %v4425 = vld [vmem:[#allocation11 + $0xaf4] sm:$0xf]
    %v4426 = vld [vmem:[#allocation11 + $0xaf8] sm:$0xf]
    %v4427 = vld [vmem:[#allocation11 + $0xafc] sm:$0xf]
    %v4428 = vld [vmem:[#allocation11 + $0xb00] sm:$0xf]
    %v4429 = vld [vmem:[#allocation11 + $0xb04] sm:$0xf]
    %v4430 = vld [vmem:[#allocation11 + $0xb08] sm:$0xf]
    %v4431 = vld [vmem:[#allocation11 + $0xb0c] sm:$0xf]
    %v4432 = vld [vmem:[#allocation11 + $0xb10] sm:$0xf]
    %v4433 = vld [vmem:[#allocation11 + $0xb14] sm:$0xf]
    %v4434 = vld [vmem:[#allocation11 + $0xb18] sm:$0xf]
    %v4435 = vld [vmem:[#allocation11 + $0xb1c] sm:$0xf]
    %v4436 = vld [vmem:[#allocation11 + $0xb20] sm:$0xf]
    %v4437 = vld [vmem:[#allocation11 + $0xb24] sm:$0xf]
    %v4438 = vld [vmem:[#allocation11 + $0xb28] sm:$0xf]
    %v4439 = vld [vmem:[#allocation11 + $0xb2c] sm:$0xf]
    %v4440 = vld [vmem:[#allocation11 + $0xb30] sm:$0xf]
    %v4441 = vld [vmem:[#allocation11 + $0xb34] sm:$0xf]
    %v4442 = vld [vmem:[#allocation11 + $0xb38] sm:$0xf]
    %v4443 = vld [vmem:[#allocation11 + $0xb3c] sm:$0xf]
    %v4444 = vld [vmem:[#allocation11 + $0xb40] sm:$0xf]
    %v4445 = vld [vmem:[#allocation11 + $0xb44] sm:$0xf]
    %v4446 = vld [vmem:[#allocation11 + $0xb48] sm:$0xf]
    %v4447 = vld [vmem:[#allocation11 + $0xb4c] sm:$0xf]
    %v4448 = vld [vmem:[#allocation11 + $0xb50] sm:$0xf]
    %v4449 = vld [vmem:[#allocation11 + $0xb54] sm:$0xf]
    %v4450 = vld [vmem:[#allocation11 + $0xb58] sm:$0xf]
    %v4451 = vld [vmem:[#allocation11 + $0xb5c] sm:$0xf]
    %v4452 = vld [vmem:[#allocation11 + $0xb60] sm:$0xf]
    %v4453 = vld [vmem:[#allocation11 + $0xb64] sm:$0xf]
    %v4454 = vld [vmem:[#allocation11 + $0xb68] sm:$0xf]
    %v4455 = vld [vmem:[#allocation11 + $0xb6c] sm:$0xf]
    %v4456 = vld [vmem:[#allocation11 + $0xb70] sm:$0xf]
    %v4457 = vld [vmem:[#allocation11 + $0xb74] sm:$0xf]
    %v4458 = vld [vmem:[#allocation11 + $0xb78] sm:$0xf]
    %v4459 = vld [vmem:[#allocation11 + $0xb7c] sm:$0xf]
    %v4460 = vld [vmem:[#allocation11 + $0xb80] sm:$0xf]
    %v4461 = vld [vmem:[#allocation11 + $0xb84] sm:$0xf]
    %v4462 = vld [vmem:[#allocation11 + $0xb88] sm:$0xf]
    %v4463 = vld [vmem:[#allocation11 + $0xb8c] sm:$0xf]
    %v4464 = vld [vmem:[#allocation11 + $0xb90] sm:$0xf]
    %v4465 = vld [vmem:[#allocation11 + $0xb94] sm:$0xf]
    %v4466 = vld [vmem:[#allocation11 + $0xb98] sm:$0xf]
    %v4467 = vld [vmem:[#allocation11 + $0xb9c] sm:$0xf]
    %v4468 = vld [vmem:[#allocation11 + $0xba0] sm:$0xf]
    %v4469 = vld [vmem:[#allocation11 + $0xba4] sm:$0xf]
    %v4470 = vld [vmem:[#allocation11 + $0xba8] sm:$0xf]
    %v4471 = vld [vmem:[#allocation11 + $0xbac] sm:$0xf]
    %v4472 = vld [vmem:[#allocation11 + $0xbb0] sm:$0xf]
    %v4473 = vld [vmem:[#allocation11 + $0xbb4] sm:$0xf]
    %v4474 = vld [vmem:[#allocation11 + $0xbb8] sm:$0xf]
    %v4475 = vld [vmem:[#allocation11 + $0xbbc] sm:$0xf]
    %v4476 = vld [vmem:[#allocation11 + $0xbc0] sm:$0xf]
    %v4477 = vld [vmem:[#allocation11 + $0xbc4] sm:$0xf]
    %v4478 = vld [vmem:[#allocation11 + $0xbc8] sm:$0xf]
    %v4479 = vld [vmem:[#allocation11 + $0xbcc] sm:$0xf]
    %v4480 = vld [vmem:[#allocation11 + $0xbd0] sm:$0xf]
    %v4481 = vld [vmem:[#allocation11 + $0xbd4] sm:$0xf]
    %v4482 = vld [vmem:[#allocation11 + $0xbd8] sm:$0xf]
    %v4483 = vld [vmem:[#allocation11 + $0xbdc] sm:$0xf]
    %v4484 = vld [vmem:[#allocation11 + $0xbe0] sm:$0xf]
    %v4485 = vld [vmem:[#allocation11 + $0xbe4] sm:$0xf]
    %v4486 = vld [vmem:[#allocation11 + $0xbe8] sm:$0xf]
    %v4487 = vld [vmem:[#allocation11 + $0xbec] sm:$0xf]
    %v4488 = vld [vmem:[#allocation11 + $0xbf0] sm:$0xf]
    %v4489 = vld [vmem:[#allocation11 + $0xbf4] sm:$0xf]
    %v4490 = vld [vmem:[#allocation11 + $0xbf8] sm:$0xf]
    %v4491 = vld [vmem:[#allocation11 + $0xbfc] sm:$0xf]
    %v4492 = vld [vmem:[#allocation11 + $0xc00] sm:$0xf]
    %v4493 = vld [vmem:[#allocation11 + $0xc04] sm:$0xf]
    %v4494 = vld [vmem:[#allocation11 + $0xc08] sm:$0xf]
    %v4495 = vld [vmem:[#allocation11 + $0xc0c] sm:$0xf]
    %v4496 = vld [vmem:[#allocation11 + $0xc10] sm:$0xf]
    %v4497 = vld [vmem:[#allocation11 + $0xc14] sm:$0xf]
    %v4498 = vld [vmem:[#allocation11 + $0xc18] sm:$0xf]
    %v4499 = vld [vmem:[#allocation11 + $0xc1c] sm:$0xf]
    %v4500 = vld [vmem:[#allocation11 + $0xc20] sm:$0xf]
    %v4501 = vld [vmem:[#allocation11 + $0xc24] sm:$0xf]
    %v4502 = vld [vmem:[#allocation11 + $0xc28] sm:$0xf]
    %v4503 = vld [vmem:[#allocation11 + $0xc2c] sm:$0xf]
    %v4504 = vld [vmem:[#allocation11 + $0xc30] sm:$0xf]
    %v4505 = vld [vmem:[#allocation11 + $0xc34] sm:$0xf]
    %v4506 = vld [vmem:[#allocation11 + $0xc38] sm:$0xf]
    %v4507 = vld [vmem:[#allocation11 + $0xc3c] sm:$0xf]
    %v4508 = vld [vmem:[#allocation11 + $0xc40] sm:$0xf]
    %v4509 = vld [vmem:[#allocation11 + $0xc44] sm:$0xf]
    %v4510 = vld [vmem:[#allocation11 + $0xc48] sm:$0xf]
    %v4511 = vld [vmem:[#allocation11 + $0xc4c] sm:$0xf]
    %v4512 = vld [vmem:[#allocation11 + $0xc50] sm:$0xf]
    %v4513 = vld [vmem:[#allocation11 + $0xc54] sm:$0xf]
    %v4514 = vld [vmem:[#allocation11 + $0xc58] sm:$0xf]
    %v4515 = vld [vmem:[#allocation11 + $0xc5c] sm:$0xf]
    %v4516 = vld [vmem:[#allocation11 + $0xc60] sm:$0xf]
    %v4517 = vld [vmem:[#allocation11 + $0xc64] sm:$0xf]
    %v4518 = vld [vmem:[#allocation11 + $0xc68] sm:$0xf]
    %v4519 = vld [vmem:[#allocation11 + $0xc6c] sm:$0xf]
    %v4520 = vld [vmem:[#allocation11 + $0xc70] sm:$0xf]
    %v4521 = vld [vmem:[#allocation11 + $0xc74] sm:$0xf]
    %v4522 = vld [vmem:[#allocation11 + $0xc78] sm:$0xf]
    %v4523 = vld [vmem:[#allocation11 + $0xc7c] sm:$0xf]
    %v4524 = vld [vmem:[#allocation11 + $0xc80] sm:$0xf]
    %v4525 = vld [vmem:[#allocation11 + $0xc84] sm:$0xf]
    %v4526 = vld [vmem:[#allocation11 + $0xc88] sm:$0xf]
    %v4527 = vld [vmem:[#allocation11 + $0xc8c] sm:$0xf]
    %v4528 = vld [vmem:[#allocation11 + $0xc90] sm:$0xf]
    %v4529 = vld [vmem:[#allocation11 + $0xc94] sm:$0xf]
    %v4530 = vld [vmem:[#allocation11 + $0xc98] sm:$0xf]
    %v4531 = vld [vmem:[#allocation11 + $0xc9c] sm:$0xf]
    %v4532 = vld [vmem:[#allocation11 + $0xca0] sm:$0xf]
    %v4533 = vld [vmem:[#allocation11 + $0xca4] sm:$0xf]
    %v4534 = vld [vmem:[#allocation11 + $0xca8] sm:$0xf]
    %v4535 = vld [vmem:[#allocation11 + $0xcac] sm:$0xf]
    %v4536 = vld [vmem:[#allocation11 + $0xcb0] sm:$0xf]
    %v4537 = vld [vmem:[#allocation11 + $0xcb4] sm:$0xf]
    %v4538 = vld [vmem:[#allocation11 + $0xcb8] sm:$0xf]
    %v4539 = vld [vmem:[#allocation11 + $0xcbc] sm:$0xf]
    %v4540 = vld [vmem:[#allocation11 + $0xcc0] sm:$0xf]
    %v4541 = vld [vmem:[#allocation11 + $0xcc4] sm:$0xf]
    %v4542 = vld [vmem:[#allocation11 + $0xcc8] sm:$0xf]
    %v4543 = vld [vmem:[#allocation11 + $0xccc] sm:$0xf]
    %v4544 = vld [vmem:[#allocation11 + $0xcd0] sm:$0xf]
    %v4545 = vld [vmem:[#allocation11 + $0xcd4] sm:$0xf]
    %v4546 = vld [vmem:[#allocation11 + $0xcd8] sm:$0xf]
    %v4547 = vld [vmem:[#allocation11 + $0xcdc] sm:$0xf]
    %v4548 = vld [vmem:[#allocation11 + $0xce0] sm:$0xf]
    %v4549 = vld [vmem:[#allocation11 + $0xce4] sm:$0xf]
    %v4550 = vld [vmem:[#allocation11 + $0xce8] sm:$0xf]
    %v4551 = vld [vmem:[#allocation11 + $0xcec] sm:$0xf]
    %v4552 = vld [vmem:[#allocation11 + $0xcf0] sm:$0xf]
    %v4553 = vld [vmem:[#allocation11 + $0xcf4] sm:$0xf]
    %v4554 = vld [vmem:[#allocation11 + $0xcf8] sm:$0xf]
    %v4555 = vld [vmem:[#allocation11 + $0xcfc] sm:$0xf]
    %v4556 = vld [vmem:[#allocation11 + $0xd00] sm:$0xf]
    %v4557 = vld [vmem:[#allocation11 + $0xd04] sm:$0xf]
    %v4558 = vld [vmem:[#allocation11 + $0xd08] sm:$0xf]
    %v4559 = vld [vmem:[#allocation11 + $0xd0c] sm:$0xf]
    %v4560 = vld [vmem:[#allocation11 + $0xd10] sm:$0xf]
    %v4561 = vld [vmem:[#allocation11 + $0xd14] sm:$0xf]
    %v4562 = vld [vmem:[#allocation11 + $0xd18] sm:$0xf]
    %v4563 = vld [vmem:[#allocation11 + $0xd1c] sm:$0xf]
    %v4564 = vld [vmem:[#allocation11 + $0xd20] sm:$0xf]
    %v4565 = vld [vmem:[#allocation11 + $0xd24] sm:$0xf]
    %v4566 = vld [vmem:[#allocation11 + $0xd28] sm:$0xf]
    %v4567 = vld [vmem:[#allocation11 + $0xd2c] sm:$0xf]
    %v4568 = vld [vmem:[#allocation11 + $0xd30] sm:$0xf]
    %v4569 = vld [vmem:[#allocation11 + $0xd34] sm:$0xf]
    %v4570 = vld [vmem:[#allocation11 + $0xd38] sm:$0xf]
    %v4571 = vld [vmem:[#allocation11 + $0xd3c] sm:$0xf]
    %v4572 = vld [vmem:[#allocation11 + $0xd40] sm:$0xf]
    %v4573 = vld [vmem:[#allocation11 + $0xd44] sm:$0xf]
    %v4574 = vld [vmem:[#allocation11 + $0xd48] sm:$0xf]
    %v4575 = vld [vmem:[#allocation11 + $0xd4c] sm:$0xf]
    %v4576 = vld [vmem:[#allocation11 + $0xd50] sm:$0xf]
    %v4577 = vld [vmem:[#allocation11 + $0xd54] sm:$0xf]
    %v4578 = vld [vmem:[#allocation11 + $0xd58] sm:$0xf]
    %v4579 = vld [vmem:[#allocation11 + $0xd5c] sm:$0xf]
    %v4580 = vld [vmem:[#allocation11 + $0xd60] sm:$0xf]
    %v4581 = vld [vmem:[#allocation11 + $0xd64] sm:$0xf]
    %v4582 = vld [vmem:[#allocation11 + $0xd68] sm:$0xf]
    %v4583 = vld [vmem:[#allocation11 + $0xd6c] sm:$0xf]
    %v4584 = vld [vmem:[#allocation11 + $0xd70] sm:$0xf]
    %v4585 = vld [vmem:[#allocation11 + $0xd74] sm:$0xf]
    %v4586 = vld [vmem:[#allocation11 + $0xd78] sm:$0xf]
    %v4587 = vld [vmem:[#allocation11 + $0xd7c] sm:$0xf]
    %v4588 = vld [vmem:[#allocation11 + $0xd80] sm:$0xf]
    %v4589 = vld [vmem:[#allocation11 + $0xd84] sm:$0xf]
    %v4590 = vld [vmem:[#allocation11 + $0xd88] sm:$0xf]
    %v4591 = vld [vmem:[#allocation11 + $0xd8c] sm:$0xf]
    %v4592 = vld [vmem:[#allocation11 + $0xd90] sm:$0xf]
    %v4593 = vld [vmem:[#allocation11 + $0xd94] sm:$0xf]
    %v4594 = vld [vmem:[#allocation11 + $0xd98] sm:$0xf]
    %v4595 = vld [vmem:[#allocation11 + $0xd9c] sm:$0xf]
    %v4596 = vld [vmem:[#allocation11 + $0xda0] sm:$0xf]
    %v4597 = vld [vmem:[#allocation11 + $0xda4] sm:$0xf]
    %v4598 = vld [vmem:[#allocation11 + $0xda8] sm:$0xf]
    %v4599 = vld [vmem:[#allocation11 + $0xdac] sm:$0xf]
    %v4600 = vld [vmem:[#allocation11 + $0xdb0] sm:$0xf]
    %v4601 = vld [vmem:[#allocation11 + $0xdb4] sm:$0xf]
    %v4602 = vld [vmem:[#allocation11 + $0xdb8] sm:$0xf]
    %v4603 = vld [vmem:[#allocation11 + $0xdbc] sm:$0xf]
    %v4604 = vld [vmem:[#allocation11 + $0xdc0] sm:$0xf]
    %v4605 = vld [vmem:[#allocation11 + $0xdc4] sm:$0xf]
    %v4606 = vld [vmem:[#allocation11 + $0xdc8] sm:$0xf]
    %v4607 = vld [vmem:[#allocation11 + $0xdcc] sm:$0xf]
    %v4608 = vld [vmem:[#allocation11 + $0xdd0] sm:$0xf]
    %v4609 = vld [vmem:[#allocation11 + $0xdd4] sm:$0xf]
    %v4610 = vld [vmem:[#allocation11 + $0xdd8] sm:$0xf]
    %v4611 = vld [vmem:[#allocation11 + $0xddc] sm:$0xf]
    %v4612 = vld [vmem:[#allocation11 + $0xde0] sm:$0xf]
    %v4613 = vld [vmem:[#allocation11 + $0xde4] sm:$0xf]
    %v4614 = vld [vmem:[#allocation11 + $0xde8] sm:$0xf]
    %v4615 = vld [vmem:[#allocation11 + $0xdec] sm:$0xf]
    %v4616 = vld [vmem:[#allocation11 + $0xdf0] sm:$0xf]
    %v4617 = vld [vmem:[#allocation11 + $0xdf4] sm:$0xf]
    %v4618 = vld [vmem:[#allocation11 + $0xdf8] sm:$0xf]
    %v4619 = vld [vmem:[#allocation11 + $0xdfc] sm:$0xf]
    %v4620 = vld [vmem:[#allocation11 + $0xe00] sm:$0xf]
    %v4621 = vld [vmem:[#allocation11 + $0xe04] sm:$0xf]
    %v4622 = vld [vmem:[#allocation11 + $0xe08] sm:$0xf]
    %v4623 = vld [vmem:[#allocation11 + $0xe0c] sm:$0xf]
    %v4624 = vld [vmem:[#allocation11 + $0xe10] sm:$0xf]
    %v4625 = vld [vmem:[#allocation11 + $0xe14] sm:$0xf]
    %v4626 = vld [vmem:[#allocation11 + $0xe18] sm:$0xf]
    %v4627 = vld [vmem:[#allocation11 + $0xe1c] sm:$0xf]
    %v4628 = vld [vmem:[#allocation11 + $0xe20] sm:$0xf]
    %v4629 = vld [vmem:[#allocation11 + $0xe24] sm:$0xf]
    %v4630 = vld [vmem:[#allocation11 + $0xe28] sm:$0xf]
    %v4631 = vld [vmem:[#allocation11 + $0xe2c] sm:$0xf]
    %v4632 = vld [vmem:[#allocation11 + $0xe30] sm:$0xf]
    %v4633 = vld [vmem:[#allocation11 + $0xe34] sm:$0xf]
    %v4634 = vld [vmem:[#allocation11 + $0xe38] sm:$0xf]
    %v4635 = vld [vmem:[#allocation11 + $0xe3c] sm:$0xf]
    %v4636 = vld [vmem:[#allocation11 + $0xe40] sm:$0xf]
    %v4637 = vld [vmem:[#allocation11 + $0xe44] sm:$0xf]
    %v4638 = vld [vmem:[#allocation11 + $0xe48] sm:$0xf]
    %v4639 = vld [vmem:[#allocation11 + $0xe4c] sm:$0xf]
    %v4640 = vld [vmem:[#allocation11 + $0xe50] sm:$0xf]
    %v4641 = vld [vmem:[#allocation11 + $0xe54] sm:$0xf]
    %v4642 = vld [vmem:[#allocation11 + $0xe58] sm:$0xf]
    %v4643 = vld [vmem:[#allocation11 + $0xe5c] sm:$0xf]
    %v4644 = vld [vmem:[#allocation11 + $0xe60] sm:$0xf]
    %v4645 = vld [vmem:[#allocation11 + $0xe64] sm:$0xf]
    %v4646 = vld [vmem:[#allocation11 + $0xe68] sm:$0xf]
    %v4647 = vld [vmem:[#allocation11 + $0xe6c] sm:$0xf]
    %v4648 = vld [vmem:[#allocation11 + $0xe70] sm:$0xf]
    %v4649 = vld [vmem:[#allocation11 + $0xe74] sm:$0xf]
    %v4650 = vld [vmem:[#allocation11 + $0xe78] sm:$0xf]
    %v4651 = vld [vmem:[#allocation11 + $0xe7c] sm:$0xf]
    %v4652 = vld [vmem:[#allocation11 + $0xe80] sm:$0xf]
    %v4653 = vld [vmem:[#allocation11 + $0xe84] sm:$0xf]
    %v4654 = vld [vmem:[#allocation11 + $0xe88] sm:$0xf]
    %v4655 = vld [vmem:[#allocation11 + $0xe8c] sm:$0xf]
    %v4656 = vld [vmem:[#allocation11 + $0xe90] sm:$0xf]
    %v4657 = vld [vmem:[#allocation11 + $0xe94] sm:$0xf]
    %v4658 = vld [vmem:[#allocation11 + $0xe98] sm:$0xf]
    %v4659 = vld [vmem:[#allocation11 + $0xe9c] sm:$0xf]
    %v4660 = vld [vmem:[#allocation11 + $0xea0] sm:$0xf]
    %v4661 = vld [vmem:[#allocation11 + $0xea4] sm:$0xf]
    %v4662 = vld [vmem:[#allocation11 + $0xea8] sm:$0xf]
    %v4663 = vld [vmem:[#allocation11 + $0xeac] sm:$0xf]
    %v4664 = vld [vmem:[#allocation11 + $0xeb0] sm:$0xf]
    %v4665 = vld [vmem:[#allocation11 + $0xeb4] sm:$0xf]
    %v4666 = vld [vmem:[#allocation11 + $0xeb8] sm:$0xf]
    %v4667 = vld [vmem:[#allocation11 + $0xebc] sm:$0xf]
    %v4668 = vld [vmem:[#allocation11 + $0xec0] sm:$0xf]
    %v4669 = vld [vmem:[#allocation11 + $0xec4] sm:$0xf]
    %v4670 = vld [vmem:[#allocation11 + $0xec8] sm:$0xf]
    %v4671 = vld [vmem:[#allocation11 + $0xecc] sm:$0xf]
    %v4672 = vld [vmem:[#allocation11 + $0xed0] sm:$0xf]
    %v4673 = vld [vmem:[#allocation11 + $0xed4] sm:$0xf]
    %v4674 = vld [vmem:[#allocation11 + $0xed8] sm:$0xf]
    %v4675 = vld [vmem:[#allocation11 + $0xedc] sm:$0xf]
    %v4676 = vld [vmem:[#allocation11 + $0xee0] sm:$0xf]
    %v4677 = vld [vmem:[#allocation11 + $0xee4] sm:$0xf]
    %v4678 = vld [vmem:[#allocation11 + $0xee8] sm:$0xf]
    %v4679 = vld [vmem:[#allocation11 + $0xeec] sm:$0xf]
    %v4680 = vld [vmem:[#allocation11 + $0xef0] sm:$0xf]
    %v4681 = vld [vmem:[#allocation11 + $0xef4] sm:$0xf]
    %v4682 = vld [vmem:[#allocation11 + $0xef8] sm:$0xf]
    %v4683 = vld [vmem:[#allocation11 + $0xefc] sm:$0xf]
    %v4684 = vld [vmem:[#allocation11 + $0xf00] sm:$0xf]
    %v4685 = vld [vmem:[#allocation11 + $0xf04] sm:$0xf]
    %v4686 = vld [vmem:[#allocation11 + $0xf08] sm:$0xf]
    %v4687 = vld [vmem:[#allocation11 + $0xf0c] sm:$0xf]
    %v4688 = vld [vmem:[#allocation11 + $0xf10] sm:$0xf]
    %v4689 = vld [vmem:[#allocation11 + $0xf14] sm:$0xf]
    %v4690 = vld [vmem:[#allocation11 + $0xf18] sm:$0xf]
    %v4691 = vld [vmem:[#allocation11 + $0xf1c] sm:$0xf]
    %v4692 = vld [vmem:[#allocation11 + $0xf20] sm:$0xf]
    %v4693 = vld [vmem:[#allocation11 + $0xf24] sm:$0xf]
    %v4694 = vld [vmem:[#allocation11 + $0xf28] sm:$0xf]
    %v4695 = vld [vmem:[#allocation11 + $0xf2c] sm:$0xf]
    %v4696 = vld [vmem:[#allocation11 + $0xf30] sm:$0xf]
    %v4697 = vld [vmem:[#allocation11 + $0xf34] sm:$0xf]
    %v4698 = vld [vmem:[#allocation11 + $0xf38] sm:$0xf]
    %v4699 = vld [vmem:[#allocation11 + $0xf3c] sm:$0xf]
    %v4700 = vld [vmem:[#allocation11 + $0xf40] sm:$0xf]
    %v4701 = vld [vmem:[#allocation11 + $0xf44] sm:$0xf]
    %v4702 = vld [vmem:[#allocation11 + $0xf48] sm:$0xf]
    %v4703 = vld [vmem:[#allocation11 + $0xf4c] sm:$0xf]
    %v4704 = vld [vmem:[#allocation11 + $0xf50] sm:$0xf]
    %v4705 = vld [vmem:[#allocation11 + $0xf54] sm:$0xf]
    %v4706 = vld [vmem:[#allocation11 + $0xf58] sm:$0xf]
    %v4707 = vld [vmem:[#allocation11 + $0xf5c] sm:$0xf]
    %v4708 = vld [vmem:[#allocation11 + $0xf60] sm:$0xf]
    %v4709 = vld [vmem:[#allocation11 + $0xf64] sm:$0xf]
    %v4710 = vld [vmem:[#allocation11 + $0xf68] sm:$0xf]
    %v4711 = vld [vmem:[#allocation11 + $0xf6c] sm:$0xf]
    %v4712 = vld [vmem:[#allocation11 + $0xf70] sm:$0xf]
    %v4713 = vld [vmem:[#allocation11 + $0xf74] sm:$0xf]
    %v4714 = vld [vmem:[#allocation11 + $0xf78] sm:$0xf]
    %v4715 = vld [vmem:[#allocation11 + $0xf7c] sm:$0xf]
    %v4716 = vld [vmem:[#allocation11 + $0xf80] sm:$0xf]
    %v4717 = vld [vmem:[#allocation11 + $0xf84] sm:$0xf]
    %v4718 = vld [vmem:[#allocation11 + $0xf88] sm:$0xf]
    %v4719 = vld [vmem:[#allocation11 + $0xf8c] sm:$0xf]
    %v4720 = vld [vmem:[#allocation11 + $0xf90] sm:$0xf]
    %v4721 = vld [vmem:[#allocation11 + $0xf94] sm:$0xf]
    %v4722 = vld [vmem:[#allocation11 + $0xf98] sm:$0xf]
    %v4723 = vld [vmem:[#allocation11 + $0xf9c] sm:$0xf]
    %v4724 = vld [vmem:[#allocation11 + $0xfa0] sm:$0xf]
    %v4725 = vld [vmem:[#allocation11 + $0xfa4] sm:$0xf]
    %v4726 = vld [vmem:[#allocation11 + $0xfa8] sm:$0xf]
    %v4727 = vld [vmem:[#allocation11 + $0xfac] sm:$0xf]
    %v4728 = vld [vmem:[#allocation11 + $0xfb0] sm:$0xf]
    %v4729 = vld [vmem:[#allocation11 + $0xfb4] sm:$0xf]
    %v4730 = vld [vmem:[#allocation11 + $0xfb8] sm:$0xf]
    %v4731 = vld [vmem:[#allocation11 + $0xfbc] sm:$0xf]
    %v4732 = vld [vmem:[#allocation11 + $0xfc0] sm:$0xf]
    %v4733 = vld [vmem:[#allocation11 + $0xfc4] sm:$0xf]
    %v4734 = vld [vmem:[#allocation11 + $0xfc8] sm:$0xf]
    %v4735 = vld [vmem:[#allocation11 + $0xfcc] sm:$0xf]
    %v4736 = vld [vmem:[#allocation11 + $0xfd0] sm:$0xf]
    %v4737 = vld [vmem:[#allocation11 + $0xfd4] sm:$0xf]
    %v4738 = vld [vmem:[#allocation11 + $0xfd8] sm:$0xf]
    %v4739 = vld [vmem:[#allocation11 + $0xfdc] sm:$0xf]
    %v4740 = vld [vmem:[#allocation11 + $0xfe0] sm:$0xf]
    %v4741 = vld [vmem:[#allocation11 + $0xfe4] sm:$0xf]
    %v4742 = vld [vmem:[#allocation11 + $0xfe8] sm:$0xf]
    %v4743 = vld [vmem:[#allocation11 + $0xfec] sm:$0xf]
    %v4744 = vld [vmem:[#allocation11 + $0xff0] sm:$0xf]
    %v4745 = vld [vmem:[#allocation11 + $0xff4] sm:$0xf]
    %v4746 = vld [vmem:[#allocation11 + $0xff8] sm:$0xf]
    %v4747 = vld [vmem:[#allocation11 + $0xffc] sm:$0xf]
    %v4748 = vld [vmem:[#allocation12] sm:$0x1]
    %v4750 = vlaneseq
    %v4751 = vshrl.u32 %v4750, 7
    %v4752 = vsub.s32 0, %v4751
    %v4753 = vrot.slane %v4748, %v4752
    %v5779 = vunpack.c.l.b16 %v3724
    %v5780 = vunpack.c.l.b16 %v3725
    %v5781 = vunpack.c.l.b16 %v3726
    %v5782 = vunpack.c.l.b16 %v3727
    %v5783 = vunpack.c.l.b16 %v3728
    %v5784 = vunpack.c.l.b16 %v3729
    %v5785 = vunpack.c.l.b16 %v3730
    %v5786 = vunpack.c.l.b16 %v3731
    %v5787 = vunpack.c.l.b16 %v3732
    %v5788 = vunpack.c.l.b16 %v3733
    %v5789 = vunpack.c.l.b16 %v3734
    %v5790 = vunpack.c.l.b16 %v3735
    %v5791 = vunpack.c.l.b16 %v3736
    %v5792 = vunpack.c.l.b16 %v3737
    %v5793 = vunpack.c.l.b16 %v3738
    %v5794 = vunpack.c.l.b16 %v3739
    %v5795 = vunpack.c.l.b16 %v3740
    %v5796 = vunpack.c.l.b16 %v3741
    %v5797 = vunpack.c.l.b16 %v3742
    %v5798 = vunpack.c.l.b16 %v3743
    %v5799 = vunpack.c.l.b16 %v3744
    %v5800 = vunpack.c.l.b16 %v3745
    %v5801 = vunpack.c.l.b16 %v3746
    %v5802 = vunpack.c.l.b16 %v3747
    %v5803 = vunpack.c.l.b16 %v3748
    %v5804 = vunpack.c.l.b16 %v3749
    %v5805 = vunpack.c.l.b16 %v3750
    %v5806 = vunpack.c.l.b16 %v3751
    %v5807 = vunpack.c.l.b16 %v3752
    %v5808 = vunpack.c.l.b16 %v3753
    %v5809 = vunpack.c.l.b16 %v3754
    %v5810 = vunpack.c.l.b16 %v3755
    %v5811 = vunpack.c.l.b16 %v3756
    %v5812 = vunpack.c.l.b16 %v3757
    %v5813 = vunpack.c.l.b16 %v3758
    %v5814 = vunpack.c.l.b16 %v3759
    %v5815 = vunpack.c.l.b16 %v3760
    %v5816 = vunpack.c.l.b16 %v3761
    %v5817 = vunpack.c.l.b16 %v3762
    %v5818 = vunpack.c.l.b16 %v3763
    %v5819 = vunpack.c.l.b16 %v3764
    %v5820 = vunpack.c.l.b16 %v3765
    %v5821 = vunpack.c.l.b16 %v3766
    %v5822 = vunpack.c.l.b16 %v3767
    %v5823 = vunpack.c.l.b16 %v3768
    %v5824 = vunpack.c.l.b16 %v3769
    %v5825 = vunpack.c.l.b16 %v3770
    %v5826 = vunpack.c.l.b16 %v3771
    %v5827 = vunpack.c.l.b16 %v3772
    %v5828 = vunpack.c.l.b16 %v3773
    %v5829 = vunpack.c.l.b16 %v3774
    %v5830 = vunpack.c.l.b16 %v3775
    %v5831 = vunpack.c.l.b16 %v3776
    %v5832 = vunpack.c.l.b16 %v3777
    %v5833 = vunpack.c.l.b16 %v3778
    %v5834 = vunpack.c.l.b16 %v3779
    %v5835 = vunpack.c.l.b16 %v3780
    %v5836 = vunpack.c.l.b16 %v3781
    %v5837 = vunpack.c.l.b16 %v3782
    %v5838 = vunpack.c.l.b16 %v3783
    %v5839 = vunpack.c.l.b16 %v3784
    %v5840 = vunpack.c.l.b16 %v3785
    %v5841 = vunpack.c.l.b16 %v3786
    %v5842 = vunpack.c.l.b16 %v3787
    %v5843 = vunpack.c.l.b16 %v3788
    %v5844 = vunpack.c.l.b16 %v3789
    %v5845 = vunpack.c.l.b16 %v3790
    %v5846 = vunpack.c.l.b16 %v3791
    %v5847 = vunpack.c.l.b16 %v3792
    %v5848 = vunpack.c.l.b16 %v3793
    %v5849 = vunpack.c.l.b16 %v3794
    %v5850 = vunpack.c.l.b16 %v3795
    %v5851 = vunpack.c.l.b16 %v3796
    %v5852 = vunpack.c.l.b16 %v3797
    %v5853 = vunpack.c.l.b16 %v3798
    %v5854 = vunpack.c.l.b16 %v3799
    %v5855 = vunpack.c.l.b16 %v3800
    %v5856 = vunpack.c.l.b16 %v3801
    %v5857 = vunpack.c.l.b16 %v3802
    %v5858 = vunpack.c.l.b16 %v3803
    %v5859 = vunpack.c.l.b16 %v3804
    %v5860 = vunpack.c.l.b16 %v3805
    %v5861 = vunpack.c.l.b16 %v3806
    %v5862 = vunpack.c.l.b16 %v3807
    %v5863 = vunpack.c.l.b16 %v3808
    %v5864 = vunpack.c.l.b16 %v3809
    %v5865 = vunpack.c.l.b16 %v3810
    %v5866 = vunpack.c.l.b16 %v3811
    %v5867 = vunpack.c.l.b16 %v3812
    %v5868 = vunpack.c.l.b16 %v3813
    %v5869 = vunpack.c.l.b16 %v3814
    %v5870 = vunpack.c.l.b16 %v3815
    %v5871 = vunpack.c.l.b16 %v3816
    %v5872 = vunpack.c.l.b16 %v3817
    %v5873 = vunpack.c.l.b16 %v3818
    %v5874 = vunpack.c.l.b16 %v3819
    %v5875 = vunpack.c.l.b16 %v3820
    %v5876 = vunpack.c.l.b16 %v3821
    %v5877 = vunpack.c.l.b16 %v3822
    %v5878 = vunpack.c.l.b16 %v3823
    %v5879 = vunpack.c.l.b16 %v3824
    %v5880 = vunpack.c.l.b16 %v3825
    %v5881 = vunpack.c.l.b16 %v3826
    %v5882 = vunpack.c.l.b16 %v3827
    %v5883 = vunpack.c.l.b16 %v3828
    %v5884 = vunpack.c.l.b16 %v3829
    %v5885 = vunpack.c.l.b16 %v3830
    %v5886 = vunpack.c.l.b16 %v3831
    %v5887 = vunpack.c.l.b16 %v3832
    %v5888 = vunpack.c.l.b16 %v3833
    %v5889 = vunpack.c.l.b16 %v3834
    %v5890 = vunpack.c.l.b16 %v3835
    %v5891 = vunpack.c.l.b16 %v3836
    %v5892 = vunpack.c.l.b16 %v3837
    %v5893 = vunpack.c.l.b16 %v3838
    %v5894 = vunpack.c.l.b16 %v3839
    %v5895 = vunpack.c.l.b16 %v3840
    %v5896 = vunpack.c.l.b16 %v3841
    %v5897 = vunpack.c.l.b16 %v3842
    %v5898 = vunpack.c.l.b16 %v3843
    %v5899 = vunpack.c.l.b16 %v3844
    %v5900 = vunpack.c.l.b16 %v3845
    %v5901 = vunpack.c.l.b16 %v3846
    %v5902 = vunpack.c.l.b16 %v3847
    %v5903 = vunpack.c.l.b16 %v3848
    %v5904 = vunpack.c.l.b16 %v3849
    %v5905 = vunpack.c.l.b16 %v3850
    %v5906 = vunpack.c.l.b16 %v3851
    %v5907 = vunpack.c.l.b16 %v3852
    %v5908 = vunpack.c.l.b16 %v3853
    %v5909 = vunpack.c.l.b16 %v3854
    %v5910 = vunpack.c.l.b16 %v3855
    %v5911 = vunpack.c.l.b16 %v3856
    %v5912 = vunpack.c.l.b16 %v3857
    %v5913 = vunpack.c.l.b16 %v3858
    %v5914 = vunpack.c.l.b16 %v3859
    %v5915 = vunpack.c.l.b16 %v3860
    %v5916 = vunpack.c.l.b16 %v3861
    %v5917 = vunpack.c.l.b16 %v3862
    %v5918 = vunpack.c.l.b16 %v3863
    %v5919 = vunpack.c.l.b16 %v3864
    %v5920 = vunpack.c.l.b16 %v3865
    %v5921 = vunpack.c.l.b16 %v3866
    %v5922 = vunpack.c.l.b16 %v3867
    %v5923 = vunpack.c.l.b16 %v3868
    %v5924 = vunpack.c.l.b16 %v3869
    %v5925 = vunpack.c.l.b16 %v3870
    %v5926 = vunpack.c.l.b16 %v3871
    %v5927 = vunpack.c.l.b16 %v3872
    %v5928 = vunpack.c.l.b16 %v3873
    %v5929 = vunpack.c.l.b16 %v3874
    %v5930 = vunpack.c.l.b16 %v3875
    %v5931 = vunpack.c.l.b16 %v3876
    %v5932 = vunpack.c.l.b16 %v3877
    %v5933 = vunpack.c.l.b16 %v3878
    %v5934 = vunpack.c.l.b16 %v3879
    %v5935 = vunpack.c.l.b16 %v3880
    %v5936 = vunpack.c.l.b16 %v3881
    %v5937 = vunpack.c.l.b16 %v3882
    %v5938 = vunpack.c.l.b16 %v3883
    %v5939 = vunpack.c.l.b16 %v3884
    %v5940 = vunpack.c.l.b16 %v3885
    %v5941 = vunpack.c.l.b16 %v3886
    %v5942 = vunpack.c.l.b16 %v3887
    %v5943 = vunpack.c.l.b16 %v3888
    %v5944 = vunpack.c.l.b16 %v3889
    %v5945 = vunpack.c.l.b16 %v3890
    %v5946 = vunpack.c.l.b16 %v3891
    %v5947 = vunpack.c.l.b16 %v3892
    %v5948 = vunpack.c.l.b16 %v3893
    %v5949 = vunpack.c.l.b16 %v3894
    %v5950 = vunpack.c.l.b16 %v3895
    %v5951 = vunpack.c.l.b16 %v3896
    %v5952 = vunpack.c.l.b16 %v3897
    %v5953 = vunpack.c.l.b16 %v3898
    %v5954 = vunpack.c.l.b16 %v3899
    %v5955 = vunpack.c.l.b16 %v3900
    %v5956 = vunpack.c.l.b16 %v3901
    %v5957 = vunpack.c.l.b16 %v3902
    %v5958 = vunpack.c.l.b16 %v3903
    %v5959 = vunpack.c.l.b16 %v3904
    %v5960 = vunpack.c.l.b16 %v3905
    %v5961 = vunpack.c.l.b16 %v3906
    %v5962 = vunpack.c.l.b16 %v3907
    %v5963 = vunpack.c.l.b16 %v3908
    %v5964 = vunpack.c.l.b16 %v3909
    %v5965 = vunpack.c.l.b16 %v3910
    %v5966 = vunpack.c.l.b16 %v3911
    %v5967 = vunpack.c.l.b16 %v3912
    %v5968 = vunpack.c.l.b16 %v3913
    %v5969 = vunpack.c.l.b16 %v3914
    %v5970 = vunpack.c.l.b16 %v3915
    %v5971 = vunpack.c.l.b16 %v3916
    %v5972 = vunpack.c.l.b16 %v3917
    %v5973 = vunpack.c.l.b16 %v3918
    %v5974 = vunpack.c.l.b16 %v3919
    %v5975 = vunpack.c.l.b16 %v3920
    %v5976 = vunpack.c.l.b16 %v3921
    %v5977 = vunpack.c.l.b16 %v3922
    %v5978 = vunpack.c.l.b16 %v3923
    %v5979 = vunpack.c.l.b16 %v3924
    %v5980 = vunpack.c.l.b16 %v3925
    %v5981 = vunpack.c.l.b16 %v3926
    %v5982 = vunpack.c.l.b16 %v3927
    %v5983 = vunpack.c.l.b16 %v3928
    %v5984 = vunpack.c.l.b16 %v3929
    %v5985 = vunpack.c.l.b16 %v3930
    %v5986 = vunpack.c.l.b16 %v3931
    %v5987 = vunpack.c.l.b16 %v3932
    %v5988 = vunpack.c.l.b16 %v3933
    %v5989 = vunpack.c.l.b16 %v3934
    %v5990 = vunpack.c.l.b16 %v3935
    %v5991 = vunpack.c.l.b16 %v3936
    %v5992 = vunpack.c.l.b16 %v3937
    %v5993 = vunpack.c.l.b16 %v3938
    %v5994 = vunpack.c.l.b16 %v3939
    %v5995 = vunpack.c.l.b16 %v3940
    %v5996 = vunpack.c.l.b16 %v3941
    %v5997 = vunpack.c.l.b16 %v3942
    %v5998 = vunpack.c.l.b16 %v3943
    %v5999 = vunpack.c.l.b16 %v3944
    %v6000 = vunpack.c.l.b16 %v3945
    %v6001 = vunpack.c.l.b16 %v3946
    %v6002 = vunpack.c.l.b16 %v3947
    %v6003 = vunpack.c.l.b16 %v3948
    %v6004 = vunpack.c.l.b16 %v3949
    %v6005 = vunpack.c.l.b16 %v3950
    %v6006 = vunpack.c.l.b16 %v3951
    %v6007 = vunpack.c.l.b16 %v3952
    %v6008 = vunpack.c.l.b16 %v3953
    %v6009 = vunpack.c.l.b16 %v3954
    %v6010 = vunpack.c.l.b16 %v3955
    %v6011 = vunpack.c.l.b16 %v3956
    %v6012 = vunpack.c.l.b16 %v3957
    %v6013 = vunpack.c.l.b16 %v3958
    %v6014 = vunpack.c.l.b16 %v3959
    %v6015 = vunpack.c.l.b16 %v3960
    %v6016 = vunpack.c.l.b16 %v3961
    %v6017 = vunpack.c.l.b16 %v3962
    %v6018 = vunpack.c.l.b16 %v3963
    %v6019 = vunpack.c.l.b16 %v3964
    %v6020 = vunpack.c.l.b16 %v3965
    %v6021 = vunpack.c.l.b16 %v3966
    %v6022 = vunpack.c.l.b16 %v3967
    %v6023 = vunpack.c.l.b16 %v3968
    %v6024 = vunpack.c.l.b16 %v3969
    %v6025 = vunpack.c.l.b16 %v3970
    %v6026 = vunpack.c.l.b16 %v3971
    %v6027 = vunpack.c.l.b16 %v3972
    %v6028 = vunpack.c.l.b16 %v3973
    %v6029 = vunpack.c.l.b16 %v3974
    %v6030 = vunpack.c.l.b16 %v3975
    %v6031 = vunpack.c.l.b16 %v3976
    %v6032 = vunpack.c.l.b16 %v3977
    %v6033 = vunpack.c.l.b16 %v3978
    %v6034 = vunpack.c.l.b16 %v3979
    %v6035 = vunpack.c.l.b16 %v3980
    %v6036 = vunpack.c.l.b16 %v3981
    %v6037 = vunpack.c.l.b16 %v3982
    %v6038 = vunpack.c.l.b16 %v3983
    %v6039 = vunpack.c.l.b16 %v3984
    %v6040 = vunpack.c.l.b16 %v3985
    %v6041 = vunpack.c.l.b16 %v3986
    %v6042 = vunpack.c.l.b16 %v3987
    %v6043 = vunpack.c.l.b16 %v3988
    %v6044 = vunpack.c.l.b16 %v3989
    %v6045 = vunpack.c.l.b16 %v3990
    %v6046 = vunpack.c.l.b16 %v3991
    %v6047 = vunpack.c.l.b16 %v3992
    %v6048 = vunpack.c.l.b16 %v3993
    %v6049 = vunpack.c.l.b16 %v3994
    %v6050 = vunpack.c.l.b16 %v3995
    %v6051 = vunpack.c.l.b16 %v3996
    %v6052 = vunpack.c.l.b16 %v3997
    %v6053 = vunpack.c.l.b16 %v3998
    %v6054 = vunpack.c.l.b16 %v3999
    %v6055 = vunpack.c.l.b16 %v4000
    %v6056 = vunpack.c.l.b16 %v4001
    %v6057 = vunpack.c.l.b16 %v4002
    %v6058 = vunpack.c.l.b16 %v4003
    %v6059 = vunpack.c.l.b16 %v4004
    %v6060 = vunpack.c.l.b16 %v4005
    %v6061 = vunpack.c.l.b16 %v4006
    %v6062 = vunpack.c.l.b16 %v4007
    %v6063 = vunpack.c.l.b16 %v4008
    %v6064 = vunpack.c.l.b16 %v4009
    %v6065 = vunpack.c.l.b16 %v4010
    %v6066 = vunpack.c.l.b16 %v4011
    %v6067 = vunpack.c.l.b16 %v4012
    %v6068 = vunpack.c.l.b16 %v4013
    %v6069 = vunpack.c.l.b16 %v4014
    %v6070 = vunpack.c.l.b16 %v4015
    %v6071 = vunpack.c.l.b16 %v4016
    %v6072 = vunpack.c.l.b16 %v4017
    %v6073 = vunpack.c.l.b16 %v4018
    %v6074 = vunpack.c.l.b16 %v4019
    %v6075 = vunpack.c.l.b16 %v4020
    %v6076 = vunpack.c.l.b16 %v4021
    %v6077 = vunpack.c.l.b16 %v4022
    %v6078 = vunpack.c.l.b16 %v4023
    %v6079 = vunpack.c.l.b16 %v4024
    %v6080 = vunpack.c.l.b16 %v4025
    %v6081 = vunpack.c.l.b16 %v4026
    %v6082 = vunpack.c.l.b16 %v4027
    %v6083 = vunpack.c.l.b16 %v4028
    %v6084 = vunpack.c.l.b16 %v4029
    %v6085 = vunpack.c.l.b16 %v4030
    %v6086 = vunpack.c.l.b16 %v4031
    %v6087 = vunpack.c.l.b16 %v4032
    %v6088 = vunpack.c.l.b16 %v4033
    %v6089 = vunpack.c.l.b16 %v4034
    %v6090 = vunpack.c.l.b16 %v4035
    %v6091 = vunpack.c.l.b16 %v4036
    %v6092 = vunpack.c.l.b16 %v4037
    %v6093 = vunpack.c.l.b16 %v4038
    %v6094 = vunpack.c.l.b16 %v4039
    %v6095 = vunpack.c.l.b16 %v4040
    %v6096 = vunpack.c.l.b16 %v4041
    %v6097 = vunpack.c.l.b16 %v4042
    %v6098 = vunpack.c.l.b16 %v4043
    %v6099 = vunpack.c.l.b16 %v4044
    %v6100 = vunpack.c.l.b16 %v4045
    %v6101 = vunpack.c.l.b16 %v4046
    %v6102 = vunpack.c.l.b16 %v4047
    %v6103 = vunpack.c.l.b16 %v4048
    %v6104 = vunpack.c.l.b16 %v4049
    %v6105 = vunpack.c.l.b16 %v4050
    %v6106 = vunpack.c.l.b16 %v4051
    %v6107 = vunpack.c.l.b16 %v4052
    %v6108 = vunpack.c.l.b16 %v4053
    %v6109 = vunpack.c.l.b16 %v4054
    %v6110 = vunpack.c.l.b16 %v4055
    %v6111 = vunpack.c.l.b16 %v4056
    %v6112 = vunpack.c.l.b16 %v4057
    %v6113 = vunpack.c.l.b16 %v4058
    %v6114 = vunpack.c.l.b16 %v4059
    %v6115 = vunpack.c.l.b16 %v4060
    %v6116 = vunpack.c.l.b16 %v4061
    %v6117 = vunpack.c.l.b16 %v4062
    %v6118 = vunpack.c.l.b16 %v4063
    %v6119 = vunpack.c.l.b16 %v4064
    %v6120 = vunpack.c.l.b16 %v4065
    %v6121 = vunpack.c.l.b16 %v4066
    %v6122 = vunpack.c.l.b16 %v4067
    %v6123 = vunpack.c.l.b16 %v4068
    %v6124 = vunpack.c.l.b16 %v4069
    %v6125 = vunpack.c.l.b16 %v4070
    %v6126 = vunpack.c.l.b16 %v4071
    %v6127 = vunpack.c.l.b16 %v4072
    %v6128 = vunpack.c.l.b16 %v4073
    %v6129 = vunpack.c.l.b16 %v4074
    %v6130 = vunpack.c.l.b16 %v4075
    %v6131 = vunpack.c.l.b16 %v4076
    %v6132 = vunpack.c.l.b16 %v4077
    %v6133 = vunpack.c.l.b16 %v4078
    %v6134 = vunpack.c.l.b16 %v4079
    %v6135 = vunpack.c.l.b16 %v4080
    %v6136 = vunpack.c.l.b16 %v4081
    %v6137 = vunpack.c.l.b16 %v4082
    %v6138 = vunpack.c.l.b16 %v4083
    %v6139 = vunpack.c.l.b16 %v4084
    %v6140 = vunpack.c.l.b16 %v4085
    %v6141 = vunpack.c.l.b16 %v4086
    %v6142 = vunpack.c.l.b16 %v4087
    %v6143 = vunpack.c.l.b16 %v4088
    %v6144 = vunpack.c.l.b16 %v4089
    %v6145 = vunpack.c.l.b16 %v4090
    %v6146 = vunpack.c.l.b16 %v4091
    %v6147 = vunpack.c.l.b16 %v4092
    %v6148 = vunpack.c.l.b16 %v4093
    %v6149 = vunpack.c.l.b16 %v4094
    %v6150 = vunpack.c.l.b16 %v4095
    %v6151 = vunpack.c.l.b16 %v4096
    %v6152 = vunpack.c.l.b16 %v4097
    %v6153 = vunpack.c.l.b16 %v4098
    %v6154 = vunpack.c.l.b16 %v4099
    %v6155 = vunpack.c.l.b16 %v4100
    %v6156 = vunpack.c.l.b16 %v4101
    %v6157 = vunpack.c.l.b16 %v4102
    %v6158 = vunpack.c.l.b16 %v4103
    %v6159 = vunpack.c.l.b16 %v4104
    %v6160 = vunpack.c.l.b16 %v4105
    %v6161 = vunpack.c.l.b16 %v4106
    %v6162 = vunpack.c.l.b16 %v4107
    %v6163 = vunpack.c.l.b16 %v4108
    %v6164 = vunpack.c.l.b16 %v4109
    %v6165 = vunpack.c.l.b16 %v4110
    %v6166 = vunpack.c.l.b16 %v4111
    %v6167 = vunpack.c.l.b16 %v4112
    %v6168 = vunpack.c.l.b16 %v4113
    %v6169 = vunpack.c.l.b16 %v4114
    %v6170 = vunpack.c.l.b16 %v4115
    %v6171 = vunpack.c.l.b16 %v4116
    %v6172 = vunpack.c.l.b16 %v4117
    %v6173 = vunpack.c.l.b16 %v4118
    %v6174 = vunpack.c.l.b16 %v4119
    %v6175 = vunpack.c.l.b16 %v4120
    %v6176 = vunpack.c.l.b16 %v4121
    %v6177 = vunpack.c.l.b16 %v4122
    %v6178 = vunpack.c.l.b16 %v4123
    %v6179 = vunpack.c.l.b16 %v4124
    %v6180 = vunpack.c.l.b16 %v4125
    %v6181 = vunpack.c.l.b16 %v4126
    %v6182 = vunpack.c.l.b16 %v4127
    %v6183 = vunpack.c.l.b16 %v4128
    %v6184 = vunpack.c.l.b16 %v4129
    %v6185 = vunpack.c.l.b16 %v4130
    %v6186 = vunpack.c.l.b16 %v4131
    %v6187 = vunpack.c.l.b16 %v4132
    %v6188 = vunpack.c.l.b16 %v4133
    %v6189 = vunpack.c.l.b16 %v4134
    %v6190 = vunpack.c.l.b16 %v4135
    %v6191 = vunpack.c.l.b16 %v4136
    %v6192 = vunpack.c.l.b16 %v4137
    %v6193 = vunpack.c.l.b16 %v4138
    %v6194 = vunpack.c.l.b16 %v4139
    %v6195 = vunpack.c.l.b16 %v4140
    %v6196 = vunpack.c.l.b16 %v4141
    %v6197 = vunpack.c.l.b16 %v4142
    %v6198 = vunpack.c.l.b16 %v4143
    %v6199 = vunpack.c.l.b16 %v4144
    %v6200 = vunpack.c.l.b16 %v4145
    %v6201 = vunpack.c.l.b16 %v4146
    %v6202 = vunpack.c.l.b16 %v4147
    %v6203 = vunpack.c.l.b16 %v4148
    %v6204 = vunpack.c.l.b16 %v4149
    %v6205 = vunpack.c.l.b16 %v4150
    %v6206 = vunpack.c.l.b16 %v4151
    %v6207 = vunpack.c.l.b16 %v4152
    %v6208 = vunpack.c.l.b16 %v4153
    %v6209 = vunpack.c.l.b16 %v4154
    %v6210 = vunpack.c.l.b16 %v4155
    %v6211 = vunpack.c.l.b16 %v4156
    %v6212 = vunpack.c.l.b16 %v4157
    %v6213 = vunpack.c.l.b16 %v4158
    %v6214 = vunpack.c.l.b16 %v4159
    %v6215 = vunpack.c.l.b16 %v4160
    %v6216 = vunpack.c.l.b16 %v4161
    %v6217 = vunpack.c.l.b16 %v4162
    %v6218 = vunpack.c.l.b16 %v4163
    %v6219 = vunpack.c.l.b16 %v4164
    %v6220 = vunpack.c.l.b16 %v4165
    %v6221 = vunpack.c.l.b16 %v4166
    %v6222 = vunpack.c.l.b16 %v4167
    %v6223 = vunpack.c.l.b16 %v4168
    %v6224 = vunpack.c.l.b16 %v4169
    %v6225 = vunpack.c.l.b16 %v4170
    %v6226 = vunpack.c.l.b16 %v4171
    %v6227 = vunpack.c.l.b16 %v4172
    %v6228 = vunpack.c.l.b16 %v4173
    %v6229 = vunpack.c.l.b16 %v4174
    %v6230 = vunpack.c.l.b16 %v4175
    %v6231 = vunpack.c.l.b16 %v4176
    %v6232 = vunpack.c.l.b16 %v4177
    %v6233 = vunpack.c.l.b16 %v4178
    %v6234 = vunpack.c.l.b16 %v4179
    %v6235 = vunpack.c.l.b16 %v4180
    %v6236 = vunpack.c.l.b16 %v4181
    %v6237 = vunpack.c.l.b16 %v4182
    %v6238 = vunpack.c.l.b16 %v4183
    %v6239 = vunpack.c.l.b16 %v4184
    %v6240 = vunpack.c.l.b16 %v4185
    %v6241 = vunpack.c.l.b16 %v4186
    %v6242 = vunpack.c.l.b16 %v4187
    %v6243 = vunpack.c.l.b16 %v4188
    %v6244 = vunpack.c.l.b16 %v4189
    %v6245 = vunpack.c.l.b16 %v4190
    %v6246 = vunpack.c.l.b16 %v4191
    %v6247 = vunpack.c.l.b16 %v4192
    %v6248 = vunpack.c.l.b16 %v4193
    %v6249 = vunpack.c.l.b16 %v4194
    %v6250 = vunpack.c.l.b16 %v4195
    %v6251 = vunpack.c.l.b16 %v4196
    %v6252 = vunpack.c.l.b16 %v4197
    %v6253 = vunpack.c.l.b16 %v4198
    %v6254 = vunpack.c.l.b16 %v4199
    %v6255 = vunpack.c.l.b16 %v4200
    %v6256 = vunpack.c.l.b16 %v4201
    %v6257 = vunpack.c.l.b16 %v4202
    %v6258 = vunpack.c.l.b16 %v4203
    %v6259 = vunpack.c.l.b16 %v4204
    %v6260 = vunpack.c.l.b16 %v4205
    %v6261 = vunpack.c.l.b16 %v4206
    %v6262 = vunpack.c.l.b16 %v4207
    %v6263 = vunpack.c.l.b16 %v4208
    %v6264 = vunpack.c.l.b16 %v4209
    %v6265 = vunpack.c.l.b16 %v4210
    %v6266 = vunpack.c.l.b16 %v4211
    %v6267 = vunpack.c.l.b16 %v4212
    %v6268 = vunpack.c.l.b16 %v4213
    %v6269 = vunpack.c.l.b16 %v4214
    %v6270 = vunpack.c.l.b16 %v4215
    %v6271 = vunpack.c.l.b16 %v4216
    %v6272 = vunpack.c.l.b16 %v4217
    %v6273 = vunpack.c.l.b16 %v4218
    %v6274 = vunpack.c.l.b16 %v4219
    %v6275 = vunpack.c.l.b16 %v4220
    %v6276 = vunpack.c.l.b16 %v4221
    %v6277 = vunpack.c.l.b16 %v4222
    %v6278 = vunpack.c.l.b16 %v4223
    %v6279 = vunpack.c.l.b16 %v4224
    %v6280 = vunpack.c.l.b16 %v4225
    %v6281 = vunpack.c.l.b16 %v4226
    %v6282 = vunpack.c.l.b16 %v4227
    %v6283 = vunpack.c.l.b16 %v4228
    %v6284 = vunpack.c.l.b16 %v4229
    %v6285 = vunpack.c.l.b16 %v4230
    %v6286 = vunpack.c.l.b16 %v4231
    %v6287 = vunpack.c.l.b16 %v4232
    %v6288 = vunpack.c.l.b16 %v4233
    %v6289 = vunpack.c.l.b16 %v4234
    %v6290 = vunpack.c.l.b16 %v4235
    %v6291 = vunpack.c.l.b16 %v4236
    %v6292 = vunpack.c.l.b16 %v4237
    %v6293 = vunpack.c.l.b16 %v4238
    %v6294 = vunpack.c.l.b16 %v4239
    %v6295 = vunpack.c.l.b16 %v4240
    %v6296 = vunpack.c.l.b16 %v4241
    %v6297 = vunpack.c.l.b16 %v4242
    %v6298 = vunpack.c.l.b16 %v4243
    %v6299 = vunpack.c.l.b16 %v4244
    %v6300 = vunpack.c.l.b16 %v4245
    %v6301 = vunpack.c.l.b16 %v4246
    %v6302 = vunpack.c.l.b16 %v4247
    %v6303 = vunpack.c.l.b16 %v4248
    %v6304 = vunpack.c.l.b16 %v4249
    %v6305 = vunpack.c.l.b16 %v4250
    %v6306 = vunpack.c.l.b16 %v4251
    %v6307 = vunpack.c.l.b16 %v4252
    %v6308 = vunpack.c.l.b16 %v4253
    %v6309 = vunpack.c.l.b16 %v4254
    %v6310 = vunpack.c.l.b16 %v4255
    %v6311 = vunpack.c.l.b16 %v4256
    %v6312 = vunpack.c.l.b16 %v4257
    %v6313 = vunpack.c.l.b16 %v4258
    %v6314 = vunpack.c.l.b16 %v4259
    %v6315 = vunpack.c.l.b16 %v4260
    %v6316 = vunpack.c.l.b16 %v4261
    %v6317 = vunpack.c.l.b16 %v4262
    %v6318 = vunpack.c.l.b16 %v4263
    %v6319 = vunpack.c.l.b16 %v4264
    %v6320 = vunpack.c.l.b16 %v4265
    %v6321 = vunpack.c.l.b16 %v4266
    %v6322 = vunpack.c.l.b16 %v4267
    %v6323 = vunpack.c.l.b16 %v4268
    %v6324 = vunpack.c.l.b16 %v4269
    %v6325 = vunpack.c.l.b16 %v4270
    %v6326 = vunpack.c.l.b16 %v4271
    %v6327 = vunpack.c.l.b16 %v4272
    %v6328 = vunpack.c.l.b16 %v4273
    %v6329 = vunpack.c.l.b16 %v4274
    %v6330 = vunpack.c.l.b16 %v4275
    %v6331 = vunpack.c.l.b16 %v4276
    %v6332 = vunpack.c.l.b16 %v4277
    %v6333 = vunpack.c.l.b16 %v4278
    %v6334 = vunpack.c.l.b16 %v4279
    %v6335 = vunpack.c.l.b16 %v4280
    %v6336 = vunpack.c.l.b16 %v4281
    %v6337 = vunpack.c.l.b16 %v4282
    %v6338 = vunpack.c.l.b16 %v4283
    %v6339 = vunpack.c.l.b16 %v4284
    %v6340 = vunpack.c.l.b16 %v4285
    %v6341 = vunpack.c.l.b16 %v4286
    %v6342 = vunpack.c.l.b16 %v4287
    %v6343 = vunpack.c.l.b16 %v4288
    %v6344 = vunpack.c.l.b16 %v4289
    %v6345 = vunpack.c.l.b16 %v4290
    %v6346 = vunpack.c.l.b16 %v4291
    %v6347 = vunpack.c.l.b16 %v4292
    %v6348 = vunpack.c.l.b16 %v4293
    %v6349 = vunpack.c.l.b16 %v4294
    %v6350 = vunpack.c.l.b16 %v4295
    %v6351 = vunpack.c.l.b16 %v4296
    %v6352 = vunpack.c.l.b16 %v4297
    %v6353 = vunpack.c.l.b16 %v4298
    %v6354 = vunpack.c.l.b16 %v4299
    %v6355 = vunpack.c.l.b16 %v4300
    %v6356 = vunpack.c.l.b16 %v4301
    %v6357 = vunpack.c.l.b16 %v4302
    %v6358 = vunpack.c.l.b16 %v4303
    %v6359 = vunpack.c.l.b16 %v4304
    %v6360 = vunpack.c.l.b16 %v4305
    %v6361 = vunpack.c.l.b16 %v4306
    %v6362 = vunpack.c.l.b16 %v4307
    %v6363 = vunpack.c.l.b16 %v4308
    %v6364 = vunpack.c.l.b16 %v4309
    %v6365 = vunpack.c.l.b16 %v4310
    %v6366 = vunpack.c.l.b16 %v4311
    %v6367 = vunpack.c.l.b16 %v4312
    %v6368 = vunpack.c.l.b16 %v4313
    %v6369 = vunpack.c.l.b16 %v4314
    %v6370 = vunpack.c.l.b16 %v4315
    %v6371 = vunpack.c.l.b16 %v4316
    %v6372 = vunpack.c.l.b16 %v4317
    %v6373 = vunpack.c.l.b16 %v4318
    %v6374 = vunpack.c.l.b16 %v4319
    %v6375 = vunpack.c.l.b16 %v4320
    %v6376 = vunpack.c.l.b16 %v4321
    %v6377 = vunpack.c.l.b16 %v4322
    %v6378 = vunpack.c.l.b16 %v4323
    %v6379 = vunpack.c.l.b16 %v4324
    %v6380 = vunpack.c.l.b16 %v4325
    %v6381 = vunpack.c.l.b16 %v4326
    %v6382 = vunpack.c.l.b16 %v4327
    %v6383 = vunpack.c.l.b16 %v4328
    %v6384 = vunpack.c.l.b16 %v4329
    %v6385 = vunpack.c.l.b16 %v4330
    %v6386 = vunpack.c.l.b16 %v4331
    %v6387 = vunpack.c.l.b16 %v4332
    %v6388 = vunpack.c.l.b16 %v4333
    %v6389 = vunpack.c.l.b16 %v4334
    %v6390 = vunpack.c.l.b16 %v4335
    %v6391 = vunpack.c.l.b16 %v4336
    %v6392 = vunpack.c.l.b16 %v4337
    %v6393 = vunpack.c.l.b16 %v4338
    %v6394 = vunpack.c.l.b16 %v4339
    %v6395 = vunpack.c.l.b16 %v4340
    %v6396 = vunpack.c.l.b16 %v4341
    %v6397 = vunpack.c.l.b16 %v4342
    %v6398 = vunpack.c.l.b16 %v4343
    %v6399 = vunpack.c.l.b16 %v4344
    %v6400 = vunpack.c.l.b16 %v4345
    %v6401 = vunpack.c.l.b16 %v4346
    %v6402 = vunpack.c.l.b16 %v4347
    %v6403 = vunpack.c.l.b16 %v4348
    %v6404 = vunpack.c.l.b16 %v4349
    %v6405 = vunpack.c.l.b16 %v4350
    %v6406 = vunpack.c.l.b16 %v4351
    %v6407 = vunpack.c.l.b16 %v4352
    %v6408 = vunpack.c.l.b16 %v4353
    %v6409 = vunpack.c.l.b16 %v4354
    %v6410 = vunpack.c.l.b16 %v4355
    %v6411 = vunpack.c.l.b16 %v4356
    %v6412 = vunpack.c.l.b16 %v4357
    %v6413 = vunpack.c.l.b16 %v4358
    %v6414 = vunpack.c.l.b16 %v4359
    %v6415 = vunpack.c.l.b16 %v4360
    %v6416 = vunpack.c.l.b16 %v4361
    %v6417 = vunpack.c.l.b16 %v4362
    %v6418 = vunpack.c.l.b16 %v4363
    %v6419 = vunpack.c.l.b16 %v4364
    %v6420 = vunpack.c.l.b16 %v4365
    %v6421 = vunpack.c.l.b16 %v4366
    %v6422 = vunpack.c.l.b16 %v4367
    %v6423 = vunpack.c.l.b16 %v4368
    %v6424 = vunpack.c.l.b16 %v4369
    %v6425 = vunpack.c.l.b16 %v4370
    %v6426 = vunpack.c.l.b16 %v4371
    %v6427 = vunpack.c.l.b16 %v4372
    %v6428 = vunpack.c.l.b16 %v4373
    %v6429 = vunpack.c.l.b16 %v4374
    %v6430 = vunpack.c.l.b16 %v4375
    %v6431 = vunpack.c.l.b16 %v4376
    %v6432 = vunpack.c.l.b16 %v4377
    %v6433 = vunpack.c.l.b16 %v4378
    %v6434 = vunpack.c.l.b16 %v4379
    %v6435 = vunpack.c.l.b16 %v4380
    %v6436 = vunpack.c.l.b16 %v4381
    %v6437 = vunpack.c.l.b16 %v4382
    %v6438 = vunpack.c.l.b16 %v4383
    %v6439 = vunpack.c.l.b16 %v4384
    %v6440 = vunpack.c.l.b16 %v4385
    %v6441 = vunpack.c.l.b16 %v4386
    %v6442 = vunpack.c.l.b16 %v4387
    %v6443 = vunpack.c.l.b16 %v4388
    %v6444 = vunpack.c.l.b16 %v4389
    %v6445 = vunpack.c.l.b16 %v4390
    %v6446 = vunpack.c.l.b16 %v4391
    %v6447 = vunpack.c.l.b16 %v4392
    %v6448 = vunpack.c.l.b16 %v4393
    %v6449 = vunpack.c.l.b16 %v4394
    %v6450 = vunpack.c.l.b16 %v4395
    %v6451 = vunpack.c.l.b16 %v4396
    %v6452 = vunpack.c.l.b16 %v4397
    %v6453 = vunpack.c.l.b16 %v4398
    %v6454 = vunpack.c.l.b16 %v4399
    %v6455 = vunpack.c.l.b16 %v4400
    %v6456 = vunpack.c.l.b16 %v4401
    %v6457 = vunpack.c.l.b16 %v4402
    %v6458 = vunpack.c.l.b16 %v4403
    %v6459 = vunpack.c.l.b16 %v4404
    %v6460 = vunpack.c.l.b16 %v4405
    %v6461 = vunpack.c.l.b16 %v4406
    %v6462 = vunpack.c.l.b16 %v4407
    %v6463 = vunpack.c.l.b16 %v4408
    %v6464 = vunpack.c.l.b16 %v4409
    %v6465 = vunpack.c.l.b16 %v4410
    %v6466 = vunpack.c.l.b16 %v4411
    %v6467 = vunpack.c.l.b16 %v4412
    %v6468 = vunpack.c.l.b16 %v4413
    %v6469 = vunpack.c.l.b16 %v4414
    %v6470 = vunpack.c.l.b16 %v4415
    %v6471 = vunpack.c.l.b16 %v4416
    %v6472 = vunpack.c.l.b16 %v4417
    %v6473 = vunpack.c.l.b16 %v4418
    %v6474 = vunpack.c.l.b16 %v4419
    %v6475 = vunpack.c.l.b16 %v4420
    %v6476 = vunpack.c.l.b16 %v4421
    %v6477 = vunpack.c.l.b16 %v4422
    %v6478 = vunpack.c.l.b16 %v4423
    %v6479 = vunpack.c.l.b16 %v4424
    %v6480 = vunpack.c.l.b16 %v4425
    %v6481 = vunpack.c.l.b16 %v4426
    %v6482 = vunpack.c.l.b16 %v4427
    %v6483 = vunpack.c.l.b16 %v4428
    %v6484 = vunpack.c.l.b16 %v4429
    %v6485 = vunpack.c.l.b16 %v4430
    %v6486 = vunpack.c.l.b16 %v4431
    %v6487 = vunpack.c.l.b16 %v4432
    %v6488 = vunpack.c.l.b16 %v4433
    %v6489 = vunpack.c.l.b16 %v4434
    %v6490 = vunpack.c.l.b16 %v4435
    %v6491 = vunpack.c.l.b16 %v4436
    %v6492 = vunpack.c.l.b16 %v4437
    %v6493 = vunpack.c.l.b16 %v4438
    %v6494 = vunpack.c.l.b16 %v4439
    %v6495 = vunpack.c.l.b16 %v4440
    %v6496 = vunpack.c.l.b16 %v4441
    %v6497 = vunpack.c.l.b16 %v4442
    %v6498 = vunpack.c.l.b16 %v4443
    %v6499 = vunpack.c.l.b16 %v4444
    %v6500 = vunpack.c.l.b16 %v4445
    %v6501 = vunpack.c.l.b16 %v4446
    %v6502 = vunpack.c.l.b16 %v4447
    %v6503 = vunpack.c.l.b16 %v4448
    %v6504 = vunpack.c.l.b16 %v4449
    %v6505 = vunpack.c.l.b16 %v4450
    %v6506 = vunpack.c.l.b16 %v4451
    %v6507 = vunpack.c.l.b16 %v4452
    %v6508 = vunpack.c.l.b16 %v4453
    %v6509 = vunpack.c.l.b16 %v4454
    %v6510 = vunpack.c.l.b16 %v4455
    %v6511 = vunpack.c.l.b16 %v4456
    %v6512 = vunpack.c.l.b16 %v4457
    %v6513 = vunpack.c.l.b16 %v4458
    %v6514 = vunpack.c.l.b16 %v4459
    %v6515 = vunpack.c.l.b16 %v4460
    %v6516 = vunpack.c.l.b16 %v4461
    %v6517 = vunpack.c.l.b16 %v4462
    %v6518 = vunpack.c.l.b16 %v4463
    %v6519 = vunpack.c.l.b16 %v4464
    %v6520 = vunpack.c.l.b16 %v4465
    %v6521 = vunpack.c.l.b16 %v4466
    %v6522 = vunpack.c.l.b16 %v4467
    %v6523 = vunpack.c.l.b16 %v4468
    %v6524 = vunpack.c.l.b16 %v4469
    %v6525 = vunpack.c.l.b16 %v4470
    %v6526 = vunpack.c.l.b16 %v4471
    %v6527 = vunpack.c.l.b16 %v4472
    %v6528 = vunpack.c.l.b16 %v4473
    %v6529 = vunpack.c.l.b16 %v4474
    %v6530 = vunpack.c.l.b16 %v4475
    %v6531 = vunpack.c.l.b16 %v4476
    %v6532 = vunpack.c.l.b16 %v4477
    %v6533 = vunpack.c.l.b16 %v4478
    %v6534 = vunpack.c.l.b16 %v4479
    %v6535 = vunpack.c.l.b16 %v4480
    %v6536 = vunpack.c.l.b16 %v4481
    %v6537 = vunpack.c.l.b16 %v4482
    %v6538 = vunpack.c.l.b16 %v4483
    %v6539 = vunpack.c.l.b16 %v4484
    %v6540 = vunpack.c.l.b16 %v4485
    %v6541 = vunpack.c.l.b16 %v4486
    %v6542 = vunpack.c.l.b16 %v4487
    %v6543 = vunpack.c.l.b16 %v4488
    %v6544 = vunpack.c.l.b16 %v4489
    %v6545 = vunpack.c.l.b16 %v4490
    %v6546 = vunpack.c.l.b16 %v4491
    %v6547 = vunpack.c.l.b16 %v4492
    %v6548 = vunpack.c.l.b16 %v4493
    %v6549 = vunpack.c.l.b16 %v4494
    %v6550 = vunpack.c.l.b16 %v4495
    %v6551 = vunpack.c.l.b16 %v4496
    %v6552 = vunpack.c.l.b16 %v4497
    %v6553 = vunpack.c.l.b16 %v4498
    %v6554 = vunpack.c.l.b16 %v4499
    %v6555 = vunpack.c.l.b16 %v4500
    %v6556 = vunpack.c.l.b16 %v4501
    %v6557 = vunpack.c.l.b16 %v4502
    %v6558 = vunpack.c.l.b16 %v4503
    %v6559 = vunpack.c.l.b16 %v4504
    %v6560 = vunpack.c.l.b16 %v4505
    %v6561 = vunpack.c.l.b16 %v4506
    %v6562 = vunpack.c.l.b16 %v4507
    %v6563 = vunpack.c.l.b16 %v4508
    %v6564 = vunpack.c.l.b16 %v4509
    %v6565 = vunpack.c.l.b16 %v4510
    %v6566 = vunpack.c.l.b16 %v4511
    %v6567 = vunpack.c.l.b16 %v4512
    %v6568 = vunpack.c.l.b16 %v4513
    %v6569 = vunpack.c.l.b16 %v4514
    %v6570 = vunpack.c.l.b16 %v4515
    %v6571 = vunpack.c.l.b16 %v4516
    %v6572 = vunpack.c.l.b16 %v4517
    %v6573 = vunpack.c.l.b16 %v4518
    %v6574 = vunpack.c.l.b16 %v4519
    %v6575 = vunpack.c.l.b16 %v4520
    %v6576 = vunpack.c.l.b16 %v4521
    %v6577 = vunpack.c.l.b16 %v4522
    %v6578 = vunpack.c.l.b16 %v4523
    %v6579 = vunpack.c.l.b16 %v4524
    %v6580 = vunpack.c.l.b16 %v4525
    %v6581 = vunpack.c.l.b16 %v4526
    %v6582 = vunpack.c.l.b16 %v4527
    %v6583 = vunpack.c.l.b16 %v4528
    %v6584 = vunpack.c.l.b16 %v4529
    %v6585 = vunpack.c.l.b16 %v4530
    %v6586 = vunpack.c.l.b16 %v4531
    %v6587 = vunpack.c.l.b16 %v4532
    %v6588 = vunpack.c.l.b16 %v4533
    %v6589 = vunpack.c.l.b16 %v4534
    %v6590 = vunpack.c.l.b16 %v4535
    %v6591 = vunpack.c.l.b16 %v4536
    %v6592 = vunpack.c.l.b16 %v4537
    %v6593 = vunpack.c.l.b16 %v4538
    %v6594 = vunpack.c.l.b16 %v4539
    %v6595 = vunpack.c.l.b16 %v4540
    %v6596 = vunpack.c.l.b16 %v4541
    %v6597 = vunpack.c.l.b16 %v4542
    %v6598 = vunpack.c.l.b16 %v4543
    %v6599 = vunpack.c.l.b16 %v4544
    %v6600 = vunpack.c.l.b16 %v4545
    %v6601 = vunpack.c.l.b16 %v4546
    %v6602 = vunpack.c.l.b16 %v4547
    %v6603 = vunpack.c.l.b16 %v4548
    %v6604 = vunpack.c.l.b16 %v4549
    %v6605 = vunpack.c.l.b16 %v4550
    %v6606 = vunpack.c.l.b16 %v4551
    %v6607 = vunpack.c.l.b16 %v4552
    %v6608 = vunpack.c.l.b16 %v4553
    %v6609 = vunpack.c.l.b16 %v4554
    %v6610 = vunpack.c.l.b16 %v4555
    %v6611 = vunpack.c.l.b16 %v4556
    %v6612 = vunpack.c.l.b16 %v4557
    %v6613 = vunpack.c.l.b16 %v4558
    %v6614 = vunpack.c.l.b16 %v4559
    %v6615 = vunpack.c.l.b16 %v4560
    %v6616 = vunpack.c.l.b16 %v4561
    %v6617 = vunpack.c.l.b16 %v4562
    %v6618 = vunpack.c.l.b16 %v4563
    %v6619 = vunpack.c.l.b16 %v4564
    %v6620 = vunpack.c.l.b16 %v4565
    %v6621 = vunpack.c.l.b16 %v4566
    %v6622 = vunpack.c.l.b16 %v4567
    %v6623 = vunpack.c.l.b16 %v4568
    %v6624 = vunpack.c.l.b16 %v4569
    %v6625 = vunpack.c.l.b16 %v4570
    %v6626 = vunpack.c.l.b16 %v4571
    %v6627 = vunpack.c.l.b16 %v4572
    %v6628 = vunpack.c.l.b16 %v4573
    %v6629 = vunpack.c.l.b16 %v4574
    %v6630 = vunpack.c.l.b16 %v4575
    %v6631 = vunpack.c.l.b16 %v4576
    %v6632 = vunpack.c.l.b16 %v4577
    %v6633 = vunpack.c.l.b16 %v4578
    %v6634 = vunpack.c.l.b16 %v4579
    %v6635 = vunpack.c.l.b16 %v4580
    %v6636 = vunpack.c.l.b16 %v4581
    %v6637 = vunpack.c.l.b16 %v4582
    %v6638 = vunpack.c.l.b16 %v4583
    %v6639 = vunpack.c.l.b16 %v4584
    %v6640 = vunpack.c.l.b16 %v4585
    %v6641 = vunpack.c.l.b16 %v4586
    %v6642 = vunpack.c.l.b16 %v4587
    %v6643 = vunpack.c.l.b16 %v4588
    %v6644 = vunpack.c.l.b16 %v4589
    %v6645 = vunpack.c.l.b16 %v4590
    %v6646 = vunpack.c.l.b16 %v4591
    %v6647 = vunpack.c.l.b16 %v4592
    %v6648 = vunpack.c.l.b16 %v4593
    %v6649 = vunpack.c.l.b16 %v4594
    %v6650 = vunpack.c.l.b16 %v4595
    %v6651 = vunpack.c.l.b16 %v4596
    %v6652 = vunpack.c.l.b16 %v4597
    %v6653 = vunpack.c.l.b16 %v4598
    %v6654 = vunpack.c.l.b16 %v4599
    %v6655 = vunpack.c.l.b16 %v4600
    %v6656 = vunpack.c.l.b16 %v4601
    %v6657 = vunpack.c.l.b16 %v4602
    %v6658 = vunpack.c.l.b16 %v4603
    %v6659 = vunpack.c.l.b16 %v4604
    %v6660 = vunpack.c.l.b16 %v4605
    %v6661 = vunpack.c.l.b16 %v4606
    %v6662 = vunpack.c.l.b16 %v4607
    %v6663 = vunpack.c.l.b16 %v4608
    %v6664 = vunpack.c.l.b16 %v4609
    %v6665 = vunpack.c.l.b16 %v4610
    %v6666 = vunpack.c.l.b16 %v4611
    %v6667 = vunpack.c.l.b16 %v4612
    %v6668 = vunpack.c.l.b16 %v4613
    %v6669 = vunpack.c.l.b16 %v4614
    %v6670 = vunpack.c.l.b16 %v4615
    %v6671 = vunpack.c.l.b16 %v4616
    %v6672 = vunpack.c.l.b16 %v4617
    %v6673 = vunpack.c.l.b16 %v4618
    %v6674 = vunpack.c.l.b16 %v4619
    %v6675 = vunpack.c.l.b16 %v4620
    %v6676 = vunpack.c.l.b16 %v4621
    %v6677 = vunpack.c.l.b16 %v4622
    %v6678 = vunpack.c.l.b16 %v4623
    %v6679 = vunpack.c.l.b16 %v4624
    %v6680 = vunpack.c.l.b16 %v4625
    %v6681 = vunpack.c.l.b16 %v4626
    %v6682 = vunpack.c.l.b16 %v4627
    %v6683 = vunpack.c.l.b16 %v4628
    %v6684 = vunpack.c.l.b16 %v4629
    %v6685 = vunpack.c.l.b16 %v4630
    %v6686 = vunpack.c.l.b16 %v4631
    %v6687 = vunpack.c.l.b16 %v4632
    %v6688 = vunpack.c.l.b16 %v4633
    %v6689 = vunpack.c.l.b16 %v4634
    %v6690 = vunpack.c.l.b16 %v4635
    %v6691 = vunpack.c.l.b16 %v4636
    %v6692 = vunpack.c.l.b16 %v4637
    %v6693 = vunpack.c.l.b16 %v4638
    %v6694 = vunpack.c.l.b16 %v4639
    %v6695 = vunpack.c.l.b16 %v4640
    %v6696 = vunpack.c.l.b16 %v4641
    %v6697 = vunpack.c.l.b16 %v4642
    %v6698 = vunpack.c.l.b16 %v4643
    %v6699 = vunpack.c.l.b16 %v4644
    %v6700 = vunpack.c.l.b16 %v4645
    %v6701 = vunpack.c.l.b16 %v4646
    %v6702 = vunpack.c.l.b16 %v4647
    %v6703 = vunpack.c.l.b16 %v4648
    %v6704 = vunpack.c.l.b16 %v4649
    %v6705 = vunpack.c.l.b16 %v4650
    %v6706 = vunpack.c.l.b16 %v4651
    %v6707 = vunpack.c.l.b16 %v4652
    %v6708 = vunpack.c.l.b16 %v4653
    %v6709 = vunpack.c.l.b16 %v4654
    %v6710 = vunpack.c.l.b16 %v4655
    %v6711 = vunpack.c.l.b16 %v4656
    %v6712 = vunpack.c.l.b16 %v4657
    %v6713 = vunpack.c.l.b16 %v4658
    %v6714 = vunpack.c.l.b16 %v4659
    %v6715 = vunpack.c.l.b16 %v4660
    %v6716 = vunpack.c.l.b16 %v4661
    %v6717 = vunpack.c.l.b16 %v4662
    %v6718 = vunpack.c.l.b16 %v4663
    %v6719 = vunpack.c.l.b16 %v4664
    %v6720 = vunpack.c.l.b16 %v4665
    %v6721 = vunpack.c.l.b16 %v4666
    %v6722 = vunpack.c.l.b16 %v4667
    %v6723 = vunpack.c.l.b16 %v4668
    %v6724 = vunpack.c.l.b16 %v4669
    %v6725 = vunpack.c.l.b16 %v4670
    %v6726 = vunpack.c.l.b16 %v4671
    %v6727 = vunpack.c.l.b16 %v4672
    %v6728 = vunpack.c.l.b16 %v4673
    %v6729 = vunpack.c.l.b16 %v4674
    %v6730 = vunpack.c.l.b16 %v4675
    %v6731 = vunpack.c.l.b16 %v4676
    %v6732 = vunpack.c.l.b16 %v4677
    %v6733 = vunpack.c.l.b16 %v4678
    %v6734 = vunpack.c.l.b16 %v4679
    %v6735 = vunpack.c.l.b16 %v4680
    %v6736 = vunpack.c.l.b16 %v4681
    %v6737 = vunpack.c.l.b16 %v4682
    %v6738 = vunpack.c.l.b16 %v4683
    %v6739 = vunpack.c.l.b16 %v4684
    %v6740 = vunpack.c.l.b16 %v4685
    %v6741 = vunpack.c.l.b16 %v4686
    %v6742 = vunpack.c.l.b16 %v4687
    %v6743 = vunpack.c.l.b16 %v4688
    %v6744 = vunpack.c.l.b16 %v4689
    %v6745 = vunpack.c.l.b16 %v4690
    %v6746 = vunpack.c.l.b16 %v4691
    %v6747 = vunpack.c.l.b16 %v4692
    %v6748 = vunpack.c.l.b16 %v4693
    %v6749 = vunpack.c.l.b16 %v4694
    %v6750 = vunpack.c.l.b16 %v4695
    %v6751 = vunpack.c.l.b16 %v4696
    %v6752 = vunpack.c.l.b16 %v4697
    %v6753 = vunpack.c.l.b16 %v4698
    %v6754 = vunpack.c.l.b16 %v4699
    %v6755 = vunpack.c.l.b16 %v4700
    %v6756 = vunpack.c.l.b16 %v4701
    %v6757 = vunpack.c.l.b16 %v4702
    %v6758 = vunpack.c.l.b16 %v4703
    %v6759 = vunpack.c.l.b16 %v4704
    %v6760 = vunpack.c.l.b16 %v4705
    %v6761 = vunpack.c.l.b16 %v4706
    %v6762 = vunpack.c.l.b16 %v4707
    %v6763 = vunpack.c.l.b16 %v4708
    %v6764 = vunpack.c.l.b16 %v4709
    %v6765 = vunpack.c.l.b16 %v4710
    %v6766 = vunpack.c.l.b16 %v4711
    %v6767 = vunpack.c.l.b16 %v4712
    %v6768 = vunpack.c.l.b16 %v4713
    %v6769 = vunpack.c.l.b16 %v4714
    %v6770 = vunpack.c.l.b16 %v4715
    %v6771 = vunpack.c.l.b16 %v4716
    %v6772 = vunpack.c.l.b16 %v4717
    %v6773 = vunpack.c.l.b16 %v4718
    %v6774 = vunpack.c.l.b16 %v4719
    %v6775 = vunpack.c.l.b16 %v4720
    %v6776 = vunpack.c.l.b16 %v4721
    %v6777 = vunpack.c.l.b16 %v4722
    %v6778 = vunpack.c.l.b16 %v4723
    %v6779 = vunpack.c.l.b16 %v4724
    %v6780 = vunpack.c.l.b16 %v4725
    %v6781 = vunpack.c.l.b16 %v4726
    %v6782 = vunpack.c.l.b16 %v4727
    %v6783 = vunpack.c.l.b16 %v4728
    %v6784 = vunpack.c.l.b16 %v4729
    %v6785 = vunpack.c.l.b16 %v4730
    %v6786 = vunpack.c.l.b16 %v4731
    %v6787 = vunpack.c.l.b16 %v4732
    %v6788 = vunpack.c.l.b16 %v4733
    %v6789 = vunpack.c.l.b16 %v4734
    %v6790 = vunpack.c.l.b16 %v4735
    %v6791 = vunpack.c.l.b16 %v4736
    %v6792 = vunpack.c.l.b16 %v4737
    %v6793 = vunpack.c.l.b16 %v4738
    %v6794 = vunpack.c.l.b16 %v4739
    %v6795 = vunpack.c.l.b16 %v4740
    %v6796 = vunpack.c.l.b16 %v4741
    %v6797 = vunpack.c.l.b16 %v4742
    %v6798 = vunpack.c.l.b16 %v4743
    %v6799 = vunpack.c.l.b16 %v4744
    %v6800 = vunpack.c.l.b16 %v4745
    %v6801 = vunpack.c.l.b16 %v4746
    %v6802 = vunpack.c.l.b16 %v4747
    %v6803 = vpack.c.b16 %v5780, %v5779
    %v6804 = vpack.c.b16 %v5782, %v5781
    %v6805 = vpack.c.b16 %v5784, %v5783
    %v6806 = vpack.c.b16 %v5786, %v5785
    %v6807 = vpack.c.b16 %v5788, %v5787
    %v6808 = vpack.c.b16 %v5790, %v5789
    %v6809 = vpack.c.b16 %v5792, %v5791
    %v6810 = vpack.c.b16 %v5794, %v5793
    %v6811 = vpack.c.b16 %v5796, %v5795
    %v6812 = vpack.c.b16 %v5798, %v5797
    %v6813 = vpack.c.b16 %v5800, %v5799
    %v6814 = vpack.c.b16 %v5802, %v5801
    %v6815 = vpack.c.b16 %v5804, %v5803
    %v6816 = vpack.c.b16 %v5806, %v5805
    %v6817 = vpack.c.b16 %v5808, %v5807
    %v6818 = vpack.c.b16 %v5810, %v5809
    %v6819 = vpack.c.b16 %v5812, %v5811
    %v6820 = vpack.c.b16 %v5814, %v5813
    %v6821 = vpack.c.b16 %v5816, %v5815
    %v6822 = vpack.c.b16 %v5818, %v5817
    %v6823 = vpack.c.b16 %v5820, %v5819
    %v6824 = vpack.c.b16 %v5822, %v5821
    %v6825 = vpack.c.b16 %v5824, %v5823
    %v6826 = vpack.c.b16 %v5826, %v5825
    %v6827 = vpack.c.b16 %v5828, %v5827
    %v6828 = vpack.c.b16 %v5830, %v5829
    %v6829 = vpack.c.b16 %v5832, %v5831
    %v6830 = vpack.c.b16 %v5834, %v5833
    %v6831 = vpack.c.b16 %v5836, %v5835
    %v6832 = vpack.c.b16 %v5838, %v5837
    %v6833 = vpack.c.b16 %v5840, %v5839
    %v6834 = vpack.c.b16 %v5842, %v5841
    %v6835 = vpack.c.b16 %v5844, %v5843
    %v6836 = vpack.c.b16 %v5846, %v5845
    %v6837 = vpack.c.b16 %v5848, %v5847
    %v6838 = vpack.c.b16 %v5850, %v5849
    %v6839 = vpack.c.b16 %v5852, %v5851
    %v6840 = vpack.c.b16 %v5854, %v5853
    %v6841 = vpack.c.b16 %v5856, %v5855
    %v6842 = vpack.c.b16 %v5858, %v5857
    %v6843 = vpack.c.b16 %v5860, %v5859
    %v6844 = vpack.c.b16 %v5862, %v5861
    %v6845 = vpack.c.b16 %v5864, %v5863
    %v6846 = vpack.c.b16 %v5866, %v5865
    %v6847 = vpack.c.b16 %v5868, %v5867
    %v6848 = vpack.c.b16 %v5870, %v5869
    %v6849 = vpack.c.b16 %v5872, %v5871
    %v6850 = vpack.c.b16 %v5874, %v5873
    %v6851 = vpack.c.b16 %v5876, %v5875
    %v6852 = vpack.c.b16 %v5878, %v5877
    %v6853 = vpack.c.b16 %v5880, %v5879
    %v6854 = vpack.c.b16 %v5882, %v5881
    %v6855 = vpack.c.b16 %v5884, %v5883
    %v6856 = vpack.c.b16 %v5886, %v5885
    %v6857 = vpack.c.b16 %v5888, %v5887
    %v6858 = vpack.c.b16 %v5890, %v5889
    %v6859 = vpack.c.b16 %v5892, %v5891
    %v6860 = vpack.c.b16 %v5894, %v5893
    %v6861 = vpack.c.b16 %v5896, %v5895
    %v6862 = vpack.c.b16 %v5898, %v5897
    %v6863 = vpack.c.b16 %v5900, %v5899
    %v6864 = vpack.c.b16 %v5902, %v5901
    %v6865 = vpack.c.b16 %v5904, %v5903
    %v6866 = vpack.c.b16 %v5906, %v5905
    %v6867 = vpack.c.b16 %v5908, %v5907
    %v6868 = vpack.c.b16 %v5910, %v5909
    %v6869 = vpack.c.b16 %v5912, %v5911
    %v6870 = vpack.c.b16 %v5914, %v5913
    %v6871 = vpack.c.b16 %v5916, %v5915
    %v6872 = vpack.c.b16 %v5918, %v5917
    %v6873 = vpack.c.b16 %v5920, %v5919
    %v6874 = vpack.c.b16 %v5922, %v5921
    %v6875 = vpack.c.b16 %v5924, %v5923
    %v6876 = vpack.c.b16 %v5926, %v5925
    %v6877 = vpack.c.b16 %v5928, %v5927
    %v6878 = vpack.c.b16 %v5930, %v5929
    %v6879 = vpack.c.b16 %v5932, %v5931
    %v6880 = vpack.c.b16 %v5934, %v5933
    %v6881 = vpack.c.b16 %v5936, %v5935
    %v6882 = vpack.c.b16 %v5938, %v5937
    %v6883 = vpack.c.b16 %v5940, %v5939
    %v6884 = vpack.c.b16 %v5942, %v5941
    %v6885 = vpack.c.b16 %v5944, %v5943
    %v6886 = vpack.c.b16 %v5946, %v5945
    %v6887 = vpack.c.b16 %v5948, %v5947
    %v6888 = vpack.c.b16 %v5950, %v5949
    %v6889 = vpack.c.b16 %v5952, %v5951
    %v6890 = vpack.c.b16 %v5954, %v5953
    %v6891 = vpack.c.b16 %v5956, %v5955
    %v6892 = vpack.c.b16 %v5958, %v5957
    %v6893 = vpack.c.b16 %v5960, %v5959
    %v6894 = vpack.c.b16 %v5962, %v5961
    %v6895 = vpack.c.b16 %v5964, %v5963
    %v6896 = vpack.c.b16 %v5966, %v5965
    %v6897 = vpack.c.b16 %v5968, %v5967
    %v6898 = vpack.c.b16 %v5970, %v5969
    %v6899 = vpack.c.b16 %v5972, %v5971
    %v6900 = vpack.c.b16 %v5974, %v5973
    %v6901 = vpack.c.b16 %v5976, %v5975
    %v6902 = vpack.c.b16 %v5978, %v5977
    %v6903 = vpack.c.b16 %v5980, %v5979
    %v6904 = vpack.c.b16 %v5982, %v5981
    %v6905 = vpack.c.b16 %v5984, %v5983
    %v6906 = vpack.c.b16 %v5986, %v5985
    %v6907 = vpack.c.b16 %v5988, %v5987
    %v6908 = vpack.c.b16 %v5990, %v5989
    %v6909 = vpack.c.b16 %v5992, %v5991
    %v6910 = vpack.c.b16 %v5994, %v5993
    %v6911 = vpack.c.b16 %v5996, %v5995
    %v6912 = vpack.c.b16 %v5998, %v5997
    %v6913 = vpack.c.b16 %v6000, %v5999
    %v6914 = vpack.c.b16 %v6002, %v6001
    %v6915 = vpack.c.b16 %v6004, %v6003
    %v6916 = vpack.c.b16 %v6006, %v6005
    %v6917 = vpack.c.b16 %v6008, %v6007
    %v6918 = vpack.c.b16 %v6010, %v6009
    %v6919 = vpack.c.b16 %v6012, %v6011
    %v6920 = vpack.c.b16 %v6014, %v6013
    %v6921 = vpack.c.b16 %v6016, %v6015
    %v6922 = vpack.c.b16 %v6018, %v6017
    %v6923 = vpack.c.b16 %v6020, %v6019
    %v6924 = vpack.c.b16 %v6022, %v6021
    %v6925 = vpack.c.b16 %v6024, %v6023
    %v6926 = vpack.c.b16 %v6026, %v6025
    %v6927 = vpack.c.b16 %v6028, %v6027
    %v6928 = vpack.c.b16 %v6030, %v6029
    %v6929 = vpack.c.b16 %v6032, %v6031
    %v6930 = vpack.c.b16 %v6034, %v6033
    %v6931 = vpack.c.b16 %v6036, %v6035
    %v6932 = vpack.c.b16 %v6038, %v6037
    %v6933 = vpack.c.b16 %v6040, %v6039
    %v6934 = vpack.c.b16 %v6042, %v6041
    %v6935 = vpack.c.b16 %v6044, %v6043
    %v6936 = vpack.c.b16 %v6046, %v6045
    %v6937 = vpack.c.b16 %v6048, %v6047
    %v6938 = vpack.c.b16 %v6050, %v6049
    %v6939 = vpack.c.b16 %v6052, %v6051
    %v6940 = vpack.c.b16 %v6054, %v6053
    %v6941 = vpack.c.b16 %v6056, %v6055
    %v6942 = vpack.c.b16 %v6058, %v6057
    %v6943 = vpack.c.b16 %v6060, %v6059
    %v6944 = vpack.c.b16 %v6062, %v6061
    %v6945 = vpack.c.b16 %v6064, %v6063
    %v6946 = vpack.c.b16 %v6066, %v6065
    %v6947 = vpack.c.b16 %v6068, %v6067
    %v6948 = vpack.c.b16 %v6070, %v6069
    %v6949 = vpack.c.b16 %v6072, %v6071
    %v6950 = vpack.c.b16 %v6074, %v6073
    %v6951 = vpack.c.b16 %v6076, %v6075
    %v6952 = vpack.c.b16 %v6078, %v6077
    %v6953 = vpack.c.b16 %v6080, %v6079
    %v6954 = vpack.c.b16 %v6082, %v6081
    %v6955 = vpack.c.b16 %v6084, %v6083
    %v6956 = vpack.c.b16 %v6086, %v6085
    %v6957 = vpack.c.b16 %v6088, %v6087
    %v6958 = vpack.c.b16 %v6090, %v6089
    %v6959 = vpack.c.b16 %v6092, %v6091
    %v6960 = vpack.c.b16 %v6094, %v6093
    %v6961 = vpack.c.b16 %v6096, %v6095
    %v6962 = vpack.c.b16 %v6098, %v6097
    %v6963 = vpack.c.b16 %v6100, %v6099
    %v6964 = vpack.c.b16 %v6102, %v6101
    %v6965 = vpack.c.b16 %v6104, %v6103
    %v6966 = vpack.c.b16 %v6106, %v6105
    %v6967 = vpack.c.b16 %v6108, %v6107
    %v6968 = vpack.c.b16 %v6110, %v6109
    %v6969 = vpack.c.b16 %v6112, %v6111
    %v6970 = vpack.c.b16 %v6114, %v6113
    %v6971 = vpack.c.b16 %v6116, %v6115
    %v6972 = vpack.c.b16 %v6118, %v6117
    %v6973 = vpack.c.b16 %v6120, %v6119
    %v6974 = vpack.c.b16 %v6122, %v6121
    %v6975 = vpack.c.b16 %v6124, %v6123
    %v6976 = vpack.c.b16 %v6126, %v6125
    %v6977 = vpack.c.b16 %v6128, %v6127
    %v6978 = vpack.c.b16 %v6130, %v6129
    %v6979 = vpack.c.b16 %v6132, %v6131
    %v6980 = vpack.c.b16 %v6134, %v6133
    %v6981 = vpack.c.b16 %v6136, %v6135
    %v6982 = vpack.c.b16 %v6138, %v6137
    %v6983 = vpack.c.b16 %v6140, %v6139
    %v6984 = vpack.c.b16 %v6142, %v6141
    %v6985 = vpack.c.b16 %v6144, %v6143
    %v6986 = vpack.c.b16 %v6146, %v6145
    %v6987 = vpack.c.b16 %v6148, %v6147
    %v6988 = vpack.c.b16 %v6150, %v6149
    %v6989 = vpack.c.b16 %v6152, %v6151
    %v6990 = vpack.c.b16 %v6154, %v6153
    %v6991 = vpack.c.b16 %v6156, %v6155
    %v6992 = vpack.c.b16 %v6158, %v6157
    %v6993 = vpack.c.b16 %v6160, %v6159
    %v6994 = vpack.c.b16 %v6162, %v6161
    %v6995 = vpack.c.b16 %v6164, %v6163
    %v6996 = vpack.c.b16 %v6166, %v6165
    %v6997 = vpack.c.b16 %v6168, %v6167
    %v6998 = vpack.c.b16 %v6170, %v6169
    %v6999 = vpack.c.b16 %v6172, %v6171
    %v7000 = vpack.c.b16 %v6174, %v6173
    %v7001 = vpack.c.b16 %v6176, %v6175
    %v7002 = vpack.c.b16 %v6178, %v6177
    %v7003 = vpack.c.b16 %v6180, %v6179
    %v7004 = vpack.c.b16 %v6182, %v6181
    %v7005 = vpack.c.b16 %v6184, %v6183
    %v7006 = vpack.c.b16 %v6186, %v6185
    %v7007 = vpack.c.b16 %v6188, %v6187
    %v7008 = vpack.c.b16 %v6190, %v6189
    %v7009 = vpack.c.b16 %v6192, %v6191
    %v7010 = vpack.c.b16 %v6194, %v6193
    %v7011 = vpack.c.b16 %v6196, %v6195
    %v7012 = vpack.c.b16 %v6198, %v6197
    %v7013 = vpack.c.b16 %v6200, %v6199
    %v7014 = vpack.c.b16 %v6202, %v6201
    %v7015 = vpack.c.b16 %v6204, %v6203
    %v7016 = vpack.c.b16 %v6206, %v6205
    %v7017 = vpack.c.b16 %v6208, %v6207
    %v7018 = vpack.c.b16 %v6210, %v6209
    %v7019 = vpack.c.b16 %v6212, %v6211
    %v7020 = vpack.c.b16 %v6214, %v6213
    %v7021 = vpack.c.b16 %v6216, %v6215
    %v7022 = vpack.c.b16 %v6218, %v6217
    %v7023 = vpack.c.b16 %v6220, %v6219
    %v7024 = vpack.c.b16 %v6222, %v6221
    %v7025 = vpack.c.b16 %v6224, %v6223
    %v7026 = vpack.c.b16 %v6226, %v6225
    %v7027 = vpack.c.b16 %v6228, %v6227
    %v7028 = vpack.c.b16 %v6230, %v6229
    %v7029 = vpack.c.b16 %v6232, %v6231
    %v7030 = vpack.c.b16 %v6234, %v6233
    %v7031 = vpack.c.b16 %v6236, %v6235
    %v7032 = vpack.c.b16 %v6238, %v6237
    %v7033 = vpack.c.b16 %v6240, %v6239
    %v7034 = vpack.c.b16 %v6242, %v6241
    %v7035 = vpack.c.b16 %v6244, %v6243
    %v7036 = vpack.c.b16 %v6246, %v6245
    %v7037 = vpack.c.b16 %v6248, %v6247
    %v7038 = vpack.c.b16 %v6250, %v6249
    %v7039 = vpack.c.b16 %v6252, %v6251
    %v7040 = vpack.c.b16 %v6254, %v6253
    %v7041 = vpack.c.b16 %v6256, %v6255
    %v7042 = vpack.c.b16 %v6258, %v6257
    %v7043 = vpack.c.b16 %v6260, %v6259
    %v7044 = vpack.c.b16 %v6262, %v6261
    %v7045 = vpack.c.b16 %v6264, %v6263
    %v7046 = vpack.c.b16 %v6266, %v6265
    %v7047 = vpack.c.b16 %v6268, %v6267
    %v7048 = vpack.c.b16 %v6270, %v6269
    %v7049 = vpack.c.b16 %v6272, %v6271
    %v7050 = vpack.c.b16 %v6274, %v6273
    %v7051 = vpack.c.b16 %v6276, %v6275
    %v7052 = vpack.c.b16 %v6278, %v6277
    %v7053 = vpack.c.b16 %v6280, %v6279
    %v7054 = vpack.c.b16 %v6282, %v6281
    %v7055 = vpack.c.b16 %v6284, %v6283
    %v7056 = vpack.c.b16 %v6286, %v6285
    %v7057 = vpack.c.b16 %v6288, %v6287
    %v7058 = vpack.c.b16 %v6290, %v6289
    %v7059 = vpack.c.b16 %v6292, %v6291
    %v7060 = vpack.c.b16 %v6294, %v6293
    %v7061 = vpack.c.b16 %v6296, %v6295
    %v7062 = vpack.c.b16 %v6298, %v6297
    %v7063 = vpack.c.b16 %v6300, %v6299
    %v7064 = vpack.c.b16 %v6302, %v6301
    %v7065 = vpack.c.b16 %v6304, %v6303
    %v7066 = vpack.c.b16 %v6306, %v6305
    %v7067 = vpack.c.b16 %v6308, %v6307
    %v7068 = vpack.c.b16 %v6310, %v6309
    %v7069 = vpack.c.b16 %v6312, %v6311
    %v7070 = vpack.c.b16 %v6314, %v6313
    %v7071 = vpack.c.b16 %v6316, %v6315
    %v7072 = vpack.c.b16 %v6318, %v6317
    %v7073 = vpack.c.b16 %v6320, %v6319
    %v7074 = vpack.c.b16 %v6322, %v6321
    %v7075 = vpack.c.b16 %v6324, %v6323
    %v7076 = vpack.c.b16 %v6326, %v6325
    %v7077 = vpack.c.b16 %v6328, %v6327
    %v7078 = vpack.c.b16 %v6330, %v6329
    %v7079 = vpack.c.b16 %v6332, %v6331
    %v7080 = vpack.c.b16 %v6334, %v6333
    %v7081 = vpack.c.b16 %v6336, %v6335
    %v7082 = vpack.c.b16 %v6338, %v6337
    %v7083 = vpack.c.b16 %v6340, %v6339
    %v7084 = vpack.c.b16 %v6342, %v6341
    %v7085 = vpack.c.b16 %v6344, %v6343
    %v7086 = vpack.c.b16 %v6346, %v6345
    %v7087 = vpack.c.b16 %v6348, %v6347
    %v7088 = vpack.c.b16 %v6350, %v6349
    %v7089 = vpack.c.b16 %v6352, %v6351
    %v7090 = vpack.c.b16 %v6354, %v6353
    %v7091 = vpack.c.b16 %v6356, %v6355
    %v7092 = vpack.c.b16 %v6358, %v6357
    %v7093 = vpack.c.b16 %v6360, %v6359
    %v7094 = vpack.c.b16 %v6362, %v6361
    %v7095 = vpack.c.b16 %v6364, %v6363
    %v7096 = vpack.c.b16 %v6366, %v6365
    %v7097 = vpack.c.b16 %v6368, %v6367
    %v7098 = vpack.c.b16 %v6370, %v6369
    %v7099 = vpack.c.b16 %v6372, %v6371
    %v7100 = vpack.c.b16 %v6374, %v6373
    %v7101 = vpack.c.b16 %v6376, %v6375
    %v7102 = vpack.c.b16 %v6378, %v6377
    %v7103 = vpack.c.b16 %v6380, %v6379
    %v7104 = vpack.c.b16 %v6382, %v6381
    %v7105 = vpack.c.b16 %v6384, %v6383
    %v7106 = vpack.c.b16 %v6386, %v6385
    %v7107 = vpack.c.b16 %v6388, %v6387
    %v7108 = vpack.c.b16 %v6390, %v6389
    %v7109 = vpack.c.b16 %v6392, %v6391
    %v7110 = vpack.c.b16 %v6394, %v6393
    %v7111 = vpack.c.b16 %v6396, %v6395
    %v7112 = vpack.c.b16 %v6398, %v6397
    %v7113 = vpack.c.b16 %v6400, %v6399
    %v7114 = vpack.c.b16 %v6402, %v6401
    %v7115 = vpack.c.b16 %v6404, %v6403
    %v7116 = vpack.c.b16 %v6406, %v6405
    %v7117 = vpack.c.b16 %v6408, %v6407
    %v7118 = vpack.c.b16 %v6410, %v6409
    %v7119 = vpack.c.b16 %v6412, %v6411
    %v7120 = vpack.c.b16 %v6414, %v6413
    %v7121 = vpack.c.b16 %v6416, %v6415
    %v7122 = vpack.c.b16 %v6418, %v6417
    %v7123 = vpack.c.b16 %v6420, %v6419
    %v7124 = vpack.c.b16 %v6422, %v6421
    %v7125 = vpack.c.b16 %v6424, %v6423
    %v7126 = vpack.c.b16 %v6426, %v6425
    %v7127 = vpack.c.b16 %v6428, %v6427
    %v7128 = vpack.c.b16 %v6430, %v6429
    %v7129 = vpack.c.b16 %v6432, %v6431
    %v7130 = vpack.c.b16 %v6434, %v6433
    %v7131 = vpack.c.b16 %v6436, %v6435
    %v7132 = vpack.c.b16 %v6438, %v6437
    %v7133 = vpack.c.b16 %v6440, %v6439
    %v7134 = vpack.c.b16 %v6442, %v6441
    %v7135 = vpack.c.b16 %v6444, %v6443
    %v7136 = vpack.c.b16 %v6446, %v6445
    %v7137 = vpack.c.b16 %v6448, %v6447
    %v7138 = vpack.c.b16 %v6450, %v6449
    %v7139 = vpack.c.b16 %v6452, %v6451
    %v7140 = vpack.c.b16 %v6454, %v6453
    %v7141 = vpack.c.b16 %v6456, %v6455
    %v7142 = vpack.c.b16 %v6458, %v6457
    %v7143 = vpack.c.b16 %v6460, %v6459
    %v7144 = vpack.c.b16 %v6462, %v6461
    %v7145 = vpack.c.b16 %v6464, %v6463
    %v7146 = vpack.c.b16 %v6466, %v6465
    %v7147 = vpack.c.b16 %v6468, %v6467
    %v7148 = vpack.c.b16 %v6470, %v6469
    %v7149 = vpack.c.b16 %v6472, %v6471
    %v7150 = vpack.c.b16 %v6474, %v6473
    %v7151 = vpack.c.b16 %v6476, %v6475
    %v7152 = vpack.c.b16 %v6478, %v6477
    %v7153 = vpack.c.b16 %v6480, %v6479
    %v7154 = vpack.c.b16 %v6482, %v6481
    %v7155 = vpack.c.b16 %v6484, %v6483
    %v7156 = vpack.c.b16 %v6486, %v6485
    %v7157 = vpack.c.b16 %v6488, %v6487
    %v7158 = vpack.c.b16 %v6490, %v6489
    %v7159 = vpack.c.b16 %v6492, %v6491
    %v7160 = vpack.c.b16 %v6494, %v6493
    %v7161 = vpack.c.b16 %v6496, %v6495
    %v7162 = vpack.c.b16 %v6498, %v6497
    %v7163 = vpack.c.b16 %v6500, %v6499
    %v7164 = vpack.c.b16 %v6502, %v6501
    %v7165 = vpack.c.b16 %v6504, %v6503
    %v7166 = vpack.c.b16 %v6506, %v6505
    %v7167 = vpack.c.b16 %v6508, %v6507
    %v7168 = vpack.c.b16 %v6510, %v6509
    %v7169 = vpack.c.b16 %v6512, %v6511
    %v7170 = vpack.c.b16 %v6514, %v6513
    %v7171 = vpack.c.b16 %v6516, %v6515
    %v7172 = vpack.c.b16 %v6518, %v6517
    %v7173 = vpack.c.b16 %v6520, %v6519
    %v7174 = vpack.c.b16 %v6522, %v6521
    %v7175 = vpack.c.b16 %v6524, %v6523
    %v7176 = vpack.c.b16 %v6526, %v6525
    %v7177 = vpack.c.b16 %v6528, %v6527
    %v7178 = vpack.c.b16 %v6530, %v6529
    %v7179 = vpack.c.b16 %v6532, %v6531
    %v7180 = vpack.c.b16 %v6534, %v6533
    %v7181 = vpack.c.b16 %v6536, %v6535
    %v7182 = vpack.c.b16 %v6538, %v6537
    %v7183 = vpack.c.b16 %v6540, %v6539
    %v7184 = vpack.c.b16 %v6542, %v6541
    %v7185 = vpack.c.b16 %v6544, %v6543
    %v7186 = vpack.c.b16 %v6546, %v6545
    %v7187 = vpack.c.b16 %v6548, %v6547
    %v7188 = vpack.c.b16 %v6550, %v6549
    %v7189 = vpack.c.b16 %v6552, %v6551
    %v7190 = vpack.c.b16 %v6554, %v6553
    %v7191 = vpack.c.b16 %v6556, %v6555
    %v7192 = vpack.c.b16 %v6558, %v6557
    %v7193 = vpack.c.b16 %v6560, %v6559
    %v7194 = vpack.c.b16 %v6562, %v6561
    %v7195 = vpack.c.b16 %v6564, %v6563
    %v7196 = vpack.c.b16 %v6566, %v6565
    %v7197 = vpack.c.b16 %v6568, %v6567
    %v7198 = vpack.c.b16 %v6570, %v6569
    %v7199 = vpack.c.b16 %v6572, %v6571
    %v7200 = vpack.c.b16 %v6574, %v6573
    %v7201 = vpack.c.b16 %v6576, %v6575
    %v7202 = vpack.c.b16 %v6578, %v6577
    %v7203 = vpack.c.b16 %v6580, %v6579
    %v7204 = vpack.c.b16 %v6582, %v6581
    %v7205 = vpack.c.b16 %v6584, %v6583
    %v7206 = vpack.c.b16 %v6586, %v6585
    %v7207 = vpack.c.b16 %v6588, %v6587
    %v7208 = vpack.c.b16 %v6590, %v6589
    %v7209 = vpack.c.b16 %v6592, %v6591
    %v7210 = vpack.c.b16 %v6594, %v6593
    %v7211 = vpack.c.b16 %v6596, %v6595
    %v7212 = vpack.c.b16 %v6598, %v6597
    %v7213 = vpack.c.b16 %v6600, %v6599
    %v7214 = vpack.c.b16 %v6602, %v6601
    %v7215 = vpack.c.b16 %v6604, %v6603
    %v7216 = vpack.c.b16 %v6606, %v6605
    %v7217 = vpack.c.b16 %v6608, %v6607
    %v7218 = vpack.c.b16 %v6610, %v6609
    %v7219 = vpack.c.b16 %v6612, %v6611
    %v7220 = vpack.c.b16 %v6614, %v6613
    %v7221 = vpack.c.b16 %v6616, %v6615
    %v7222 = vpack.c.b16 %v6618, %v6617
    %v7223 = vpack.c.b16 %v6620, %v6619
    %v7224 = vpack.c.b16 %v6622, %v6621
    %v7225 = vpack.c.b16 %v6624, %v6623
    %v7226 = vpack.c.b16 %v6626, %v6625
    %v7227 = vpack.c.b16 %v6628, %v6627
    %v7228 = vpack.c.b16 %v6630, %v6629
    %v7229 = vpack.c.b16 %v6632, %v6631
    %v7230 = vpack.c.b16 %v6634, %v6633
    %v7231 = vpack.c.b16 %v6636, %v6635
    %v7232 = vpack.c.b16 %v6638, %v6637
    %v7233 = vpack.c.b16 %v6640, %v6639
    %v7234 = vpack.c.b16 %v6642, %v6641
    %v7235 = vpack.c.b16 %v6644, %v6643
    %v7236 = vpack.c.b16 %v6646, %v6645
    %v7237 = vpack.c.b16 %v6648, %v6647
    %v7238 = vpack.c.b16 %v6650, %v6649
    %v7239 = vpack.c.b16 %v6652, %v6651
    %v7240 = vpack.c.b16 %v6654, %v6653
    %v7241 = vpack.c.b16 %v6656, %v6655
    %v7242 = vpack.c.b16 %v6658, %v6657
    %v7243 = vpack.c.b16 %v6660, %v6659
    %v7244 = vpack.c.b16 %v6662, %v6661
    %v7245 = vpack.c.b16 %v6664, %v6663
    %v7246 = vpack.c.b16 %v6666, %v6665
    %v7247 = vpack.c.b16 %v6668, %v6667
    %v7248 = vpack.c.b16 %v6670, %v6669
    %v7249 = vpack.c.b16 %v6672, %v6671
    %v7250 = vpack.c.b16 %v6674, %v6673
    %v7251 = vpack.c.b16 %v6676, %v6675
    %v7252 = vpack.c.b16 %v6678, %v6677
    %v7253 = vpack.c.b16 %v6680, %v6679
    %v7254 = vpack.c.b16 %v6682, %v6681
    %v7255 = vpack.c.b16 %v6684, %v6683
    %v7256 = vpack.c.b16 %v6686, %v6685
    %v7257 = vpack.c.b16 %v6688, %v6687
    %v7258 = vpack.c.b16 %v6690, %v6689
    %v7259 = vpack.c.b16 %v6692, %v6691
    %v7260 = vpack.c.b16 %v6694, %v6693
    %v7261 = vpack.c.b16 %v6696, %v6695
    %v7262 = vpack.c.b16 %v6698, %v6697
    %v7263 = vpack.c.b16 %v6700, %v6699
    %v7264 = vpack.c.b16 %v6702, %v6701
    %v7265 = vpack.c.b16 %v6704, %v6703
    %v7266 = vpack.c.b16 %v6706, %v6705
    %v7267 = vpack.c.b16 %v6708, %v6707
    %v7268 = vpack.c.b16 %v6710, %v6709
    %v7269 = vpack.c.b16 %v6712, %v6711
    %v7270 = vpack.c.b16 %v6714, %v6713
    %v7271 = vpack.c.b16 %v6716, %v6715
    %v7272 = vpack.c.b16 %v6718, %v6717
    %v7273 = vpack.c.b16 %v6720, %v6719
    %v7274 = vpack.c.b16 %v6722, %v6721
    %v7275 = vpack.c.b16 %v6724, %v6723
    %v7276 = vpack.c.b16 %v6726, %v6725
    %v7277 = vpack.c.b16 %v6728, %v6727
    %v7278 = vpack.c.b16 %v6730, %v6729
    %v7279 = vpack.c.b16 %v6732, %v6731
    %v7280 = vpack.c.b16 %v6734, %v6733
    %v7281 = vpack.c.b16 %v6736, %v6735
    %v7282 = vpack.c.b16 %v6738, %v6737
    %v7283 = vpack.c.b16 %v6740, %v6739
    %v7284 = vpack.c.b16 %v6742, %v6741
    %v7285 = vpack.c.b16 %v6744, %v6743
    %v7286 = vpack.c.b16 %v6746, %v6745
    %v7287 = vpack.c.b16 %v6748, %v6747
    %v7288 = vpack.c.b16 %v6750, %v6749
    %v7289 = vpack.c.b16 %v6752, %v6751
    %v7290 = vpack.c.b16 %v6754, %v6753
    %v7291 = vpack.c.b16 %v6756, %v6755
    %v7292 = vpack.c.b16 %v6758, %v6757
    %v7293 = vpack.c.b16 %v6760, %v6759
    %v7294 = vpack.c.b16 %v6762, %v6761
    %v7295 = vpack.c.b16 %v6764, %v6763
    %v7296 = vpack.c.b16 %v6766, %v6765
    %v7297 = vpack.c.b16 %v6768, %v6767
    %v7298 = vpack.c.b16 %v6770, %v6769
    %v7299 = vpack.c.b16 %v6772, %v6771
    %v7300 = vpack.c.b16 %v6774, %v6773
    %v7301 = vpack.c.b16 %v6776, %v6775
    %v7302 = vpack.c.b16 %v6778, %v6777
    %v7303 = vpack.c.b16 %v6780, %v6779
    %v7304 = vpack.c.b16 %v6782, %v6781
    %v7305 = vpack.c.b16 %v6784, %v6783
    %v7306 = vpack.c.b16 %v6786, %v6785
    %v7307 = vpack.c.b16 %v6788, %v6787
    %v7308 = vpack.c.b16 %v6790, %v6789
    %v7309 = vpack.c.b16 %v6792, %v6791
    %v7310 = vpack.c.b16 %v6794, %v6793
    %v7311 = vpack.c.b16 %v6796, %v6795
    %v7312 = vpack.c.b16 %v6798, %v6797
    %v7313 = vpack.c.b16 %v6800, %v6799
    %v7314 = vpack.c.b16 %v6802, %v6801
    %7827 = vmatprep.subr.bf16.mxu0 0
    %7828 = vmatpush1.bf16.msra.mxu0 %v6810
    %7829 = vmatprep.subr.bf16.mxu0 0
    %7830 = vmatpush1.bf16.msra.mxu0 %v6809
    %7831 = vmatprep.subr.bf16.mxu0 0
    %7832 = vmatpush1.bf16.msra.mxu0 %v6808
    %7833 = vmatprep.subr.bf16.mxu0 0
    %7834 = vmatpush1.bf16.msra.mxu0 %v6807
    %7835 = vmatprep.subr.bf16.mxu0 0
    %7836 = vmatpush1.bf16.msra.mxu0 %v6806
    %7837 = vmatprep.subr.bf16.mxu0 0
    %7838 = vmatpush1.bf16.msra.mxu0 %v6805
    %7839 = vmatprep.subr.bf16.mxu0 0
    %7840 = vmatpush1.bf16.msra.mxu0 %v6804
    %7841 = vmatprep.subr.bf16.mxu0 0
    %7842 = vmatpush1.bf16.msra.mxu0 %v6803
    %7843 = vmatprep.subr.bf16.mxu0 0
    %7844 = vmatpush2.bf16.msra.mxu0 %v6818
    %7845 = vmatprep.subr.bf16.mxu0 0
    %7846 = vmatpush2.bf16.msra.mxu0 %v6817
    %7847 = vmatprep.subr.bf16.mxu0 0
    %7848 = vmatpush2.bf16.msra.mxu0 %v6816
    %7849 = vmatprep.subr.bf16.mxu0 0
    %7850 = vmatpush2.bf16.msra.mxu0 %v6815
    %7851 = vmatprep.subr.bf16.mxu0 0
    %7852 = vmatpush2.bf16.msra.mxu0 %v6814
    %7853 = vmatprep.subr.bf16.mxu0 0
    %7854 = vmatpush2.bf16.msra.mxu0 %v6813
    %7855 = vmatprep.subr.bf16.mxu0 0
    %7856 = vmatpush2.bf16.msra.mxu0 %v6812
    %7857 = vmatprep.subr.bf16.mxu0 0
    %7858 = vmatpush2.bf16.msra.mxu0 %v6811
    %7859 = vmatprep.mubr.bf16.mxu0 %v3661
    %7860 = vmatmul.mubr.bf16.gmra.mxu0 %v3660
    %v7861 = vpop.f32.mrf.mxu0
    %v7862 = vadd.f32 %v4753, %v7861
    %v7863 = vpop.f32.mrf.mxu0
    %v7864 = vpop.f32.mrf.mxu0
    %v7865 = vpop.f32.mrf.mxu0
    %7866 = vdwg.mxu0
    %7867 = vmatprep.subr.bf16.mxu0 0
    %7868 = vmatpush1.bf16.msra.mxu0 %v6826
    %7869 = vmatprep.subr.bf16.mxu0 0
    %7870 = vmatpush1.bf16.msra.mxu0 %v6825
    %7871 = vmatprep.subr.bf16.mxu0 0
    %7872 = vmatpush1.bf16.msra.mxu0 %v6824
    %7873 = vmatprep.subr.bf16.mxu0 0
    %7874 = vmatpush1.bf16.msra.mxu0 %v6823
    %7875 = vmatprep.subr.bf16.mxu0 0
    %7876 = vmatpush1.bf16.msra.mxu0 %v6822
    %7877 = vmatprep.subr.bf16.mxu0 0
    %7878 = vmatpush1.bf16.msra.mxu0 %v6821
    %7879 = vmatprep.subr.bf16.mxu0 0
    %7880 = vmatpush1.bf16.msra.mxu0 %v6820
    %7881 = vmatprep.subr.bf16.mxu0 0
    %7882 = vmatpush1.bf16.msra.mxu0 %v6819
    %7883 = vmatprep.subr.bf16.mxu0 0
    %7884 = vmatpush2.bf16.msra.mxu0 %v6834
    %7885 = vmatprep.subr.bf16.mxu0 0
    %7886 = vmatpush2.bf16.msra.mxu0 %v6833
    %7887 = vmatprep.subr.bf16.mxu0 0
    %7888 = vmatpush2.bf16.msra.mxu0 %v6832
    %7889 = vmatprep.subr.bf16.mxu0 0
    %7890 = vmatpush2.bf16.msra.mxu0 %v6831
    %7891 = vmatprep.subr.bf16.mxu0 0
    %7892 = vmatpush2.bf16.msra.mxu0 %v6830
    %7893 = vmatprep.subr.bf16.mxu0 0
    %7894 = vmatpush2.bf16.msra.mxu0 %v6829
    %7895 = vmatprep.subr.bf16.mxu0 0
    %7896 = vmatpush2.bf16.msra.mxu0 %v6828
    %7897 = vmatprep.subr.bf16.mxu0 0
    %7898 = vmatpush2.bf16.msra.mxu0 %v6827
    %7899 = vmatprep.mubr.bf16.mxu0 %v3663
    %7900 = vmatmul.mubr.bf16.gmra.mxu0 %v3662
    %v7901 = vpop.f32.mrf.mxu0
    %v7902 = vadd.f32 %v7862, %v7901
    %v7903 = vpop.f32.mrf.mxu0
    %v7904 = vpop.f32.mrf.mxu0
    %v7905 = vpop.f32.mrf.mxu0
    %7906 = vdwg.mxu0
    %7907 = vmatprep.subr.bf16.mxu0 0
    %7908 = vmatpush1.bf16.msra.mxu0 %v6842
    %7909 = vmatprep.subr.bf16.mxu0 0
    %7910 = vmatpush1.bf16.msra.mxu0 %v6841
    %7911 = vmatprep.subr.bf16.mxu0 0
    %7912 = vmatpush1.bf16.msra.mxu0 %v6840
    %7913 = vmatprep.subr.bf16.mxu0 0
    %7914 = vmatpush1.bf16.msra.mxu0 %v6839
    %7915 = vmatprep.subr.bf16.mxu0 0
    %7916 = vmatpush1.bf16.msra.mxu0 %v6838
    %7917 = vmatprep.subr.bf16.mxu0 0
    %7918 = vmatpush1.bf16.msra.mxu0 %v6837
    %7919 = vmatprep.subr.bf16.mxu0 0
    %7920 = vmatpush1.bf16.msra.mxu0 %v6836
    %7921 = vmatprep.subr.bf16.mxu0 0
    %7922 = vmatpush1.bf16.msra.mxu0 %v6835
    %7923 = vmatprep.subr.bf16.mxu0 0
    %7924 = vmatpush2.bf16.msra.mxu0 %v6850
    %7925 = vmatprep.subr.bf16.mxu0 0
    %7926 = vmatpush2.bf16.msra.mxu0 %v6849
    %7927 = vmatprep.subr.bf16.mxu0 0
    %7928 = vmatpush2.bf16.msra.mxu0 %v6848
    %7929 = vmatprep.subr.bf16.mxu0 0
    %7930 = vmatpush2.bf16.msra.mxu0 %v6847
    %7931 = vmatprep.subr.bf16.mxu0 0
    %7932 = vmatpush2.bf16.msra.mxu0 %v6846
    %7933 = vmatprep.subr.bf16.mxu0 0
    %7934 = vmatpush2.bf16.msra.mxu0 %v6845
    %7935 = vmatprep.subr.bf16.mxu0 0
    %7936 = vmatpush2.bf16.msra.mxu0 %v6844
    %7937 = vmatprep.subr.bf16.mxu0 0
    %7938 = vmatpush2.bf16.msra.mxu0 %v6843
    %7939 = vmatprep.mubr.bf16.mxu0 %v3665
    %7940 = vmatmul.mubr.bf16.gmra.mxu0 %v3664
    %v7941 = vpop.f32.mrf.mxu0
    %v7942 = vadd.f32 %v7902, %v7941
    %v7943 = vpop.f32.mrf.mxu0
    %v7944 = vpop.f32.mrf.mxu0
    %v7945 = vpop.f32.mrf.mxu0
    %7946 = vdwg.mxu0
    %7947 = vmatprep.subr.bf16.mxu0 0
    %7948 = vmatpush1.bf16.msra.mxu0 %v6858
    %7949 = vmatprep.subr.bf16.mxu0 0
    %7950 = vmatpush1.bf16.msra.mxu0 %v6857
    %7951 = vmatprep.subr.bf16.mxu0 0
    %7952 = vmatpush1.bf16.msra.mxu0 %v6856
    %7953 = vmatprep.subr.bf16.mxu0 0
    %7954 = vmatpush1.bf16.msra.mxu0 %v6855
    %7955 = vmatprep.subr.bf16.mxu0 0
    %7956 = vmatpush1.bf16.msra.mxu0 %v6854
    %7957 = vmatprep.subr.bf16.mxu0 0
    %7958 = vmatpush1.bf16.msra.mxu0 %v6853
    %7959 = vmatprep.subr.bf16.mxu0 0
    %7960 = vmatpush1.bf16.msra.mxu0 %v6852
    %7961 = vmatprep.subr.bf16.mxu0 0
    %7962 = vmatpush1.bf16.msra.mxu0 %v6851
    %7963 = vmatprep.subr.bf16.mxu0 0
    %7964 = vmatpush2.bf16.msra.mxu0 %v6866
    %7965 = vmatprep.subr.bf16.mxu0 0
    %7966 = vmatpush2.bf16.msra.mxu0 %v6865
    %7967 = vmatprep.subr.bf16.mxu0 0
    %7968 = vmatpush2.bf16.msra.mxu0 %v6864
    %7969 = vmatprep.subr.bf16.mxu0 0
    %7970 = vmatpush2.bf16.msra.mxu0 %v6863
    %7971 = vmatprep.subr.bf16.mxu0 0
    %7972 = vmatpush2.bf16.msra.mxu0 %v6862
    %7973 = vmatprep.subr.bf16.mxu0 0
    %7974 = vmatpush2.bf16.msra.mxu0 %v6861
    %7975 = vmatprep.subr.bf16.mxu0 0
    %7976 = vmatpush2.bf16.msra.mxu0 %v6860
    %7977 = vmatprep.subr.bf16.mxu0 0
    %7978 = vmatpush2.bf16.msra.mxu0 %v6859
    %7979 = vmatprep.mubr.bf16.mxu0 %v3667
    %7980 = vmatmul.mubr.bf16.gmra.mxu0 %v3666
    %v7981 = vpop.f32.mrf.mxu0
    %v7982 = vadd.f32 %v7942, %v7981
    %v7983 = vpop.f32.mrf.mxu0
    %v7984 = vpop.f32.mrf.mxu0
    %v7985 = vpop.f32.mrf.mxu0
    %7986 = vdwg.mxu0
    %7987 = vmatprep.subr.bf16.mxu0 0
    %7988 = vmatpush1.bf16.msra.mxu0 %v6874
    %7989 = vmatprep.subr.bf16.mxu0 0
    %7990 = vmatpush1.bf16.msra.mxu0 %v6873
    %7991 = vmatprep.subr.bf16.mxu0 0
    %7992 = vmatpush1.bf16.msra.mxu0 %v6872
    %7993 = vmatprep.subr.bf16.mxu0 0
    %7994 = vmatpush1.bf16.msra.mxu0 %v6871
    %7995 = vmatprep.subr.bf16.mxu0 0
    %7996 = vmatpush1.bf16.msra.mxu0 %v6870
    %7997 = vmatprep.subr.bf16.mxu0 0
    %7998 = vmatpush1.bf16.msra.mxu0 %v6869
    %7999 = vmatprep.subr.bf16.mxu0 0
    %8000 = vmatpush1.bf16.msra.mxu0 %v6868
    %8001 = vmatprep.subr.bf16.mxu0 0
    %8002 = vmatpush1.bf16.msra.mxu0 %v6867
    %8003 = vmatprep.subr.bf16.mxu0 0
    %8004 = vmatpush2.bf16.msra.mxu0 %v6882
    %8005 = vmatprep.subr.bf16.mxu0 0
    %8006 = vmatpush2.bf16.msra.mxu0 %v6881
    %8007 = vmatprep.subr.bf16.mxu0 0
    %8008 = vmatpush2.bf16.msra.mxu0 %v6880
    %8009 = vmatprep.subr.bf16.mxu0 0
    %8010 = vmatpush2.bf16.msra.mxu0 %v6879
    %8011 = vmatprep.subr.bf16.mxu0 0
    %8012 = vmatpush2.bf16.msra.mxu0 %v6878
    %8013 = vmatprep.subr.bf16.mxu0 0
    %8014 = vmatpush2.bf16.msra.mxu0 %v6877
    %8015 = vmatprep.subr.bf16.mxu0 0
    %8016 = vmatpush2.bf16.msra.mxu0 %v6876
    %8017 = vmatprep.subr.bf16.mxu0 0
    %8018 = vmatpush2.bf16.msra.mxu0 %v6875
    %8019 = vmatprep.mubr.bf16.mxu0 %v3669
    %8020 = vmatmul.mubr.bf16.gmra.mxu0 %v3668
    %v8021 = vpop.f32.mrf.mxu0
    %v8022 = vadd.f32 %v7982, %v8021
    %v8023 = vpop.f32.mrf.mxu0
    %v8024 = vpop.f32.mrf.mxu0
    %v8025 = vpop.f32.mrf.mxu0
    %8026 = vdwg.mxu0
    %8027 = vmatprep.subr.bf16.mxu0 0
    %8028 = vmatpush1.bf16.msra.mxu0 %v6890
    %8029 = vmatprep.subr.bf16.mxu0 0
    %8030 = vmatpush1.bf16.msra.mxu0 %v6889
    %8031 = vmatprep.subr.bf16.mxu0 0
    %8032 = vmatpush1.bf16.msra.mxu0 %v6888
    %8033 = vmatprep.subr.bf16.mxu0 0
    %8034 = vmatpush1.bf16.msra.mxu0 %v6887
    %8035 = vmatprep.subr.bf16.mxu0 0
    %8036 = vmatpush1.bf16.msra.mxu0 %v6886
    %8037 = vmatprep.subr.bf16.mxu0 0
    %8038 = vmatpush1.bf16.msra.mxu0 %v6885
    %8039 = vmatprep.subr.bf16.mxu0 0
    %8040 = vmatpush1.bf16.msra.mxu0 %v6884
    %8041 = vmatprep.subr.bf16.mxu0 0
    %8042 = vmatpush1.bf16.msra.mxu0 %v6883
    %8043 = vmatprep.subr.bf16.mxu0 0
    %8044 = vmatpush2.bf16.msra.mxu0 %v6898
    %8045 = vmatprep.subr.bf16.mxu0 0
    %8046 = vmatpush2.bf16.msra.mxu0 %v6897
    %8047 = vmatprep.subr.bf16.mxu0 0
    %8048 = vmatpush2.bf16.msra.mxu0 %v6896
    %8049 = vmatprep.subr.bf16.mxu0 0
    %8050 = vmatpush2.bf16.msra.mxu0 %v6895
    %8051 = vmatprep.subr.bf16.mxu0 0
    %8052 = vmatpush2.bf16.msra.mxu0 %v6894
    %8053 = vmatprep.subr.bf16.mxu0 0
    %8054 = vmatpush2.bf16.msra.mxu0 %v6893
    %8055 = vmatprep.subr.bf16.mxu0 0
    %8056 = vmatpush2.bf16.msra.mxu0 %v6892
    %8057 = vmatprep.subr.bf16.mxu0 0
    %8058 = vmatpush2.bf16.msra.mxu0 %v6891
    %8059 = vmatprep.mubr.bf16.mxu0 %v3671
    %8060 = vmatmul.mubr.bf16.gmra.mxu0 %v3670
    %v8061 = vpop.f32.mrf.mxu0
    %v8062 = vadd.f32 %v8022, %v8061
    %v8063 = vpop.f32.mrf.mxu0
    %v8064 = vpop.f32.mrf.mxu0
    %v8065 = vpop.f32.mrf.mxu0
    %8066 = vdwg.mxu0
    %8067 = vmatprep.subr.bf16.mxu0 0
    %8068 = vmatpush1.bf16.msra.mxu0 %v6906
    %8069 = vmatprep.subr.bf16.mxu0 0
    %8070 = vmatpush1.bf16.msra.mxu0 %v6905
    %8071 = vmatprep.subr.bf16.mxu0 0
    %8072 = vmatpush1.bf16.msra.mxu0 %v6904
    %8073 = vmatprep.subr.bf16.mxu0 0
    %8074 = vmatpush1.bf16.msra.mxu0 %v6903
    %8075 = vmatprep.subr.bf16.mxu0 0
    %8076 = vmatpush1.bf16.msra.mxu0 %v6902
    %8077 = vmatprep.subr.bf16.mxu0 0
    %8078 = vmatpush1.bf16.msra.mxu0 %v6901
    %8079 = vmatprep.subr.bf16.mxu0 0
    %8080 = vmatpush1.bf16.msra.mxu0 %v6900
    %8081 = vmatprep.subr.bf16.mxu0 0
    %8082 = vmatpush1.bf16.msra.mxu0 %v6899
    %8083 = vmatprep.subr.bf16.mxu0 0
    %8084 = vmatpush2.bf16.msra.mxu0 %v6914
    %8085 = vmatprep.subr.bf16.mxu0 0
    %8086 = vmatpush2.bf16.msra.mxu0 %v6913
    %8087 = vmatprep.subr.bf16.mxu0 0
    %8088 = vmatpush2.bf16.msra.mxu0 %v6912
    %8089 = vmatprep.subr.bf16.mxu0 0
    %8090 = vmatpush2.bf16.msra.mxu0 %v6911
    %8091 = vmatprep.subr.bf16.mxu0 0
    %8092 = vmatpush2.bf16.msra.mxu0 %v6910
    %8093 = vmatprep.subr.bf16.mxu0 0
    %8094 = vmatpush2.bf16.msra.mxu0 %v6909
    %8095 = vmatprep.subr.bf16.mxu0 0
    %8096 = vmatpush2.bf16.msra.mxu0 %v6908
    %8097 = vmatprep.subr.bf16.mxu0 0
    %8098 = vmatpush2.bf16.msra.mxu0 %v6907
    %8099 = vmatprep.mubr.bf16.mxu0 %v3673
    %8100 = vmatmul.mubr.bf16.gmra.mxu0 %v3672
    %v8101 = vpop.f32.mrf.mxu0
    %v8102 = vadd.f32 %v8062, %v8101
    %v8103 = vpop.f32.mrf.mxu0
    %v8104 = vpop.f32.mrf.mxu0
    %v8105 = vpop.f32.mrf.mxu0
    %8106 = vdwg.mxu0
    %8107 = vmatprep.subr.bf16.mxu0 0
    %8108 = vmatpush1.bf16.msra.mxu0 %v6922
    %8109 = vmatprep.subr.bf16.mxu0 0
    %8110 = vmatpush1.bf16.msra.mxu0 %v6921
    %8111 = vmatprep.subr.bf16.mxu0 0
    %8112 = vmatpush1.bf16.msra.mxu0 %v6920
    %8113 = vmatprep.subr.bf16.mxu0 0
    %8114 = vmatpush1.bf16.msra.mxu0 %v6919
    %8115 = vmatprep.subr.bf16.mxu0 0
    %8116 = vmatpush1.bf16.msra.mxu0 %v6918
    %8117 = vmatprep.subr.bf16.mxu0 0
    %8118 = vmatpush1.bf16.msra.mxu0 %v6917
    %8119 = vmatprep.subr.bf16.mxu0 0
    %8120 = vmatpush1.bf16.msra.mxu0 %v6916
    %8121 = vmatprep.subr.bf16.mxu0 0
    %8122 = vmatpush1.bf16.msra.mxu0 %v6915
    %8123 = vmatprep.subr.bf16.mxu0 0
    %8124 = vmatpush2.bf16.msra.mxu0 %v6930
    %8125 = vmatprep.subr.bf16.mxu0 0
    %8126 = vmatpush2.bf16.msra.mxu0 %v6929
    %8127 = vmatprep.subr.bf16.mxu0 0
    %8128 = vmatpush2.bf16.msra.mxu0 %v6928
    %8129 = vmatprep.subr.bf16.mxu0 0
    %8130 = vmatpush2.bf16.msra.mxu0 %v6927
    %8131 = vmatprep.subr.bf16.mxu0 0
    %8132 = vmatpush2.bf16.msra.mxu0 %v6926
    %8133 = vmatprep.subr.bf16.mxu0 0
    %8134 = vmatpush2.bf16.msra.mxu0 %v6925
    %8135 = vmatprep.subr.bf16.mxu0 0
    %8136 = vmatpush2.bf16.msra.mxu0 %v6924
    %8137 = vmatprep.subr.bf16.mxu0 0
    %8138 = vmatpush2.bf16.msra.mxu0 %v6923
    %8139 = vmatprep.mubr.bf16.mxu0 %v3675
    %8140 = vmatmul.mubr.bf16.gmra.mxu0 %v3674
    %v8141 = vpop.f32.mrf.mxu0
    %v8142 = vadd.f32 %v8102, %v8141
    %v8143 = vpop.f32.mrf.mxu0
    %v8144 = vpop.f32.mrf.mxu0
    %v8145 = vpop.f32.mrf.mxu0
    %8146 = vdwg.mxu0
    %8147 = vmatprep.subr.bf16.mxu0 0
    %8148 = vmatpush1.bf16.msra.mxu0 %v6938
    %8149 = vmatprep.subr.bf16.mxu0 0
    %8150 = vmatpush1.bf16.msra.mxu0 %v6937
    %8151 = vmatprep.subr.bf16.mxu0 0
    %8152 = vmatpush1.bf16.msra.mxu0 %v6936
    %8153 = vmatprep.subr.bf16.mxu0 0
    %8154 = vmatpush1.bf16.msra.mxu0 %v6935
    %8155 = vmatprep.subr.bf16.mxu0 0
    %8156 = vmatpush1.bf16.msra.mxu0 %v6934
    %8157 = vmatprep.subr.bf16.mxu0 0
    %8158 = vmatpush1.bf16.msra.mxu0 %v6933
    %8159 = vmatprep.subr.bf16.mxu0 0
    %8160 = vmatpush1.bf16.msra.mxu0 %v6932
    %8161 = vmatprep.subr.bf16.mxu0 0
    %8162 = vmatpush1.bf16.msra.mxu0 %v6931
    %8163 = vmatprep.subr.bf16.mxu0 0
    %8164 = vmatpush2.bf16.msra.mxu0 %v6946
    %8165 = vmatprep.subr.bf16.mxu0 0
    %8166 = vmatpush2.bf16.msra.mxu0 %v6945
    %8167 = vmatprep.subr.bf16.mxu0 0
    %8168 = vmatpush2.bf16.msra.mxu0 %v6944
    %8169 = vmatprep.subr.bf16.mxu0 0
    %8170 = vmatpush2.bf16.msra.mxu0 %v6943
    %8171 = vmatprep.subr.bf16.mxu0 0
    %8172 = vmatpush2.bf16.msra.mxu0 %v6942
    %8173 = vmatprep.subr.bf16.mxu0 0
    %8174 = vmatpush2.bf16.msra.mxu0 %v6941
    %8175 = vmatprep.subr.bf16.mxu0 0
    %8176 = vmatpush2.bf16.msra.mxu0 %v6940
    %8177 = vmatprep.subr.bf16.mxu0 0
    %8178 = vmatpush2.bf16.msra.mxu0 %v6939
    %8179 = vmatprep.mubr.bf16.mxu0 %v3677
    %8180 = vmatmul.mubr.bf16.gmra.mxu0 %v3676
    %v8181 = vpop.f32.mrf.mxu0
    %v8182 = vadd.f32 %v8142, %v8181
    %v8183 = vpop.f32.mrf.mxu0
    %v8184 = vpop.f32.mrf.mxu0
    %v8185 = vpop.f32.mrf.mxu0
    %8186 = vdwg.mxu0
    %8187 = vmatprep.subr.bf16.mxu0 0
    %8188 = vmatpush1.bf16.msra.mxu0 %v6954
    %8189 = vmatprep.subr.bf16.mxu0 0
    %8190 = vmatpush1.bf16.msra.mxu0 %v6953
    %8191 = vmatprep.subr.bf16.mxu0 0
    %8192 = vmatpush1.bf16.msra.mxu0 %v6952
    %8193 = vmatprep.subr.bf16.mxu0 0
    %8194 = vmatpush1.bf16.msra.mxu0 %v6951
    %8195 = vmatprep.subr.bf16.mxu0 0
    %8196 = vmatpush1.bf16.msra.mxu0 %v6950
    %8197 = vmatprep.subr.bf16.mxu0 0
    %8198 = vmatpush1.bf16.msra.mxu0 %v6949
    %8199 = vmatprep.subr.bf16.mxu0 0
    %8200 = vmatpush1.bf16.msra.mxu0 %v6948
    %8201 = vmatprep.subr.bf16.mxu0 0
    %8202 = vmatpush1.bf16.msra.mxu0 %v6947
    %8203 = vmatprep.subr.bf16.mxu0 0
    %8204 = vmatpush2.bf16.msra.mxu0 %v6962
    %8205 = vmatprep.subr.bf16.mxu0 0
    %8206 = vmatpush2.bf16.msra.mxu0 %v6961
    %8207 = vmatprep.subr.bf16.mxu0 0
    %8208 = vmatpush2.bf16.msra.mxu0 %v6960
    %8209 = vmatprep.subr.bf16.mxu0 0
    %8210 = vmatpush2.bf16.msra.mxu0 %v6959
    %8211 = vmatprep.subr.bf16.mxu0 0
    %8212 = vmatpush2.bf16.msra.mxu0 %v6958
    %8213 = vmatprep.subr.bf16.mxu0 0
    %8214 = vmatpush2.bf16.msra.mxu0 %v6957
    %8215 = vmatprep.subr.bf16.mxu0 0
    %8216 = vmatpush2.bf16.msra.mxu0 %v6956
    %8217 = vmatprep.subr.bf16.mxu0 0
    %8218 = vmatpush2.bf16.msra.mxu0 %v6955
    %8219 = vmatprep.mubr.bf16.mxu0 %v3679
    %8220 = vmatmul.mubr.bf16.gmra.mxu0 %v3678
    %v8221 = vpop.f32.mrf.mxu0
    %v8222 = vadd.f32 %v8182, %v8221
    %v8223 = vpop.f32.mrf.mxu0
    %v8224 = vpop.f32.mrf.mxu0
    %v8225 = vpop.f32.mrf.mxu0
    %8226 = vdwg.mxu0
    %8227 = vmatprep.subr.bf16.mxu0 0
    %8228 = vmatpush1.bf16.msra.mxu0 %v6970
    %8229 = vmatprep.subr.bf16.mxu0 0
    %8230 = vmatpush1.bf16.msra.mxu0 %v6969
    %8231 = vmatprep.subr.bf16.mxu0 0
    %8232 = vmatpush1.bf16.msra.mxu0 %v6968
    %8233 = vmatprep.subr.bf16.mxu0 0
    %8234 = vmatpush1.bf16.msra.mxu0 %v6967
    %8235 = vmatprep.subr.bf16.mxu0 0
    %8236 = vmatpush1.bf16.msra.mxu0 %v6966
    %8237 = vmatprep.subr.bf16.mxu0 0
    %8238 = vmatpush1.bf16.msra.mxu0 %v6965
    %8239 = vmatprep.subr.bf16.mxu0 0
    %8240 = vmatpush1.bf16.msra.mxu0 %v6964
    %8241 = vmatprep.subr.bf16.mxu0 0
    %8242 = vmatpush1.bf16.msra.mxu0 %v6963
    %8243 = vmatprep.subr.bf16.mxu0 0
    %8244 = vmatpush2.bf16.msra.mxu0 %v6978
    %8245 = vmatprep.subr.bf16.mxu0 0
    %8246 = vmatpush2.bf16.msra.mxu0 %v6977
    %8247 = vmatprep.subr.bf16.mxu0 0
    %8248 = vmatpush2.bf16.msra.mxu0 %v6976
    %8249 = vmatprep.subr.bf16.mxu0 0
    %8250 = vmatpush2.bf16.msra.mxu0 %v6975
    %8251 = vmatprep.subr.bf16.mxu0 0
    %8252 = vmatpush2.bf16.msra.mxu0 %v6974
    %8253 = vmatprep.subr.bf16.mxu0 0
    %8254 = vmatpush2.bf16.msra.mxu0 %v6973
    %8255 = vmatprep.subr.bf16.mxu0 0
    %8256 = vmatpush2.bf16.msra.mxu0 %v6972
    %8257 = vmatprep.subr.bf16.mxu0 0
    %8258 = vmatpush2.bf16.msra.mxu0 %v6971
    %8259 = vmatprep.mubr.bf16.mxu0 %v3681
    %8260 = vmatmul.mubr.bf16.gmra.mxu0 %v3680
    %v8261 = vpop.f32.mrf.mxu0
    %v8262 = vadd.f32 %v8222, %v8261
    %v8263 = vpop.f32.mrf.mxu0
    %v8264 = vpop.f32.mrf.mxu0
    %v8265 = vpop.f32.mrf.mxu0
    %8266 = vdwg.mxu0
    %8267 = vmatprep.subr.bf16.mxu0 0
    %8268 = vmatpush1.bf16.msra.mxu0 %v6986
    %8269 = vmatprep.subr.bf16.mxu0 0
    %8270 = vmatpush1.bf16.msra.mxu0 %v6985
    %8271 = vmatprep.subr.bf16.mxu0 0
    %8272 = vmatpush1.bf16.msra.mxu0 %v6984
    %8273 = vmatprep.subr.bf16.mxu0 0
    %8274 = vmatpush1.bf16.msra.mxu0 %v6983
    %8275 = vmatprep.subr.bf16.mxu0 0
    %8276 = vmatpush1.bf16.msra.mxu0 %v6982
    %8277 = vmatprep.subr.bf16.mxu0 0
    %8278 = vmatpush1.bf16.msra.mxu0 %v6981
    %8279 = vmatprep.subr.bf16.mxu0 0
    %8280 = vmatpush1.bf16.msra.mxu0 %v6980
    %8281 = vmatprep.subr.bf16.mxu0 0
    %8282 = vmatpush1.bf16.msra.mxu0 %v6979
    %8283 = vmatprep.subr.bf16.mxu0 0
    %8284 = vmatpush2.bf16.msra.mxu0 %v6994
    %8285 = vmatprep.subr.bf16.mxu0 0
    %8286 = vmatpush2.bf16.msra.mxu0 %v6993
    %8287 = vmatprep.subr.bf16.mxu0 0
    %8288 = vmatpush2.bf16.msra.mxu0 %v6992
    %8289 = vmatprep.subr.bf16.mxu0 0
    %8290 = vmatpush2.bf16.msra.mxu0 %v6991
    %8291 = vmatprep.subr.bf16.mxu0 0
    %8292 = vmatpush2.bf16.msra.mxu0 %v6990
    %8293 = vmatprep.subr.bf16.mxu0 0
    %8294 = vmatpush2.bf16.msra.mxu0 %v6989
    %8295 = vmatprep.subr.bf16.mxu0 0
    %8296 = vmatpush2.bf16.msra.mxu0 %v6988
    %8297 = vmatprep.subr.bf16.mxu0 0
    %8298 = vmatpush2.bf16.msra.mxu0 %v6987
    %8299 = vmatprep.mubr.bf16.mxu0 %v3683
    %8300 = vmatmul.mubr.bf16.gmra.mxu0 %v3682
    %v8301 = vpop.f32.mrf.mxu0
    %v8302 = vadd.f32 %v8262, %v8301
    %v8303 = vpop.f32.mrf.mxu0
    %v8304 = vpop.f32.mrf.mxu0
    %v8305 = vpop.f32.mrf.mxu0
    %8306 = vdwg.mxu0
    %8307 = vmatprep.subr.bf16.mxu0 0
    %8308 = vmatpush1.bf16.msra.mxu0 %v7002
    %8309 = vmatprep.subr.bf16.mxu0 0
    %8310 = vmatpush1.bf16.msra.mxu0 %v7001
    %8311 = vmatprep.subr.bf16.mxu0 0
    %8312 = vmatpush1.bf16.msra.mxu0 %v7000
    %8313 = vmatprep.subr.bf16.mxu0 0
    %8314 = vmatpush1.bf16.msra.mxu0 %v6999
    %8315 = vmatprep.subr.bf16.mxu0 0
    %8316 = vmatpush1.bf16.msra.mxu0 %v6998
    %8317 = vmatprep.subr.bf16.mxu0 0
    %8318 = vmatpush1.bf16.msra.mxu0 %v6997
    %8319 = vmatprep.subr.bf16.mxu0 0
    %8320 = vmatpush1.bf16.msra.mxu0 %v6996
    %8321 = vmatprep.subr.bf16.mxu0 0
    %8322 = vmatpush1.bf16.msra.mxu0 %v6995
    %8323 = vmatprep.subr.bf16.mxu0 0
    %8324 = vmatpush2.bf16.msra.mxu0 %v7010
    %8325 = vmatprep.subr.bf16.mxu0 0
    %8326 = vmatpush2.bf16.msra.mxu0 %v7009
    %8327 = vmatprep.subr.bf16.mxu0 0
    %8328 = vmatpush2.bf16.msra.mxu0 %v7008
    %8329 = vmatprep.subr.bf16.mxu0 0
    %8330 = vmatpush2.bf16.msra.mxu0 %v7007
    %8331 = vmatprep.subr.bf16.mxu0 0
    %8332 = vmatpush2.bf16.msra.mxu0 %v7006
    %8333 = vmatprep.subr.bf16.mxu0 0
    %8334 = vmatpush2.bf16.msra.mxu0 %v7005
    %8335 = vmatprep.subr.bf16.mxu0 0
    %8336 = vmatpush2.bf16.msra.mxu0 %v7004
    %8337 = vmatprep.subr.bf16.mxu0 0
    %8338 = vmatpush2.bf16.msra.mxu0 %v7003
    %8339 = vmatprep.mubr.bf16.mxu0 %v3685
    %8340 = vmatmul.mubr.bf16.gmra.mxu0 %v3684
    %v8341 = vpop.f32.mrf.mxu0
    %v8342 = vadd.f32 %v8302, %v8341
    %v8343 = vpop.f32.mrf.mxu0
    %v8344 = vpop.f32.mrf.mxu0
    %v8345 = vpop.f32.mrf.mxu0
    %8346 = vdwg.mxu0
    %8347 = vmatprep.subr.bf16.mxu0 0
    %8348 = vmatpush1.bf16.msra.mxu0 %v7018
    %8349 = vmatprep.subr.bf16.mxu0 0
    %8350 = vmatpush1.bf16.msra.mxu0 %v7017
    %8351 = vmatprep.subr.bf16.mxu0 0
    %8352 = vmatpush1.bf16.msra.mxu0 %v7016
    %8353 = vmatprep.subr.bf16.mxu0 0
    %8354 = vmatpush1.bf16.msra.mxu0 %v7015
    %8355 = vmatprep.subr.bf16.mxu0 0
    %8356 = vmatpush1.bf16.msra.mxu0 %v7014
    %8357 = vmatprep.subr.bf16.mxu0 0
    %8358 = vmatpush1.bf16.msra.mxu0 %v7013
    %8359 = vmatprep.subr.bf16.mxu0 0
    %8360 = vmatpush1.bf16.msra.mxu0 %v7012
    %8361 = vmatprep.subr.bf16.mxu0 0
    %8362 = vmatpush1.bf16.msra.mxu0 %v7011
    %8363 = vmatprep.subr.bf16.mxu0 0
    %8364 = vmatpush2.bf16.msra.mxu0 %v7026
    %8365 = vmatprep.subr.bf16.mxu0 0
    %8366 = vmatpush2.bf16.msra.mxu0 %v7025
    %8367 = vmatprep.subr.bf16.mxu0 0
    %8368 = vmatpush2.bf16.msra.mxu0 %v7024
    %8369 = vmatprep.subr.bf16.mxu0 0
    %8370 = vmatpush2.bf16.msra.mxu0 %v7023
    %8371 = vmatprep.subr.bf16.mxu0 0
    %8372 = vmatpush2.bf16.msra.mxu0 %v7022
    %8373 = vmatprep.subr.bf16.mxu0 0
    %8374 = vmatpush2.bf16.msra.mxu0 %v7021
    %8375 = vmatprep.subr.bf16.mxu0 0
    %8376 = vmatpush2.bf16.msra.mxu0 %v7020
    %8377 = vmatprep.subr.bf16.mxu0 0
    %8378 = vmatpush2.bf16.msra.mxu0 %v7019
    %8379 = vmatprep.mubr.bf16.mxu0 %v3687
    %8380 = vmatmul.mubr.bf16.gmra.mxu0 %v3686
    %v8381 = vpop.f32.mrf.mxu0
    %v8382 = vadd.f32 %v8342, %v8381
    %v8383 = vpop.f32.mrf.mxu0
    %v8384 = vpop.f32.mrf.mxu0
    %v8385 = vpop.f32.mrf.mxu0
    %8386 = vdwg.mxu0
    %8387 = vmatprep.subr.bf16.mxu0 0
    %8388 = vmatpush1.bf16.msra.mxu0 %v7034
    %8389 = vmatprep.subr.bf16.mxu0 0
    %8390 = vmatpush1.bf16.msra.mxu0 %v7033
    %8391 = vmatprep.subr.bf16.mxu0 0
    %8392 = vmatpush1.bf16.msra.mxu0 %v7032
    %8393 = vmatprep.subr.bf16.mxu0 0
    %8394 = vmatpush1.bf16.msra.mxu0 %v7031
    %8395 = vmatprep.subr.bf16.mxu0 0
    %8396 = vmatpush1.bf16.msra.mxu0 %v7030
    %8397 = vmatprep.subr.bf16.mxu0 0
    %8398 = vmatpush1.bf16.msra.mxu0 %v7029
    %8399 = vmatprep.subr.bf16.mxu0 0
    %8400 = vmatpush1.bf16.msra.mxu0 %v7028
    %8401 = vmatprep.subr.bf16.mxu0 0
    %8402 = vmatpush1.bf16.msra.mxu0 %v7027
    %8403 = vmatprep.subr.bf16.mxu0 0
    %8404 = vmatpush2.bf16.msra.mxu0 %v7042
    %8405 = vmatprep.subr.bf16.mxu0 0
    %8406 = vmatpush2.bf16.msra.mxu0 %v7041
    %8407 = vmatprep.subr.bf16.mxu0 0
    %8408 = vmatpush2.bf16.msra.mxu0 %v7040
    %8409 = vmatprep.subr.bf16.mxu0 0
    %8410 = vmatpush2.bf16.msra.mxu0 %v7039
    %8411 = vmatprep.subr.bf16.mxu0 0
    %8412 = vmatpush2.bf16.msra.mxu0 %v7038
    %8413 = vmatprep.subr.bf16.mxu0 0
    %8414 = vmatpush2.bf16.msra.mxu0 %v7037
    %8415 = vmatprep.subr.bf16.mxu0 0
    %8416 = vmatpush2.bf16.msra.mxu0 %v7036
    %8417 = vmatprep.subr.bf16.mxu0 0
    %8418 = vmatpush2.bf16.msra.mxu0 %v7035
    %8419 = vmatprep.mubr.bf16.mxu0 %v3689
    %8420 = vmatmul.mubr.bf16.gmra.mxu0 %v3688
    %v8421 = vpop.f32.mrf.mxu0
    %v8422 = vadd.f32 %v8382, %v8421
    %v8423 = vpop.f32.mrf.mxu0
    %v8424 = vpop.f32.mrf.mxu0
    %v8425 = vpop.f32.mrf.mxu0
    %8426 = vdwg.mxu0
    %8427 = vmatprep.subr.bf16.mxu0 0
    %8428 = vmatpush1.bf16.msra.mxu0 %v7050
    %8429 = vmatprep.subr.bf16.mxu0 0
    %8430 = vmatpush1.bf16.msra.mxu0 %v7049
    %8431 = vmatprep.subr.bf16.mxu0 0
    %8432 = vmatpush1.bf16.msra.mxu0 %v7048
    %8433 = vmatprep.subr.bf16.mxu0 0
    %8434 = vmatpush1.bf16.msra.mxu0 %v7047
    %8435 = vmatprep.subr.bf16.mxu0 0
    %8436 = vmatpush1.bf16.msra.mxu0 %v7046
    %8437 = vmatprep.subr.bf16.mxu0 0
    %8438 = vmatpush1.bf16.msra.mxu0 %v7045
    %8439 = vmatprep.subr.bf16.mxu0 0
    %8440 = vmatpush1.bf16.msra.mxu0 %v7044
    %8441 = vmatprep.subr.bf16.mxu0 0
    %8442 = vmatpush1.bf16.msra.mxu0 %v7043
    %8443 = vmatprep.subr.bf16.mxu0 0
    %8444 = vmatpush2.bf16.msra.mxu0 %v7058
    %8445 = vmatprep.subr.bf16.mxu0 0
    %8446 = vmatpush2.bf16.msra.mxu0 %v7057
    %8447 = vmatprep.subr.bf16.mxu0 0
    %8448 = vmatpush2.bf16.msra.mxu0 %v7056
    %8449 = vmatprep.subr.bf16.mxu0 0
    %8450 = vmatpush2.bf16.msra.mxu0 %v7055
    %8451 = vmatprep.subr.bf16.mxu0 0
    %8452 = vmatpush2.bf16.msra.mxu0 %v7054
    %8453 = vmatprep.subr.bf16.mxu0 0
    %8454 = vmatpush2.bf16.msra.mxu0 %v7053
    %8455 = vmatprep.subr.bf16.mxu0 0
    %8456 = vmatpush2.bf16.msra.mxu0 %v7052
    %8457 = vmatprep.subr.bf16.mxu0 0
    %8458 = vmatpush2.bf16.msra.mxu0 %v7051
    %8459 = vmatprep.mubr.bf16.mxu0 %v3691
    %8460 = vmatmul.mubr.bf16.gmra.mxu0 %v3690
    %v8461 = vpop.f32.mrf.mxu0
    %v8462 = vadd.f32 %v8422, %v8461
    %v8463 = vpop.f32.mrf.mxu0
    %v8464 = vpop.f32.mrf.mxu0
    %v8465 = vpop.f32.mrf.mxu0
    %8466 = vdwg.mxu0
    %8467 = vmatprep.subr.bf16.mxu0 0
    %8468 = vmatpush1.bf16.msra.mxu0 %v7066
    %8469 = vmatprep.subr.bf16.mxu0 0
    %8470 = vmatpush1.bf16.msra.mxu0 %v7065
    %8471 = vmatprep.subr.bf16.mxu0 0
    %8472 = vmatpush1.bf16.msra.mxu0 %v7064
    %8473 = vmatprep.subr.bf16.mxu0 0
    %8474 = vmatpush1.bf16.msra.mxu0 %v7063
    %8475 = vmatprep.subr.bf16.mxu0 0
    %8476 = vmatpush1.bf16.msra.mxu0 %v7062
    %8477 = vmatprep.subr.bf16.mxu0 0
    %8478 = vmatpush1.bf16.msra.mxu0 %v7061
    %8479 = vmatprep.subr.bf16.mxu0 0
    %8480 = vmatpush1.bf16.msra.mxu0 %v7060
    %8481 = vmatprep.subr.bf16.mxu0 0
    %8482 = vmatpush1.bf16.msra.mxu0 %v7059
    %8483 = vmatprep.subr.bf16.mxu0 0
    %8484 = vmatpush2.bf16.msra.mxu0 %v7074
    %8485 = vmatprep.subr.bf16.mxu0 0
    %8486 = vmatpush2.bf16.msra.mxu0 %v7073
    %8487 = vmatprep.subr.bf16.mxu0 0
    %8488 = vmatpush2.bf16.msra.mxu0 %v7072
    %8489 = vmatprep.subr.bf16.mxu0 0
    %8490 = vmatpush2.bf16.msra.mxu0 %v7071
    %8491 = vmatprep.subr.bf16.mxu0 0
    %8492 = vmatpush2.bf16.msra.mxu0 %v7070
    %8493 = vmatprep.subr.bf16.mxu0 0
    %8494 = vmatpush2.bf16.msra.mxu0 %v7069
    %8495 = vmatprep.subr.bf16.mxu0 0
    %8496 = vmatpush2.bf16.msra.mxu0 %v7068
    %8497 = vmatprep.subr.bf16.mxu0 0
    %8498 = vmatpush2.bf16.msra.mxu0 %v7067
    %8499 = vmatprep.mubr.bf16.mxu0 %v3693
    %8500 = vmatmul.mubr.bf16.gmra.mxu0 %v3692
    %v8501 = vpop.f32.mrf.mxu0
    %v8502 = vadd.f32 %v8462, %v8501
    %v8503 = vpop.f32.mrf.mxu0
    %v8504 = vpop.f32.mrf.mxu0
    %v8505 = vpop.f32.mrf.mxu0
    %8506 = vdwg.mxu0
    %8507 = vmatprep.subr.bf16.mxu0 0
    %8508 = vmatpush1.bf16.msra.mxu0 %v7082
    %8509 = vmatprep.subr.bf16.mxu0 0
    %8510 = vmatpush1.bf16.msra.mxu0 %v7081
    %8511 = vmatprep.subr.bf16.mxu0 0
    %8512 = vmatpush1.bf16.msra.mxu0 %v7080
    %8513 = vmatprep.subr.bf16.mxu0 0
    %8514 = vmatpush1.bf16.msra.mxu0 %v7079
    %8515 = vmatprep.subr.bf16.mxu0 0
    %8516 = vmatpush1.bf16.msra.mxu0 %v7078
    %8517 = vmatprep.subr.bf16.mxu0 0
    %8518 = vmatpush1.bf16.msra.mxu0 %v7077
    %8519 = vmatprep.subr.bf16.mxu0 0
    %8520 = vmatpush1.bf16.msra.mxu0 %v7076
    %8521 = vmatprep.subr.bf16.mxu0 0
    %8522 = vmatpush1.bf16.msra.mxu0 %v7075
    %8523 = vmatprep.subr.bf16.mxu0 0
    %8524 = vmatpush2.bf16.msra.mxu0 %v7090
    %8525 = vmatprep.subr.bf16.mxu0 0
    %8526 = vmatpush2.bf16.msra.mxu0 %v7089
    %8527 = vmatprep.subr.bf16.mxu0 0
    %8528 = vmatpush2.bf16.msra.mxu0 %v7088
    %8529 = vmatprep.subr.bf16.mxu0 0
    %8530 = vmatpush2.bf16.msra.mxu0 %v7087
    %8531 = vmatprep.subr.bf16.mxu0 0
    %8532 = vmatpush2.bf16.msra.mxu0 %v7086
    %8533 = vmatprep.subr.bf16.mxu0 0
    %8534 = vmatpush2.bf16.msra.mxu0 %v7085
    %8535 = vmatprep.subr.bf16.mxu0 0
    %8536 = vmatpush2.bf16.msra.mxu0 %v7084
    %8537 = vmatprep.subr.bf16.mxu0 0
    %8538 = vmatpush2.bf16.msra.mxu0 %v7083
    %8539 = vmatprep.mubr.bf16.mxu0 %v3695
    %8540 = vmatmul.mubr.bf16.gmra.mxu0 %v3694
    %v8541 = vpop.f32.mrf.mxu0
    %v8542 = vadd.f32 %v8502, %v8541
    %v8543 = vpop.f32.mrf.mxu0
    %v8544 = vpop.f32.mrf.mxu0
    %v8545 = vpop.f32.mrf.mxu0
    %8546 = vdwg.mxu0
    %8547 = vmatprep.subr.bf16.mxu0 0
    %8548 = vmatpush1.bf16.msra.mxu0 %v7098
    %8549 = vmatprep.subr.bf16.mxu0 0
    %8550 = vmatpush1.bf16.msra.mxu0 %v7097
    %8551 = vmatprep.subr.bf16.mxu0 0
    %8552 = vmatpush1.bf16.msra.mxu0 %v7096
    %8553 = vmatprep.subr.bf16.mxu0 0
    %8554 = vmatpush1.bf16.msra.mxu0 %v7095
    %8555 = vmatprep.subr.bf16.mxu0 0
    %8556 = vmatpush1.bf16.msra.mxu0 %v7094
    %8557 = vmatprep.subr.bf16.mxu0 0
    %8558 = vmatpush1.bf16.msra.mxu0 %v7093
    %8559 = vmatprep.subr.bf16.mxu0 0
    %8560 = vmatpush1.bf16.msra.mxu0 %v7092
    %8561 = vmatprep.subr.bf16.mxu0 0
    %8562 = vmatpush1.bf16.msra.mxu0 %v7091
    %8563 = vmatprep.subr.bf16.mxu0 0
    %8564 = vmatpush2.bf16.msra.mxu0 %v7106
    %8565 = vmatprep.subr.bf16.mxu0 0
    %8566 = vmatpush2.bf16.msra.mxu0 %v7105
    %8567 = vmatprep.subr.bf16.mxu0 0
    %8568 = vmatpush2.bf16.msra.mxu0 %v7104
    %8569 = vmatprep.subr.bf16.mxu0 0
    %8570 = vmatpush2.bf16.msra.mxu0 %v7103
    %8571 = vmatprep.subr.bf16.mxu0 0
    %8572 = vmatpush2.bf16.msra.mxu0 %v7102
    %8573 = vmatprep.subr.bf16.mxu0 0
    %8574 = vmatpush2.bf16.msra.mxu0 %v7101
    %8575 = vmatprep.subr.bf16.mxu0 0
    %8576 = vmatpush2.bf16.msra.mxu0 %v7100
    %8577 = vmatprep.subr.bf16.mxu0 0
    %8578 = vmatpush2.bf16.msra.mxu0 %v7099
    %8579 = vmatprep.mubr.bf16.mxu0 %v3697
    %8580 = vmatmul.mubr.bf16.gmra.mxu0 %v3696
    %v8581 = vpop.f32.mrf.mxu0
    %v8582 = vadd.f32 %v8542, %v8581
    %v8583 = vpop.f32.mrf.mxu0
    %v8584 = vpop.f32.mrf.mxu0
    %v8585 = vpop.f32.mrf.mxu0
    %8586 = vdwg.mxu0
    %8587 = vmatprep.subr.bf16.mxu0 0
    %8588 = vmatpush1.bf16.msra.mxu0 %v7114
    %8589 = vmatprep.subr.bf16.mxu0 0
    %8590 = vmatpush1.bf16.msra.mxu0 %v7113
    %8591 = vmatprep.subr.bf16.mxu0 0
    %8592 = vmatpush1.bf16.msra.mxu0 %v7112
    %8593 = vmatprep.subr.bf16.mxu0 0
    %8594 = vmatpush1.bf16.msra.mxu0 %v7111
    %8595 = vmatprep.subr.bf16.mxu0 0
    %8596 = vmatpush1.bf16.msra.mxu0 %v7110
    %8597 = vmatprep.subr.bf16.mxu0 0
    %8598 = vmatpush1.bf16.msra.mxu0 %v7109
    %8599 = vmatprep.subr.bf16.mxu0 0
    %8600 = vmatpush1.bf16.msra.mxu0 %v7108
    %8601 = vmatprep.subr.bf16.mxu0 0
    %8602 = vmatpush1.bf16.msra.mxu0 %v7107
    %8603 = vmatprep.subr.bf16.mxu0 0
    %8604 = vmatpush2.bf16.msra.mxu0 %v7122
    %8605 = vmatprep.subr.bf16.mxu0 0
    %8606 = vmatpush2.bf16.msra.mxu0 %v7121
    %8607 = vmatprep.subr.bf16.mxu0 0
    %8608 = vmatpush2.bf16.msra.mxu0 %v7120
    %8609 = vmatprep.subr.bf16.mxu0 0
    %8610 = vmatpush2.bf16.msra.mxu0 %v7119
    %8611 = vmatprep.subr.bf16.mxu0 0
    %8612 = vmatpush2.bf16.msra.mxu0 %v7118
    %8613 = vmatprep.subr.bf16.mxu0 0
    %8614 = vmatpush2.bf16.msra.mxu0 %v7117
    %8615 = vmatprep.subr.bf16.mxu0 0
    %8616 = vmatpush2.bf16.msra.mxu0 %v7116
    %8617 = vmatprep.subr.bf16.mxu0 0
    %8618 = vmatpush2.bf16.msra.mxu0 %v7115
    %8619 = vmatprep.mubr.bf16.mxu0 %v3699
    %8620 = vmatmul.mubr.bf16.gmra.mxu0 %v3698
    %v8621 = vpop.f32.mrf.mxu0
    %v8622 = vadd.f32 %v8582, %v8621
    %v8623 = vpop.f32.mrf.mxu0
    %v8624 = vpop.f32.mrf.mxu0
    %v8625 = vpop.f32.mrf.mxu0
    %8626 = vdwg.mxu0
    %8627 = vmatprep.subr.bf16.mxu0 0
    %8628 = vmatpush1.bf16.msra.mxu0 %v7130
    %8629 = vmatprep.subr.bf16.mxu0 0
    %8630 = vmatpush1.bf16.msra.mxu0 %v7129
    %8631 = vmatprep.subr.bf16.mxu0 0
    %8632 = vmatpush1.bf16.msra.mxu0 %v7128
    %8633 = vmatprep.subr.bf16.mxu0 0
    %8634 = vmatpush1.bf16.msra.mxu0 %v7127
    %8635 = vmatprep.subr.bf16.mxu0 0
    %8636 = vmatpush1.bf16.msra.mxu0 %v7126
    %8637 = vmatprep.subr.bf16.mxu0 0
    %8638 = vmatpush1.bf16.msra.mxu0 %v7125
    %8639 = vmatprep.subr.bf16.mxu0 0
    %8640 = vmatpush1.bf16.msra.mxu0 %v7124
    %8641 = vmatprep.subr.bf16.mxu0 0
    %8642 = vmatpush1.bf16.msra.mxu0 %v7123
    %8643 = vmatprep.subr.bf16.mxu0 0
    %8644 = vmatpush2.bf16.msra.mxu0 %v7138
    %8645 = vmatprep.subr.bf16.mxu0 0
    %8646 = vmatpush2.bf16.msra.mxu0 %v7137
    %8647 = vmatprep.subr.bf16.mxu0 0
    %8648 = vmatpush2.bf16.msra.mxu0 %v7136
    %8649 = vmatprep.subr.bf16.mxu0 0
    %8650 = vmatpush2.bf16.msra.mxu0 %v7135
    %8651 = vmatprep.subr.bf16.mxu0 0
    %8652 = vmatpush2.bf16.msra.mxu0 %v7134
    %8653 = vmatprep.subr.bf16.mxu0 0
    %8654 = vmatpush2.bf16.msra.mxu0 %v7133
    %8655 = vmatprep.subr.bf16.mxu0 0
    %8656 = vmatpush2.bf16.msra.mxu0 %v7132
    %8657 = vmatprep.subr.bf16.mxu0 0
    %8658 = vmatpush2.bf16.msra.mxu0 %v7131
    %8659 = vmatprep.mubr.bf16.mxu0 %v3701
    %8660 = vmatmul.mubr.bf16.gmra.mxu0 %v3700
    %v8661 = vpop.f32.mrf.mxu0
    %v8662 = vadd.f32 %v8622, %v8661
    %v8663 = vpop.f32.mrf.mxu0
    %v8664 = vpop.f32.mrf.mxu0
    %v8665 = vpop.f32.mrf.mxu0
    %8666 = vdwg.mxu0
    %8667 = vmatprep.subr.bf16.mxu0 0
    %8668 = vmatpush1.bf16.msra.mxu0 %v7146
    %8669 = vmatprep.subr.bf16.mxu0 0
    %8670 = vmatpush1.bf16.msra.mxu0 %v7145
    %8671 = vmatprep.subr.bf16.mxu0 0
    %8672 = vmatpush1.bf16.msra.mxu0 %v7144
    %8673 = vmatprep.subr.bf16.mxu0 0
    %8674 = vmatpush1.bf16.msra.mxu0 %v7143
    %8675 = vmatprep.subr.bf16.mxu0 0
    %8676 = vmatpush1.bf16.msra.mxu0 %v7142
    %8677 = vmatprep.subr.bf16.mxu0 0
    %8678 = vmatpush1.bf16.msra.mxu0 %v7141
    %8679 = vmatprep.subr.bf16.mxu0 0
    %8680 = vmatpush1.bf16.msra.mxu0 %v7140
    %8681 = vmatprep.subr.bf16.mxu0 0
    %8682 = vmatpush1.bf16.msra.mxu0 %v7139
    %8683 = vmatprep.subr.bf16.mxu0 0
    %8684 = vmatpush2.bf16.msra.mxu0 %v7154
    %8685 = vmatprep.subr.bf16.mxu0 0
    %8686 = vmatpush2.bf16.msra.mxu0 %v7153
    %8687 = vmatprep.subr.bf16.mxu0 0
    %8688 = vmatpush2.bf16.msra.mxu0 %v7152
    %8689 = vmatprep.subr.bf16.mxu0 0
    %8690 = vmatpush2.bf16.msra.mxu0 %v7151
    %8691 = vmatprep.subr.bf16.mxu0 0
    %8692 = vmatpush2.bf16.msra.mxu0 %v7150
    %8693 = vmatprep.subr.bf16.mxu0 0
    %8694 = vmatpush2.bf16.msra.mxu0 %v7149
    %8695 = vmatprep.subr.bf16.mxu0 0
    %8696 = vmatpush2.bf16.msra.mxu0 %v7148
    %8697 = vmatprep.subr.bf16.mxu0 0
    %8698 = vmatpush2.bf16.msra.mxu0 %v7147
    %8699 = vmatprep.mubr.bf16.mxu0 %v3703
    %8700 = vmatmul.mubr.bf16.gmra.mxu0 %v3702
    %v8701 = vpop.f32.mrf.mxu0
    %v8702 = vadd.f32 %v8662, %v8701
    %v8703 = vpop.f32.mrf.mxu0
    %v8704 = vpop.f32.mrf.mxu0
    %v8705 = vpop.f32.mrf.mxu0
    %8706 = vdwg.mxu0
    %8707 = vmatprep.subr.bf16.mxu0 0
    %8708 = vmatpush1.bf16.msra.mxu0 %v7162
    %8709 = vmatprep.subr.bf16.mxu0 0
    %8710 = vmatpush1.bf16.msra.mxu0 %v7161
    %8711 = vmatprep.subr.bf16.mxu0 0
    %8712 = vmatpush1.bf16.msra.mxu0 %v7160
    %8713 = vmatprep.subr.bf16.mxu0 0
    %8714 = vmatpush1.bf16.msra.mxu0 %v7159
    %8715 = vmatprep.subr.bf16.mxu0 0
    %8716 = vmatpush1.bf16.msra.mxu0 %v7158
    %8717 = vmatprep.subr.bf16.mxu0 0
    %8718 = vmatpush1.bf16.msra.mxu0 %v7157
    %8719 = vmatprep.subr.bf16.mxu0 0
    %8720 = vmatpush1.bf16.msra.mxu0 %v7156
    %8721 = vmatprep.subr.bf16.mxu0 0
    %8722 = vmatpush1.bf16.msra.mxu0 %v7155
    %8723 = vmatprep.subr.bf16.mxu0 0
    %8724 = vmatpush2.bf16.msra.mxu0 %v7170
    %8725 = vmatprep.subr.bf16.mxu0 0
    %8726 = vmatpush2.bf16.msra.mxu0 %v7169
    %8727 = vmatprep.subr.bf16.mxu0 0
    %8728 = vmatpush2.bf16.msra.mxu0 %v7168
    %8729 = vmatprep.subr.bf16.mxu0 0
    %8730 = vmatpush2.bf16.msra.mxu0 %v7167
    %8731 = vmatprep.subr.bf16.mxu0 0
    %8732 = vmatpush2.bf16.msra.mxu0 %v7166
    %8733 = vmatprep.subr.bf16.mxu0 0
    %8734 = vmatpush2.bf16.msra.mxu0 %v7165
    %8735 = vmatprep.subr.bf16.mxu0 0
    %8736 = vmatpush2.bf16.msra.mxu0 %v7164
    %8737 = vmatprep.subr.bf16.mxu0 0
    %8738 = vmatpush2.bf16.msra.mxu0 %v7163
    %8739 = vmatprep.mubr.bf16.mxu0 %v3705
    %8740 = vmatmul.mubr.bf16.gmra.mxu0 %v3704
    %v8741 = vpop.f32.mrf.mxu0
    %v8742 = vadd.f32 %v8702, %v8741
    %v8743 = vpop.f32.mrf.mxu0
    %v8744 = vpop.f32.mrf.mxu0
    %v8745 = vpop.f32.mrf.mxu0
    %8746 = vdwg.mxu0
    %8747 = vmatprep.subr.bf16.mxu0 0
    %8748 = vmatpush1.bf16.msra.mxu0 %v7178
    %8749 = vmatprep.subr.bf16.mxu0 0
    %8750 = vmatpush1.bf16.msra.mxu0 %v7177
    %8751 = vmatprep.subr.bf16.mxu0 0
    %8752 = vmatpush1.bf16.msra.mxu0 %v7176
    %8753 = vmatprep.subr.bf16.mxu0 0
    %8754 = vmatpush1.bf16.msra.mxu0 %v7175
    %8755 = vmatprep.subr.bf16.mxu0 0
    %8756 = vmatpush1.bf16.msra.mxu0 %v7174
    %8757 = vmatprep.subr.bf16.mxu0 0
    %8758 = vmatpush1.bf16.msra.mxu0 %v7173
    %8759 = vmatprep.subr.bf16.mxu0 0
    %8760 = vmatpush1.bf16.msra.mxu0 %v7172
    %8761 = vmatprep.subr.bf16.mxu0 0
    %8762 = vmatpush1.bf16.msra.mxu0 %v7171
    %8763 = vmatprep.subr.bf16.mxu0 0
    %8764 = vmatpush2.bf16.msra.mxu0 %v7186
    %8765 = vmatprep.subr.bf16.mxu0 0
    %8766 = vmatpush2.bf16.msra.mxu0 %v7185
    %8767 = vmatprep.subr.bf16.mxu0 0
    %8768 = vmatpush2.bf16.msra.mxu0 %v7184
    %8769 = vmatprep.subr.bf16.mxu0 0
    %8770 = vmatpush2.bf16.msra.mxu0 %v7183
    %8771 = vmatprep.subr.bf16.mxu0 0
    %8772 = vmatpush2.bf16.msra.mxu0 %v7182
    %8773 = vmatprep.subr.bf16.mxu0 0
    %8774 = vmatpush2.bf16.msra.mxu0 %v7181
    %8775 = vmatprep.subr.bf16.mxu0 0
    %8776 = vmatpush2.bf16.msra.mxu0 %v7180
    %8777 = vmatprep.subr.bf16.mxu0 0
    %8778 = vmatpush2.bf16.msra.mxu0 %v7179
    %8779 = vmatprep.mubr.bf16.mxu0 %v3707
    %8780 = vmatmul.mubr.bf16.gmra.mxu0 %v3706
    %v8781 = vpop.f32.mrf.mxu0
    %v8782 = vadd.f32 %v8742, %v8781
    %v8783 = vpop.f32.mrf.mxu0
    %v8784 = vpop.f32.mrf.mxu0
    %v8785 = vpop.f32.mrf.mxu0
    %8786 = vdwg.mxu0
    %8787 = vmatprep.subr.bf16.mxu0 0
    %8788 = vmatpush1.bf16.msra.mxu0 %v7194
    %8789 = vmatprep.subr.bf16.mxu0 0
    %8790 = vmatpush1.bf16.msra.mxu0 %v7193
    %8791 = vmatprep.subr.bf16.mxu0 0
    %8792 = vmatpush1.bf16.msra.mxu0 %v7192
    %8793 = vmatprep.subr.bf16.mxu0 0
    %8794 = vmatpush1.bf16.msra.mxu0 %v7191
    %8795 = vmatprep.subr.bf16.mxu0 0
    %8796 = vmatpush1.bf16.msra.mxu0 %v7190
    %8797 = vmatprep.subr.bf16.mxu0 0
    %8798 = vmatpush1.bf16.msra.mxu0 %v7189
    %8799 = vmatprep.subr.bf16.mxu0 0
    %8800 = vmatpush1.bf16.msra.mxu0 %v7188
    %8801 = vmatprep.subr.bf16.mxu0 0
    %8802 = vmatpush1.bf16.msra.mxu0 %v7187
    %8803 = vmatprep.subr.bf16.mxu0 0
    %8804 = vmatpush2.bf16.msra.mxu0 %v7202
    %8805 = vmatprep.subr.bf16.mxu0 0
    %8806 = vmatpush2.bf16.msra.mxu0 %v7201
    %8807 = vmatprep.subr.bf16.mxu0 0
    %8808 = vmatpush2.bf16.msra.mxu0 %v7200
    %8809 = vmatprep.subr.bf16.mxu0 0
    %8810 = vmatpush2.bf16.msra.mxu0 %v7199
    %8811 = vmatprep.subr.bf16.mxu0 0
    %8812 = vmatpush2.bf16.msra.mxu0 %v7198
    %8813 = vmatprep.subr.bf16.mxu0 0
    %8814 = vmatpush2.bf16.msra.mxu0 %v7197
    %8815 = vmatprep.subr.bf16.mxu0 0
    %8816 = vmatpush2.bf16.msra.mxu0 %v7196
    %8817 = vmatprep.subr.bf16.mxu0 0
    %8818 = vmatpush2.bf16.msra.mxu0 %v7195
    %8819 = vmatprep.mubr.bf16.mxu0 %v3709
    %8820 = vmatmul.mubr.bf16.gmra.mxu0 %v3708
    %v8821 = vpop.f32.mrf.mxu0
    %v8822 = vadd.f32 %v8782, %v8821
    %v8823 = vpop.f32.mrf.mxu0
    %v8824 = vpop.f32.mrf.mxu0
    %v8825 = vpop.f32.mrf.mxu0
    %8826 = vdwg.mxu0
    %8827 = vmatprep.subr.bf16.mxu0 0
    %8828 = vmatpush1.bf16.msra.mxu0 %v7210
    %8829 = vmatprep.subr.bf16.mxu0 0
    %8830 = vmatpush1.bf16.msra.mxu0 %v7209
    %8831 = vmatprep.subr.bf16.mxu0 0
    %8832 = vmatpush1.bf16.msra.mxu0 %v7208
    %8833 = vmatprep.subr.bf16.mxu0 0
    %8834 = vmatpush1.bf16.msra.mxu0 %v7207
    %8835 = vmatprep.subr.bf16.mxu0 0
    %8836 = vmatpush1.bf16.msra.mxu0 %v7206
    %8837 = vmatprep.subr.bf16.mxu0 0
    %8838 = vmatpush1.bf16.msra.mxu0 %v7205
    %8839 = vmatprep.subr.bf16.mxu0 0
    %8840 = vmatpush1.bf16.msra.mxu0 %v7204
    %8841 = vmatprep.subr.bf16.mxu0 0
    %8842 = vmatpush1.bf16.msra.mxu0 %v7203
    %8843 = vmatprep.subr.bf16.mxu0 0
    %8844 = vmatpush2.bf16.msra.mxu0 %v7218
    %8845 = vmatprep.subr.bf16.mxu0 0
    %8846 = vmatpush2.bf16.msra.mxu0 %v7217
    %8847 = vmatprep.subr.bf16.mxu0 0
    %8848 = vmatpush2.bf16.msra.mxu0 %v7216
    %8849 = vmatprep.subr.bf16.mxu0 0
    %8850 = vmatpush2.bf16.msra.mxu0 %v7215
    %8851 = vmatprep.subr.bf16.mxu0 0
    %8852 = vmatpush2.bf16.msra.mxu0 %v7214
    %8853 = vmatprep.subr.bf16.mxu0 0
    %8854 = vmatpush2.bf16.msra.mxu0 %v7213
    %8855 = vmatprep.subr.bf16.mxu0 0
    %8856 = vmatpush2.bf16.msra.mxu0 %v7212
    %8857 = vmatprep.subr.bf16.mxu0 0
    %8858 = vmatpush2.bf16.msra.mxu0 %v7211
    %8859 = vmatprep.mubr.bf16.mxu0 %v3711
    %8860 = vmatmul.mubr.bf16.gmra.mxu0 %v3710
    %v8861 = vpop.f32.mrf.mxu0
    %v8862 = vadd.f32 %v8822, %v8861
    %v8863 = vpop.f32.mrf.mxu0
    %v8864 = vpop.f32.mrf.mxu0
    %v8865 = vpop.f32.mrf.mxu0
    %8866 = vdwg.mxu0
    %8867 = vmatprep.subr.bf16.mxu0 0
    %8868 = vmatpush1.bf16.msra.mxu0 %v7226
    %8869 = vmatprep.subr.bf16.mxu0 0
    %8870 = vmatpush1.bf16.msra.mxu0 %v7225
    %8871 = vmatprep.subr.bf16.mxu0 0
    %8872 = vmatpush1.bf16.msra.mxu0 %v7224
    %8873 = vmatprep.subr.bf16.mxu0 0
    %8874 = vmatpush1.bf16.msra.mxu0 %v7223
    %8875 = vmatprep.subr.bf16.mxu0 0
    %8876 = vmatpush1.bf16.msra.mxu0 %v7222
    %8877 = vmatprep.subr.bf16.mxu0 0
    %8878 = vmatpush1.bf16.msra.mxu0 %v7221
    %8879 = vmatprep.subr.bf16.mxu0 0
    %8880 = vmatpush1.bf16.msra.mxu0 %v7220
    %8881 = vmatprep.subr.bf16.mxu0 0
    %8882 = vmatpush1.bf16.msra.mxu0 %v7219
    %8883 = vmatprep.subr.bf16.mxu0 0
    %8884 = vmatpush2.bf16.msra.mxu0 %v7234
    %8885 = vmatprep.subr.bf16.mxu0 0
    %8886 = vmatpush2.bf16.msra.mxu0 %v7233
    %8887 = vmatprep.subr.bf16.mxu0 0
    %8888 = vmatpush2.bf16.msra.mxu0 %v7232
    %8889 = vmatprep.subr.bf16.mxu0 0
    %8890 = vmatpush2.bf16.msra.mxu0 %v7231
    %8891 = vmatprep.subr.bf16.mxu0 0
    %8892 = vmatpush2.bf16.msra.mxu0 %v7230
    %8893 = vmatprep.subr.bf16.mxu0 0
    %8894 = vmatpush2.bf16.msra.mxu0 %v7229
    %8895 = vmatprep.subr.bf16.mxu0 0
    %8896 = vmatpush2.bf16.msra.mxu0 %v7228
    %8897 = vmatprep.subr.bf16.mxu0 0
    %8898 = vmatpush2.bf16.msra.mxu0 %v7227
    %8899 = vmatprep.mubr.bf16.mxu0 %v3713
    %8900 = vmatmul.mubr.bf16.gmra.mxu0 %v3712
    %v8901 = vpop.f32.mrf.mxu0
    %v8902 = vadd.f32 %v8862, %v8901
    %v8903 = vpop.f32.mrf.mxu0
    %v8904 = vpop.f32.mrf.mxu0
    %v8905 = vpop.f32.mrf.mxu0
    %8906 = vdwg.mxu0
    %8907 = vmatprep.subr.bf16.mxu0 0
    %8908 = vmatpush1.bf16.msra.mxu0 %v7242
    %8909 = vmatprep.subr.bf16.mxu0 0
    %8910 = vmatpush1.bf16.msra.mxu0 %v7241
    %8911 = vmatprep.subr.bf16.mxu0 0
    %8912 = vmatpush1.bf16.msra.mxu0 %v7240
    %8913 = vmatprep.subr.bf16.mxu0 0
    %8914 = vmatpush1.bf16.msra.mxu0 %v7239
    %8915 = vmatprep.subr.bf16.mxu0 0
    %8916 = vmatpush1.bf16.msra.mxu0 %v7238
    %8917 = vmatprep.subr.bf16.mxu0 0
    %8918 = vmatpush1.bf16.msra.mxu0 %v7237
    %8919 = vmatprep.subr.bf16.mxu0 0
    %8920 = vmatpush1.bf16.msra.mxu0 %v7236
    %8921 = vmatprep.subr.bf16.mxu0 0
    %8922 = vmatpush1.bf16.msra.mxu0 %v7235
    %8923 = vmatprep.subr.bf16.mxu0 0
    %8924 = vmatpush2.bf16.msra.mxu0 %v7250
    %8925 = vmatprep.subr.bf16.mxu0 0
    %8926 = vmatpush2.bf16.msra.mxu0 %v7249
    %8927 = vmatprep.subr.bf16.mxu0 0
    %8928 = vmatpush2.bf16.msra.mxu0 %v7248
    %8929 = vmatprep.subr.bf16.mxu0 0
    %8930 = vmatpush2.bf16.msra.mxu0 %v7247
    %8931 = vmatprep.subr.bf16.mxu0 0
    %8932 = vmatpush2.bf16.msra.mxu0 %v7246
    %8933 = vmatprep.subr.bf16.mxu0 0
    %8934 = vmatpush2.bf16.msra.mxu0 %v7245
    %8935 = vmatprep.subr.bf16.mxu0 0
    %8936 = vmatpush2.bf16.msra.mxu0 %v7244
    %8937 = vmatprep.subr.bf16.mxu0 0
    %8938 = vmatpush2.bf16.msra.mxu0 %v7243
    %8939 = vmatprep.mubr.bf16.mxu0 %v3715
    %8940 = vmatmul.mubr.bf16.gmra.mxu0 %v3714
    %v8941 = vpop.f32.mrf.mxu0
    %v8942 = vadd.f32 %v8902, %v8941
    %v8943 = vpop.f32.mrf.mxu0
    %v8944 = vpop.f32.mrf.mxu0
    %v8945 = vpop.f32.mrf.mxu0
    %8946 = vdwg.mxu0
    %8947 = vmatprep.subr.bf16.mxu0 0
    %8948 = vmatpush1.bf16.msra.mxu0 %v7258
    %8949 = vmatprep.subr.bf16.mxu0 0
    %8950 = vmatpush1.bf16.msra.mxu0 %v7257
    %8951 = vmatprep.subr.bf16.mxu0 0
    %8952 = vmatpush1.bf16.msra.mxu0 %v7256
    %8953 = vmatprep.subr.bf16.mxu0 0
    %8954 = vmatpush1.bf16.msra.mxu0 %v7255
    %8955 = vmatprep.subr.bf16.mxu0 0
    %8956 = vmatpush1.bf16.msra.mxu0 %v7254
    %8957 = vmatprep.subr.bf16.mxu0 0
    %8958 = vmatpush1.bf16.msra.mxu0 %v7253
    %8959 = vmatprep.subr.bf16.mxu0 0
    %8960 = vmatpush1.bf16.msra.mxu0 %v7252
    %8961 = vmatprep.subr.bf16.mxu0 0
    %8962 = vmatpush1.bf16.msra.mxu0 %v7251
    %8963 = vmatprep.subr.bf16.mxu0 0
    %8964 = vmatpush2.bf16.msra.mxu0 %v7266
    %8965 = vmatprep.subr.bf16.mxu0 0
    %8966 = vmatpush2.bf16.msra.mxu0 %v7265
    %8967 = vmatprep.subr.bf16.mxu0 0
    %8968 = vmatpush2.bf16.msra.mxu0 %v7264
    %8969 = vmatprep.subr.bf16.mxu0 0
    %8970 = vmatpush2.bf16.msra.mxu0 %v7263
    %8971 = vmatprep.subr.bf16.mxu0 0
    %8972 = vmatpush2.bf16.msra.mxu0 %v7262
    %8973 = vmatprep.subr.bf16.mxu0 0
    %8974 = vmatpush2.bf16.msra.mxu0 %v7261
    %8975 = vmatprep.subr.bf16.mxu0 0
    %8976 = vmatpush2.bf16.msra.mxu0 %v7260
    %8977 = vmatprep.subr.bf16.mxu0 0
    %8978 = vmatpush2.bf16.msra.mxu0 %v7259
    %8979 = vmatprep.mubr.bf16.mxu0 %v3717
    %8980 = vmatmul.mubr.bf16.gmra.mxu0 %v3716
    %v8981 = vpop.f32.mrf.mxu0
    %v8982 = vadd.f32 %v8942, %v8981
    %v8983 = vpop.f32.mrf.mxu0
    %v8984 = vpop.f32.mrf.mxu0
    %v8985 = vpop.f32.mrf.mxu0
    %8986 = vdwg.mxu0
    %8987 = vmatprep.subr.bf16.mxu0 0
    %8988 = vmatpush1.bf16.msra.mxu0 %v7274
    %8989 = vmatprep.subr.bf16.mxu0 0
    %8990 = vmatpush1.bf16.msra.mxu0 %v7273
    %8991 = vmatprep.subr.bf16.mxu0 0
    %8992 = vmatpush1.bf16.msra.mxu0 %v7272
    %8993 = vmatprep.subr.bf16.mxu0 0
    %8994 = vmatpush1.bf16.msra.mxu0 %v7271
    %8995 = vmatprep.subr.bf16.mxu0 0
    %8996 = vmatpush1.bf16.msra.mxu0 %v7270
    %8997 = vmatprep.subr.bf16.mxu0 0
    %8998 = vmatpush1.bf16.msra.mxu0 %v7269
    %8999 = vmatprep.subr.bf16.mxu0 0
    %9000 = vmatpush1.bf16.msra.mxu0 %v7268
    %9001 = vmatprep.subr.bf16.mxu0 0
    %9002 = vmatpush1.bf16.msra.mxu0 %v7267
    %9003 = vmatprep.subr.bf16.mxu0 0
    %9004 = vmatpush2.bf16.msra.mxu0 %v7282
    %9005 = vmatprep.subr.bf16.mxu0 0
    %9006 = vmatpush2.bf16.msra.mxu0 %v7281
    %9007 = vmatprep.subr.bf16.mxu0 0
    %9008 = vmatpush2.bf16.msra.mxu0 %v7280
    %9009 = vmatprep.subr.bf16.mxu0 0
    %9010 = vmatpush2.bf16.msra.mxu0 %v7279
    %9011 = vmatprep.subr.bf16.mxu0 0
    %9012 = vmatpush2.bf16.msra.mxu0 %v7278
    %9013 = vmatprep.subr.bf16.mxu0 0
    %9014 = vmatpush2.bf16.msra.mxu0 %v7277
    %9015 = vmatprep.subr.bf16.mxu0 0
    %9016 = vmatpush2.bf16.msra.mxu0 %v7276
    %9017 = vmatprep.subr.bf16.mxu0 0
    %9018 = vmatpush2.bf16.msra.mxu0 %v7275
    %9019 = vmatprep.mubr.bf16.mxu0 %v3719
    %9020 = vmatmul.mubr.bf16.gmra.mxu0 %v3718
    %v9021 = vpop.f32.mrf.mxu0
    %v9022 = vadd.f32 %v8982, %v9021
    %v9023 = vpop.f32.mrf.mxu0
    %v9024 = vpop.f32.mrf.mxu0
    %v9025 = vpop.f32.mrf.mxu0
    %9026 = vdwg.mxu0
    %9027 = vmatprep.subr.bf16.mxu0 0
    %9028 = vmatpush1.bf16.msra.mxu0 %v7290
    %9029 = vmatprep.subr.bf16.mxu0 0
    %9030 = vmatpush1.bf16.msra.mxu0 %v7289
    %9031 = vmatprep.subr.bf16.mxu0 0
    %9032 = vmatpush1.bf16.msra.mxu0 %v7288
    %9033 = vmatprep.subr.bf16.mxu0 0
    %9034 = vmatpush1.bf16.msra.mxu0 %v7287
    %9035 = vmatprep.subr.bf16.mxu0 0
    %9036 = vmatpush1.bf16.msra.mxu0 %v7286
    %9037 = vmatprep.subr.bf16.mxu0 0
    %9038 = vmatpush1.bf16.msra.mxu0 %v7285
    %9039 = vmatprep.subr.bf16.mxu0 0
    %9040 = vmatpush1.bf16.msra.mxu0 %v7284
    %9041 = vmatprep.subr.bf16.mxu0 0
    %9042 = vmatpush1.bf16.msra.mxu0 %v7283
    %9043 = vmatprep.subr.bf16.mxu0 0
    %9044 = vmatpush2.bf16.msra.mxu0 %v7298
    %9045 = vmatprep.subr.bf16.mxu0 0
    %9046 = vmatpush2.bf16.msra.mxu0 %v7297
    %9047 = vmatprep.subr.bf16.mxu0 0
    %9048 = vmatpush2.bf16.msra.mxu0 %v7296
    %9049 = vmatprep.subr.bf16.mxu0 0
    %9050 = vmatpush2.bf16.msra.mxu0 %v7295
    %9051 = vmatprep.subr.bf16.mxu0 0
    %9052 = vmatpush2.bf16.msra.mxu0 %v7294
    %9053 = vmatprep.subr.bf16.mxu0 0
    %9054 = vmatpush2.bf16.msra.mxu0 %v7293
    %9055 = vmatprep.subr.bf16.mxu0 0
    %9056 = vmatpush2.bf16.msra.mxu0 %v7292
    %9057 = vmatprep.subr.bf16.mxu0 0
    %9058 = vmatpush2.bf16.msra.mxu0 %v7291
    %9059 = vmatprep.mubr.bf16.mxu0 %v3721
    %9060 = vmatmul.mubr.bf16.gmra.mxu0 %v3720
    %v9061 = vpop.f32.mrf.mxu0
    %v9062 = vadd.f32 %v9022, %v9061
    %v9063 = vpop.f32.mrf.mxu0
    %v9064 = vpop.f32.mrf.mxu0
    %v9065 = vpop.f32.mrf.mxu0
    %9066 = vdwg.mxu0
    %9067 = vmatprep.subr.bf16.mxu0 0
    %9068 = vmatpush1.bf16.msra.mxu0 %v7306
    %9069 = vmatprep.subr.bf16.mxu0 0
    %9070 = vmatpush1.bf16.msra.mxu0 %v7305
    %9071 = vmatprep.subr.bf16.mxu0 0
    %9072 = vmatpush1.bf16.msra.mxu0 %v7304
    %9073 = vmatprep.subr.bf16.mxu0 0
    %9074 = vmatpush1.bf16.msra.mxu0 %v7303
    %9075 = vmatprep.subr.bf16.mxu0 0
    %9076 = vmatpush1.bf16.msra.mxu0 %v7302
    %9077 = vmatprep.subr.bf16.mxu0 0
    %9078 = vmatpush1.bf16.msra.mxu0 %v7301
    %9079 = vmatprep.subr.bf16.mxu0 0
    %9080 = vmatpush1.bf16.msra.mxu0 %v7300
    %9081 = vmatprep.subr.bf16.mxu0 0
    %9082 = vmatpush1.bf16.msra.mxu0 %v7299
    %9083 = vmatprep.subr.bf16.mxu0 0
    %9084 = vmatpush2.bf16.msra.mxu0 %v7314
    %9085 = vmatprep.subr.bf16.mxu0 0
    %9086 = vmatpush2.bf16.msra.mxu0 %v7313
    %9087 = vmatprep.subr.bf16.mxu0 0
    %9088 = vmatpush2.bf16.msra.mxu0 %v7312
    %9089 = vmatprep.subr.bf16.mxu0 0
    %9090 = vmatpush2.bf16.msra.mxu0 %v7311
    %9091 = vmatprep.subr.bf16.mxu0 0
    %9092 = vmatpush2.bf16.msra.mxu0 %v7310
    %9093 = vmatprep.subr.bf16.mxu0 0
    %9094 = vmatpush2.bf16.msra.mxu0 %v7309
    %9095 = vmatprep.subr.bf16.mxu0 0
    %9096 = vmatpush2.bf16.msra.mxu0 %v7308
    %9097 = vmatprep.subr.bf16.mxu0 0
    %9098 = vmatpush2.bf16.msra.mxu0 %v7307
    %9099 = vmatprep.mubr.bf16.mxu0 %v3723
    %9100 = vmatmul.mubr.bf16.gmra.mxu0 %v3722
    %v9101 = vpop.f32.mrf.mxu0
    %v9102 = vadd.f32 %v9062, %v9101
    %v9103 = vpop.f32.mrf.mxu0
    %v9104 = vpop.f32.mrf.mxu0
    %v9105 = vpop.f32.mrf.mxu0
    %9106 = vdwg.mxu0
    %v9107 = vmax.f32 %v9102, 0.0
    %v9108 = vld [vmem:[%s7] sm:$0xff]
    %v9109 = vld [vmem:[%s7 + $0x8] sm:$0xff]
    %v9110 = vld [vmem:[%s7 + $0x10] sm:$0xff]
    %v9111 = vld [vmem:[%s7 + $0x18] sm:$0xff]
    %v9112 = vld [vmem:[%s7 + $0x20] sm:$0xff]
    %v9113 = vld [vmem:[%s7 + $0x28] sm:$0xff]
    %v9114 = vld [vmem:[%s7 + $0x30] sm:$0xff]
    %v9115 = vld [vmem:[%s7 + $0x38] sm:$0xff]
    %v9116 = vld [vmem:[%s7 + $0x40] sm:$0xff]
    %v9117 = vld [vmem:[%s7 + $0x48] sm:$0xff]
    %v9118 = vld [vmem:[%s7 + $0x50] sm:$0xff]
    %v9119 = vld [vmem:[%s7 + $0x58] sm:$0xff]
    %v9120 = vld [vmem:[%s7 + $0x60] sm:$0xff]
    %v9121 = vld [vmem:[%s7 + $0x68] sm:$0xff]
    %v9122 = vld [vmem:[%s7 + $0x70] sm:$0xff]
    %v9123 = vld [vmem:[%s7 + $0x78] sm:$0xff]
    %v9124 = vld [vmem:[#allocation14] sm:$0x1]
    %v9126 = vlaneseq
    %v9127 = vshrl.u32 %v9126, 7
    %v9128 = vsub.s32 0, %v9127
    %v9129 = vrot.slane %v9124, %v9128
    %9131 = vmatprep.subr.mxu0 0.0
    %9132 = vmatpush1.msra.mxu0 %v9123
    %9133 = vmatprep.subr.mxu0 0.0
    %9134 = vmatpush1.msra.mxu0 %v9122
    %9135 = vmatprep.subr.mxu0 0.0
    %9136 = vmatpush1.msra.mxu0 %v9121
    %9137 = vmatprep.subr.mxu0 0.0
    %9138 = vmatpush1.msra.mxu0 %v9120
    %9139 = vmatprep.subr.mxu0 0.0
    %9140 = vmatpush1.msra.mxu0 %v9119
    %9141 = vmatprep.subr.mxu0 0.0
    %9142 = vmatpush1.msra.mxu0 %v9118
    %9143 = vmatprep.subr.mxu0 0.0
    %9144 = vmatpush1.msra.mxu0 %v9117
    %9145 = vmatprep.subr.mxu0 0.0
    %9146 = vmatpush1.msra.mxu0 %v9116
    %9147 = vmatprep.subr.mxu0 0.0
    %9148 = vmatpush1.msra.mxu0 %v9115
    %9149 = vmatprep.subr.mxu0 0.0
    %9150 = vmatpush1.msra.mxu0 %v9114
    %9151 = vmatprep.subr.mxu0 0.0
    %9152 = vmatpush1.msra.mxu0 %v9113
    %9153 = vmatprep.subr.mxu0 0.0
    %9154 = vmatpush1.msra.mxu0 %v9112
    %9155 = vmatprep.subr.mxu0 0.0
    %9156 = vmatpush1.msra.mxu0 %v9111
    %9157 = vmatprep.subr.mxu0 0.0
    %9158 = vmatpush1.msra.mxu0 %v9110
    %9159 = vmatprep.subr.mxu0 0.0
    %9160 = vmatpush1.msra.mxu0 %v9109
    %9161 = vmatprep.subr.mxu0 0.0
    %9162 = vmatpush1.msra.mxu0 %v9108
    %9163 = vmatprep.subr.mxu0 0.0
    %9164 = vmatpush2.msra.mxu0 0.0
    %9165 = vmatprep.subr.mxu0 0.0
    %9166 = vmatpush2.msra.mxu0 0.0
    %9167 = vmatprep.subr.mxu0 0.0
    %9168 = vmatpush2.msra.mxu0 0.0
    %9169 = vmatprep.subr.mxu0 0.0
    %9170 = vmatpush2.msra.mxu0 0.0
    %9171 = vmatprep.subr.mxu0 0.0
    %9172 = vmatpush2.msra.mxu0 0.0
    %9173 = vmatprep.subr.mxu0 0.0
    %9174 = vmatpush2.msra.mxu0 0.0
    %9175 = vmatprep.subr.mxu0 0.0
    %9176 = vmatpush2.msra.mxu0 0.0
    %9177 = vmatprep.subr.mxu0 0.0
    %9178 = vmatpush2.msra.mxu0 0.0
    %9179 = vmatprep.subr.mxu0 0.0
    %9180 = vmatpush2.msra.mxu0 0.0
    %9181 = vmatprep.subr.mxu0 0.0
    %9182 = vmatpush2.msra.mxu0 0.0
    %9183 = vmatprep.subr.mxu0 0.0
    %9184 = vmatpush2.msra.mxu0 0.0
    %9185 = vmatprep.subr.mxu0 0.0
    %9186 = vmatpush2.msra.mxu0 0.0
    %9187 = vmatprep.subr.mxu0 0.0
    %9188 = vmatpush2.msra.mxu0 0.0
    %9189 = vmatprep.subr.mxu0 0.0
    %9190 = vmatpush2.msra.mxu0 0.0
    %9191 = vmatprep.subr.mxu0 0.0
    %9192 = vmatpush2.msra.mxu0 0.0
    %9193 = vmatprep.subr.mxu0 0.0
    %9194 = vmatpush2.msra.mxu0 0.0
    %9195 = vmatprep.mubr.f32.mxu0 0.0
    %9196 = vmatmul.mubr.f32.gmra.mxu0 %v9107
    %v9197 = vpop.f32.mrf.mxu0
    %v9198 = vadd.f32 %v9129, %v9197
    %v9199 = vpop.f32.mrf.mxu0
    %9200 = vdwg.mxu0
    %vm9201 = vcmask 25600
    %9202 = vst.msk [vmem:[#allocation15] sm:$0x3] %vm9201, %v9198
    // Predicated region
    $region66: #{dqn_forward.1} parent=1 // pred_check
      _
    $region67: #{dqn_forward.1} parent=1 // pred_check_branch
      %9204 = sbr.rel (0) target = $region69
    $region68: #{dqn_forward.1} parent=1 // pred_region
      %s9206 = ssub.s32 32, 32
      %9207 = vsyncadd [#allocation5], %s9206
      %s9209 = sshll.u32 [#allocation15], 4
      %s9210 = int_to_ptr.vmem [resolvable:$true] %s9209
      %9212 = dma.vmem_to_hbm [thread:$0]  %s9210, 32, %s9, [#allocation5]
    $region69: #{dqn_forward.1} parent=1 // pred_fallthru
      _
    // Predicated region
    $region70: #{dqn_forward.1} parent=1 // pred_check
      _
    $region71: #{dqn_forward.1} parent=1 // pred_check_branch
      %9214 = sbr.rel (0) target = $region73
    $region72: #{dqn_forward.1} parent=1 // pred_region
      %9215 = dma.done [#allocation5], 32
    $region73: #{dqn_forward.1} parent=1 // pred_fallthru
      _
    %9216 = vsyncpa [#allocation4], 1
    %9217 = vsyncpa [#allocation7], 1
    %9218 = vsyncpa [#allocation10], 1
    %9219 = vsyncpa [#allocation13], 1
    %9220 = vsyncpa [#allocation5], 1

</llo_original>
